<compile_context>
chip_gen: v5e
topology: v5e:2x2
jax: 0.10.0
libtpu: 0.0.40
codegen_flags: <defaults>
</compile_context>

<pallas_src>
import jax
import jax.numpy as jnp
from jax.experimental import pallas as pl
from jax.experimental.pallas import tpu as pltpu

# ----------------------------- model dimensions ------------------------------
B = 2              # batch_size
EMBED = 32         # embedding_dim
ENC = 32           # encode_dim (GRU input size)
HID = 32           # hidden_dim
HID2 = 2 * HID     # bidirectional GRU output size
T_CODE = 8         # statements per code item
T_WORD = 8         # words per report (== T_CODE so all sequences batch together)
N_EXP = 3          # expand methods per batch item
VOCAB = 50         # node vocab
WORD_VOCAB = 60    # word vocab
LABEL = 1          # label_size (must be 1)
NSEQ = B + B + B * N_EXP     # 10 real sequences
NPAD = 16                    # padded sequence count (sublane-aligned recurrence slices)
TAB_ROWS = 128               # merged embedding table rows (word @0, node @NODE_OFF)
NODE_OFF = 64

assert T_WORD == T_CODE and NSEQ <= NPAD


def _sigmoid(x):
    # exp + approx reciprocal -> both on the EUP slot, off the VPU divide path
    return pl.reciprocal(1.0 + jnp.exp(-x), approx=True)


def _gru_step(gi, gh, h):
    """Packed-gate GRU update.

    Column layout of gi/gh is [r (2H) | z (2H) | n (2H)].  For the fused bi-GRU the 2H-wide
    blocks are [gate_fwd | gate_bwd] and h is [h_f | h_b]; for the GRUCell they are the plain
    64-wide gates.  One sigmoid covers r and z of both directions (128 lanes), one tanh
    covers both n gates (64 lanes)."""
    G = 2 * HID
    rz = _sigmoid(gi[:, 0:2 * G] + gh[:, 0:2 * G])
    r = rz[:, 0:G]
    z = rz[:, G:2 * G]
    n = jnp.tanh(gi[:, 2 * G:3 * G] + r * gh[:, 2 * G:3 * G])
    return (1.0 - z) * n + z * h


# ------------------------------ fused Pallas kernel -------------------------------
def fused_forward_kernel(word_ref, code_ref, exp_ref, brr_ref, bfr_ref, cfs_ref,
                         tab_ref, w_ref, misc_ref, out_ref, x_buf, l1_buf):
    H, H2, N, T, E = HID, 2 * HID, NPAD, T_CODE, ENC

    # ---- packed weight / bias views (static, aligned slices of the 2 big buffers) ----
    wih0 = w_ref[0:64, :]          # (2*ENC, 6H)  input proj, layer 0 (fwd-time | rev-time rows)
    whh0 = w_ref[64:128, :]        # (2H, 6H)     hidden proj, layer 0 (block-diag fwd/bwd)
    wih1 = w_ref[128:256, :]       # (4H, 6H)     input proj, layer 1
    whh1 = w_ref[256:320, :]       # (2H, 6H)     hidden proj, layer 1
    cwih = w_ref[320:384, :]       # (2H, 6H)     GRUCell input proj
    cwhh = w_ref[384:448, :]       # (2H, 6H)     GRUCell hidden proj
    bih0 = misc_ref[0:1, :]
    bhh0 = misc_ref[1:2, :]
    bih1 = misc_ref[2:3, :]
    bhh1 = misc_ref[3:4, :]
    cbih = misc_ref[4:5, :]
    cbhh = misc_ref[5:6, :]

    # ---- in-kernel embedding gather: time-major + time-reversed assembly in one pass ----
    # x_buf row t*N + n:  lanes 0:E  = emb(seq n, time t)        (fwd-time input)
    #                     lanes E:2E = emb(seq n, time T-1-t)    (rev-time input, bwd dir)
    x_buf[...] = jnp.zeros((T * N, 2 * E), jnp.float32)
    for t in range(T):
        fwd = t * N
        rev = (T - 1 - t) * N
        for n in range(B):                                   # word sequences -> rows 0..B-1
            row = tab_ref[pl.ds(word_ref[n, t], 1), :]
            x_buf[fwd + n:fwd + n + 1, 0:E] = row
            x_buf[rev + n:rev + n + 1, E:2 * E] = row
        for n in range(B):                                   # code sequences -> rows B..2B-1
            row = tab_ref[pl.ds(NODE_OFF + code_ref[n, t], 1), :]
            x_buf[fwd + B + n:fwd + B + n + 1, 0:E] = row
            x_buf[rev + B + n:rev + B + n + 1, E:2 * E] = row
        for n in range(B * N_EXP):                           # expand sequences -> rows 2B..
            row = tab_ref[pl.ds(NODE_OFF + exp_ref[n, t], 1), :]
            x_buf[fwd + 2 * B + n:fwd + 2 * B + n + 1, 0:E] = row
            x_buf[rev + 2 * B + n:rev + 2 * B + n + 1, E:2 * E] = row

    # ---- layer 0: hoisted input projection (128,64)@(64,192), fused fwd/bwd recurrence ----
    gi0 = jnp.dot(x_buf[...], wih0, preferred_element_type=jnp.float32) + bih0   # (T*N, 6H)

    h = jnp.zeros((N, H2), jnp.float32)                      # [h_f | h_b]
    for s in range(T):                                       # statically unrolled, T=8
        gh = jnp.dot(h, whh0, preferred_element_type=jnp.float32) + bhh0
        h = _gru_step(gi0[s * N:(s + 1) * N], gh, h)
        f_o = h[:, 0:H]                                      # fwd output at time s
        b_o = h[:, H:H2]                                     # bwd output at time T-1-s
        # layer-1 input rows: lanes 0:2H = l1[time] (fwd-time), lanes 2H:4H = l1[T-1-time]
        l1_buf[s * N:(s + 1) * N, 0:H] = f_o
        l1_buf[(T - 1 - s) * N:(T - s) * N, H:H2] = b_o
        l1_buf[(T - 1 - s) * N:(T - s) * N, H2:H2 + H] = f_o
        l1_buf[s * N:(s + 1) * N, H2 + H:2 * H2] = b_o

    # ---- layer 1: hoisted input projection (128,128)@(128,192), recurrence + max-pool ----
    gi1 = jnp.dot(l1_buf[...], wih1, preferred_element_type=jnp.float32) + bih1  # (T*N, 6H)

    h = jnp.zeros((N, H2), jnp.float32)
    mx = jnp.full((N, H2), -jnp.inf, jnp.float32)
    for s in range(T):                                       # statically unrolled, T=8
        gh = jnp.dot(h, whh1, preferred_element_type=jnp.float32) + bhh1
        h = _gru_step(gi1[s * N:(s + 1) * N], gh, h)
        mx = jnp.maximum(mx, h)                              # maxpool over time (both dirs)

    seq_vec = mx                                             # (NPAD, 2H): word|code|expand|pad
    word_vec = seq_vec[0:B]                                  # (B, 2H)
    code_vec = seq_vec[B:2 * B]                              # (B, 2H)

    # ---- expand-set dot-attention + GRUCell update ----
    em_rows = []
    for i in range(B):                                       # B=2, statically unrolled
        base = 2 * B + i * N_EXP
        ev = seq_vec[base:base + N_EXP]                      # (N_EXP, 2H)
        cv = code_vec[i:i + 1]                               # (1, 2H)
        d = jnp.sum(ev * cv, axis=-1, keepdims=True)         # (N_EXP, 1)
        d = d - jnp.max(d, axis=0, keepdims=True)
        e = jnp.exp(d)
        attn = e / jnp.sum(e, axis=0, keepdims=True)         # exact softmax (tiny, off hot path)
        em_rows.append(jnp.sum(attn * ev, axis=0, keepdims=True))
    em = jnp.concatenate(em_rows, axis=0)                    # (B, 2H)

    gi_c = jnp.dot(em, cwih, preferred_element_type=jnp.float32) + cbih
    gh_c = jnp.dot(code_vec, cwhh, preferred_element_type=jnp.float32) + cbhh
    cve = _gru_step(gi_c, gh_c, code_vec)                    # (B, 2H)

    # ---- head: |cve + wv| -> exact sigmoid -> Long-cast features -> MLP -> clamp ----
    abs_dist = jnp.abs(cve + word_vec)                       # (B, 2H)
    h2l_w = misc_ref[6:7, 0:H2]                              # (1, 2H)
    h2l_b = misc_ref[6:7, H2:H2 + 1]                         # (1, 1)
    logits = jnp.sum(abs_dist * h2l_w, axis=-1, keepdims=True) + h2l_b
    y = 1.0 / (1.0 + jnp.exp(-logits))                       # exact sigmoid: rate trunc is sensitive
    rate = y.astype(jnp.int32).astype(jnp.float32)           # torch.LongTensor(...).float()

    w_rate = misc_ref[7:8, 0:H]
    w_brr = misc_ref[8:9, 0:H]
    w_bfr = misc_ref[9:10, 0:H]
    w_cfs = misc_ref[10:11, 0:H]
    b1 = misc_ref[11:12, 0:H]
    w2 = misc_ref[12:13, 0:H]
    b2 = misc_ref[12:13, H:H + 1]

    rows = []
    for i in range(B):                                       # truncate-toward-zero feature cast
        bi = brr_ref[i].astype(jnp.int32).astype(jnp.float32)
        fi = bfr_ref[i].astype(jnp.int32).astype(jnp.float32)
        ci = cfs_ref[i].astype(jnp.int32).astype(jnp.float32)
        rows.append(bi * w_brr + fi * w_bfr + ci * w_cfs)    # (1, H)
    feat_h = jnp.concatenate(rows, axis=0)                   # (B, H)
    hmlp = jnp.maximum(rate * w_rate + feat_h + b1, 0.0)     # ReLU
    res = jnp.sum(hmlp * w2, axis=-1, keepdims=True) + b2    # (B, 1)
    out_ref[...] = jnp.clip(res, 0.0, 1.0)                   # result[<0]=0; [>1]=1


# ------------------------------ wrapper -------------------------------
def fused_forward(word, code, expand_flat, brr, bfr, cfs, table, w_all, misc):
    smem = pl.BlockSpec(memory_space=pltpu.MemorySpace.SMEM)
    vmem = pl.BlockSpec(memory_space=pltpu.MemorySpace.VMEM)
    return pl.pallas_call(
        fused_forward_kernel,
        out_shape=jax.ShapeDtypeStruct((B, 1), jnp.float32),
        in_specs=[smem, smem, smem, smem, smem, smem, vmem, vmem, vmem],
        out_specs=vmem,
        scratch_shapes=[
            pltpu.VMEM((T_CODE * NPAD, 2 * ENC), jnp.float32),   # gathered inputs (fwd|rev time)
            pltpu.VMEM((T_CODE * NPAD, 4 * HID), jnp.float32),   # layer-1 inputs  (fwd|rev time)
        ],
    )(word, code, expand_flat, brr, bfr, cfs, table, w_all, misc)


@jax.jit
def forward(buffers, code, word, brr, bfr, cfs, expand_set):
    # (B, N_EXP, T) -> (B*N_EXP, T) is a contiguous row-major reshape (free bitcast);
    # everything else happens inside the single pallas_call.
    expand_flat = expand_set.reshape(B * N_EXP, T_CODE)
    return fused_forward(word, code, expand_flat, brr, bfr, cfs,
                         buffers['table'], buffers['w_all'], buffers['misc'])


# ------------------------------- parameter packing -----------------------------------
def _rnd(k, shape, scale=0.1):
    return jax.random.normal(k, shape, jnp.float32) * scale


def _pack_bigru_layer(key, in_dim, H):
    """Pack one bidirectional GRU layer:
       * input rows  = [x_fwd_time | x_rev_time]      -> (2*in_dim, 6H)
       * hidden rows = [h_fwd | h_bwd] (block-diag)   -> (2H, 6H)
       * gate columns packed [r_f r_b | z_f z_b | n_f n_b] (each H wide)
    so both directions advance with a single matmul / sigmoid / tanh per step."""
    k = jax.random.split(key, 8)
    wif, wib = _rnd(k[0], (in_dim, 3 * H)), _rnd(k[1], (in_dim, 3 * H))
    whf, whb = _rnd(k[2], (H, 3 * H)), _rnd(k[3], (H, 3 * H))
    bif, bib = _rnd(k[4], (3 * H,)), _rnd(k[5], (3 * H,))
    bhf, bhb = _rnd(k[6], (3 * H,)), _rnd(k[7], (3 * H,))

    def cols(wf, wb):   # (rows, 3H) per dir in [r|z|n] order -> (rows, 6H) packed
        return jnp.concatenate([wf[..., 0:H], wb[..., 0:H],
                                wf[..., H:2 * H], wb[..., H:2 * H],
                                wf[..., 2 * H:3 * H], wb[..., 2 * H:3 * H]], axis=-1)

    wih = jnp.concatenate([cols(wif, jnp.zeros_like(wif)),
                           cols(jnp.zeros_like(wib), wib)], axis=0)
    whh = jnp.concatenate([cols(whf, jnp.zeros_like(whf)),
                           cols(jnp.zeros_like(whb), whb)], axis=0)
    bih = cols(bif, bib)
    bhh = cols(bhf, bhb)
    return wih, whh, bih, bhh


def init_params(key):
    ks = jax.random.split(key, 16)

    # merged embedding table; W_c of the leaf tree-encoder folded into the node rows (exact)
    word_emb = _rnd(ks[0], (WORD_VOCAB, EMBED))
    node_emb = _rnd(ks[1], (VOCAB, EMBED))
    wc = _rnd(ks[2], (EMBED, ENC))
    bc = _rnd(ks[3], (1, ENC))
    node_table = jnp.dot(node_emb, wc) + bc
    table = jnp.zeros((TAB_ROWS, ENC), jnp.float32)
    table = table.at[0:WORD_VOCAB].set(word_emb)
    table = table.at[NODE_OFF:NODE_OFF + VOCAB].set(node_table)

    # bi-GRU layers (packed) + GRUCell(2H -> 2H)
    wih0, whh0, bih0, bhh0 = _pack_bigru_layer(ks[4], ENC, HID)
    wih1, whh1, bih1, bhh1 = _pack_bigru_layer(ks[5], 2 * HID, HID)
    cell_wih = _rnd(ks[6], (2 * HID, 6 * HID))
    cell_whh = _rnd(ks[7], (2 * HID, 6 * HID))
    cell_bih = _rnd(ks[8], (6 * HID,))
    cell_bhh = _rnd(ks[9], (6 * HID,))

    # one contiguous buffer for every matmul weight (all 6H=192 columns wide)
    w_all = jnp.concatenate([wih0, whh0, wih1, whh1, cell_wih, cell_whh], axis=0)  # (448, 192)

    # head weights
    h2l_w = _rnd(ks[10], (2 * HID,))
    h2l_b = _rnd(ks[11], ())
    mlp_w1 = _rnd(ks[12], (4, HID))
    mlp_b1 = _rnd(ks[13], (HID,))
    mlp_w2 = _rnd(ks[14], (HID,))
    mlp_b2 = _rnd(ks[15], ())

    # one small buffer for every bias + head weight
    misc = jnp.zeros((16, 6 * HID), jnp.float32)
    misc = misc.at[0].set(bih0).at[1].set(bhh0).at[2].set(bih1).at[3].set(bhh1)
    misc = misc.at[4].set(cell_bih).at[5].set(cell_bhh)
    misc = misc.at[6, 0:2 * HID].set(h2l_w).at[6, 2 * HID].set(h2l_b)
    misc = misc.at[7, 0:HID].set(mlp_w1[0]).at[8, 0:HID].set(mlp_w1[1])
    misc = misc.at[9, 0:HID].set(mlp_w1[2]).at[10, 0:HID].set(mlp_w1[3])
    misc = misc.at[11, 0:HID].set(mlp_b1)
    misc = misc.at[12, 0:HID].set(mlp_w2).at[12, HID].set(mlp_b2)

    return {'table': table, 'w_all': w_all, 'misc': misc}


# ---------------------------------- main ---------------------------------------
if __name__ == "__main__":
    key = jax.random.PRNGKey(0)
    pkey, dkey = jax.random.split(key)
    buffers = init_params(pkey)

    d = jax.random.split(dkey, 6)
    code = jax.random.randint(d[0], (B, T_CODE), 0, VOCAB, dtype=jnp.int32)
    word = jax.random.randint(d[1], (B, T_WORD), 0, WORD_VOCAB, dtype=jnp.int32)
    expand_set = jax.random.randint(d[2], (B, N_EXP, T_CODE), 0, VOCAB, dtype=jnp.int32)
    brr = jax.random.uniform(d[3], (B,), jnp.float32, 0.0, 5.0)
    bfr = jax.random.uniform(d[4], (B,), jnp.float32, 0.0, 5.0)
    cfs = jax.random.uniform(d[5], (B,), jnp.float32, 0.0, 5.0)

    result = forward(buffers, code, word, brr, bfr, cfs, expand_set)
    result = jax.block_until_ready(result)
    assert result.shape == (B, 1)
    assert bool(jnp.all(jnp.isfinite(result)))
    assert bool(jnp.all((result >= 0.0) & (result <= 1.0)))
    print("KERNEL_OK")
</pallas_src>

<mosaic_0001>
module attributes {stable_mosaic.version = 11 : i64} {
  func.func @fused_forward_kernel(%arg0: memref<2x8xi32, #tpu.memory_space<smem>>, %arg1: memref<2x8xi32, #tpu.memory_space<smem>>, %arg2: memref<6x8xi32, #tpu.memory_space<smem>>, %arg3: memref<2xf32, #tpu.memory_space<smem>>, %arg4: memref<2xf32, #tpu.memory_space<smem>>, %arg5: memref<2xf32, #tpu.memory_space<smem>>, %arg6: memref<128x32xf32, #tpu.memory_space<vmem>>, %arg7: memref<448x192xf32, #tpu.memory_space<vmem>>, %arg8: memref<16x192xf32, #tpu.memory_space<vmem>>, %arg9: memref<2x1xf32, #tpu.memory_space<vmem>>, %arg10: memref<128x64xf32, #tpu.memory_space<vmem>>, %arg11: memref<128x128xf32, #tpu.memory_space<vmem>>) attributes {dimension_semantics = [], scalar_prefetch = 0 : i64, scratch_operands = 2 : i64, tpu.core_type = #tpu.core_type<tc>} {
    %c0 = arith.constant 0 : index
    %c0_0 = arith.constant 0 : index
    %0 = vector.load %arg7[%c0, %c0_0] : memref<448x192xf32, #tpu.memory_space<vmem>>, vector<64x192xf32>
    %c64 = arith.constant 64 : index
    %c0_1 = arith.constant 0 : index
    %1 = vector.load %arg7[%c64, %c0_1] : memref<448x192xf32, #tpu.memory_space<vmem>>, vector<64x192xf32>
    %c128 = arith.constant 128 : index
    %c0_2 = arith.constant 0 : index
    %2 = vector.load %arg7[%c128, %c0_2] : memref<448x192xf32, #tpu.memory_space<vmem>>, vector<128x192xf32>
    %c256 = arith.constant 256 : index
    %c0_3 = arith.constant 0 : index
    %3 = vector.load %arg7[%c256, %c0_3] : memref<448x192xf32, #tpu.memory_space<vmem>>, vector<64x192xf32>
    %c320 = arith.constant 320 : index
    %c0_4 = arith.constant 0 : index
    %4 = vector.load %arg7[%c320, %c0_4] : memref<448x192xf32, #tpu.memory_space<vmem>>, vector<64x192xf32>
    %c384 = arith.constant 384 : index
    %c0_5 = arith.constant 0 : index
    %5 = vector.load %arg7[%c384, %c0_5] : memref<448x192xf32, #tpu.memory_space<vmem>>, vector<64x192xf32>
    %c0_6 = arith.constant 0 : index
    %c0_7 = arith.constant 0 : index
    %6 = vector.load %arg8[%c0_6, %c0_7] : memref<16x192xf32, #tpu.memory_space<vmem>>, vector<1x192xf32>
    %c1 = arith.constant 1 : index
    %c0_8 = arith.constant 0 : index
    %7 = vector.load %arg8[%c1, %c0_8] : memref<16x192xf32, #tpu.memory_space<vmem>>, vector<1x192xf32>
    %c2 = arith.constant 2 : index
    %c0_9 = arith.constant 0 : index
    %8 = vector.load %arg8[%c2, %c0_9] : memref<16x192xf32, #tpu.memory_space<vmem>>, vector<1x192xf32>
    %c3 = arith.constant 3 : index
    %c0_10 = arith.constant 0 : index
    %9 = vector.load %arg8[%c3, %c0_10] : memref<16x192xf32, #tpu.memory_space<vmem>>, vector<1x192xf32>
    %c4 = arith.constant 4 : index
    %c0_11 = arith.constant 0 : index
    %10 = vector.load %arg8[%c4, %c0_11] : memref<16x192xf32, #tpu.memory_space<vmem>>, vector<1x192xf32>
    %c5 = arith.constant 5 : index
    %c0_12 = arith.constant 0 : index
    %11 = vector.load %arg8[%c5, %c0_12] : memref<16x192xf32, #tpu.memory_space<vmem>>, vector<1x192xf32>
    %cst = arith.constant 0.000000e+00 : f32
    %12 = vector.broadcast %cst : f32 to vector<128x64xf32>
    %c0_13 = arith.constant 0 : index
    %c0_14 = arith.constant 0 : index
    %13 = vector.load %arg10[%c0_13, %c0_14] : memref<128x64xf32, #tpu.memory_space<vmem>>, vector<128x64xf32>
    tpu.vector_store %arg10[%c0_13, %c0_14], %12 {strides = array<i32>} : memref<128x64xf32, #tpu.memory_space<vmem>>, vector<128x64xf32>,
    %c0_15 = arith.constant 0 : index
    %c0_16 = arith.constant 0 : index
    %14 = memref.load %arg0[%c0_15, %c0_16] : memref<2x8xi32, #tpu.memory_space<smem>>
    %15 = arith.index_cast %14 : i32 to index
    %c0_17 = arith.constant 0 : index
    %16 = vector.load %arg6[%15, %c0_17] : memref<128x32xf32, #tpu.memory_space<vmem>>, vector<1x32xf32>
    %c0_18 = arith.constant 0 : index
    %c0_19 = arith.constant 0 : index
    %17 = vector.load %arg10[%c0_18, %c0_19] : memref<128x64xf32, #tpu.memory_space<vmem>>, vector<1x32xf32>
    tpu.vector_store %arg10[%c0_18, %c0_19], %16 {strides = array<i32>} : memref<128x64xf32, #tpu.memory_space<vmem>>, vector<1x32xf32>,
    %c112 = arith.constant 112 : index
    %c32 = arith.constant 32 : index
    %18 = vector.load %arg10[%c112, %c32] : memref<128x64xf32, #tpu.memory_space<vmem>>, vector<1x32xf32>
    tpu.vector_store %arg10[%c112, %c32], %16 {strides = array<i32>} : memref<128x64xf32, #tpu.memory_space<vmem>>, vector<1x32xf32>,
    %c1_20 = arith.constant 1 : index
    %c0_21 = arith.constant 0 : index
    %19 = memref.load %arg0[%c1_20, %c0_21] : memref<2x8xi32, #tpu.memory_space<smem>>
    %20 = arith.index_cast %19 : i32 to index
    %c0_22 = arith.constant 0 : index
    %21 = vector.load %arg6[%20, %c0_22] : memref<128x32xf32, #tpu.memory_space<vmem>>, vector<1x32xf32>
    %c1_23 = arith.constant 1 : index
    %c0_24 = arith.constant 0 : index
    %22 = vector.load %arg10[%c1_23, %c0_24] : memref<128x64xf32, #tpu.memory_space<vmem>>, vector<1x32xf32>
    tpu.vector_store %arg10[%c1_23, %c0_24], %21 {strides = array<i32>} : memref<128x64xf32, #tpu.memory_space<vmem>>, vector<1x32xf32>,
    %c113 = arith.constant 113 : index
    %c32_25 = arith.constant 32 : index
    %23 = vector.load %arg10[%c113, %c32_25] : memref<128x64xf32, #tpu.memory_space<vmem>>, vector<1x32xf32>
    tpu.vector_store %arg10[%c113, %c32_25], %21 {strides = array<i32>} : memref<128x64xf32, #tpu.memory_space<vmem>>, vector<1x32xf32>,
    %c0_26 = arith.constant 0 : index
    %c0_27 = arith.constant 0 : index
    %24 = memref.load %arg1[%c0_26, %c0_27] : memref<2x8xi32, #tpu.memory_space<smem>>
    %c64_i32 = arith.constant 64 : i32
    %25 = arith.addi %c64_i32, %24 : i32
    %26 = arith.index_cast %25 : i32 to index
    %c0_28 = arith.constant 0 : index
    %27 = vector.load %arg6[%26, %c0_28] : memref<128x32xf32, #tpu.memory_space<vmem>>, vector<1x32xf32>
    %c2_29 = arith.constant 2 : index
    %c0_30 = arith.constant 0 : index
    %28 = vector.load %arg10[%c2_29, %c0_30] : memref<128x64xf32, #tpu.memory_space<vmem>>, vector<1x32xf32>
    tpu.vector_store %arg10[%c2_29, %c0_30], %27 {strides = array<i32>} : memref<128x64xf32, #tpu.memory_space<vmem>>, vector<1x32xf32>,
    %c114 = arith.constant 114 : index
    %c32_31 = arith.constant 32 : index
    %29 = vector.load %arg10[%c114, %c32_31] : memref<128x64xf32, #tpu.memory_space<vmem>>, vector<1x32xf32>
    tpu.vector_store %arg10[%c114, %c32_31], %27 {strides = array<i32>} : memref<128x64xf32, #tpu.memory_space<vmem>>, vector<1x32xf32>,
    %c1_32 = arith.constant 1 : index
    %c0_33 = arith.constant 0 : index
    %30 = memref.load %arg1[%c1_32, %c0_33] : memref<2x8xi32, #tpu.memory_space<smem>>
    %c64_i32_34 = arith.constant 64 : i32
    %31 = arith.addi %c64_i32_34, %30 : i32
    %32 = arith.index_cast %31 : i32 to index
    %c0_35 = arith.constant 0 : index
    %33 = vector.load %arg6[%32, %c0_35] : memref<128x32xf32, #tpu.memory_space<vmem>>, vector<1x32xf32>
    %c3_36 = arith.constant 3 : index
    %c0_37 = arith.constant 0 : index
    %34 = vector.load %arg10[%c3_36, %c0_37] : memref<128x64xf32, #tpu.memory_space<vmem>>, vector<1x32xf32>
    tpu.vector_store %arg10[%c3_36, %c0_37], %33 {strides = array<i32>} : memref<128x64xf32, #tpu.memory_space<vmem>>, vector<1x32xf32>,
    %c115 = arith.constant 115 : index
    %c32_38 = arith.constant 32 : index
    %35 = vector.load %arg10[%c115, %c32_38] : memref<128x64xf32, #tpu.memory_space<vmem>>, vector<1x32xf32>
    tpu.vector_store %arg10[%c115, %c32_38], %33 {strides = array<i32>} : memref<128x64xf32, #tpu.memory_space<vmem>>, vector<1x32xf32>,
    %c0_39 = arith.constant 0 : index
    %c0_40 = arith.constant 0 : index
    %36 = memref.load %arg2[%c0_39, %c0_40] : memref<6x8xi32, #tpu.memory_space<smem>>
    %c64_i32_41 = arith.constant 64 : i32
    %37 = arith.addi %c64_i32_41, %36 : i32
    %38 = arith.index_cast %37 : i32 to index
    %c0_42 = arith.constant 0 : index
    %39 = vector.load %arg6[%38, %c0_42] : memref<128x32xf32, #tpu.memory_space<vmem>>, vector<1x32xf32>
    %c4_43 = arith.constant 4 : index
    %c0_44 = arith.constant 0 : index
    %40 = vector.load %arg10[%c4_43, %c0_44] : memref<128x64xf32, #tpu.memory_space<vmem>>, vector<1x32xf32>
    tpu.vector_store %arg10[%c4_43, %c0_44], %39 {strides = array<i32>} : memref<128x64xf32, #tpu.memory_space<vmem>>, vector<1x32xf32>,
    %c116 = arith.constant 116 : index
    %c32_45 = arith.constant 32 : index
    %41 = vector.load %arg10[%c116, %c32_45] : memref<128x64xf32, #tpu.memory_space<vmem>>, vector<1x32xf32>
    tpu.vector_store %arg10[%c116, %c32_45], %39 {strides = array<i32>} : memref<128x64xf32, #tpu.memory_space<vmem>>, vector<1x32xf32>,
    %c1_46 = arith.constant 1 : index
    %c0_47 = arith.constant 0 : index
    %42 = memref.load %arg2[%c1_46, %c0_47] : memref<6x8xi32, #tpu.memory_space<smem>>
    %c64_i32_48 = arith.constant 64 : i32
    %43 = arith.addi %c64_i32_48, %42 : i32
    %44 = arith.index_cast %43 : i32 to index
    %c0_49 = arith.constant 0 : index
    %45 = vector.load %arg6[%44, %c0_49] : memref<128x32xf32, #tpu.memory_space<vmem>>, vector<1x32xf32>
    %c5_50 = arith.constant 5 : index
    %c0_51 = arith.constant 0 : index
    %46 = vector.load %arg10[%c5_50, %c0_51] : memref<128x64xf32, #tpu.memory_space<vmem>>, vector<1x32xf32>
    tpu.vector_store %arg10[%c5_50, %c0_51], %45 {strides = array<i32>} : memref<128x64xf32, #tpu.memory_space<vmem>>, vector<1x32xf32>,
    %c117 = arith.constant 117 : index
    %c32_52 = arith.constant 32 : index
    %47 = vector.load %arg10[%c117, %c32_52] : memref<128x64xf32, #tpu.memory_space<vmem>>, vector<1x32xf32>
    tpu.vector_store %arg10[%c117, %c32_52], %45 {strides = array<i32>} : memref<128x64xf32, #tpu.memory_space<vmem>>, vector<1x32xf32>,
    %c2_53 = arith.constant 2 : index
    %c0_54 = arith.constant 0 : index
    %48 = memref.load %arg2[%c2_53, %c0_54] : memref<6x8xi32, #tpu.memory_space<smem>>
    %c64_i32_55 = arith.constant 64 : i32
    %49 = arith.addi %c64_i32_55, %48 : i32
    %50 = arith.index_cast %49 : i32 to index
    %c0_56 = arith.constant 0 : index
    %51 = vector.load %arg6[%50, %c0_56] : memref<128x32xf32, #tpu.memory_space<vmem>>, vector<1x32xf32>
    %c6 = arith.constant 6 : index
    %c0_57 = arith.constant 0 : index
    %52 = vector.load %arg10[%c6, %c0_57] : memref<128x64xf32, #tpu.memory_space<vmem>>, vector<1x32xf32>
    tpu.vector_store %arg10[%c6, %c0_57], %51 {strides = array<i32>} : memref<128x64xf32, #tpu.memory_space<vmem>>, vector<1x32xf32>,
    %c118 = arith.constant 118 : index
    %c32_58 = arith.constant 32 : index
    %53 = vector.load %arg10[%c118, %c32_58] : memref<128x64xf32, #tpu.memory_space<vmem>>, vector<1x32xf32>
    tpu.vector_store %arg10[%c118, %c32_58], %51 {strides = array<i32>} : memref<128x64xf32, #tpu.memory_space<vmem>>, vector<1x32xf32>,
    %c3_59 = arith.constant 3 : index
    %c0_60 = arith.constant 0 : index
    %54 = memref.load %arg2[%c3_59, %c0_60] : memref<6x8xi32, #tpu.memory_space<smem>>
    %c64_i32_61 = arith.constant 64 : i32
    %55 = arith.addi %c64_i32_61, %54 : i32
    %56 = arith.index_cast %55 : i32 to index
    %c0_62 = arith.constant 0 : index
    %57 = vector.load %arg6[%56, %c0_62] : memref<128x32xf32, #tpu.memory_space<vmem>>, vector<1x32xf32>
    %c7 = arith.constant 7 : index
    %c0_63 = arith.constant 0 : index
    %58 = vector.load %arg10[%c7, %c0_63] : memref<128x64xf32, #tpu.memory_space<vmem>>, vector<1x32xf32>
    tpu.vector_store %arg10[%c7, %c0_63], %57 {strides = array<i32>} : memref<128x64xf32, #tpu.memory_space<vmem>>, vector<1x32xf32>,
    %c119 = arith.constant 119 : index
    %c32_64 = arith.constant 32 : index
    %59 = vector.load %arg10[%c119, %c32_64] : memref<128x64xf32, #tpu.memory_space<vmem>>, vector<1x32xf32>
    tpu.vector_store %arg10[%c119, %c32_64], %57 {strides = array<i32>} : memref<128x64xf32, #tpu.memory_space<vmem>>, vector<1x32xf32>,
    %c4_65 = arith.constant 4 : index
    %c0_66 = arith.constant 0 : index
    %60 = memref.load %arg2[%c4_65, %c0_66] : memref<6x8xi32, #tpu.memory_space<smem>>
    %c64_i32_67 = arith.constant 64 : i32
    %61 = arith.addi %c64_i32_67, %60 : i32
    %62 = arith.index_cast %61 : i32 to index
    %c0_68 = arith.constant 0 : index
    %63 = vector.load %arg6[%62, %c0_68] : memref<128x32xf32, #tpu.memory_space<vmem>>, vector<1x32xf32>
    %c8 = arith.constant 8 : index
    %c0_69 = arith.constant 0 : index
    %64 = vector.load %arg10[%c8, %c0_69] : memref<128x64xf32, #tpu.memory_space<vmem>>, vector<1x32xf32>
    tpu.vector_store %arg10[%c8, %c0_69], %63 {strides = array<i32>} : memref<128x64xf32, #tpu.memory_space<vmem>>, vector<1x32xf32>,
    %c120 = arith.constant 120 : index
    %c32_70 = arith.constant 32 : index
    %65 = vector.load %arg10[%c120, %c32_70] : memref<128x64xf32, #tpu.memory_space<vmem>>, vector<1x32xf32>
    tpu.vector_store %arg10[%c120, %c32_70], %63 {strides = array<i32>} : memref<128x64xf32, #tpu.memory_space<vmem>>, vector<1x32xf32>,
    %c5_71 = arith.constant 5 : index
    %c0_72 = arith.constant 0 : index
    %66 = memref.load %arg2[%c5_71, %c0_72] : memref<6x8xi32, #tpu.memory_space<smem>>
    %c64_i32_73 = arith.constant 64 : i32
    %67 = arith.addi %c64_i32_73, %66 : i32
    %68 = arith.index_cast %67 : i32 to index
    %c0_74 = arith.constant 0 : index
    %69 = vector.load %arg6[%68, %c0_74] : memref<128x32xf32, #tpu.memory_space<vmem>>, vector<1x32xf32>
    %c9 = arith.constant 9 : index
    %c0_75 = arith.constant 0 : index
    %70 = vector.load %arg10[%c9, %c0_75] : memref<128x64xf32, #tpu.memory_space<vmem>>, vector<1x32xf32>
    tpu.vector_store %arg10[%c9, %c0_75], %69 {strides = array<i32>} : memref<128x64xf32, #tpu.memory_space<vmem>>, vector<1x32xf32>,
    %c121 = arith.constant 121 : index
    %c32_76 = arith.constant 32 : index
    %71 = vector.load %arg10[%c121, %c32_76] : memref<128x64xf32, #tpu.memory_space<vmem>>, vector<1x32xf32>
    tpu.vector_store %arg10[%c121, %c32_76], %69 {strides = array<i32>} : memref<128x64xf32, #tpu.memory_space<vmem>>, vector<1x32xf32>,
    %c0_77 = arith.constant 0 : index
    %c1_78 = arith.constant 1 : index
    %72 = memref.load %arg0[%c0_77, %c1_78] : memref<2x8xi32, #tpu.memory_space<smem>>
    %73 = arith.index_cast %72 : i32 to index
    %c0_79 = arith.constant 0 : index
    %74 = vector.load %arg6[%73, %c0_79] : memref<128x32xf32, #tpu.memory_space<vmem>>, vector<1x32xf32>
    %c16 = arith.constant 16 : index
    %c0_80 = arith.constant 0 : index
    %75 = vector.load %arg10[%c16, %c0_80] : memref<128x64xf32, #tpu.memory_space<vmem>>, vector<1x32xf32>
    tpu.vector_store %arg10[%c16, %c0_80], %74 {strides = array<i32>} : memref<128x64xf32, #tpu.memory_space<vmem>>, vector<1x32xf32>,
    %c96 = arith.constant 96 : index
    %c32_81 = arith.constant 32 : index
    %76 = vector.load %arg10[%c96, %c32_81] : memref<128x64xf32, #tpu.memory_space<vmem>>, vector<1x32xf32>
    tpu.vector_store %arg10[%c96, %c32_81], %74 {strides = array<i32>} : memref<128x64xf32, #tpu.memory_space<vmem>>, vector<1x32xf32>,
    %c1_82 = arith.constant 1 : index
    %c1_83 = arith.constant 1 : index
    %77 = memref.load %arg0[%c1_82, %c1_83] : memref<2x8xi32, #tpu.memory_space<smem>>
    %78 = arith.index_cast %77 : i32 to index
    %c0_84 = arith.constant 0 : index
    %79 = vector.load %arg6[%78, %c0_84] : memref<128x32xf32, #tpu.memory_space<vmem>>, vector<1x32xf32>
    %c17 = arith.constant 17 : index
    %c0_85 = arith.constant 0 : index
    %80 = vector.load %arg10[%c17, %c0_85] : memref<128x64xf32, #tpu.memory_space<vmem>>, vector<1x32xf32>
    tpu.vector_store %arg10[%c17, %c0_85], %79 {strides = array<i32>} : memref<128x64xf32, #tpu.memory_space<vmem>>, vector<1x32xf32>,
    %c97 = arith.constant 97 : index
    %c32_86 = arith.constant 32 : index
    %81 = vector.load %arg10[%c97, %c32_86] : memref<128x64xf32, #tpu.memory_space<vmem>>, vector<1x32xf32>
    tpu.vector_store %arg10[%c97, %c32_86], %79 {strides = array<i32>} : memref<128x64xf32, #tpu.memory_space<vmem>>, vector<1x32xf32>,
    %c0_87 = arith.constant 0 : index
    %c1_88 = arith.constant 1 : index
    %82 = memref.load %arg1[%c0_87, %c1_88] : memref<2x8xi32, #tpu.memory_space<smem>>
    %c64_i32_89 = arith.constant 64 : i32
    %83 = arith.addi %c64_i32_89, %82 : i32
    %84 = arith.index_cast %83 : i32 to index
    %c0_90 = arith.constant 0 : index
    %85 = vector.load %arg6[%84, %c0_90] : memref<128x32xf32, #tpu.memory_space<vmem>>, vector<1x32xf32>
    %c18 = arith.constant 18 : index
    %c0_91 = arith.constant 0 : index
    %86 = vector.load %arg10[%c18, %c0_91] : memref<128x64xf32, #tpu.memory_space<vmem>>, vector<1x32xf32>
    tpu.vector_store %arg10[%c18, %c0_91], %85 {strides = array<i32>} : memref<128x64xf32, #tpu.memory_space<vmem>>, vector<1x32xf32>,
    %c98 = arith.constant 98 : index
    %c32_92 = arith.constant 32 : index
    %87 = vector.load %arg10[%c98, %c32_92] : memref<128x64xf32, #tpu.memory_space<vmem>>, vector<1x32xf32>
    tpu.vector_store %arg10[%c98, %c32_92], %85 {strides = array<i32>} : memref<128x64xf32, #tpu.memory_space<vmem>>, vector<1x32xf32>,
    %c1_93 = arith.constant 1 : index
    %c1_94 = arith.constant 1 : index
    %88 = memref.load %arg1[%c1_93, %c1_94] : memref<2x8xi32, #tpu.memory_space<smem>>
    %c64_i32_95 = arith.constant 64 : i32
    %89 = arith.addi %c64_i32_95, %88 : i32
    %90 = arith.index_cast %89 : i32 to index
    %c0_96 = arith.constant 0 : index
    %91 = vector.load %arg6[%90, %c0_96] : memref<128x32xf32, #tpu.memory_space<vmem>>, vector<1x32xf32>
    %c19 = arith.constant 19 : index
    %c0_97 = arith.constant 0 : index
    %92 = vector.load %arg10[%c19, %c0_97] : memref<128x64xf32, #tpu.memory_space<vmem>>, vector<1x32xf32>
    tpu.vector_store %arg10[%c19, %c0_97], %91 {strides = array<i32>} : memref<128x64xf32, #tpu.memory_space<vmem>>, vector<1x32xf32>,
    %c99 = arith.constant 99 : index
    %c32_98 = arith.constant 32 : index
    %93 = vector.load %arg10[%c99, %c32_98] : memref<128x64xf32, #tpu.memory_space<vmem>>, vector<1x32xf32>
    tpu.vector_store %arg10[%c99, %c32_98], %91 {strides = array<i32>} : memref<128x64xf32, #tpu.memory_space<vmem>>, vector<1x32xf32>,
    %c0_99 = arith.constant 0 : index
    %c1_100 = arith.constant 1 : index
    %94 = memref.load %arg2[%c0_99, %c1_100] : memref<6x8xi32, #tpu.memory_space<smem>>
    %c64_i32_101 = arith.constant 64 : i32
    %95 = arith.addi %c64_i32_101, %94 : i32
    %96 = arith.index_cast %95 : i32 to index
    %c0_102 = arith.constant 0 : index
    %97 = vector.load %arg6[%96, %c0_102] : memref<128x32xf32, #tpu.memory_space<vmem>>, vector<1x32xf32>
    %c20 = arith.constant 20 : index
    %c0_103 = arith.constant 0 : index
    %98 = vector.load %arg10[%c20, %c0_103] : memref<128x64xf32, #tpu.memory_space<vmem>>, vector<1x32xf32>
    tpu.vector_store %arg10[%c20, %c0_103], %97 {strides = array<i32>} : memref<128x64xf32, #tpu.memory_space<vmem>>, vector<1x32xf32>,
    %c100 = arith.constant 100 : index
    %c32_104 = arith.constant 32 : index
    %99 = vector.load %arg10[%c100, %c32_104] : memref<128x64xf32, #tpu.memory_space<vmem>>, vector<1x32xf32>
    tpu.vector_store %arg10[%c100, %c32_104], %97 {strides = array<i32>} : memref<128x64xf32, #tpu.memory_space<vmem>>, vector<1x32xf32>,
    %c1_105 = arith.constant 1 : index
    %c1_106 = arith.constant 1 : index
    %100 = memref.load %arg2[%c1_105, %c1_106] : memref<6x8xi32, #tpu.memory_space<smem>>
    %c64_i32_107 = arith.constant 64 : i32
    %101 = arith.addi %c64_i32_107, %100 : i32
    %102 = arith.index_cast %101 : i32 to index
    %c0_108 = arith.constant 0 : index
    %103 = vector.load %arg6[%102, %c0_108] : memref<128x32xf32, #tpu.memory_space<vmem>>, vector<1x32xf32>
    %c21 = arith.constant 21 : index
    %c0_109 = arith.constant 0 : index
    %104 = vector.load %arg10[%c21, %c0_109] : memref<128x64xf32, #tpu.memory_space<vmem>>, vector<1x32xf32>
    tpu.vector_store %arg10[%c21, %c0_109], %103 {strides = array<i32>} : memref<128x64xf32, #tpu.memory_space<vmem>>, vector<1x32xf32>,
    %c101 = arith.constant 101 : index
    %c32_110 = arith.constant 32 : index
    %105 = vector.load %arg10[%c101, %c32_110] : memref<128x64xf32, #tpu.memory_space<vmem>>, vector<1x32xf32>
    tpu.vector_store %arg10[%c101, %c32_110], %103 {strides = array<i32>} : memref<128x64xf32, #tpu.memory_space<vmem>>, vector<1x32xf32>,
    %c2_111 = arith.constant 2 : index
    %c1_112 = arith.constant 1 : index
    %106 = memref.load %arg2[%c2_111, %c1_112] : memref<6x8xi32, #tpu.memory_space<smem>>
    %c64_i32_113 = arith.constant 64 : i32
    %107 = arith.addi %c64_i32_113, %106 : i32
    %108 = arith.index_cast %107 : i32 to index
    %c0_114 = arith.constant 0 : index
    %109 = vector.load %arg6[%108, %c0_114] : memref<128x32xf32, #tpu.memory_space<vmem>>, vector<1x32xf32>
    %c22 = arith.constant 22 : index
    %c0_115 = arith.constant 0 : index
    %110 = vector.load %arg10[%c22, %c0_115] : memref<128x64xf32, #tpu.memory_space<vmem>>, vector<1x32xf32>
    tpu.vector_store %arg10[%c22, %c0_115], %109 {strides = array<i32>} : memref<128x64xf32, #tpu.memory_space<vmem>>, vector<1x32xf32>,
    %c102 = arith.constant 102 : index
    %c32_116 = arith.constant 32 : index
    %111 = vector.load %arg10[%c102, %c32_116] : memref<128x64xf32, #tpu.memory_space<vmem>>, vector<1x32xf32>
    tpu.vector_store %arg10[%c102, %c32_116], %109 {strides = array<i32>} : memref<128x64xf32, #tpu.memory_space<vmem>>, vector<1x32xf32>,
    %c3_117 = arith.constant 3 : index
    %c1_118 = arith.constant 1 : index
    %112 = memref.load %arg2[%c3_117, %c1_118] : memref<6x8xi32, #tpu.memory_space<smem>>
    %c64_i32_119 = arith.constant 64 : i32
    %113 = arith.addi %c64_i32_119, %112 : i32
    %114 = arith.index_cast %113 : i32 to index
    %c0_120 = arith.constant 0 : index
    %115 = vector.load %arg6[%114, %c0_120] : memref<128x32xf32, #tpu.memory_space<vmem>>, vector<1x32xf32>
    %c23 = arith.constant 23 : index
    %c0_121 = arith.constant 0 : index
    %116 = vector.load %arg10[%c23, %c0_121] : memref<128x64xf32, #tpu.memory_space<vmem>>, vector<1x32xf32>
    tpu.vector_store %arg10[%c23, %c0_121], %115 {strides = array<i32>} : memref<128x64xf32, #tpu.memory_space<vmem>>, vector<1x32xf32>,
    %c103 = arith.constant 103 : index
    %c32_122 = arith.constant 32 : index
    %117 = vector.load %arg10[%c103, %c32_122] : memref<128x64xf32, #tpu.memory_space<vmem>>, vector<1x32xf32>
    tpu.vector_store %arg10[%c103, %c32_122], %115 {strides = array<i32>} : memref<128x64xf32, #tpu.memory_space<vmem>>, vector<1x32xf32>,
    %c4_123 = arith.constant 4 : index
    %c1_124 = arith.constant 1 : index
    %118 = memref.load %arg2[%c4_123, %c1_124] : memref<6x8xi32, #tpu.memory_space<smem>>
    %c64_i32_125 = arith.constant 64 : i32
    %119 = arith.addi %c64_i32_125, %118 : i32
    %120 = arith.index_cast %119 : i32 to index
    %c0_126 = arith.constant 0 : index
    %121 = vector.load %arg6[%120, %c0_126] : memref<128x32xf32, #tpu.memory_space<vmem>>, vector<1x32xf32>
    %c24 = arith.constant 24 : index
    %c0_127 = arith.constant 0 : index
    %122 = vector.load %arg10[%c24, %c0_127] : memref<128x64xf32, #tpu.memory_space<vmem>>, vector<1x32xf32>
    tpu.vector_store %arg10[%c24, %c0_127], %121 {strides = array<i32>} : memref<128x64xf32, #tpu.memory_space<vmem>>, vector<1x32xf32>,
    %c104 = arith.constant 104 : index
    %c32_128 = arith.constant 32 : index
    %123 = vector.load %arg10[%c104, %c32_128] : memref<128x64xf32, #tpu.memory_space<vmem>>, vector<1x32xf32>
    tpu.vector_store %arg10[%c104, %c32_128], %121 {strides = array<i32>} : memref<128x64xf32, #tpu.memory_space<vmem>>, vector<1x32xf32>,
    %c5_129 = arith.constant 5 : index
    %c1_130 = arith.constant 1 : index
    %124 = memref.load %arg2[%c5_129, %c1_130] : memref<6x8xi32, #tpu.memory_space<smem>>
    %c64_i32_131 = arith.constant 64 : i32
    %125 = arith.addi %c64_i32_131, %124 : i32
    %126 = arith.index_cast %125 : i32 to index
    %c0_132 = arith.constant 0 : index
    %127 = vector.load %arg6[%126, %c0_132] : memref<128x32xf32, #tpu.memory_space<vmem>>, vector<1x32xf32>
    %c25 = arith.constant 25 : index
    %c0_133 = arith.constant 0 : index
    %128 = vector.load %arg10[%c25, %c0_133] : memref<128x64xf32, #tpu.memory_space<vmem>>, vector<1x32xf32>
    tpu.vector_store %arg10[%c25, %c0_133], %127 {strides = array<i32>} : memref<128x64xf32, #tpu.memory_space<vmem>>, vector<1x32xf32>,
    %c105 = arith.constant 105 : index
    %c32_134 = arith.constant 32 : index
    %129 = vector.load %arg10[%c105, %c32_134] : memref<128x64xf32, #tpu.memory_space<vmem>>, vector<1x32xf32>
    tpu.vector_store %arg10[%c105, %c32_134], %127 {strides = array<i32>} : memref<128x64xf32, #tpu.memory_space<vmem>>, vector<1x32xf32>,
    %c0_135 = arith.constant 0 : index
    %c2_136 = arith.constant 2 : index
    %130 = memref.load %arg0[%c0_135, %c2_136] : memref<2x8xi32, #tpu.memory_space<smem>>
    %131 = arith.index_cast %130 : i32 to index
    %c0_137 = arith.constant 0 : index
    %132 = vector.load %arg6[%131, %c0_137] : memref<128x32xf32, #tpu.memory_space<vmem>>, vector<1x32xf32>
    %c32_138 = arith.constant 32 : index
    %c0_139 = arith.constant 0 : index
    %133 = vector.load %arg10[%c32_138, %c0_139] : memref<128x64xf32, #tpu.memory_space<vmem>>, vector<1x32xf32>
    tpu.vector_store %arg10[%c32_138, %c0_139], %132 {strides = array<i32>} : memref<128x64xf32, #tpu.memory_space<vmem>>, vector<1x32xf32>,
    %c80 = arith.constant 80 : index
    %c32_140 = arith.constant 32 : index
    %134 = vector.load %arg10[%c80, %c32_140] : memref<128x64xf32, #tpu.memory_space<vmem>>, vector<1x32xf32>
    tpu.vector_store %arg10[%c80, %c32_140], %132 {strides = array<i32>} : memref<128x64xf32, #tpu.memory_space<vmem>>, vector<1x32xf32>,
    %c1_141 = arith.constant 1 : index
    %c2_142 = arith.constant 2 : index
    %135 = memref.load %arg0[%c1_141, %c2_142] : memref<2x8xi32, #tpu.memory_space<smem>>
    %136 = arith.index_cast %135 : i32 to index
    %c0_143 = arith.constant 0 : index
    %137 = vector.load %arg6[%136, %c0_143] : memref<128x32xf32, #tpu.memory_space<vmem>>, vector<1x32xf32>
    %c33 = arith.constant 33 : index
    %c0_144 = arith.constant 0 : index
    %138 = vector.load %arg10[%c33, %c0_144] : memref<128x64xf32, #tpu.memory_space<vmem>>, vector<1x32xf32>
    tpu.vector_store %arg10[%c33, %c0_144], %137 {strides = array<i32>} : memref<128x64xf32, #tpu.memory_space<vmem>>, vector<1x32xf32>,
    %c81 = arith.constant 81 : index
    %c32_145 = arith.constant 32 : index
    %139 = vector.load %arg10[%c81, %c32_145] : memref<128x64xf32, #tpu.memory_space<vmem>>, vector<1x32xf32>
    tpu.vector_store %arg10[%c81, %c32_145], %137 {strides = array<i32>} : memref<128x64xf32, #tpu.memory_space<vmem>>, vector<1x32xf32>,
    %c0_146 = arith.constant 0 : index
    %c2_147 = arith.constant 2 : index
    %140 = memref.load %arg1[%c0_146, %c2_147] : memref<2x8xi32, #tpu.memory_space<smem>>
    %c64_i32_148 = arith.constant 64 : i32
    %141 = arith.addi %c64_i32_148, %140 : i32
    %142 = arith.index_cast %141 : i32 to index
    %c0_149 = arith.constant 0 : index
    %143 = vector.load %arg6[%142, %c0_149] : memref<128x32xf32, #tpu.memory_space<vmem>>, vector<1x32xf32>
    %c34 = arith.constant 34 : index
    %c0_150 = arith.constant 0 : index
    %144 = vector.load %arg10[%c34, %c0_150] : memref<128x64xf32, #tpu.memory_space<vmem>>, vector<1x32xf32>
    tpu.vector_store %arg10[%c34, %c0_150], %143 {strides = array<i32>} : memref<128x64xf32, #tpu.memory_space<vmem>>, vector<1x32xf32>,
    %c82 = arith.constant 82 : index
    %c32_151 = arith.constant 32 : index
    %145 = vector.load %arg10[%c82, %c32_151] : memref<128x64xf32, #tpu.memory_space<vmem>>, vector<1x32xf32>
    tpu.vector_store %arg10[%c82, %c32_151], %143 {strides = array<i32>} : memref<128x64xf32, #tpu.memory_space<vmem>>, vector<1x32xf32>,
    %c1_152 = arith.constant 1 : index
    %c2_153 = arith.constant 2 : index
    %146 = memref.load %arg1[%c1_152, %c2_153] : memref<2x8xi32, #tpu.memory_space<smem>>
    %c64_i32_154 = arith.constant 64 : i32
    %147 = arith.addi %c64_i32_154, %146 : i32
    %148 = arith.index_cast %147 : i32 to index
    %c0_155 = arith.constant 0 : index
    %149 = vector.load %arg6[%148, %c0_155] : memref<128x32xf32, #tpu.memory_space<vmem>>, vector<1x32xf32>
    %c35 = arith.constant 35 : index
    %c0_156 = arith.constant 0 : index
    %150 = vector.load %arg10[%c35, %c0_156] : memref<128x64xf32, #tpu.memory_space<vmem>>, vector<1x32xf32>
    tpu.vector_store %arg10[%c35, %c0_156], %149 {strides = array<i32>} : memref<128x64xf32, #tpu.memory_space<vmem>>, vector<1x32xf32>,
    %c83 = arith.constant 83 : index
    %c32_157 = arith.constant 32 : index
    %151 = vector.load %arg10[%c83, %c32_157] : memref<128x64xf32, #tpu.memory_space<vmem>>, vector<1x32xf32>
    tpu.vector_store %arg10[%c83, %c32_157], %149 {strides = array<i32>} : memref<128x64xf32, #tpu.memory_space<vmem>>, vector<1x32xf32>,
    %c0_158 = arith.constant 0 : index
    %c2_159 = arith.constant 2 : index
    %152 = memref.load %arg2[%c0_158, %c2_159] : memref<6x8xi32, #tpu.memory_space<smem>>
    %c64_i32_160 = arith.constant 64 : i32
    %153 = arith.addi %c64_i32_160, %152 : i32
    %154 = arith.index_cast %153 : i32 to index
    %c0_161 = arith.constant 0 : index
    %155 = vector.load %arg6[%154, %c0_161] : memref<128x32xf32, #tpu.memory_space<vmem>>, vector<1x32xf32>
    %c36 = arith.constant 36 : index
    %c0_162 = arith.constant 0 : index
    %156 = vector.load %arg10[%c36, %c0_162] : memref<128x64xf32, #tpu.memory_space<vmem>>, vector<1x32xf32>
    tpu.vector_store %arg10[%c36, %c0_162], %155 {strides = array<i32>} : memref<128x64xf32, #tpu.memory_space<vmem>>, vector<1x32xf32>,
    %c84 = arith.constant 84 : index
    %c32_163 = arith.constant 32 : index
    %157 = vector.load %arg10[%c84, %c32_163] : memref<128x64xf32, #tpu.memory_space<vmem>>, vector<1x32xf32>
    tpu.vector_store %arg10[%c84, %c32_163], %155 {strides = array<i32>} : memref<128x64xf32, #tpu.memory_space<vmem>>, vector<1x32xf32>,
    %c1_164 = arith.constant 1 : index
    %c2_165 = arith.constant 2 : index
    %158 = memref.load %arg2[%c1_164, %c2_165] : memref<6x8xi32, #tpu.memory_space<smem>>
    %c64_i32_166 = arith.constant 64 : i32
    %159 = arith.addi %c64_i32_166, %158 : i32
    %160 = arith.index_cast %159 : i32 to index
    %c0_167 = arith.constant 0 : index
    %161 = vector.load %arg6[%160, %c0_167] : memref<128x32xf32, #tpu.memory_space<vmem>>, vector<1x32xf32>
    %c37 = arith.constant 37 : index
    %c0_168 = arith.constant 0 : index
    %162 = vector.load %arg10[%c37, %c0_168] : memref<128x64xf32, #tpu.memory_space<vmem>>, vector<1x32xf32>
    tpu.vector_store %arg10[%c37, %c0_168], %161 {strides = array<i32>} : memref<128x64xf32, #tpu.memory_space<vmem>>, vector<1x32xf32>,
    %c85 = arith.constant 85 : index
    %c32_169 = arith.constant 32 : index
    %163 = vector.load %arg10[%c85, %c32_169] : memref<128x64xf32, #tpu.memory_space<vmem>>, vector<1x32xf32>
    tpu.vector_store %arg10[%c85, %c32_169], %161 {strides = array<i32>} : memref<128x64xf32, #tpu.memory_space<vmem>>, vector<1x32xf32>,
    %c2_170 = arith.constant 2 : index
    %c2_171 = arith.constant 2 : index
    %164 = memref.load %arg2[%c2_170, %c2_171] : memref<6x8xi32, #tpu.memory_space<smem>>
    %c64_i32_172 = arith.constant 64 : i32
    %165 = arith.addi %c64_i32_172, %164 : i32
    %166 = arith.index_cast %165 : i32 to index
    %c0_173 = arith.constant 0 : index
    %167 = vector.load %arg6[%166, %c0_173] : memref<128x32xf32, #tpu.memory_space<vmem>>, vector<1x32xf32>
    %c38 = arith.constant 38 : index
    %c0_174 = arith.constant 0 : index
    %168 = vector.load %arg10[%c38, %c0_174] : memref<128x64xf32, #tpu.memory_space<vmem>>, vector<1x32xf32>
    tpu.vector_store %arg10[%c38, %c0_174], %167 {strides = array<i32>} : memref<128x64xf32, #tpu.memory_space<vmem>>, vector<1x32xf32>,
    %c86 = arith.constant 86 : index
    %c32_175 = arith.constant 32 : index
    %169 = vector.load %arg10[%c86, %c32_175] : memref<128x64xf32, #tpu.memory_space<vmem>>, vector<1x32xf32>
    tpu.vector_store %arg10[%c86, %c32_175], %167 {strides = array<i32>} : memref<128x64xf32, #tpu.memory_space<vmem>>, vector<1x32xf32>,
    %c3_176 = arith.constant 3 : index
    %c2_177 = arith.constant 2 : index
    %170 = memref.load %arg2[%c3_176, %c2_177] : memref<6x8xi32, #tpu.memory_space<smem>>
    %c64_i32_178 = arith.constant 64 : i32
    %171 = arith.addi %c64_i32_178, %170 : i32
    %172 = arith.index_cast %171 : i32 to index
    %c0_179 = arith.constant 0 : index
    %173 = vector.load %arg6[%172, %c0_179] : memref<128x32xf32, #tpu.memory_space<vmem>>, vector<1x32xf32>
    %c39 = arith.constant 39 : index
    %c0_180 = arith.constant 0 : index
    %174 = vector.load %arg10[%c39, %c0_180] : memref<128x64xf32, #tpu.memory_space<vmem>>, vector<1x32xf32>
    tpu.vector_store %arg10[%c39, %c0_180], %173 {strides = array<i32>} : memref<128x64xf32, #tpu.memory_space<vmem>>, vector<1x32xf32>,
    %c87 = arith.constant 87 : index
    %c32_181 = arith.constant 32 : index
    %175 = vector.load %arg10[%c87, %c32_181] : memref<128x64xf32, #tpu.memory_space<vmem>>, vector<1x32xf32>
    tpu.vector_store %arg10[%c87, %c32_181], %173 {strides = array<i32>} : memref<128x64xf32, #tpu.memory_space<vmem>>, vector<1x32xf32>,
    %c4_182 = arith.constant 4 : index
    %c2_183 = arith.constant 2 : index
    %176 = memref.load %arg2[%c4_182, %c2_183] : memref<6x8xi32, #tpu.memory_space<smem>>
    %c64_i32_184 = arith.constant 64 : i32
    %177 = arith.addi %c64_i32_184, %176 : i32
    %178 = arith.index_cast %177 : i32 to index
    %c0_185 = arith.constant 0 : index
    %179 = vector.load %arg6[%178, %c0_185] : memref<128x32xf32, #tpu.memory_space<vmem>>, vector<1x32xf32>
    %c40 = arith.constant 40 : index
    %c0_186 = arith.constant 0 : index
    %180 = vector.load %arg10[%c40, %c0_186] : memref<128x64xf32, #tpu.memory_space<vmem>>, vector<1x32xf32>
    tpu.vector_store %arg10[%c40, %c0_186], %179 {strides = array<i32>} : memref<128x64xf32, #tpu.memory_space<vmem>>, vector<1x32xf32>,
    %c88 = arith.constant 88 : index
    %c32_187 = arith.constant 32 : index
    %181 = vector.load %arg10[%c88, %c32_187] : memref<128x64xf32, #tpu.memory_space<vmem>>, vector<1x32xf32>
    tpu.vector_store %arg10[%c88, %c32_187], %179 {strides = array<i32>} : memref<128x64xf32, #tpu.memory_space<vmem>>, vector<1x32xf32>,
    %c5_188 = arith.constant 5 : index
    %c2_189 = arith.constant 2 : index
    %182 = memref.load %arg2[%c5_188, %c2_189] : memref<6x8xi32, #tpu.memory_space<smem>>
    %c64_i32_190 = arith.constant 64 : i32
    %183 = arith.addi %c64_i32_190, %182 : i32
    %184 = arith.index_cast %183 : i32 to index
    %c0_191 = arith.constant 0 : index
    %185 = vector.load %arg6[%184, %c0_191] : memref<128x32xf32, #tpu.memory_space<vmem>>, vector<1x32xf32>
    %c41 = arith.constant 41 : index
    %c0_192 = arith.constant 0 : index
    %186 = vector.load %arg10[%c41, %c0_192] : memref<128x64xf32, #tpu.memory_space<vmem>>, vector<1x32xf32>
    tpu.vector_store %arg10[%c41, %c0_192], %185 {strides = array<i32>} : memref<128x64xf32, #tpu.memory_space<vmem>>, vector<1x32xf32>,
    %c89 = arith.constant 89 : index
    %c32_193 = arith.constant 32 : index
    %187 = vector.load %arg10[%c89, %c32_193] : memref<128x64xf32, #tpu.memory_space<vmem>>, vector<1x32xf32>
    tpu.vector_store %arg10[%c89, %c32_193], %185 {strides = array<i32>} : memref<128x64xf32, #tpu.memory_space<vmem>>, vector<1x32xf32>,
    %c0_194 = arith.constant 0 : index
    %c3_195 = arith.constant 3 : index
    %188 = memref.load %arg0[%c0_194, %c3_195] : memref<2x8xi32, #tpu.memory_space<smem>>
    %189 = arith.index_cast %188 : i32 to index
    %c0_196 = arith.constant 0 : index
    %190 = vector.load %arg6[%189, %c0_196] : memref<128x32xf32, #tpu.memory_space<vmem>>, vector<1x32xf32>
    %c48 = arith.constant 48 : index
    %c0_197 = arith.constant 0 : index
    %191 = vector.load %arg10[%c48, %c0_197] : memref<128x64xf32, #tpu.memory_space<vmem>>, vector<1x32xf32>
    tpu.vector_store %arg10[%c48, %c0_197], %190 {strides = array<i32>} : memref<128x64xf32, #tpu.memory_space<vmem>>, vector<1x32xf32>,
    %c64_198 = arith.constant 64 : index
    %c32_199 = arith.constant 32 : index
    %192 = vector.load %arg10[%c64_198, %c32_199] : memref<128x64xf32, #tpu.memory_space<vmem>>, vector<1x32xf32>
    tpu.vector_store %arg10[%c64_198, %c32_199], %190 {strides = array<i32>} : memref<128x64xf32, #tpu.memory_space<vmem>>, vector<1x32xf32>,
    %c1_200 = arith.constant 1 : index
    %c3_201 = arith.constant 3 : index
    %193 = memref.load %arg0[%c1_200, %c3_201] : memref<2x8xi32, #tpu.memory_space<smem>>
    %194 = arith.index_cast %193 : i32 to index
    %c0_202 = arith.constant 0 : index
    %195 = vector.load %arg6[%194, %c0_202] : memref<128x32xf32, #tpu.memory_space<vmem>>, vector<1x32xf32>
    %c49 = arith.constant 49 : index
    %c0_203 = arith.constant 0 : index
    %196 = vector.load %arg10[%c49, %c0_203] : memref<128x64xf32, #tpu.memory_space<vmem>>, vector<1x32xf32>
    tpu.vector_store %arg10[%c49, %c0_203], %195 {strides = array<i32>} : memref<128x64xf32, #tpu.memory_space<vmem>>, vector<1x32xf32>,
    %c65 = arith.constant 65 : index
    %c32_204 = arith.constant 32 : index
    %197 = vector.load %arg10[%c65, %c32_204] : memref<128x64xf32, #tpu.memory_space<vmem>>, vector<1x32xf32>
    tpu.vector_store %arg10[%c65, %c32_204], %195 {strides = array<i32>} : memref<128x64xf32, #tpu.memory_space<vmem>>, vector<1x32xf32>,
    %c0_205 = arith.constant 0 : index
    %c3_206 = arith.constant 3 : index
    %198 = memref.load %arg1[%c0_205, %c3_206] : memref<2x8xi32, #tpu.memory_space<smem>>
    %c64_i32_207 = arith.constant 64 : i32
    %199 = arith.addi %c64_i32_207, %198 : i32
    %200 = arith.index_cast %199 : i32 to index
    %c0_208 = arith.constant 0 : index
    %201 = vector.load %arg6[%200, %c0_208] : memref<128x32xf32, #tpu.memory_space<vmem>>, vector<1x32xf32>
    %c50 = arith.constant 50 : index
    %c0_209 = arith.constant 0 : index
    %202 = vector.load %arg10[%c50, %c0_209] : memref<128x64xf32, #tpu.memory_space<vmem>>, vector<1x32xf32>
    tpu.vector_store %arg10[%c50, %c0_209], %201 {strides = array<i32>} : memref<128x64xf32, #tpu.memory_space<vmem>>, vector<1x32xf32>,
    %c66 = arith.constant 66 : index
    %c32_210 = arith.constant 32 : index
    %203 = vector.load %arg10[%c66, %c32_210] : memref<128x64xf32, #tpu.memory_space<vmem>>, vector<1x32xf32>
    tpu.vector_store %arg10[%c66, %c32_210], %201 {strides = array<i32>} : memref<128x64xf32, #tpu.memory_space<vmem>>, vector<1x32xf32>,
    %c1_211 = arith.constant 1 : index
    %c3_212 = arith.constant 3 : index
    %204 = memref.load %arg1[%c1_211, %c3_212] : memref<2x8xi32, #tpu.memory_space<smem>>
    %c64_i32_213 = arith.constant 64 : i32
    %205 = arith.addi %c64_i32_213, %204 : i32
    %206 = arith.index_cast %205 : i32 to index
    %c0_214 = arith.constant 0 : index
    %207 = vector.load %arg6[%206, %c0_214] : memref<128x32xf32, #tpu.memory_space<vmem>>, vector<1x32xf32>
    %c51 = arith.constant 51 : index
    %c0_215 = arith.constant 0 : index
    %208 = vector.load %arg10[%c51, %c0_215] : memref<128x64xf32, #tpu.memory_space<vmem>>, vector<1x32xf32>
    tpu.vector_store %arg10[%c51, %c0_215], %207 {strides = array<i32>} : memref<128x64xf32, #tpu.memory_space<vmem>>, vector<1x32xf32>,
    %c67 = arith.constant 67 : index
    %c32_216 = arith.constant 32 : index
    %209 = vector.load %arg10[%c67, %c32_216] : memref<128x64xf32, #tpu.memory_space<vmem>>, vector<1x32xf32>
    tpu.vector_store %arg10[%c67, %c32_216], %207 {strides = array<i32>} : memref<128x64xf32, #tpu.memory_space<vmem>>, vector<1x32xf32>,
    %c0_217 = arith.constant 0 : index
    %c3_218 = arith.constant 3 : index
    %210 = memref.load %arg2[%c0_217, %c3_218] : memref<6x8xi32, #tpu.memory_space<smem>>
    %c64_i32_219 = arith.constant 64 : i32
    %211 = arith.addi %c64_i32_219, %210 : i32
    %212 = arith.index_cast %211 : i32 to index
    %c0_220 = arith.constant 0 : index
    %213 = vector.load %arg6[%212, %c0_220] : memref<128x32xf32, #tpu.memory_space<vmem>>, vector<1x32xf32>
    %c52 = arith.constant 52 : index
    %c0_221 = arith.constant 0 : index
    %214 = vector.load %arg10[%c52, %c0_221] : memref<128x64xf32, #tpu.memory_space<vmem>>, vector<1x32xf32>
    tpu.vector_store %arg10[%c52, %c0_221], %213 {strides = array<i32>} : memref<128x64xf32, #tpu.memory_space<vmem>>, vector<1x32xf32>,
    %c68 = arith.constant 68 : index
    %c32_222 = arith.constant 32 : index
    %215 = vector.load %arg10[%c68, %c32_222] : memref<128x64xf32, #tpu.memory_space<vmem>>, vector<1x32xf32>
    tpu.vector_store %arg10[%c68, %c32_222], %213 {strides = array<i32>} : memref<128x64xf32, #tpu.memory_space<vmem>>, vector<1x32xf32>,
    %c1_223 = arith.constant 1 : index
    %c3_224 = arith.constant 3 : index
    %216 = memref.load %arg2[%c1_223, %c3_224] : memref<6x8xi32, #tpu.memory_space<smem>>
    %c64_i32_225 = arith.constant 64 : i32
    %217 = arith.addi %c64_i32_225, %216 : i32
    %218 = arith.index_cast %217 : i32 to index
    %c0_226 = arith.constant 0 : index
    %219 = vector.load %arg6[%218, %c0_226] : memref<128x32xf32, #tpu.memory_space<vmem>>, vector<1x32xf32>
    %c53 = arith.constant 53 : index
    %c0_227 = arith.constant 0 : index
    %220 = vector.load %arg10[%c53, %c0_227] : memref<128x64xf32, #tpu.memory_space<vmem>>, vector<1x32xf32>
    tpu.vector_store %arg10[%c53, %c0_227], %219 {strides = array<i32>} : memref<128x64xf32, #tpu.memory_space<vmem>>, vector<1x32xf32>,
    %c69 = arith.constant 69 : index
    %c32_228 = arith.constant 32 : index
    %221 = vector.load %arg10[%c69, %c32_228] : memref<128x64xf32, #tpu.memory_space<vmem>>, vector<1x32xf32>
    tpu.vector_store %arg10[%c69, %c32_228], %219 {strides = array<i32>} : memref<128x64xf32, #tpu.memory_space<vmem>>, vector<1x32xf32>,
    %c2_229 = arith.constant 2 : index
    %c3_230 = arith.constant 3 : index
    %222 = memref.load %arg2[%c2_229, %c3_230] : memref<6x8xi32, #tpu.memory_space<smem>>
    %c64_i32_231 = arith.constant 64 : i32
    %223 = arith.addi %c64_i32_231, %222 : i32
    %224 = arith.index_cast %223 : i32 to index
    %c0_232 = arith.constant 0 : index
    %225 = vector.load %arg6[%224, %c0_232] : memref<128x32xf32, #tpu.memory_space<vmem>>, vector<1x32xf32>
    %c54 = arith.constant 54 : index
    %c0_233 = arith.constant 0 : index
    %226 = vector.load %arg10[%c54, %c0_233] : memref<128x64xf32, #tpu.memory_space<vmem>>, vector<1x32xf32>
    tpu.vector_store %arg10[%c54, %c0_233], %225 {strides = array<i32>} : memref<128x64xf32, #tpu.memory_space<vmem>>, vector<1x32xf32>,
    %c70 = arith.constant 70 : index
    %c32_234 = arith.constant 32 : index
    %227 = vector.load %arg10[%c70, %c32_234] : memref<128x64xf32, #tpu.memory_space<vmem>>, vector<1x32xf32>
    tpu.vector_store %arg10[%c70, %c32_234], %225 {strides = array<i32>} : memref<128x64xf32, #tpu.memory_space<vmem>>, vector<1x32xf32>,
    %c3_235 = arith.constant 3 : index
    %c3_236 = arith.constant 3 : index
    %228 = memref.load %arg2[%c3_235, %c3_236] : memref<6x8xi32, #tpu.memory_space<smem>>
    %c64_i32_237 = arith.constant 64 : i32
    %229 = arith.addi %c64_i32_237, %228 : i32
    %230 = arith.index_cast %229 : i32 to index
    %c0_238 = arith.constant 0 : index
    %231 = vector.load %arg6[%230, %c0_238] : memref<128x32xf32, #tpu.memory_space<vmem>>, vector<1x32xf32>
    %c55 = arith.constant 55 : index
    %c0_239 = arith.constant 0 : index
    %232 = vector.load %arg10[%c55, %c0_239] : memref<128x64xf32, #tpu.memory_space<vmem>>, vector<1x32xf32>
    tpu.vector_store %arg10[%c55, %c0_239], %231 {strides = array<i32>} : memref<128x64xf32, #tpu.memory_space<vmem>>, vector<1x32xf32>,
    %c71 = arith.constant 71 : index
    %c32_240 = arith.constant 32 : index
    %233 = vector.load %arg10[%c71, %c32_240] : memref<128x64xf32, #tpu.memory_space<vmem>>, vector<1x32xf32>
    tpu.vector_store %arg10[%c71, %c32_240], %231 {strides = array<i32>} : memref<128x64xf32, #tpu.memory_space<vmem>>, vector<1x32xf32>,
    %c4_241 = arith.constant 4 : index
    %c3_242 = arith.constant 3 : index
    %234 = memref.load %arg2[%c4_241, %c3_242] : memref<6x8xi32, #tpu.memory_space<smem>>
    %c64_i32_243 = arith.constant 64 : i32
    %235 = arith.addi %c64_i32_243, %234 : i32
    %236 = arith.index_cast %235 : i32 to index
    %c0_244 = arith.constant 0 : index
    %237 = vector.load %arg6[%236, %c0_244] : memref<128x32xf32, #tpu.memory_space<vmem>>, vector<1x32xf32>
    %c56 = arith.constant 56 : index
    %c0_245 = arith.constant 0 : index
    %238 = vector.load %arg10[%c56, %c0_245] : memref<128x64xf32, #tpu.memory_space<vmem>>, vector<1x32xf32>
    tpu.vector_store %arg10[%c56, %c0_245], %237 {strides = array<i32>} : memref<128x64xf32, #tpu.memory_space<vmem>>, vector<1x32xf32>,
    %c72 = arith.constant 72 : index
    %c32_246 = arith.constant 32 : index
    %239 = vector.load %arg10[%c72, %c32_246] : memref<128x64xf32, #tpu.memory_space<vmem>>, vector<1x32xf32>
    tpu.vector_store %arg10[%c72, %c32_246], %237 {strides = array<i32>} : memref<128x64xf32, #tpu.memory_space<vmem>>, vector<1x32xf32>,
    %c5_247 = arith.constant 5 : index
    %c3_248 = arith.constant 3 : index
    %240 = memref.load %arg2[%c5_247, %c3_248] : memref<6x8xi32, #tpu.memory_space<smem>>
    %c64_i32_249 = arith.constant 64 : i32
    %241 = arith.addi %c64_i32_249, %240 : i32
    %242 = arith.index_cast %241 : i32 to index
    %c0_250 = arith.constant 0 : index
    %243 = vector.load %arg6[%242, %c0_250] : memref<128x32xf32, #tpu.memory_space<vmem>>, vector<1x32xf32>
    %c57 = arith.constant 57 : index
    %c0_251 = arith.constant 0 : index
    %244 = vector.load %arg10[%c57, %c0_251] : memref<128x64xf32, #tpu.memory_space<vmem>>, vector<1x32xf32>
    tpu.vector_store %arg10[%c57, %c0_251], %243 {strides = array<i32>} : memref<128x64xf32, #tpu.memory_space<vmem>>, vector<1x32xf32>,
    %c73 = arith.constant 73 : index
    %c32_252 = arith.constant 32 : index
    %245 = vector.load %arg10[%c73, %c32_252] : memref<128x64xf32, #tpu.memory_space<vmem>>, vector<1x32xf32>
    tpu.vector_store %arg10[%c73, %c32_252], %243 {strides = array<i32>} : memref<128x64xf32, #tpu.memory_space<vmem>>, vector<1x32xf32>,
    %c0_253 = arith.constant 0 : index
    %c4_254 = arith.constant 4 : index
    %246 = memref.load %arg0[%c0_253, %c4_254] : memref<2x8xi32, #tpu.memory_space<smem>>
    %247 = arith.index_cast %246 : i32 to index
    %c0_255 = arith.constant 0 : index
    %248 = vector.load %arg6[%247, %c0_255] : memref<128x32xf32, #tpu.memory_space<vmem>>, vector<1x32xf32>
    %c64_256 = arith.constant 64 : index
    %c0_257 = arith.constant 0 : index
    %249 = vector.load %arg10[%c64_256, %c0_257] : memref<128x64xf32, #tpu.memory_space<vmem>>, vector<1x32xf32>
    tpu.vector_store %arg10[%c64_256, %c0_257], %248 {strides = array<i32>} : memref<128x64xf32, #tpu.memory_space<vmem>>, vector<1x32xf32>,
    %c48_258 = arith.constant 48 : index
    %c32_259 = arith.constant 32 : index
    %250 = vector.load %arg10[%c48_258, %c32_259] : memref<128x64xf32, #tpu.memory_space<vmem>>, vector<1x32xf32>
    tpu.vector_store %arg10[%c48_258, %c32_259], %248 {strides = array<i32>} : memref<128x64xf32, #tpu.memory_space<vmem>>, vector<1x32xf32>,
    %c1_260 = arith.constant 1 : index
    %c4_261 = arith.constant 4 : index
    %251 = memref.load %arg0[%c1_260, %c4_261] : memref<2x8xi32, #tpu.memory_space<smem>>
    %252 = arith.index_cast %251 : i32 to index
    %c0_262 = arith.constant 0 : index
    %253 = vector.load %arg6[%252, %c0_262] : memref<128x32xf32, #tpu.memory_space<vmem>>, vector<1x32xf32>
    %c65_263 = arith.constant 65 : index
    %c0_264 = arith.constant 0 : index
    %254 = vector.load %arg10[%c65_263, %c0_264] : memref<128x64xf32, #tpu.memory_space<vmem>>, vector<1x32xf32>
    tpu.vector_store %arg10[%c65_263, %c0_264], %253 {strides = array<i32>} : memref<128x64xf32, #tpu.memory_space<vmem>>, vector<1x32xf32>,
    %c49_265 = arith.constant 49 : index
    %c32_266 = arith.constant 32 : index
    %255 = vector.load %arg10[%c49_265, %c32_266] : memref<128x64xf32, #tpu.memory_space<vmem>>, vector<1x32xf32>
    tpu.vector_store %arg10[%c49_265, %c32_266], %253 {strides = array<i32>} : memref<128x64xf32, #tpu.memory_space<vmem>>, vector<1x32xf32>,
    %c0_267 = arith.constant 0 : index
    %c4_268 = arith.constant 4 : index
    %256 = memref.load %arg1[%c0_267, %c4_268] : memref<2x8xi32, #tpu.memory_space<smem>>
    %c64_i32_269 = arith.constant 64 : i32
    %257 = arith.addi %c64_i32_269, %256 : i32
    %258 = arith.index_cast %257 : i32 to index
    %c0_270 = arith.constant 0 : index
    %259 = vector.load %arg6[%258, %c0_270] : memref<128x32xf32, #tpu.memory_space<vmem>>, vector<1x32xf32>
    %c66_271 = arith.constant 66 : index
    %c0_272 = arith.constant 0 : index
    %260 = vector.load %arg10[%c66_271, %c0_272] : memref<128x64xf32, #tpu.memory_space<vmem>>, vector<1x32xf32>
    tpu.vector_store %arg10[%c66_271, %c0_272], %259 {strides = array<i32>} : memref<128x64xf32, #tpu.memory_space<vmem>>, vector<1x32xf32>,
    %c50_273 = arith.constant 50 : index
    %c32_274 = arith.constant 32 : index
    %261 = vector.load %arg10[%c50_273, %c32_274] : memref<128x64xf32, #tpu.memory_space<vmem>>, vector<1x32xf32>
    tpu.vector_store %arg10[%c50_273, %c32_274], %259 {strides = array<i32>} : memref<128x64xf32, #tpu.memory_space<vmem>>, vector<1x32xf32>,
    %c1_275 = arith.constant 1 : index
    %c4_276 = arith.constant 4 : index
    %262 = memref.load %arg1[%c1_275, %c4_276] : memref<2x8xi32, #tpu.memory_space<smem>>
    %c64_i32_277 = arith.constant 64 : i32
    %263 = arith.addi %c64_i32_277, %262 : i32
    %264 = arith.index_cast %263 : i32 to index
    %c0_278 = arith.constant 0 : index
    %265 = vector.load %arg6[%264, %c0_278] : memref<128x32xf32, #tpu.memory_space<vmem>>, vector<1x32xf32>
    %c67_279 = arith.constant 67 : index
    %c0_280 = arith.constant 0 : index
    %266 = vector.load %arg10[%c67_279, %c0_280] : memref<128x64xf32, #tpu.memory_space<vmem>>, vector<1x32xf32>
    tpu.vector_store %arg10[%c67_279, %c0_280], %265 {strides = array<i32>} : memref<128x64xf32, #tpu.memory_space<vmem>>, vector<1x32xf32>,
    %c51_281 = arith.constant 51 : index
    %c32_282 = arith.constant 32 : index
    %267 = vector.load %arg10[%c51_281, %c32_282] : memref<128x64xf32, #tpu.memory_space<vmem>>, vector<1x32xf32>
    tpu.vector_store %arg10[%c51_281, %c32_282], %265 {strides = array<i32>} : memref<128x64xf32, #tpu.memory_space<vmem>>, vector<1x32xf32>,
    %c0_283 = arith.constant 0 : index
    %c4_284 = arith.constant 4 : index
    %268 = memref.load %arg2[%c0_283, %c4_284] : memref<6x8xi32, #tpu.memory_space<smem>>
    %c64_i32_285 = arith.constant 64 : i32
    %269 = arith.addi %c64_i32_285, %268 : i32
    %270 = arith.index_cast %269 : i32 to index
    %c0_286 = arith.constant 0 : index
    %271 = vector.load %arg6[%270, %c0_286] : memref<128x32xf32, #tpu.memory_space<vmem>>, vector<1x32xf32>
    %c68_287 = arith.constant 68 : index
    %c0_288 = arith.constant 0 : index
    %272 = vector.load %arg10[%c68_287, %c0_288] : memref<128x64xf32, #tpu.memory_space<vmem>>, vector<1x32xf32>
    tpu.vector_store %arg10[%c68_287, %c0_288], %271 {strides = array<i32>} : memref<128x64xf32, #tpu.memory_space<vmem>>, vector<1x32xf32>,
    %c52_289 = arith.constant 52 : index
    %c32_290 = arith.constant 32 : index
    %273 = vector.load %arg10[%c52_289, %c32_290] : memref<128x64xf32, #tpu.memory_space<vmem>>, vector<1x32xf32>
    tpu.vector_store %arg10[%c52_289, %c32_290], %271 {strides = array<i32>} : memref<128x64xf32, #tpu.memory_space<vmem>>, vector<1x32xf32>,
    %c1_291 = arith.constant 1 : index
    %c4_292 = arith.constant 4 : index
    %274 = memref.load %arg2[%c1_291, %c4_292] : memref<6x8xi32, #tpu.memory_space<smem>>
    %c64_i32_293 = arith.constant 64 : i32
    %275 = arith.addi %c64_i32_293, %274 : i32
    %276 = arith.index_cast %275 : i32 to index
    %c0_294 = arith.constant 0 : index
    %277 = vector.load %arg6[%276, %c0_294] : memref<128x32xf32, #tpu.memory_space<vmem>>, vector<1x32xf32>
    %c69_295 = arith.constant 69 : index
    %c0_296 = arith.constant 0 : index
    %278 = vector.load %arg10[%c69_295, %c0_296] : memref<128x64xf32, #tpu.memory_space<vmem>>, vector<1x32xf32>
    tpu.vector_store %arg10[%c69_295, %c0_296], %277 {strides = array<i32>} : memref<128x64xf32, #tpu.memory_space<vmem>>, vector<1x32xf32>,
    %c53_297 = arith.constant 53 : index
    %c32_298 = arith.constant 32 : index
    %279 = vector.load %arg10[%c53_297, %c32_298] : memref<128x64xf32, #tpu.memory_space<vmem>>, vector<1x32xf32>
    tpu.vector_store %arg10[%c53_297, %c32_298], %277 {strides = array<i32>} : memref<128x64xf32, #tpu.memory_space<vmem>>, vector<1x32xf32>,
    %c2_299 = arith.constant 2 : index
    %c4_300 = arith.constant 4 : index
    %280 = memref.load %arg2[%c2_299, %c4_300] : memref<6x8xi32, #tpu.memory_space<smem>>
    %c64_i32_301 = arith.constant 64 : i32
    %281 = arith.addi %c64_i32_301, %280 : i32
    %282 = arith.index_cast %281 : i32 to index
    %c0_302 = arith.constant 0 : index
    %283 = vector.load %arg6[%282, %c0_302] : memref<128x32xf32, #tpu.memory_space<vmem>>, vector<1x32xf32>
    %c70_303 = arith.constant 70 : index
    %c0_304 = arith.constant 0 : index
    %284 = vector.load %arg10[%c70_303, %c0_304] : memref<128x64xf32, #tpu.memory_space<vmem>>, vector<1x32xf32>
    tpu.vector_store %arg10[%c70_303, %c0_304], %283 {strides = array<i32>} : memref<128x64xf32, #tpu.memory_space<vmem>>, vector<1x32xf32>,
    %c54_305 = arith.constant 54 : index
    %c32_306 = arith.constant 32 : index
    %285 = vector.load %arg10[%c54_305, %c32_306] : memref<128x64xf32, #tpu.memory_space<vmem>>, vector<1x32xf32>
    tpu.vector_store %arg10[%c54_305, %c32_306], %283 {strides = array<i32>} : memref<128x64xf32, #tpu.memory_space<vmem>>, vector<1x32xf32>,
    %c3_307 = arith.constant 3 : index
    %c4_308 = arith.constant 4 : index
    %286 = memref.load %arg2[%c3_307, %c4_308] : memref<6x8xi32, #tpu.memory_space<smem>>
    %c64_i32_309 = arith.constant 64 : i32
    %287 = arith.addi %c64_i32_309, %286 : i32
    %288 = arith.index_cast %287 : i32 to index
    %c0_310 = arith.constant 0 : index
    %289 = vector.load %arg6[%288, %c0_310] : memref<128x32xf32, #tpu.memory_space<vmem>>, vector<1x32xf32>
    %c71_311 = arith.constant 71 : index
    %c0_312 = arith.constant 0 : index
    %290 = vector.load %arg10[%c71_311, %c0_312] : memref<128x64xf32, #tpu.memory_space<vmem>>, vector<1x32xf32>
    tpu.vector_store %arg10[%c71_311, %c0_312], %289 {strides = array<i32>} : memref<128x64xf32, #tpu.memory_space<vmem>>, vector<1x32xf32>,
    %c55_313 = arith.constant 55 : index
    %c32_314 = arith.constant 32 : index
    %291 = vector.load %arg10[%c55_313, %c32_314] : memref<128x64xf32, #tpu.memory_space<vmem>>, vector<1x32xf32>
    tpu.vector_store %arg10[%c55_313, %c32_314], %289 {strides = array<i32>} : memref<128x64xf32, #tpu.memory_space<vmem>>, vector<1x32xf32>,
    %c4_315 = arith.constant 4 : index
    %c4_316 = arith.constant 4 : index
    %292 = memref.load %arg2[%c4_315, %c4_316] : memref<6x8xi32, #tpu.memory_space<smem>>
    %c64_i32_317 = arith.constant 64 : i32
    %293 = arith.addi %c64_i32_317, %292 : i32
    %294 = arith.index_cast %293 : i32 to index
    %c0_318 = arith.constant 0 : index
    %295 = vector.load %arg6[%294, %c0_318] : memref<128x32xf32, #tpu.memory_space<vmem>>, vector<1x32xf32>
    %c72_319 = arith.constant 72 : index
    %c0_320 = arith.constant 0 : index
    %296 = vector.load %arg10[%c72_319, %c0_320] : memref<128x64xf32, #tpu.memory_space<vmem>>, vector<1x32xf32>
    tpu.vector_store %arg10[%c72_319, %c0_320], %295 {strides = array<i32>} : memref<128x64xf32, #tpu.memory_space<vmem>>, vector<1x32xf32>,
    %c56_321 = arith.constant 56 : index
    %c32_322 = arith.constant 32 : index
    %297 = vector.load %arg10[%c56_321, %c32_322] : memref<128x64xf32, #tpu.memory_space<vmem>>, vector<1x32xf32>
    tpu.vector_store %arg10[%c56_321, %c32_322], %295 {strides = array<i32>} : memref<128x64xf32, #tpu.memory_space<vmem>>, vector<1x32xf32>,
    %c5_323 = arith.constant 5 : index
    %c4_324 = arith.constant 4 : index
    %298 = memref.load %arg2[%c5_323, %c4_324] : memref<6x8xi32, #tpu.memory_space<smem>>
    %c64_i32_325 = arith.constant 64 : i32
    %299 = arith.addi %c64_i32_325, %298 : i32
    %300 = arith.index_cast %299 : i32 to index
    %c0_326 = arith.constant 0 : index
    %301 = vector.load %arg6[%300, %c0_326] : memref<128x32xf32, #tpu.memory_space<vmem>>, vector<1x32xf32>
    %c73_327 = arith.constant 73 : index
    %c0_328 = arith.constant 0 : index
    %302 = vector.load %arg10[%c73_327, %c0_328] : memref<128x64xf32, #tpu.memory_space<vmem>>, vector<1x32xf32>
    tpu.vector_store %arg10[%c73_327, %c0_328], %301 {strides = array<i32>} : memref<128x64xf32, #tpu.memory_space<vmem>>, vector<1x32xf32>,
    %c57_329 = arith.constant 57 : index
    %c32_330 = arith.constant 32 : index
    %303 = vector.load %arg10[%c57_329, %c32_330] : memref<128x64xf32, #tpu.memory_space<vmem>>, vector<1x32xf32>
    tpu.vector_store %arg10[%c57_329, %c32_330], %301 {strides = array<i32>} : memref<128x64xf32, #tpu.memory_space<vmem>>, vector<1x32xf32>,
    %c0_331 = arith.constant 0 : index
    %c5_332 = arith.constant 5 : index
    %304 = memref.load %arg0[%c0_331, %c5_332] : memref<2x8xi32, #tpu.memory_space<smem>>
    %305 = arith.index_cast %304 : i32 to index
    %c0_333 = arith.constant 0 : index
    %306 = vector.load %arg6[%305, %c0_333] : memref<128x32xf32, #tpu.memory_space<vmem>>, vector<1x32xf32>
    %c80_334 = arith.constant 80 : index
    %c0_335 = arith.constant 0 : index
    %307 = vector.load %arg10[%c80_334, %c0_335] : memref<128x64xf32, #tpu.memory_space<vmem>>, vector<1x32xf32>
    tpu.vector_store %arg10[%c80_334, %c0_335], %306 {strides = array<i32>} : memref<128x64xf32, #tpu.memory_space<vmem>>, vector<1x32xf32>,
    %c32_336 = arith.constant 32 : index
    %c32_337 = arith.constant 32 : index
    %308 = vector.load %arg10[%c32_336, %c32_337] : memref<128x64xf32, #tpu.memory_space<vmem>>, vector<1x32xf32>
    tpu.vector_store %arg10[%c32_336, %c32_337], %306 {strides = array<i32>} : memref<128x64xf32, #tpu.memory_space<vmem>>, vector<1x32xf32>,
    %c1_338 = arith.constant 1 : index
    %c5_339 = arith.constant 5 : index
    %309 = memref.load %arg0[%c1_338, %c5_339] : memref<2x8xi32, #tpu.memory_space<smem>>
    %310 = arith.index_cast %309 : i32 to index
    %c0_340 = arith.constant 0 : index
    %311 = vector.load %arg6[%310, %c0_340] : memref<128x32xf32, #tpu.memory_space<vmem>>, vector<1x32xf32>
    %c81_341 = arith.constant 81 : index
    %c0_342 = arith.constant 0 : index
    %312 = vector.load %arg10[%c81_341, %c0_342] : memref<128x64xf32, #tpu.memory_space<vmem>>, vector<1x32xf32>
    tpu.vector_store %arg10[%c81_341, %c0_342], %311 {strides = array<i32>} : memref<128x64xf32, #tpu.memory_space<vmem>>, vector<1x32xf32>,
    %c33_343 = arith.constant 33 : index
    %c32_344 = arith.constant 32 : index
    %313 = vector.load %arg10[%c33_343, %c32_344] : memref<128x64xf32, #tpu.memory_space<vmem>>, vector<1x32xf32>
    tpu.vector_store %arg10[%c33_343, %c32_344], %311 {strides = array<i32>} : memref<128x64xf32, #tpu.memory_space<vmem>>, vector<1x32xf32>,
    %c0_345 = arith.constant 0 : index
    %c5_346 = arith.constant 5 : index
    %314 = memref.load %arg1[%c0_345, %c5_346] : memref<2x8xi32, #tpu.memory_space<smem>>
    %c64_i32_347 = arith.constant 64 : i32
    %315 = arith.addi %c64_i32_347, %314 : i32
    %316 = arith.index_cast %315 : i32 to index
    %c0_348 = arith.constant 0 : index
    %317 = vector.load %arg6[%316, %c0_348] : memref<128x32xf32, #tpu.memory_space<vmem>>, vector<1x32xf32>
    %c82_349 = arith.constant 82 : index
    %c0_350 = arith.constant 0 : index
    %318 = vector.load %arg10[%c82_349, %c0_350] : memref<128x64xf32, #tpu.memory_space<vmem>>, vector<1x32xf32>
    tpu.vector_store %arg10[%c82_349, %c0_350], %317 {strides = array<i32>} : memref<128x64xf32, #tpu.memory_space<vmem>>, vector<1x32xf32>,
    %c34_351 = arith.constant 34 : index
    %c32_352 = arith.constant 32 : index
    %319 = vector.load %arg10[%c34_351, %c32_352] : memref<128x64xf32, #tpu.memory_space<vmem>>, vector<1x32xf32>
    tpu.vector_store %arg10[%c34_351, %c32_352], %317 {strides = array<i32>} : memref<128x64xf32, #tpu.memory_space<vmem>>, vector<1x32xf32>,
    %c1_353 = arith.constant 1 : index
    %c5_354 = arith.constant 5 : index
    %320 = memref.load %arg1[%c1_353, %c5_354] : memref<2x8xi32, #tpu.memory_space<smem>>
    %c64_i32_355 = arith.constant 64 : i32
    %321 = arith.addi %c64_i32_355, %320 : i32
    %322 = arith.index_cast %321 : i32 to index
    %c0_356 = arith.constant 0 : index
    %323 = vector.load %arg6[%322, %c0_356] : memref<128x32xf32, #tpu.memory_space<vmem>>, vector<1x32xf32>
    %c83_357 = arith.constant 83 : index
    %c0_358 = arith.constant 0 : index
    %324 = vector.load %arg10[%c83_357, %c0_358] : memref<128x64xf32, #tpu.memory_space<vmem>>, vector<1x32xf32>
    tpu.vector_store %arg10[%c83_357, %c0_358], %323 {strides = array<i32>} : memref<128x64xf32, #tpu.memory_space<vmem>>, vector<1x32xf32>,
    %c35_359 = arith.constant 35 : index
    %c32_360 = arith.constant 32 : index
    %325 = vector.load %arg10[%c35_359, %c32_360] : memref<128x64xf32, #tpu.memory_space<vmem>>, vector<1x32xf32>
    tpu.vector_store %arg10[%c35_359, %c32_360], %323 {strides = array<i32>} : memref<128x64xf32, #tpu.memory_space<vmem>>, vector<1x32xf32>,
    %c0_361 = arith.constant 0 : index
    %c5_362 = arith.constant 5 : index
    %326 = memref.load %arg2[%c0_361, %c5_362] : memref<6x8xi32, #tpu.memory_space<smem>>
    %c64_i32_363 = arith.constant 64 : i32
    %327 = arith.addi %c64_i32_363, %326 : i32
    %328 = arith.index_cast %327 : i32 to index
    %c0_364 = arith.constant 0 : index
    %329 = vector.load %arg6[%328, %c0_364] : memref<128x32xf32, #tpu.memory_space<vmem>>, vector<1x32xf32>
    %c84_365 = arith.constant 84 : index
    %c0_366 = arith.constant 0 : index
    %330 = vector.load %arg10[%c84_365, %c0_366] : memref<128x64xf32, #tpu.memory_space<vmem>>, vector<1x32xf32>
    tpu.vector_store %arg10[%c84_365, %c0_366], %329 {strides = array<i32>} : memref<128x64xf32, #tpu.memory_space<vmem>>, vector<1x32xf32>,
    %c36_367 = arith.constant 36 : index
    %c32_368 = arith.constant 32 : index
    %331 = vector.load %arg10[%c36_367, %c32_368] : memref<128x64xf32, #tpu.memory_space<vmem>>, vector<1x32xf32>
    tpu.vector_store %arg10[%c36_367, %c32_368], %329 {strides = array<i32>} : memref<128x64xf32, #tpu.memory_space<vmem>>, vector<1x32xf32>,
    %c1_369 = arith.constant 1 : index
    %c5_370 = arith.constant 5 : index
    %332 = memref.load %arg2[%c1_369, %c5_370] : memref<6x8xi32, #tpu.memory_space<smem>>
    %c64_i32_371 = arith.constant 64 : i32
    %333 = arith.addi %c64_i32_371, %332 : i32
    %334 = arith.index_cast %333 : i32 to index
    %c0_372 = arith.constant 0 : index
    %335 = vector.load %arg6[%334, %c0_372] : memref<128x32xf32, #tpu.memory_space<vmem>>, vector<1x32xf32>
    %c85_373 = arith.constant 85 : index
    %c0_374 = arith.constant 0 : index
    %336 = vector.load %arg10[%c85_373, %c0_374] : memref<128x64xf32, #tpu.memory_space<vmem>>, vector<1x32xf32>
    tpu.vector_store %arg10[%c85_373, %c0_374], %335 {strides = array<i32>} : memref<128x64xf32, #tpu.memory_space<vmem>>, vector<1x32xf32>,
    %c37_375 = arith.constant 37 : index
    %c32_376 = arith.constant 32 : index
    %337 = vector.load %arg10[%c37_375, %c32_376] : memref<128x64xf32, #tpu.memory_space<vmem>>, vector<1x32xf32>
    tpu.vector_store %arg10[%c37_375, %c32_376], %335 {strides = array<i32>} : memref<128x64xf32, #tpu.memory_space<vmem>>, vector<1x32xf32>,
    %c2_377 = arith.constant 2 : index
    %c5_378 = arith.constant 5 : index
    %338 = memref.load %arg2[%c2_377, %c5_378] : memref<6x8xi32, #tpu.memory_space<smem>>
    %c64_i32_379 = arith.constant 64 : i32
    %339 = arith.addi %c64_i32_379, %338 : i32
    %340 = arith.index_cast %339 : i32 to index
    %c0_380 = arith.constant 0 : index
    %341 = vector.load %arg6[%340, %c0_380] : memref<128x32xf32, #tpu.memory_space<vmem>>, vector<1x32xf32>
    %c86_381 = arith.constant 86 : index
    %c0_382 = arith.constant 0 : index
    %342 = vector.load %arg10[%c86_381, %c0_382] : memref<128x64xf32, #tpu.memory_space<vmem>>, vector<1x32xf32>
    tpu.vector_store %arg10[%c86_381, %c0_382], %341 {strides = array<i32>} : memref<128x64xf32, #tpu.memory_space<vmem>>, vector<1x32xf32>,
    %c38_383 = arith.constant 38 : index
    %c32_384 = arith.constant 32 : index
    %343 = vector.load %arg10[%c38_383, %c32_384] : memref<128x64xf32, #tpu.memory_space<vmem>>, vector<1x32xf32>
    tpu.vector_store %arg10[%c38_383, %c32_384], %341 {strides = array<i32>} : memref<128x64xf32, #tpu.memory_space<vmem>>, vector<1x32xf32>,
    %c3_385 = arith.constant 3 : index
    %c5_386 = arith.constant 5 : index
    %344 = memref.load %arg2[%c3_385, %c5_386] : memref<6x8xi32, #tpu.memory_space<smem>>
    %c64_i32_387 = arith.constant 64 : i32
    %345 = arith.addi %c64_i32_387, %344 : i32
    %346 = arith.index_cast %345 : i32 to index
    %c0_388 = arith.constant 0 : index
    %347 = vector.load %arg6[%346, %c0_388] : memref<128x32xf32, #tpu.memory_space<vmem>>, vector<1x32xf32>
    %c87_389 = arith.constant 87 : index
    %c0_390 = arith.constant 0 : index
    %348 = vector.load %arg10[%c87_389, %c0_390] : memref<128x64xf32, #tpu.memory_space<vmem>>, vector<1x32xf32>
    tpu.vector_store %arg10[%c87_389, %c0_390], %347 {strides = array<i32>} : memref<128x64xf32, #tpu.memory_space<vmem>>, vector<1x32xf32>,
    %c39_391 = arith.constant 39 : index
    %c32_392 = arith.constant 32 : index
    %349 = vector.load %arg10[%c39_391, %c32_392] : memref<128x64xf32, #tpu.memory_space<vmem>>, vector<1x32xf32>
    tpu.vector_store %arg10[%c39_391, %c32_392], %347 {strides = array<i32>} : memref<128x64xf32, #tpu.memory_space<vmem>>, vector<1x32xf32>,
    %c4_393 = arith.constant 4 : index
    %c5_394 = arith.constant 5 : index
    %350 = memref.load %arg2[%c4_393, %c5_394] : memref<6x8xi32, #tpu.memory_space<smem>>
    %c64_i32_395 = arith.constant 64 : i32
    %351 = arith.addi %c64_i32_395, %350 : i32
    %352 = arith.index_cast %351 : i32 to index
    %c0_396 = arith.constant 0 : index
    %353 = vector.load %arg6[%352, %c0_396] : memref<128x32xf32, #tpu.memory_space<vmem>>, vector<1x32xf32>
    %c88_397 = arith.constant 88 : index
    %c0_398 = arith.constant 0 : index
    %354 = vector.load %arg10[%c88_397, %c0_398] : memref<128x64xf32, #tpu.memory_space<vmem>>, vector<1x32xf32>
    tpu.vector_store %arg10[%c88_397, %c0_398], %353 {strides = array<i32>} : memref<128x64xf32, #tpu.memory_space<vmem>>, vector<1x32xf32>,
    %c40_399 = arith.constant 40 : index
    %c32_400 = arith.constant 32 : index
    %355 = vector.load %arg10[%c40_399, %c32_400] : memref<128x64xf32, #tpu.memory_space<vmem>>, vector<1x32xf32>
    tpu.vector_store %arg10[%c40_399, %c32_400], %353 {strides = array<i32>} : memref<128x64xf32, #tpu.memory_space<vmem>>, vector<1x32xf32>,
    %c5_401 = arith.constant 5 : index
    %c5_402 = arith.constant 5 : index
    %356 = memref.load %arg2[%c5_401, %c5_402] : memref<6x8xi32, #tpu.memory_space<smem>>
    %c64_i32_403 = arith.constant 64 : i32
    %357 = arith.addi %c64_i32_403, %356 : i32
    %358 = arith.index_cast %357 : i32 to index
    %c0_404 = arith.constant 0 : index
    %359 = vector.load %arg6[%358, %c0_404] : memref<128x32xf32, #tpu.memory_space<vmem>>, vector<1x32xf32>
    %c89_405 = arith.constant 89 : index
    %c0_406 = arith.constant 0 : index
    %360 = vector.load %arg10[%c89_405, %c0_406] : memref<128x64xf32, #tpu.memory_space<vmem>>, vector<1x32xf32>
    tpu.vector_store %arg10[%c89_405, %c0_406], %359 {strides = array<i32>} : memref<128x64xf32, #tpu.memory_space<vmem>>, vector<1x32xf32>,
    %c41_407 = arith.constant 41 : index
    %c32_408 = arith.constant 32 : index
    %361 = vector.load %arg10[%c41_407, %c32_408] : memref<128x64xf32, #tpu.memory_space<vmem>>, vector<1x32xf32>
    tpu.vector_store %arg10[%c41_407, %c32_408], %359 {strides = array<i32>} : memref<128x64xf32, #tpu.memory_space<vmem>>, vector<1x32xf32>,
    %c0_409 = arith.constant 0 : index
    %c6_410 = arith.constant 6 : index
    %362 = memref.load %arg0[%c0_409, %c6_410] : memref<2x8xi32, #tpu.memory_space<smem>>
    %363 = arith.index_cast %362 : i32 to index
    %c0_411 = arith.constant 0 : index
    %364 = vector.load %arg6[%363, %c0_411] : memref<128x32xf32, #tpu.memory_space<vmem>>, vector<1x32xf32>
    %c96_412 = arith.constant 96 : index
    %c0_413 = arith.constant 0 : index
    %365 = vector.load %arg10[%c96_412, %c0_413] : memref<128x64xf32, #tpu.memory_space<vmem>>, vector<1x32xf32>
    tpu.vector_store %arg10[%c96_412, %c0_413], %364 {strides = array<i32>} : memref<128x64xf32, #tpu.memory_space<vmem>>, vector<1x32xf32>,
    %c16_414 = arith.constant 16 : index
    %c32_415 = arith.constant 32 : index
    %366 = vector.load %arg10[%c16_414, %c32_415] : memref<128x64xf32, #tpu.memory_space<vmem>>, vector<1x32xf32>
    tpu.vector_store %arg10[%c16_414, %c32_415], %364 {strides = array<i32>} : memref<128x64xf32, #tpu.memory_space<vmem>>, vector<1x32xf32>,
    %c1_416 = arith.constant 1 : index
    %c6_417 = arith.constant 6 : index
    %367 = memref.load %arg0[%c1_416, %c6_417] : memref<2x8xi32, #tpu.memory_space<smem>>
    %368 = arith.index_cast %367 : i32 to index
    %c0_418 = arith.constant 0 : index
    %369 = vector.load %arg6[%368, %c0_418] : memref<128x32xf32, #tpu.memory_space<vmem>>, vector<1x32xf32>
    %c97_419 = arith.constant 97 : index
    %c0_420 = arith.constant 0 : index
    %370 = vector.load %arg10[%c97_419, %c0_420] : memref<128x64xf32, #tpu.memory_space<vmem>>, vector<1x32xf32>
    tpu.vector_store %arg10[%c97_419, %c0_420], %369 {strides = array<i32>} : memref<128x64xf32, #tpu.memory_space<vmem>>, vector<1x32xf32>,
    %c17_421 = arith.constant 17 : index
    %c32_422 = arith.constant 32 : index
    %371 = vector.load %arg10[%c17_421, %c32_422] : memref<128x64xf32, #tpu.memory_space<vmem>>, vector<1x32xf32>
    tpu.vector_store %arg10[%c17_421, %c32_422], %369 {strides = array<i32>} : memref<128x64xf32, #tpu.memory_space<vmem>>, vector<1x32xf32>,
    %c0_423 = arith.constant 0 : index
    %c6_424 = arith.constant 6 : index
    %372 = memref.load %arg1[%c0_423, %c6_424] : memref<2x8xi32, #tpu.memory_space<smem>>
    %c64_i32_425 = arith.constant 64 : i32
    %373 = arith.addi %c64_i32_425, %372 : i32
    %374 = arith.index_cast %373 : i32 to index
    %c0_426 = arith.constant 0 : index
    %375 = vector.load %arg6[%374, %c0_426] : memref<128x32xf32, #tpu.memory_space<vmem>>, vector<1x32xf32>
    %c98_427 = arith.constant 98 : index
    %c0_428 = arith.constant 0 : index
    %376 = vector.load %arg10[%c98_427, %c0_428] : memref<128x64xf32, #tpu.memory_space<vmem>>, vector<1x32xf32>
    tpu.vector_store %arg10[%c98_427, %c0_428], %375 {strides = array<i32>} : memref<128x64xf32, #tpu.memory_space<vmem>>, vector<1x32xf32>,
    %c18_429 = arith.constant 18 : index
    %c32_430 = arith.constant 32 : index
    %377 = vector.load %arg10[%c18_429, %c32_430] : memref<128x64xf32, #tpu.memory_space<vmem>>, vector<1x32xf32>
    tpu.vector_store %arg10[%c18_429, %c32_430], %375 {strides = array<i32>} : memref<128x64xf32, #tpu.memory_space<vmem>>, vector<1x32xf32>,
    %c1_431 = arith.constant 1 : index
    %c6_432 = arith.constant 6 : index
    %378 = memref.load %arg1[%c1_431, %c6_432] : memref<2x8xi32, #tpu.memory_space<smem>>
    %c64_i32_433 = arith.constant 64 : i32
    %379 = arith.addi %c64_i32_433, %378 : i32
    %380 = arith.index_cast %379 : i32 to index
    %c0_434 = arith.constant 0 : index
    %381 = vector.load %arg6[%380, %c0_434] : memref<128x32xf32, #tpu.memory_space<vmem>>, vector<1x32xf32>
    %c99_435 = arith.constant 99 : index
    %c0_436 = arith.constant 0 : index
    %382 = vector.load %arg10[%c99_435, %c0_436] : memref<128x64xf32, #tpu.memory_space<vmem>>, vector<1x32xf32>
    tpu.vector_store %arg10[%c99_435, %c0_436], %381 {strides = array<i32>} : memref<128x64xf32, #tpu.memory_space<vmem>>, vector<1x32xf32>,
    %c19_437 = arith.constant 19 : index
    %c32_438 = arith.constant 32 : index
    %383 = vector.load %arg10[%c19_437, %c32_438] : memref<128x64xf32, #tpu.memory_space<vmem>>, vector<1x32xf32>
    tpu.vector_store %arg10[%c19_437, %c32_438], %381 {strides = array<i32>} : memref<128x64xf32, #tpu.memory_space<vmem>>, vector<1x32xf32>,
    %c0_439 = arith.constant 0 : index
    %c6_440 = arith.constant 6 : index
    %384 = memref.load %arg2[%c0_439, %c6_440] : memref<6x8xi32, #tpu.memory_space<smem>>
    %c64_i32_441 = arith.constant 64 : i32
    %385 = arith.addi %c64_i32_441, %384 : i32
    %386 = arith.index_cast %385 : i32 to index
    %c0_442 = arith.constant 0 : index
    %387 = vector.load %arg6[%386, %c0_442] : memref<128x32xf32, #tpu.memory_space<vmem>>, vector<1x32xf32>
    %c100_443 = arith.constant 100 : index
    %c0_444 = arith.constant 0 : index
    %388 = vector.load %arg10[%c100_443, %c0_444] : memref<128x64xf32, #tpu.memory_space<vmem>>, vector<1x32xf32>
    tpu.vector_store %arg10[%c100_443, %c0_444], %387 {strides = array<i32>} : memref<128x64xf32, #tpu.memory_space<vmem>>, vector<1x32xf32>,
    %c20_445 = arith.constant 20 : index
    %c32_446 = arith.constant 32 : index
    %389 = vector.load %arg10[%c20_445, %c32_446] : memref<128x64xf32, #tpu.memory_space<vmem>>, vector<1x32xf32>
    tpu.vector_store %arg10[%c20_445, %c32_446], %387 {strides = array<i32>} : memref<128x64xf32, #tpu.memory_space<vmem>>, vector<1x32xf32>,
    %c1_447 = arith.constant 1 : index
    %c6_448 = arith.constant 6 : index
    %390 = memref.load %arg2[%c1_447, %c6_448] : memref<6x8xi32, #tpu.memory_space<smem>>
    %c64_i32_449 = arith.constant 64 : i32
    %391 = arith.addi %c64_i32_449, %390 : i32
    %392 = arith.index_cast %391 : i32 to index
    %c0_450 = arith.constant 0 : index
    %393 = vector.load %arg6[%392, %c0_450] : memref<128x32xf32, #tpu.memory_space<vmem>>, vector<1x32xf32>
    %c101_451 = arith.constant 101 : index
    %c0_452 = arith.constant 0 : index
    %394 = vector.load %arg10[%c101_451, %c0_452] : memref<128x64xf32, #tpu.memory_space<vmem>>, vector<1x32xf32>
    tpu.vector_store %arg10[%c101_451, %c0_452], %393 {strides = array<i32>} : memref<128x64xf32, #tpu.memory_space<vmem>>, vector<1x32xf32>,
    %c21_453 = arith.constant 21 : index
    %c32_454 = arith.constant 32 : index
    %395 = vector.load %arg10[%c21_453, %c32_454] : memref<128x64xf32, #tpu.memory_space<vmem>>, vector<1x32xf32>
    tpu.vector_store %arg10[%c21_453, %c32_454], %393 {strides = array<i32>} : memref<128x64xf32, #tpu.memory_space<vmem>>, vector<1x32xf32>,
    %c2_455 = arith.constant 2 : index
    %c6_456 = arith.constant 6 : index
    %396 = memref.load %arg2[%c2_455, %c6_456] : memref<6x8xi32, #tpu.memory_space<smem>>
    %c64_i32_457 = arith.constant 64 : i32
    %397 = arith.addi %c64_i32_457, %396 : i32
    %398 = arith.index_cast %397 : i32 to index
    %c0_458 = arith.constant 0 : index
    %399 = vector.load %arg6[%398, %c0_458] : memref<128x32xf32, #tpu.memory_space<vmem>>, vector<1x32xf32>
    %c102_459 = arith.constant 102 : index
    %c0_460 = arith.constant 0 : index
    %400 = vector.load %arg10[%c102_459, %c0_460] : memref<128x64xf32, #tpu.memory_space<vmem>>, vector<1x32xf32>
    tpu.vector_store %arg10[%c102_459, %c0_460], %399 {strides = array<i32>} : memref<128x64xf32, #tpu.memory_space<vmem>>, vector<1x32xf32>,
    %c22_461 = arith.constant 22 : index
    %c32_462 = arith.constant 32 : index
    %401 = vector.load %arg10[%c22_461, %c32_462] : memref<128x64xf32, #tpu.memory_space<vmem>>, vector<1x32xf32>
    tpu.vector_store %arg10[%c22_461, %c32_462], %399 {strides = array<i32>} : memref<128x64xf32, #tpu.memory_space<vmem>>, vector<1x32xf32>,
    %c3_463 = arith.constant 3 : index
    %c6_464 = arith.constant 6 : index
    %402 = memref.load %arg2[%c3_463, %c6_464] : memref<6x8xi32, #tpu.memory_space<smem>>
    %c64_i32_465 = arith.constant 64 : i32
    %403 = arith.addi %c64_i32_465, %402 : i32
    %404 = arith.index_cast %403 : i32 to index
    %c0_466 = arith.constant 0 : index
    %405 = vector.load %arg6[%404, %c0_466] : memref<128x32xf32, #tpu.memory_space<vmem>>, vector<1x32xf32>
    %c103_467 = arith.constant 103 : index
    %c0_468 = arith.constant 0 : index
    %406 = vector.load %arg10[%c103_467, %c0_468] : memref<128x64xf32, #tpu.memory_space<vmem>>, vector<1x32xf32>
    tpu.vector_store %arg10[%c103_467, %c0_468], %405 {strides = array<i32>} : memref<128x64xf32, #tpu.memory_space<vmem>>, vector<1x32xf32>,
    %c23_469 = arith.constant 23 : index
    %c32_470 = arith.constant 32 : index
    %407 = vector.load %arg10[%c23_469, %c32_470] : memref<128x64xf32, #tpu.memory_space<vmem>>, vector<1x32xf32>
    tpu.vector_store %arg10[%c23_469, %c32_470], %405 {strides = array<i32>} : memref<128x64xf32, #tpu.memory_space<vmem>>, vector<1x32xf32>,
    %c4_471 = arith.constant 4 : index
    %c6_472 = arith.constant 6 : index
    %408 = memref.load %arg2[%c4_471, %c6_472] : memref<6x8xi32, #tpu.memory_space<smem>>
    %c64_i32_473 = arith.constant 64 : i32
    %409 = arith.addi %c64_i32_473, %408 : i32
    %410 = arith.index_cast %409 : i32 to index
    %c0_474 = arith.constant 0 : index
    %411 = vector.load %arg6[%410, %c0_474] : memref<128x32xf32, #tpu.memory_space<vmem>>, vector<1x32xf32>
    %c104_475 = arith.constant 104 : index
    %c0_476 = arith.constant 0 : index
    %412 = vector.load %arg10[%c104_475, %c0_476] : memref<128x64xf32, #tpu.memory_space<vmem>>, vector<1x32xf32>
    tpu.vector_store %arg10[%c104_475, %c0_476], %411 {strides = array<i32>} : memref<128x64xf32, #tpu.memory_space<vmem>>, vector<1x32xf32>,
    %c24_477 = arith.constant 24 : index
    %c32_478 = arith.constant 32 : index
    %413 = vector.load %arg10[%c24_477, %c32_478] : memref<128x64xf32, #tpu.memory_space<vmem>>, vector<1x32xf32>
    tpu.vector_store %arg10[%c24_477, %c32_478], %411 {strides = array<i32>} : memref<128x64xf32, #tpu.memory_space<vmem>>, vector<1x32xf32>,
    %c5_479 = arith.constant 5 : index
    %c6_480 = arith.constant 6 : index
    %414 = memref.load %arg2[%c5_479, %c6_480] : memref<6x8xi32, #tpu.memory_space<smem>>
    %c64_i32_481 = arith.constant 64 : i32
    %415 = arith.addi %c64_i32_481, %414 : i32
    %416 = arith.index_cast %415 : i32 to index
    %c0_482 = arith.constant 0 : index
    %417 = vector.load %arg6[%416, %c0_482] : memref<128x32xf32, #tpu.memory_space<vmem>>, vector<1x32xf32>
    %c105_483 = arith.constant 105 : index
    %c0_484 = arith.constant 0 : index
    %418 = vector.load %arg10[%c105_483, %c0_484] : memref<128x64xf32, #tpu.memory_space<vmem>>, vector<1x32xf32>
    tpu.vector_store %arg10[%c105_483, %c0_484], %417 {strides = array<i32>} : memref<128x64xf32, #tpu.memory_space<vmem>>, vector<1x32xf32>,
    %c25_485 = arith.constant 25 : index
    %c32_486 = arith.constant 32 : index
    %419 = vector.load %arg10[%c25_485, %c32_486] : memref<128x64xf32, #tpu.memory_space<vmem>>, vector<1x32xf32>
    tpu.vector_store %arg10[%c25_485, %c32_486], %417 {strides = array<i32>} : memref<128x64xf32, #tpu.memory_space<vmem>>, vector<1x32xf32>,
    %c0_487 = arith.constant 0 : index
    %c7_488 = arith.constant 7 : index
    %420 = memref.load %arg0[%c0_487, %c7_488] : memref<2x8xi32, #tpu.memory_space<smem>>
    %421 = arith.index_cast %420 : i32 to index
    %c0_489 = arith.constant 0 : index
    %422 = vector.load %arg6[%421, %c0_489] : memref<128x32xf32, #tpu.memory_space<vmem>>, vector<1x32xf32>
    %c112_490 = arith.constant 112 : index
    %c0_491 = arith.constant 0 : index
    %423 = vector.load %arg10[%c112_490, %c0_491] : memref<128x64xf32, #tpu.memory_space<vmem>>, vector<1x32xf32>
    tpu.vector_store %arg10[%c112_490, %c0_491], %422 {strides = array<i32>} : memref<128x64xf32, #tpu.memory_space<vmem>>, vector<1x32xf32>,
    %c0_492 = arith.constant 0 : index
    %c32_493 = arith.constant 32 : index
    %424 = vector.load %arg10[%c0_492, %c32_493] : memref<128x64xf32, #tpu.memory_space<vmem>>, vector<1x32xf32>
    tpu.vector_store %arg10[%c0_492, %c32_493], %422 {strides = array<i32>} : memref<128x64xf32, #tpu.memory_space<vmem>>, vector<1x32xf32>,
    %c1_494 = arith.constant 1 : index
    %c7_495 = arith.constant 7 : index
    %425 = memref.load %arg0[%c1_494, %c7_495] : memref<2x8xi32, #tpu.memory_space<smem>>
    %426 = arith.index_cast %425 : i32 to index
    %c0_496 = arith.constant 0 : index
    %427 = vector.load %arg6[%426, %c0_496] : memref<128x32xf32, #tpu.memory_space<vmem>>, vector<1x32xf32>
    %c113_497 = arith.constant 113 : index
    %c0_498 = arith.constant 0 : index
    %428 = vector.load %arg10[%c113_497, %c0_498] : memref<128x64xf32, #tpu.memory_space<vmem>>, vector<1x32xf32>
    tpu.vector_store %arg10[%c113_497, %c0_498], %427 {strides = array<i32>} : memref<128x64xf32, #tpu.memory_space<vmem>>, vector<1x32xf32>,
    %c1_499 = arith.constant 1 : index
    %c32_500 = arith.constant 32 : index
    %429 = vector.load %arg10[%c1_499, %c32_500] : memref<128x64xf32, #tpu.memory_space<vmem>>, vector<1x32xf32>
    tpu.vector_store %arg10[%c1_499, %c32_500], %427 {strides = array<i32>} : memref<128x64xf32, #tpu.memory_space<vmem>>, vector<1x32xf32>,
    %c0_501 = arith.constant 0 : index
    %c7_502 = arith.constant 7 : index
    %430 = memref.load %arg1[%c0_501, %c7_502] : memref<2x8xi32, #tpu.memory_space<smem>>
    %c64_i32_503 = arith.constant 64 : i32
    %431 = arith.addi %c64_i32_503, %430 : i32
    %432 = arith.index_cast %431 : i32 to index
    %c0_504 = arith.constant 0 : index
    %433 = vector.load %arg6[%432, %c0_504] : memref<128x32xf32, #tpu.memory_space<vmem>>, vector<1x32xf32>
    %c114_505 = arith.constant 114 : index
    %c0_506 = arith.constant 0 : index
    %434 = vector.load %arg10[%c114_505, %c0_506] : memref<128x64xf32, #tpu.memory_space<vmem>>, vector<1x32xf32>
    tpu.vector_store %arg10[%c114_505, %c0_506], %433 {strides = array<i32>} : memref<128x64xf32, #tpu.memory_space<vmem>>, vector<1x32xf32>,
    %c2_507 = arith.constant 2 : index
    %c32_508 = arith.constant 32 : index
    %435 = vector.load %arg10[%c2_507, %c32_508] : memref<128x64xf32, #tpu.memory_space<vmem>>, vector<1x32xf32>
    tpu.vector_store %arg10[%c2_507, %c32_508], %433 {strides = array<i32>} : memref<128x64xf32, #tpu.memory_space<vmem>>, vector<1x32xf32>,
    %c1_509 = arith.constant 1 : index
    %c7_510 = arith.constant 7 : index
    %436 = memref.load %arg1[%c1_509, %c7_510] : memref<2x8xi32, #tpu.memory_space<smem>>
    %c64_i32_511 = arith.constant 64 : i32
    %437 = arith.addi %c64_i32_511, %436 : i32
    %438 = arith.index_cast %437 : i32 to index
    %c0_512 = arith.constant 0 : index
    %439 = vector.load %arg6[%438, %c0_512] : memref<128x32xf32, #tpu.memory_space<vmem>>, vector<1x32xf32>
    %c115_513 = arith.constant 115 : index
    %c0_514 = arith.constant 0 : index
    %440 = vector.load %arg10[%c115_513, %c0_514] : memref<128x64xf32, #tpu.memory_space<vmem>>, vector<1x32xf32>
    tpu.vector_store %arg10[%c115_513, %c0_514], %439 {strides = array<i32>} : memref<128x64xf32, #tpu.memory_space<vmem>>, vector<1x32xf32>,
    %c3_515 = arith.constant 3 : index
    %c32_516 = arith.constant 32 : index
    %441 = vector.load %arg10[%c3_515, %c32_516] : memref<128x64xf32, #tpu.memory_space<vmem>>, vector<1x32xf32>
    tpu.vector_store %arg10[%c3_515, %c32_516], %439 {strides = array<i32>} : memref<128x64xf32, #tpu.memory_space<vmem>>, vector<1x32xf32>,
    %c0_517 = arith.constant 0 : index
    %c7_518 = arith.constant 7 : index
    %442 = memref.load %arg2[%c0_517, %c7_518] : memref<6x8xi32, #tpu.memory_space<smem>>
    %c64_i32_519 = arith.constant 64 : i32
    %443 = arith.addi %c64_i32_519, %442 : i32
    %444 = arith.index_cast %443 : i32 to index
    %c0_520 = arith.constant 0 : index
    %445 = vector.load %arg6[%444, %c0_520] : memref<128x32xf32, #tpu.memory_space<vmem>>, vector<1x32xf32>
    %c116_521 = arith.constant 116 : index
    %c0_522 = arith.constant 0 : index
    %446 = vector.load %arg10[%c116_521, %c0_522] : memref<128x64xf32, #tpu.memory_space<vmem>>, vector<1x32xf32>
    tpu.vector_store %arg10[%c116_521, %c0_522], %445 {strides = array<i32>} : memref<128x64xf32, #tpu.memory_space<vmem>>, vector<1x32xf32>,
    %c4_523 = arith.constant 4 : index
    %c32_524 = arith.constant 32 : index
    %447 = vector.load %arg10[%c4_523, %c32_524] : memref<128x64xf32, #tpu.memory_space<vmem>>, vector<1x32xf32>
    tpu.vector_store %arg10[%c4_523, %c32_524], %445 {strides = array<i32>} : memref<128x64xf32, #tpu.memory_space<vmem>>, vector<1x32xf32>,
    %c1_525 = arith.constant 1 : index
    %c7_526 = arith.constant 7 : index
    %448 = memref.load %arg2[%c1_525, %c7_526] : memref<6x8xi32, #tpu.memory_space<smem>>
    %c64_i32_527 = arith.constant 64 : i32
    %449 = arith.addi %c64_i32_527, %448 : i32
    %450 = arith.index_cast %449 : i32 to index
    %c0_528 = arith.constant 0 : index
    %451 = vector.load %arg6[%450, %c0_528] : memref<128x32xf32, #tpu.memory_space<vmem>>, vector<1x32xf32>
    %c117_529 = arith.constant 117 : index
    %c0_530 = arith.constant 0 : index
    %452 = vector.load %arg10[%c117_529, %c0_530] : memref<128x64xf32, #tpu.memory_space<vmem>>, vector<1x32xf32>
    tpu.vector_store %arg10[%c117_529, %c0_530], %451 {strides = array<i32>} : memref<128x64xf32, #tpu.memory_space<vmem>>, vector<1x32xf32>,
    %c5_531 = arith.constant 5 : index
    %c32_532 = arith.constant 32 : index
    %453 = vector.load %arg10[%c5_531, %c32_532] : memref<128x64xf32, #tpu.memory_space<vmem>>, vector<1x32xf32>
    tpu.vector_store %arg10[%c5_531, %c32_532], %451 {strides = array<i32>} : memref<128x64xf32, #tpu.memory_space<vmem>>, vector<1x32xf32>,
    %c2_533 = arith.constant 2 : index
    %c7_534 = arith.constant 7 : index
    %454 = memref.load %arg2[%c2_533, %c7_534] : memref<6x8xi32, #tpu.memory_space<smem>>
    %c64_i32_535 = arith.constant 64 : i32
    %455 = arith.addi %c64_i32_535, %454 : i32
    %456 = arith.index_cast %455 : i32 to index
    %c0_536 = arith.constant 0 : index
    %457 = vector.load %arg6[%456, %c0_536] : memref<128x32xf32, #tpu.memory_space<vmem>>, vector<1x32xf32>
    %c118_537 = arith.constant 118 : index
    %c0_538 = arith.constant 0 : index
    %458 = vector.load %arg10[%c118_537, %c0_538] : memref<128x64xf32, #tpu.memory_space<vmem>>, vector<1x32xf32>
    tpu.vector_store %arg10[%c118_537, %c0_538], %457 {strides = array<i32>} : memref<128x64xf32, #tpu.memory_space<vmem>>, vector<1x32xf32>,
    %c6_539 = arith.constant 6 : index
    %c32_540 = arith.constant 32 : index
    %459 = vector.load %arg10[%c6_539, %c32_540] : memref<128x64xf32, #tpu.memory_space<vmem>>, vector<1x32xf32>
    tpu.vector_store %arg10[%c6_539, %c32_540], %457 {strides = array<i32>} : memref<128x64xf32, #tpu.memory_space<vmem>>, vector<1x32xf32>,
    %c3_541 = arith.constant 3 : index
    %c7_542 = arith.constant 7 : index
    %460 = memref.load %arg2[%c3_541, %c7_542] : memref<6x8xi32, #tpu.memory_space<smem>>
    %c64_i32_543 = arith.constant 64 : i32
    %461 = arith.addi %c64_i32_543, %460 : i32
    %462 = arith.index_cast %461 : i32 to index
    %c0_544 = arith.constant 0 : index
    %463 = vector.load %arg6[%462, %c0_544] : memref<128x32xf32, #tpu.memory_space<vmem>>, vector<1x32xf32>
    %c119_545 = arith.constant 119 : index
    %c0_546 = arith.constant 0 : index
    %464 = vector.load %arg10[%c119_545, %c0_546] : memref<128x64xf32, #tpu.memory_space<vmem>>, vector<1x32xf32>
    tpu.vector_store %arg10[%c119_545, %c0_546], %463 {strides = array<i32>} : memref<128x64xf32, #tpu.memory_space<vmem>>, vector<1x32xf32>,
    %c7_547 = arith.constant 7 : index
    %c32_548 = arith.constant 32 : index
    %465 = vector.load %arg10[%c7_547, %c32_548] : memref<128x64xf32, #tpu.memory_space<vmem>>, vector<1x32xf32>
    tpu.vector_store %arg10[%c7_547, %c32_548], %463 {strides = array<i32>} : memref<128x64xf32, #tpu.memory_space<vmem>>, vector<1x32xf32>,
    %c4_549 = arith.constant 4 : index
    %c7_550 = arith.constant 7 : index
    %466 = memref.load %arg2[%c4_549, %c7_550] : memref<6x8xi32, #tpu.memory_space<smem>>
    %c64_i32_551 = arith.constant 64 : i32
    %467 = arith.addi %c64_i32_551, %466 : i32
    %468 = arith.index_cast %467 : i32 to index
    %c0_552 = arith.constant 0 : index
    %469 = vector.load %arg6[%468, %c0_552] : memref<128x32xf32, #tpu.memory_space<vmem>>, vector<1x32xf32>
    %c120_553 = arith.constant 120 : index
    %c0_554 = arith.constant 0 : index
    %470 = vector.load %arg10[%c120_553, %c0_554] : memref<128x64xf32, #tpu.memory_space<vmem>>, vector<1x32xf32>
    tpu.vector_store %arg10[%c120_553, %c0_554], %469 {strides = array<i32>} : memref<128x64xf32, #tpu.memory_space<vmem>>, vector<1x32xf32>,
    %c8_555 = arith.constant 8 : index
    %c32_556 = arith.constant 32 : index
    %471 = vector.load %arg10[%c8_555, %c32_556] : memref<128x64xf32, #tpu.memory_space<vmem>>, vector<1x32xf32>
    tpu.vector_store %arg10[%c8_555, %c32_556], %469 {strides = array<i32>} : memref<128x64xf32, #tpu.memory_space<vmem>>, vector<1x32xf32>,
    %c5_557 = arith.constant 5 : index
    %c7_558 = arith.constant 7 : index
    %472 = memref.load %arg2[%c5_557, %c7_558] : memref<6x8xi32, #tpu.memory_space<smem>>
    %c64_i32_559 = arith.constant 64 : i32
    %473 = arith.addi %c64_i32_559, %472 : i32
    %474 = arith.index_cast %473 : i32 to index
    %c0_560 = arith.constant 0 : index
    %475 = vector.load %arg6[%474, %c0_560] : memref<128x32xf32, #tpu.memory_space<vmem>>, vector<1x32xf32>
    %c121_561 = arith.constant 121 : index
    %c0_562 = arith.constant 0 : index
    %476 = vector.load %arg10[%c121_561, %c0_562] : memref<128x64xf32, #tpu.memory_space<vmem>>, vector<1x32xf32>
    tpu.vector_store %arg10[%c121_561, %c0_562], %475 {strides = array<i32>} : memref<128x64xf32, #tpu.memory_space<vmem>>, vector<1x32xf32>,
    %c9_563 = arith.constant 9 : index
    %c32_564 = arith.constant 32 : index
    %477 = vector.load %arg10[%c9_563, %c32_564] : memref<128x64xf32, #tpu.memory_space<vmem>>, vector<1x32xf32>
    tpu.vector_store %arg10[%c9_563, %c32_564], %475 {strides = array<i32>} : memref<128x64xf32, #tpu.memory_space<vmem>>, vector<1x32xf32>,
    %c0_565 = arith.constant 0 : index
    %c0_566 = arith.constant 0 : index
    %478 = vector.load %arg10[%c0_565, %c0_566] : memref<128x64xf32, #tpu.memory_space<vmem>>, vector<128x64xf32>
    %cst_567 = arith.constant dense<0.000000e+00> : vector<128x192xf32>
    %479 = tpu.matmul %478, %0, %cst_567 {dimension_numbers = #tpu.dot_dimension_numbers<[1], [0], [0], [1], [0, 0, 1, 1], [], []>} : vector<128x64xf32>, vector<64x192xf32>, vector<128x192xf32> -> vector<128x192xf32>
    %480 = vector.broadcast %6 : vector<1x192xf32> to vector<128x192xf32>
    %481 = arith.addf %479, %480 : vector<128x192xf32>
    %cst_568 = arith.constant 0.000000e+00 : f32
    %482 = vector.broadcast %cst_568 : f32 to vector<16x64xf32>
    %cst_569 = arith.constant dense<0.000000e+00> : vector<16x192xf32>
    %483 = tpu.matmul %482, %1, %cst_569 {dimension_numbers = #tpu.dot_dimension_numbers<[1], [0], [0], [1], [0, 0, 1, 1], [], []>} : vector<16x64xf32>, vector<64x192xf32>, vector<16x192xf32> -> vector<16x192xf32>
    %484 = vector.broadcast %7 : vector<1x192xf32> to vector<16x192xf32>
    %485 = arith.addf %483, %484 : vector<16x192xf32>
    %486 = vector.extract_strided_slice %481 {offsets = [0, 0], sizes = [16, 192], strides = [1, 1]} : vector<128x192xf32> to vector<16x192xf32>
    %487 = vector.extract_strided_slice %486 {offsets = [0, 0], sizes = [16, 128], strides = [1, 1]} : vector<16x192xf32> to vector<16x128xf32>
    %488 = vector.extract_strided_slice %485 {offsets = [0, 0], sizes = [16, 128], strides = [1, 1]} : vector<16x192xf32> to vector<16x128xf32>
    %489 = arith.addf %487, %488 : vector<16x128xf32>
    %cst_570 = arith.constant 0.000000e+00 : f32
    %490 = vector.broadcast %cst_570 : f32 to vector<16x128xf32>
    %491 = arith.subf %490, %489 : vector<16x128xf32>
    %492 = math.exp %491 : vector<16x128xf32>
    %cst_571 = arith.constant 1.000000e+00 : f32
    %493 = vector.broadcast %cst_571 : f32 to vector<16x128xf32>
    %494 = arith.addf %493, %492 : vector<16x128xf32>
    %495 = tpu.reciprocal %494 {approx = true} : vector<16x128xf32> -> vector<16x128xf32>
    %496 = vector.extract_strided_slice %495 {offsets = [0, 0], sizes = [16, 64], strides = [1, 1]} : vector<16x128xf32> to vector<16x64xf32>
    %497 = vector.extract_strided_slice %495 {offsets = [0, 64], sizes = [16, 64], strides = [1, 1]} : vector<16x128xf32> to vector<16x64xf32>
    %498 = vector.extract_strided_slice %486 {offsets = [0, 128], sizes = [16, 64], strides = [1, 1]} : vector<16x192xf32> to vector<16x64xf32>
    %499 = vector.extract_strided_slice %485 {offsets = [0, 128], sizes = [16, 64], strides = [1, 1]} : vector<16x192xf32> to vector<16x64xf32>
    %500 = arith.mulf %496, %499 : vector<16x64xf32>
    %501 = arith.addf %498, %500 : vector<16x64xf32>
    %502 = math.tanh %501 : vector<16x64xf32>
    %cst_572 = arith.constant 1.000000e+00 : f32
    %503 = vector.broadcast %cst_572 : f32 to vector<16x64xf32>
    %504 = arith.subf %503, %497 : vector<16x64xf32>
    %505 = arith.mulf %504, %502 : vector<16x64xf32>
    %506 = arith.mulf %497, %482 : vector<16x64xf32>
    %507 = arith.addf %505, %506 : vector<16x64xf32>
    %508 = vector.extract_strided_slice %507 {offsets = [0, 0], sizes = [16, 32], strides = [1, 1]} : vector<16x64xf32> to vector<16x32xf32>
    %509 = vector.extract_strided_slice %507 {offsets = [0, 32], sizes = [16, 32], strides = [1, 1]} : vector<16x64xf32> to vector<16x32xf32>
    %c0_573 = arith.constant 0 : index
    %c0_574 = arith.constant 0 : index
    %510 = vector.load %arg11[%c0_573, %c0_574] : memref<128x128xf32, #tpu.memory_space<vmem>>, vector<16x32xf32>
    tpu.vector_store %arg11[%c0_573, %c0_574], %508 {strides = array<i32>} : memref<128x128xf32, #tpu.memory_space<vmem>>, vector<16x32xf32>,
    %c112_575 = arith.constant 112 : index
    %c32_576 = arith.constant 32 : index
    %511 = vector.load %arg11[%c112_575, %c32_576] : memref<128x128xf32, #tpu.memory_space<vmem>>, vector<16x32xf32>
    tpu.vector_store %arg11[%c112_575, %c32_576], %509 {strides = array<i32>} : memref<128x128xf32, #tpu.memory_space<vmem>>, vector<16x32xf32>,
    %c112_577 = arith.constant 112 : index
    %c64_578 = arith.constant 64 : index
    %512 = vector.load %arg11[%c112_577, %c64_578] : memref<128x128xf32, #tpu.memory_space<vmem>>, vector<16x32xf32>
    tpu.vector_store %arg11[%c112_577, %c64_578], %508 {strides = array<i32>} : memref<128x128xf32, #tpu.memory_space<vmem>>, vector<16x32xf32>,
    %c0_579 = arith.constant 0 : index
    %c96_580 = arith.constant 96 : index
    %513 = vector.load %arg11[%c0_579, %c96_580] : memref<128x128xf32, #tpu.memory_space<vmem>>, vector<16x32xf32>
    tpu.vector_store %arg11[%c0_579, %c96_580], %509 {strides = array<i32>} : memref<128x128xf32, #tpu.memory_space<vmem>>, vector<16x32xf32>,
    %cst_581 = arith.constant dense<0.000000e+00> : vector<16x192xf32>
    %514 = tpu.matmul %507, %1, %cst_581 {dimension_numbers = #tpu.dot_dimension_numbers<[1], [0], [0], [1], [0, 0, 1, 1], [], []>} : vector<16x64xf32>, vector<64x192xf32>, vector<16x192xf32> -> vector<16x192xf32>
    %515 = vector.broadcast %7 : vector<1x192xf32> to vector<16x192xf32>
    %516 = arith.addf %514, %515 : vector<16x192xf32>
    %517 = vector.extract_strided_slice %481 {offsets = [16, 0], sizes = [16, 192], strides = [1, 1]} : vector<128x192xf32> to vector<16x192xf32>
    %518 = vector.extract_strided_slice %517 {offsets = [0, 0], sizes = [16, 128], strides = [1, 1]} : vector<16x192xf32> to vector<16x128xf32>
    %519 = vector.extract_strided_slice %516 {offsets = [0, 0], sizes = [16, 128], strides = [1, 1]} : vector<16x192xf32> to vector<16x128xf32>
    %520 = arith.addf %518, %519 : vector<16x128xf32>
    %cst_582 = arith.constant 0.000000e+00 : f32
    %521 = vector.broadcast %cst_582 : f32 to vector<16x128xf32>
    %522 = arith.subf %521, %520 : vector<16x128xf32>
    %523 = math.exp %522 : vector<16x128xf32>
    %cst_583 = arith.constant 1.000000e+00 : f32
    %524 = vector.broadcast %cst_583 : f32 to vector<16x128xf32>
    %525 = arith.addf %524, %523 : vector<16x128xf32>
    %526 = tpu.reciprocal %525 {approx = true} : vector<16x128xf32> -> vector<16x128xf32>
    %527 = vector.extract_strided_slice %526 {offsets = [0, 0], sizes = [16, 64], strides = [1, 1]} : vector<16x128xf32> to vector<16x64xf32>
    %528 = vector.extract_strided_slice %526 {offsets = [0, 64], sizes = [16, 64], strides = [1, 1]} : vector<16x128xf32> to vector<16x64xf32>
    %529 = vector.extract_strided_slice %517 {offsets = [0, 128], sizes = [16, 64], strides = [1, 1]} : vector<16x192xf32> to vector<16x64xf32>
    %530 = vector.extract_strided_slice %516 {offsets = [0, 128], sizes = [16, 64], strides = [1, 1]} : vector<16x192xf32> to vector<16x64xf32>
    %531 = arith.mulf %527, %530 : vector<16x64xf32>
    %532 = arith.addf %529, %531 : vector<16x64xf32>
    %533 = math.tanh %532 : vector<16x64xf32>
    %cst_584 = arith.constant 1.000000e+00 : f32
    %534 = vector.broadcast %cst_584 : f32 to vector<16x64xf32>
    %535 = arith.subf %534, %528 : vector<16x64xf32>
    %536 = arith.mulf %535, %533 : vector<16x64xf32>
    %537 = arith.mulf %528, %507 : vector<16x64xf32>
    %538 = arith.addf %536, %537 : vector<16x64xf32>
    %539 = vector.extract_strided_slice %538 {offsets = [0, 0], sizes = [16, 32], strides = [1, 1]} : vector<16x64xf32> to vector<16x32xf32>
    %540 = vector.extract_strided_slice %538 {offsets = [0, 32], sizes = [16, 32], strides = [1, 1]} : vector<16x64xf32> to vector<16x32xf32>
    %c16_585 = arith.constant 16 : index
    %c0_586 = arith.constant 0 : index
    %541 = vector.load %arg11[%c16_585, %c0_586] : memref<128x128xf32, #tpu.memory_space<vmem>>, vector<16x32xf32>
    tpu.vector_store %arg11[%c16_585, %c0_586], %539 {strides = array<i32>} : memref<128x128xf32, #tpu.memory_space<vmem>>, vector<16x32xf32>,
    %c96_587 = arith.constant 96 : index
    %c32_588 = arith.constant 32 : index
    %542 = vector.load %arg11[%c96_587, %c32_588] : memref<128x128xf32, #tpu.memory_space<vmem>>, vector<16x32xf32>
    tpu.vector_store %arg11[%c96_587, %c32_588], %540 {strides = array<i32>} : memref<128x128xf32, #tpu.memory_space<vmem>>, vector<16x32xf32>,
    %c96_589 = arith.constant 96 : index
    %c64_590 = arith.constant 64 : index
    %543 = vector.load %arg11[%c96_589, %c64_590] : memref<128x128xf32, #tpu.memory_space<vmem>>, vector<16x32xf32>
    tpu.vector_store %arg11[%c96_589, %c64_590], %539 {strides = array<i32>} : memref<128x128xf32, #tpu.memory_space<vmem>>, vector<16x32xf32>,
    %c16_591 = arith.constant 16 : index
    %c96_592 = arith.constant 96 : index
    %544 = vector.load %arg11[%c16_591, %c96_592] : memref<128x128xf32, #tpu.memory_space<vmem>>, vector<16x32xf32>
    tpu.vector_store %arg11[%c16_591, %c96_592], %540 {strides = array<i32>} : memref<128x128xf32, #tpu.memory_space<vmem>>, vector<16x32xf32>,
    %cst_593 = arith.constant dense<0.000000e+00> : vector<16x192xf32>
    %545 = tpu.matmul %538, %1, %cst_593 {dimension_numbers = #tpu.dot_dimension_numbers<[1], [0], [0], [1], [0, 0, 1, 1], [], []>} : vector<16x64xf32>, vector<64x192xf32>, vector<16x192xf32> -> vector<16x192xf32>
    %546 = vector.broadcast %7 : vector<1x192xf32> to vector<16x192xf32>
    %547 = arith.addf %545, %546 : vector<16x192xf32>
    %548 = vector.extract_strided_slice %481 {offsets = [32, 0], sizes = [16, 192], strides = [1, 1]} : vector<128x192xf32> to vector<16x192xf32>
    %549 = vector.extract_strided_slice %548 {offsets = [0, 0], sizes = [16, 128], strides = [1, 1]} : vector<16x192xf32> to vector<16x128xf32>
    %550 = vector.extract_strided_slice %547 {offsets = [0, 0], sizes = [16, 128], strides = [1, 1]} : vector<16x192xf32> to vector<16x128xf32>
    %551 = arith.addf %549, %550 : vector<16x128xf32>
    %cst_594 = arith.constant 0.000000e+00 : f32
    %552 = vector.broadcast %cst_594 : f32 to vector<16x128xf32>
    %553 = arith.subf %552, %551 : vector<16x128xf32>
    %554 = math.exp %553 : vector<16x128xf32>
    %cst_595 = arith.constant 1.000000e+00 : f32
    %555 = vector.broadcast %cst_595 : f32 to vector<16x128xf32>
    %556 = arith.addf %555, %554 : vector<16x128xf32>
    %557 = tpu.reciprocal %556 {approx = true} : vector<16x128xf32> -> vector<16x128xf32>
    %558 = vector.extract_strided_slice %557 {offsets = [0, 0], sizes = [16, 64], strides = [1, 1]} : vector<16x128xf32> to vector<16x64xf32>
    %559 = vector.extract_strided_slice %557 {offsets = [0, 64], sizes = [16, 64], strides = [1, 1]} : vector<16x128xf32> to vector<16x64xf32>
    %560 = vector.extract_strided_slice %548 {offsets = [0, 128], sizes = [16, 64], strides = [1, 1]} : vector<16x192xf32> to vector<16x64xf32>
    %561 = vector.extract_strided_slice %547 {offsets = [0, 128], sizes = [16, 64], strides = [1, 1]} : vector<16x192xf32> to vector<16x64xf32>
    %562 = arith.mulf %558, %561 : vector<16x64xf32>
    %563 = arith.addf %560, %562 : vector<16x64xf32>
    %564 = math.tanh %563 : vector<16x64xf32>
    %cst_596 = arith.constant 1.000000e+00 : f32
    %565 = vector.broadcast %cst_596 : f32 to vector<16x64xf32>
    %566 = arith.subf %565, %559 : vector<16x64xf32>
    %567 = arith.mulf %566, %564 : vector<16x64xf32>
    %568 = arith.mulf %559, %538 : vector<16x64xf32>
    %569 = arith.addf %567, %568 : vector<16x64xf32>
    %570 = vector.extract_strided_slice %569 {offsets = [0, 0], sizes = [16, 32], strides = [1, 1]} : vector<16x64xf32> to vector<16x32xf32>
    %571 = vector.extract_strided_slice %569 {offsets = [0, 32], sizes = [16, 32], strides = [1, 1]} : vector<16x64xf32> to vector<16x32xf32>
    %c32_597 = arith.constant 32 : index
    %c0_598 = arith.constant 0 : index
    %572 = vector.load %arg11[%c32_597, %c0_598] : memref<128x128xf32, #tpu.memory_space<vmem>>, vector<16x32xf32>
    tpu.vector_store %arg11[%c32_597, %c0_598], %570 {strides = array<i32>} : memref<128x128xf32, #tpu.memory_space<vmem>>, vector<16x32xf32>,
    %c80_599 = arith.constant 80 : index
    %c32_600 = arith.constant 32 : index
    %573 = vector.load %arg11[%c80_599, %c32_600] : memref<128x128xf32, #tpu.memory_space<vmem>>, vector<16x32xf32>
    tpu.vector_store %arg11[%c80_599, %c32_600], %571 {strides = array<i32>} : memref<128x128xf32, #tpu.memory_space<vmem>>, vector<16x32xf32>,
    %c80_601 = arith.constant 80 : index
    %c64_602 = arith.constant 64 : index
    %574 = vector.load %arg11[%c80_601, %c64_602] : memref<128x128xf32, #tpu.memory_space<vmem>>, vector<16x32xf32>
    tpu.vector_store %arg11[%c80_601, %c64_602], %570 {strides = array<i32>} : memref<128x128xf32, #tpu.memory_space<vmem>>, vector<16x32xf32>,
    %c32_603 = arith.constant 32 : index
    %c96_604 = arith.constant 96 : index
    %575 = vector.load %arg11[%c32_603, %c96_604] : memref<128x128xf32, #tpu.memory_space<vmem>>, vector<16x32xf32>
    tpu.vector_store %arg11[%c32_603, %c96_604], %571 {strides = array<i32>} : memref<128x128xf32, #tpu.memory_space<vmem>>, vector<16x32xf32>,
    %cst_605 = arith.constant dense<0.000000e+00> : vector<16x192xf32>
    %576 = tpu.matmul %569, %1, %cst_605 {dimension_numbers = #tpu.dot_dimension_numbers<[1], [0], [0], [1], [0, 0, 1, 1], [], []>} : vector<16x64xf32>, vector<64x192xf32>, vector<16x192xf32> -> vector<16x192xf32>
    %577 = vector.broadcast %7 : vector<1x192xf32> to vector<16x192xf32>
    %578 = arith.addf %576, %577 : vector<16x192xf32>
    %579 = vector.extract_strided_slice %481 {offsets = [48, 0], sizes = [16, 192], strides = [1, 1]} : vector<128x192xf32> to vector<16x192xf32>
    %580 = vector.extract_strided_slice %579 {offsets = [0, 0], sizes = [16, 128], strides = [1, 1]} : vector<16x192xf32> to vector<16x128xf32>
    %581 = vector.extract_strided_slice %578 {offsets = [0, 0], sizes = [16, 128], strides = [1, 1]} : vector<16x192xf32> to vector<16x128xf32>
    %582 = arith.addf %580, %581 : vector<16x128xf32>
    %cst_606 = arith.constant 0.000000e+00 : f32
    %583 = vector.broadcast %cst_606 : f32 to vector<16x128xf32>
    %584 = arith.subf %583, %582 : vector<16x128xf32>
    %585 = math.exp %584 : vector<16x128xf32>
    %cst_607 = arith.constant 1.000000e+00 : f32
    %586 = vector.broadcast %cst_607 : f32 to vector<16x128xf32>
    %587 = arith.addf %586, %585 : vector<16x128xf32>
    %588 = tpu.reciprocal %587 {approx = true} : vector<16x128xf32> -> vector<16x128xf32>
    %589 = vector.extract_strided_slice %588 {offsets = [0, 0], sizes = [16, 64], strides = [1, 1]} : vector<16x128xf32> to vector<16x64xf32>
    %590 = vector.extract_strided_slice %588 {offsets = [0, 64], sizes = [16, 64], strides = [1, 1]} : vector<16x128xf32> to vector<16x64xf32>
    %591 = vector.extract_strided_slice %579 {offsets = [0, 128], sizes = [16, 64], strides = [1, 1]} : vector<16x192xf32> to vector<16x64xf32>
    %592 = vector.extract_strided_slice %578 {offsets = [0, 128], sizes = [16, 64], strides = [1, 1]} : vector<16x192xf32> to vector<16x64xf32>
    %593 = arith.mulf %589, %592 : vector<16x64xf32>
    %594 = arith.addf %591, %593 : vector<16x64xf32>
    %595 = math.tanh %594 : vector<16x64xf32>
    %cst_608 = arith.constant 1.000000e+00 : f32
    %596 = vector.broadcast %cst_608 : f32 to vector<16x64xf32>
    %597 = arith.subf %596, %590 : vector<16x64xf32>
    %598 = arith.mulf %597, %595 : vector<16x64xf32>
    %599 = arith.mulf %590, %569 : vector<16x64xf32>
    %600 = arith.addf %598, %599 : vector<16x64xf32>
    %601 = vector.extract_strided_slice %600 {offsets = [0, 0], sizes = [16, 32], strides = [1, 1]} : vector<16x64xf32> to vector<16x32xf32>
    %602 = vector.extract_strided_slice %600 {offsets = [0, 32], sizes = [16, 32], strides = [1, 1]} : vector<16x64xf32> to vector<16x32xf32>
    %c48_609 = arith.constant 48 : index
    %c0_610 = arith.constant 0 : index
    %603 = vector.load %arg11[%c48_609, %c0_610] : memref<128x128xf32, #tpu.memory_space<vmem>>, vector<16x32xf32>
    tpu.vector_store %arg11[%c48_609, %c0_610], %601 {strides = array<i32>} : memref<128x128xf32, #tpu.memory_space<vmem>>, vector<16x32xf32>,
    %c64_611 = arith.constant 64 : index
    %c32_612 = arith.constant 32 : index
    %604 = vector.load %arg11[%c64_611, %c32_612] : memref<128x128xf32, #tpu.memory_space<vmem>>, vector<16x32xf32>
    tpu.vector_store %arg11[%c64_611, %c32_612], %602 {strides = array<i32>} : memref<128x128xf32, #tpu.memory_space<vmem>>, vector<16x32xf32>,
    %c64_613 = arith.constant 64 : index
    %c64_614 = arith.constant 64 : index
    %605 = vector.load %arg11[%c64_613, %c64_614] : memref<128x128xf32, #tpu.memory_space<vmem>>, vector<16x32xf32>
    tpu.vector_store %arg11[%c64_613, %c64_614], %601 {strides = array<i32>} : memref<128x128xf32, #tpu.memory_space<vmem>>, vector<16x32xf32>,
    %c48_615 = arith.constant 48 : index
    %c96_616 = arith.constant 96 : index
    %606 = vector.load %arg11[%c48_615, %c96_616] : memref<128x128xf32, #tpu.memory_space<vmem>>, vector<16x32xf32>
    tpu.vector_store %arg11[%c48_615, %c96_616], %602 {strides = array<i32>} : memref<128x128xf32, #tpu.memory_space<vmem>>, vector<16x32xf32>,
    %cst_617 = arith.constant dense<0.000000e+00> : vector<16x192xf32>
    %607 = tpu.matmul %600, %1, %cst_617 {dimension_numbers = #tpu.dot_dimension_numbers<[1], [0], [0], [1], [0, 0, 1, 1], [], []>} : vector<16x64xf32>, vector<64x192xf32>, vector<16x192xf32> -> vector<16x192xf32>
    %608 = vector.broadcast %7 : vector<1x192xf32> to vector<16x192xf32>
    %609 = arith.addf %607, %608 : vector<16x192xf32>
    %610 = vector.extract_strided_slice %481 {offsets = [64, 0], sizes = [16, 192], strides = [1, 1]} : vector<128x192xf32> to vector<16x192xf32>
    %611 = vector.extract_strided_slice %610 {offsets = [0, 0], sizes = [16, 128], strides = [1, 1]} : vector<16x192xf32> to vector<16x128xf32>
    %612 = vector.extract_strided_slice %609 {offsets = [0, 0], sizes = [16, 128], strides = [1, 1]} : vector<16x192xf32> to vector<16x128xf32>
    %613 = arith.addf %611, %612 : vector<16x128xf32>
    %cst_618 = arith.constant 0.000000e+00 : f32
    %614 = vector.broadcast %cst_618 : f32 to vector<16x128xf32>
    %615 = arith.subf %614, %613 : vector<16x128xf32>
    %616 = math.exp %615 : vector<16x128xf32>
    %cst_619 = arith.constant 1.000000e+00 : f32
    %617 = vector.broadcast %cst_619 : f32 to vector<16x128xf32>
    %618 = arith.addf %617, %616 : vector<16x128xf32>
    %619 = tpu.reciprocal %618 {approx = true} : vector<16x128xf32> -> vector<16x128xf32>
    %620 = vector.extract_strided_slice %619 {offsets = [0, 0], sizes = [16, 64], strides = [1, 1]} : vector<16x128xf32> to vector<16x64xf32>
    %621 = vector.extract_strided_slice %619 {offsets = [0, 64], sizes = [16, 64], strides = [1, 1]} : vector<16x128xf32> to vector<16x64xf32>
    %622 = vector.extract_strided_slice %610 {offsets = [0, 128], sizes = [16, 64], strides = [1, 1]} : vector<16x192xf32> to vector<16x64xf32>
    %623 = vector.extract_strided_slice %609 {offsets = [0, 128], sizes = [16, 64], strides = [1, 1]} : vector<16x192xf32> to vector<16x64xf32>
    %624 = arith.mulf %620, %623 : vector<16x64xf32>
    %625 = arith.addf %622, %624 : vector<16x64xf32>
    %626 = math.tanh %625 : vector<16x64xf32>
    %cst_620 = arith.constant 1.000000e+00 : f32
    %627 = vector.broadcast %cst_620 : f32 to vector<16x64xf32>
    %628 = arith.subf %627, %621 : vector<16x64xf32>
    %629 = arith.mulf %628, %626 : vector<16x64xf32>
    %630 = arith.mulf %621, %600 : vector<16x64xf32>
    %631 = arith.addf %629, %630 : vector<16x64xf32>
    %632 = vector.extract_strided_slice %631 {offsets = [0, 0], sizes = [16, 32], strides = [1, 1]} : vector<16x64xf32> to vector<16x32xf32>
    %633 = vector.extract_strided_slice %631 {offsets = [0, 32], sizes = [16, 32], strides = [1, 1]} : vector<16x64xf32> to vector<16x32xf32>
    %c64_621 = arith.constant 64 : index
    %c0_622 = arith.constant 0 : index
    %634 = vector.load %arg11[%c64_621, %c0_622] : memref<128x128xf32, #tpu.memory_space<vmem>>, vector<16x32xf32>
    tpu.vector_store %arg11[%c64_621, %c0_622], %632 {strides = array<i32>} : memref<128x128xf32, #tpu.memory_space<vmem>>, vector<16x32xf32>,
    %c48_623 = arith.constant 48 : index
    %c32_624 = arith.constant 32 : index
    %635 = vector.load %arg11[%c48_623, %c32_624] : memref<128x128xf32, #tpu.memory_space<vmem>>, vector<16x32xf32>
    tpu.vector_store %arg11[%c48_623, %c32_624], %633 {strides = array<i32>} : memref<128x128xf32, #tpu.memory_space<vmem>>, vector<16x32xf32>,
    %c48_625 = arith.constant 48 : index
    %c64_626 = arith.constant 64 : index
    %636 = vector.load %arg11[%c48_625, %c64_626] : memref<128x128xf32, #tpu.memory_space<vmem>>, vector<16x32xf32>
    tpu.vector_store %arg11[%c48_625, %c64_626], %632 {strides = array<i32>} : memref<128x128xf32, #tpu.memory_space<vmem>>, vector<16x32xf32>,
    %c64_627 = arith.constant 64 : index
    %c96_628 = arith.constant 96 : index
    %637 = vector.load %arg11[%c64_627, %c96_628] : memref<128x128xf32, #tpu.memory_space<vmem>>, vector<16x32xf32>
    tpu.vector_store %arg11[%c64_627, %c96_628], %633 {strides = array<i32>} : memref<128x128xf32, #tpu.memory_space<vmem>>, vector<16x32xf32>,
    %cst_629 = arith.constant dense<0.000000e+00> : vector<16x192xf32>
    %638 = tpu.matmul %631, %1, %cst_629 {dimension_numbers = #tpu.dot_dimension_numbers<[1], [0], [0], [1], [0, 0, 1, 1], [], []>} : vector<16x64xf32>, vector<64x192xf32>, vector<16x192xf32> -> vector<16x192xf32>
    %639 = vector.broadcast %7 : vector<1x192xf32> to vector<16x192xf32>
    %640 = arith.addf %638, %639 : vector<16x192xf32>
    %641 = vector.extract_strided_slice %481 {offsets = [80, 0], sizes = [16, 192], strides = [1, 1]} : vector<128x192xf32> to vector<16x192xf32>
    %642 = vector.extract_strided_slice %641 {offsets = [0, 0], sizes = [16, 128], strides = [1, 1]} : vector<16x192xf32> to vector<16x128xf32>
    %643 = vector.extract_strided_slice %640 {offsets = [0, 0], sizes = [16, 128], strides = [1, 1]} : vector<16x192xf32> to vector<16x128xf32>
    %644 = arith.addf %642, %643 : vector<16x128xf32>
    %cst_630 = arith.constant 0.000000e+00 : f32
    %645 = vector.broadcast %cst_630 : f32 to vector<16x128xf32>
    %646 = arith.subf %645, %644 : vector<16x128xf32>
    %647 = math.exp %646 : vector<16x128xf32>
    %cst_631 = arith.constant 1.000000e+00 : f32
    %648 = vector.broadcast %cst_631 : f32 to vector<16x128xf32>
    %649 = arith.addf %648, %647 : vector<16x128xf32>
    %650 = tpu.reciprocal %649 {approx = true} : vector<16x128xf32> -> vector<16x128xf32>
    %651 = vector.extract_strided_slice %650 {offsets = [0, 0], sizes = [16, 64], strides = [1, 1]} : vector<16x128xf32> to vector<16x64xf32>
    %652 = vector.extract_strided_slice %650 {offsets = [0, 64], sizes = [16, 64], strides = [1, 1]} : vector<16x128xf32> to vector<16x64xf32>
    %653 = vector.extract_strided_slice %641 {offsets = [0, 128], sizes = [16, 64], strides = [1, 1]} : vector<16x192xf32> to vector<16x64xf32>
    %654 = vector.extract_strided_slice %640 {offsets = [0, 128], sizes = [16, 64], strides = [1, 1]} : vector<16x192xf32> to vector<16x64xf32>
    %655 = arith.mulf %651, %654 : vector<16x64xf32>
    %656 = arith.addf %653, %655 : vector<16x64xf32>
    %657 = math.tanh %656 : vector<16x64xf32>
    %cst_632 = arith.constant 1.000000e+00 : f32
    %658 = vector.broadcast %cst_632 : f32 to vector<16x64xf32>
    %659 = arith.subf %658, %652 : vector<16x64xf32>
    %660 = arith.mulf %659, %657 : vector<16x64xf32>
    %661 = arith.mulf %652, %631 : vector<16x64xf32>
    %662 = arith.addf %660, %661 : vector<16x64xf32>
    %663 = vector.extract_strided_slice %662 {offsets = [0, 0], sizes = [16, 32], strides = [1, 1]} : vector<16x64xf32> to vector<16x32xf32>
    %664 = vector.extract_strided_slice %662 {offsets = [0, 32], sizes = [16, 32], strides = [1, 1]} : vector<16x64xf32> to vector<16x32xf32>
    %c80_633 = arith.constant 80 : index
    %c0_634 = arith.constant 0 : index
    %665 = vector.load %arg11[%c80_633, %c0_634] : memref<128x128xf32, #tpu.memory_space<vmem>>, vector<16x32xf32>
    tpu.vector_store %arg11[%c80_633, %c0_634], %663 {strides = array<i32>} : memref<128x128xf32, #tpu.memory_space<vmem>>, vector<16x32xf32>,
    %c32_635 = arith.constant 32 : index
    %c32_636 = arith.constant 32 : index
    %666 = vector.load %arg11[%c32_635, %c32_636] : memref<128x128xf32, #tpu.memory_space<vmem>>, vector<16x32xf32>
    tpu.vector_store %arg11[%c32_635, %c32_636], %664 {strides = array<i32>} : memref<128x128xf32, #tpu.memory_space<vmem>>, vector<16x32xf32>,
    %c32_637 = arith.constant 32 : index
    %c64_638 = arith.constant 64 : index
    %667 = vector.load %arg11[%c32_637, %c64_638] : memref<128x128xf32, #tpu.memory_space<vmem>>, vector<16x32xf32>
    tpu.vector_store %arg11[%c32_637, %c64_638], %663 {strides = array<i32>} : memref<128x128xf32, #tpu.memory_space<vmem>>, vector<16x32xf32>,
    %c80_639 = arith.constant 80 : index
    %c96_640 = arith.constant 96 : index
    %668 = vector.load %arg11[%c80_639, %c96_640] : memref<128x128xf32, #tpu.memory_space<vmem>>, vector<16x32xf32>
    tpu.vector_store %arg11[%c80_639, %c96_640], %664 {strides = array<i32>} : memref<128x128xf32, #tpu.memory_space<vmem>>, vector<16x32xf32>,
    %cst_641 = arith.constant dense<0.000000e+00> : vector<16x192xf32>
    %669 = tpu.matmul %662, %1, %cst_641 {dimension_numbers = #tpu.dot_dimension_numbers<[1], [0], [0], [1], [0, 0, 1, 1], [], []>} : vector<16x64xf32>, vector<64x192xf32>, vector<16x192xf32> -> vector<16x192xf32>
    %670 = vector.broadcast %7 : vector<1x192xf32> to vector<16x192xf32>
    %671 = arith.addf %669, %670 : vector<16x192xf32>
    %672 = vector.extract_strided_slice %481 {offsets = [96, 0], sizes = [16, 192], strides = [1, 1]} : vector<128x192xf32> to vector<16x192xf32>
    %673 = vector.extract_strided_slice %672 {offsets = [0, 0], sizes = [16, 128], strides = [1, 1]} : vector<16x192xf32> to vector<16x128xf32>
    %674 = vector.extract_strided_slice %671 {offsets = [0, 0], sizes = [16, 128], strides = [1, 1]} : vector<16x192xf32> to vector<16x128xf32>
    %675 = arith.addf %673, %674 : vector<16x128xf32>
    %cst_642 = arith.constant 0.000000e+00 : f32
    %676 = vector.broadcast %cst_642 : f32 to vector<16x128xf32>
    %677 = arith.subf %676, %675 : vector<16x128xf32>
    %678 = math.exp %677 : vector<16x128xf32>
    %cst_643 = arith.constant 1.000000e+00 : f32
    %679 = vector.broadcast %cst_643 : f32 to vector<16x128xf32>
    %680 = arith.addf %679, %678 : vector<16x128xf32>
    %681 = tpu.reciprocal %680 {approx = true} : vector<16x128xf32> -> vector<16x128xf32>
    %682 = vector.extract_strided_slice %681 {offsets = [0, 0], sizes = [16, 64], strides = [1, 1]} : vector<16x128xf32> to vector<16x64xf32>
    %683 = vector.extract_strided_slice %681 {offsets = [0, 64], sizes = [16, 64], strides = [1, 1]} : vector<16x128xf32> to vector<16x64xf32>
    %684 = vector.extract_strided_slice %672 {offsets = [0, 128], sizes = [16, 64], strides = [1, 1]} : vector<16x192xf32> to vector<16x64xf32>
    %685 = vector.extract_strided_slice %671 {offsets = [0, 128], sizes = [16, 64], strides = [1, 1]} : vector<16x192xf32> to vector<16x64xf32>
    %686 = arith.mulf %682, %685 : vector<16x64xf32>
    %687 = arith.addf %684, %686 : vector<16x64xf32>
    %688 = math.tanh %687 : vector<16x64xf32>
    %cst_644 = arith.constant 1.000000e+00 : f32
    %689 = vector.broadcast %cst_644 : f32 to vector<16x64xf32>
    %690 = arith.subf %689, %683 : vector<16x64xf32>
    %691 = arith.mulf %690, %688 : vector<16x64xf32>
    %692 = arith.mulf %683, %662 : vector<16x64xf32>
    %693 = arith.addf %691, %692 : vector<16x64xf32>
    %694 = vector.extract_strided_slice %693 {offsets = [0, 0], sizes = [16, 32], strides = [1, 1]} : vector<16x64xf32> to vector<16x32xf32>
    %695 = vector.extract_strided_slice %693 {offsets = [0, 32], sizes = [16, 32], strides = [1, 1]} : vector<16x64xf32> to vector<16x32xf32>
    %c96_645 = arith.constant 96 : index
    %c0_646 = arith.constant 0 : index
    %696 = vector.load %arg11[%c96_645, %c0_646] : memref<128x128xf32, #tpu.memory_space<vmem>>, vector<16x32xf32>
    tpu.vector_store %arg11[%c96_645, %c0_646], %694 {strides = array<i32>} : memref<128x128xf32, #tpu.memory_space<vmem>>, vector<16x32xf32>,
    %c16_647 = arith.constant 16 : index
    %c32_648 = arith.constant 32 : index
    %697 = vector.load %arg11[%c16_647, %c32_648] : memref<128x128xf32, #tpu.memory_space<vmem>>, vector<16x32xf32>
    tpu.vector_store %arg11[%c16_647, %c32_648], %695 {strides = array<i32>} : memref<128x128xf32, #tpu.memory_space<vmem>>, vector<16x32xf32>,
    %c16_649 = arith.constant 16 : index
    %c64_650 = arith.constant 64 : index
    %698 = vector.load %arg11[%c16_649, %c64_650] : memref<128x128xf32, #tpu.memory_space<vmem>>, vector<16x32xf32>
    tpu.vector_store %arg11[%c16_649, %c64_650], %694 {strides = array<i32>} : memref<128x128xf32, #tpu.memory_space<vmem>>, vector<16x32xf32>,
    %c96_651 = arith.constant 96 : index
    %c96_652 = arith.constant 96 : index
    %699 = vector.load %arg11[%c96_651, %c96_652] : memref<128x128xf32, #tpu.memory_space<vmem>>, vector<16x32xf32>
    tpu.vector_store %arg11[%c96_651, %c96_652], %695 {strides = array<i32>} : memref<128x128xf32, #tpu.memory_space<vmem>>, vector<16x32xf32>,
    %cst_653 = arith.constant dense<0.000000e+00> : vector<16x192xf32>
    %700 = tpu.matmul %693, %1, %cst_653 {dimension_numbers = #tpu.dot_dimension_numbers<[1], [0], [0], [1], [0, 0, 1, 1], [], []>} : vector<16x64xf32>, vector<64x192xf32>, vector<16x192xf32> -> vector<16x192xf32>
    %701 = vector.broadcast %7 : vector<1x192xf32> to vector<16x192xf32>
    %702 = arith.addf %700, %701 : vector<16x192xf32>
    %703 = vector.extract_strided_slice %481 {offsets = [112, 0], sizes = [16, 192], strides = [1, 1]} : vector<128x192xf32> to vector<16x192xf32>
    %704 = vector.extract_strided_slice %703 {offsets = [0, 0], sizes = [16, 128], strides = [1, 1]} : vector<16x192xf32> to vector<16x128xf32>
    %705 = vector.extract_strided_slice %702 {offsets = [0, 0], sizes = [16, 128], strides = [1, 1]} : vector<16x192xf32> to vector<16x128xf32>
    %706 = arith.addf %704, %705 : vector<16x128xf32>
    %cst_654 = arith.constant 0.000000e+00 : f32
    %707 = vector.broadcast %cst_654 : f32 to vector<16x128xf32>
    %708 = arith.subf %707, %706 : vector<16x128xf32>
    %709 = math.exp %708 : vector<16x128xf32>
    %cst_655 = arith.constant 1.000000e+00 : f32
    %710 = vector.broadcast %cst_655 : f32 to vector<16x128xf32>
    %711 = arith.addf %710, %709 : vector<16x128xf32>
    %712 = tpu.reciprocal %711 {approx = true} : vector<16x128xf32> -> vector<16x128xf32>
    %713 = vector.extract_strided_slice %712 {offsets = [0, 0], sizes = [16, 64], strides = [1, 1]} : vector<16x128xf32> to vector<16x64xf32>
    %714 = vector.extract_strided_slice %712 {offsets = [0, 64], sizes = [16, 64], strides = [1, 1]} : vector<16x128xf32> to vector<16x64xf32>
    %715 = vector.extract_strided_slice %703 {offsets = [0, 128], sizes = [16, 64], strides = [1, 1]} : vector<16x192xf32> to vector<16x64xf32>
    %716 = vector.extract_strided_slice %702 {offsets = [0, 128], sizes = [16, 64], strides = [1, 1]} : vector<16x192xf32> to vector<16x64xf32>
    %717 = arith.mulf %713, %716 : vector<16x64xf32>
    %718 = arith.addf %715, %717 : vector<16x64xf32>
    %719 = math.tanh %718 : vector<16x64xf32>
    %cst_656 = arith.constant 1.000000e+00 : f32
    %720 = vector.broadcast %cst_656 : f32 to vector<16x64xf32>
    %721 = arith.subf %720, %714 : vector<16x64xf32>
    %722 = arith.mulf %721, %719 : vector<16x64xf32>
    %723 = arith.mulf %714, %693 : vector<16x64xf32>
    %724 = arith.addf %722, %723 : vector<16x64xf32>
    %725 = vector.extract_strided_slice %724 {offsets = [0, 0], sizes = [16, 32], strides = [1, 1]} : vector<16x64xf32> to vector<16x32xf32>
    %726 = vector.extract_strided_slice %724 {offsets = [0, 32], sizes = [16, 32], strides = [1, 1]} : vector<16x64xf32> to vector<16x32xf32>
    %c112_657 = arith.constant 112 : index
    %c0_658 = arith.constant 0 : index
    %727 = vector.load %arg11[%c112_657, %c0_658] : memref<128x128xf32, #tpu.memory_space<vmem>>, vector<16x32xf32>
    tpu.vector_store %arg11[%c112_657, %c0_658], %725 {strides = array<i32>} : memref<128x128xf32, #tpu.memory_space<vmem>>, vector<16x32xf32>,
    %c0_659 = arith.constant 0 : index
    %c32_660 = arith.constant 32 : index
    %728 = vector.load %arg11[%c0_659, %c32_660] : memref<128x128xf32, #tpu.memory_space<vmem>>, vector<16x32xf32>
    tpu.vector_store %arg11[%c0_659, %c32_660], %726 {strides = array<i32>} : memref<128x128xf32, #tpu.memory_space<vmem>>, vector<16x32xf32>,
    %c0_661 = arith.constant 0 : index
    %c64_662 = arith.constant 64 : index
    %729 = vector.load %arg11[%c0_661, %c64_662] : memref<128x128xf32, #tpu.memory_space<vmem>>, vector<16x32xf32>
    tpu.vector_store %arg11[%c0_661, %c64_662], %725 {strides = array<i32>} : memref<128x128xf32, #tpu.memory_space<vmem>>, vector<16x32xf32>,
    %c112_663 = arith.constant 112 : index
    %c96_664 = arith.constant 96 : index
    %730 = vector.load %arg11[%c112_663, %c96_664] : memref<128x128xf32, #tpu.memory_space<vmem>>, vector<16x32xf32>
    tpu.vector_store %arg11[%c112_663, %c96_664], %726 {strides = array<i32>} : memref<128x128xf32, #tpu.memory_space<vmem>>, vector<16x32xf32>,
    %c0_665 = arith.constant 0 : index
    %c0_666 = arith.constant 0 : index
    %731 = vector.load %arg11[%c0_665, %c0_666] : memref<128x128xf32, #tpu.memory_space<vmem>>, vector<128x128xf32>
    %cst_667 = arith.constant dense<0.000000e+00> : vector<128x192xf32>
    %732 = tpu.matmul %731, %2, %cst_667 {dimension_numbers = #tpu.dot_dimension_numbers<[1], [0], [0], [1], [0, 0, 1, 1], [], []>} : vector<128x128xf32>, vector<128x192xf32>, vector<128x192xf32> -> vector<128x192xf32>
    %733 = vector.broadcast %8 : vector<1x192xf32> to vector<128x192xf32>
    %734 = arith.addf %732, %733 : vector<128x192xf32>
    %cst_668 = arith.constant 0.000000e+00 : f32
    %735 = vector.broadcast %cst_668 : f32 to vector<16x64xf32>
    %cst_669 = arith.constant 0xFF800000 : f32
    %736 = vector.broadcast %cst_669 : f32 to vector<16x64xf32>
    %cst_670 = arith.constant dense<0.000000e+00> : vector<16x192xf32>
    %737 = tpu.matmul %735, %3, %cst_670 {dimension_numbers = #tpu.dot_dimension_numbers<[1], [0], [0], [1], [0, 0, 1, 1], [], []>} : vector<16x64xf32>, vector<64x192xf32>, vector<16x192xf32> -> vector<16x192xf32>
    %738 = vector.broadcast %9 : vector<1x192xf32> to vector<16x192xf32>
    %739 = arith.addf %737, %738 : vector<16x192xf32>
    %740 = vector.extract_strided_slice %734 {offsets = [0, 0], sizes = [16, 192], strides = [1, 1]} : vector<128x192xf32> to vector<16x192xf32>
    %741 = vector.extract_strided_slice %740 {offsets = [0, 0], sizes = [16, 128], strides = [1, 1]} : vector<16x192xf32> to vector<16x128xf32>
    %742 = vector.extract_strided_slice %739 {offsets = [0, 0], sizes = [16, 128], strides = [1, 1]} : vector<16x192xf32> to vector<16x128xf32>
    %743 = arith.addf %741, %742 : vector<16x128xf32>
    %cst_671 = arith.constant 0.000000e+00 : f32
    %744 = vector.broadcast %cst_671 : f32 to vector<16x128xf32>
    %745 = arith.subf %744, %743 : vector<16x128xf32>
    %746 = math.exp %745 : vector<16x128xf32>
    %cst_672 = arith.constant 1.000000e+00 : f32
    %747 = vector.broadcast %cst_672 : f32 to vector<16x128xf32>
    %748 = arith.addf %747, %746 : vector<16x128xf32>
    %749 = tpu.reciprocal %748 {approx = true} : vector<16x128xf32> -> vector<16x128xf32>
    %750 = vector.extract_strided_slice %749 {offsets = [0, 0], sizes = [16, 64], strides = [1, 1]} : vector<16x128xf32> to vector<16x64xf32>
    %751 = vector.extract_strided_slice %749 {offsets = [0, 64], sizes = [16, 64], strides = [1, 1]} : vector<16x128xf32> to vector<16x64xf32>
    %752 = vector.extract_strided_slice %740 {offsets = [0, 128], sizes = [16, 64], strides = [1, 1]} : vector<16x192xf32> to vector<16x64xf32>
    %753 = vector.extract_strided_slice %739 {offsets = [0, 128], sizes = [16, 64], strides = [1, 1]} : vector<16x192xf32> to vector<16x64xf32>
    %754 = arith.mulf %750, %753 : vector<16x64xf32>
    %755 = arith.addf %752, %754 : vector<16x64xf32>
    %756 = math.tanh %755 : vector<16x64xf32>
    %cst_673 = arith.constant 1.000000e+00 : f32
    %757 = vector.broadcast %cst_673 : f32 to vector<16x64xf32>
    %758 = arith.subf %757, %751 : vector<16x64xf32>
    %759 = arith.mulf %758, %756 : vector<16x64xf32>
    %760 = arith.mulf %751, %735 : vector<16x64xf32>
    %761 = arith.addf %759, %760 : vector<16x64xf32>
    %762 = arith.maximumf %736, %761 : vector<16x64xf32>
    %cst_674 = arith.constant dense<0.000000e+00> : vector<16x192xf32>
    %763 = tpu.matmul %761, %3, %cst_674 {dimension_numbers = #tpu.dot_dimension_numbers<[1], [0], [0], [1], [0, 0, 1, 1], [], []>} : vector<16x64xf32>, vector<64x192xf32>, vector<16x192xf32> -> vector<16x192xf32>
    %764 = vector.broadcast %9 : vector<1x192xf32> to vector<16x192xf32>
    %765 = arith.addf %763, %764 : vector<16x192xf32>
    %766 = vector.extract_strided_slice %734 {offsets = [16, 0], sizes = [16, 192], strides = [1, 1]} : vector<128x192xf32> to vector<16x192xf32>
    %767 = vector.extract_strided_slice %766 {offsets = [0, 0], sizes = [16, 128], strides = [1, 1]} : vector<16x192xf32> to vector<16x128xf32>
    %768 = vector.extract_strided_slice %765 {offsets = [0, 0], sizes = [16, 128], strides = [1, 1]} : vector<16x192xf32> to vector<16x128xf32>
    %769 = arith.addf %767, %768 : vector<16x128xf32>
    %cst_675 = arith.constant 0.000000e+00 : f32
    %770 = vector.broadcast %cst_675 : f32 to vector<16x128xf32>
    %771 = arith.subf %770, %769 : vector<16x128xf32>
    %772 = math.exp %771 : vector<16x128xf32>
    %cst_676 = arith.constant 1.000000e+00 : f32
    %773 = vector.broadcast %cst_676 : f32 to vector<16x128xf32>
    %774 = arith.addf %773, %772 : vector<16x128xf32>
    %775 = tpu.reciprocal %774 {approx = true} : vector<16x128xf32> -> vector<16x128xf32>
    %776 = vector.extract_strided_slice %775 {offsets = [0, 0], sizes = [16, 64], strides = [1, 1]} : vector<16x128xf32> to vector<16x64xf32>
    %777 = vector.extract_strided_slice %775 {offsets = [0, 64], sizes = [16, 64], strides = [1, 1]} : vector<16x128xf32> to vector<16x64xf32>
    %778 = vector.extract_strided_slice %766 {offsets = [0, 128], sizes = [16, 64], strides = [1, 1]} : vector<16x192xf32> to vector<16x64xf32>
    %779 = vector.extract_strided_slice %765 {offsets = [0, 128], sizes = [16, 64], strides = [1, 1]} : vector<16x192xf32> to vector<16x64xf32>
    %780 = arith.mulf %776, %779 : vector<16x64xf32>
    %781 = arith.addf %778, %780 : vector<16x64xf32>
    %782 = math.tanh %781 : vector<16x64xf32>
    %cst_677 = arith.constant 1.000000e+00 : f32
    %783 = vector.broadcast %cst_677 : f32 to vector<16x64xf32>
    %784 = arith.subf %783, %777 : vector<16x64xf32>
    %785 = arith.mulf %784, %782 : vector<16x64xf32>
    %786 = arith.mulf %777, %761 : vector<16x64xf32>
    %787 = arith.addf %785, %786 : vector<16x64xf32>
    %788 = arith.maximumf %762, %787 : vector<16x64xf32>
    %cst_678 = arith.constant dense<0.000000e+00> : vector<16x192xf32>
    %789 = tpu.matmul %787, %3, %cst_678 {dimension_numbers = #tpu.dot_dimension_numbers<[1], [0], [0], [1], [0, 0, 1, 1], [], []>} : vector<16x64xf32>, vector<64x192xf32>, vector<16x192xf32> -> vector<16x192xf32>
    %790 = vector.broadcast %9 : vector<1x192xf32> to vector<16x192xf32>
    %791 = arith.addf %789, %790 : vector<16x192xf32>
    %792 = vector.extract_strided_slice %734 {offsets = [32, 0], sizes = [16, 192], strides = [1, 1]} : vector<128x192xf32> to vector<16x192xf32>
    %793 = vector.extract_strided_slice %792 {offsets = [0, 0], sizes = [16, 128], strides = [1, 1]} : vector<16x192xf32> to vector<16x128xf32>
    %794 = vector.extract_strided_slice %791 {offsets = [0, 0], sizes = [16, 128], strides = [1, 1]} : vector<16x192xf32> to vector<16x128xf32>
    %795 = arith.addf %793, %794 : vector<16x128xf32>
    %cst_679 = arith.constant 0.000000e+00 : f32
    %796 = vector.broadcast %cst_679 : f32 to vector<16x128xf32>
    %797 = arith.subf %796, %795 : vector<16x128xf32>
    %798 = math.exp %797 : vector<16x128xf32>
    %cst_680 = arith.constant 1.000000e+00 : f32
    %799 = vector.broadcast %cst_680 : f32 to vector<16x128xf32>
    %800 = arith.addf %799, %798 : vector<16x128xf32>
    %801 = tpu.reciprocal %800 {approx = true} : vector<16x128xf32> -> vector<16x128xf32>
    %802 = vector.extract_strided_slice %801 {offsets = [0, 0], sizes = [16, 64], strides = [1, 1]} : vector<16x128xf32> to vector<16x64xf32>
    %803 = vector.extract_strided_slice %801 {offsets = [0, 64], sizes = [16, 64], strides = [1, 1]} : vector<16x128xf32> to vector<16x64xf32>
    %804 = vector.extract_strided_slice %792 {offsets = [0, 128], sizes = [16, 64], strides = [1, 1]} : vector<16x192xf32> to vector<16x64xf32>
    %805 = vector.extract_strided_slice %791 {offsets = [0, 128], sizes = [16, 64], strides = [1, 1]} : vector<16x192xf32> to vector<16x64xf32>
    %806 = arith.mulf %802, %805 : vector<16x64xf32>
    %807 = arith.addf %804, %806 : vector<16x64xf32>
    %808 = math.tanh %807 : vector<16x64xf32>
    %cst_681 = arith.constant 1.000000e+00 : f32
    %809 = vector.broadcast %cst_681 : f32 to vector<16x64xf32>
    %810 = arith.subf %809, %803 : vector<16x64xf32>
    %811 = arith.mulf %810, %808 : vector<16x64xf32>
    %812 = arith.mulf %803, %787 : vector<16x64xf32>
    %813 = arith.addf %811, %812 : vector<16x64xf32>
    %814 = arith.maximumf %788, %813 : vector<16x64xf32>
    %cst_682 = arith.constant dense<0.000000e+00> : vector<16x192xf32>
    %815 = tpu.matmul %813, %3, %cst_682 {dimension_numbers = #tpu.dot_dimension_numbers<[1], [0], [0], [1], [0, 0, 1, 1], [], []>} : vector<16x64xf32>, vector<64x192xf32>, vector<16x192xf32> -> vector<16x192xf32>
    %816 = vector.broadcast %9 : vector<1x192xf32> to vector<16x192xf32>
    %817 = arith.addf %815, %816 : vector<16x192xf32>
    %818 = vector.extract_strided_slice %734 {offsets = [48, 0], sizes = [16, 192], strides = [1, 1]} : vector<128x192xf32> to vector<16x192xf32>
    %819 = vector.extract_strided_slice %818 {offsets = [0, 0], sizes = [16, 128], strides = [1, 1]} : vector<16x192xf32> to vector<16x128xf32>
    %820 = vector.extract_strided_slice %817 {offsets = [0, 0], sizes = [16, 128], strides = [1, 1]} : vector<16x192xf32> to vector<16x128xf32>
    %821 = arith.addf %819, %820 : vector<16x128xf32>
    %cst_683 = arith.constant 0.000000e+00 : f32
    %822 = vector.broadcast %cst_683 : f32 to vector<16x128xf32>
    %823 = arith.subf %822, %821 : vector<16x128xf32>
    %824 = math.exp %823 : vector<16x128xf32>
    %cst_684 = arith.constant 1.000000e+00 : f32
    %825 = vector.broadcast %cst_684 : f32 to vector<16x128xf32>
    %826 = arith.addf %825, %824 : vector<16x128xf32>
    %827 = tpu.reciprocal %826 {approx = true} : vector<16x128xf32> -> vector<16x128xf32>
    %828 = vector.extract_strided_slice %827 {offsets = [0, 0], sizes = [16, 64], strides = [1, 1]} : vector<16x128xf32> to vector<16x64xf32>
    %829 = vector.extract_strided_slice %827 {offsets = [0, 64], sizes = [16, 64], strides = [1, 1]} : vector<16x128xf32> to vector<16x64xf32>
    %830 = vector.extract_strided_slice %818 {offsets = [0, 128], sizes = [16, 64], strides = [1, 1]} : vector<16x192xf32> to vector<16x64xf32>
    %831 = vector.extract_strided_slice %817 {offsets = [0, 128], sizes = [16, 64], strides = [1, 1]} : vector<16x192xf32> to vector<16x64xf32>
    %832 = arith.mulf %828, %831 : vector<16x64xf32>
    %833 = arith.addf %830, %832 : vector<16x64xf32>
    %834 = math.tanh %833 : vector<16x64xf32>
    %cst_685 = arith.constant 1.000000e+00 : f32
    %835 = vector.broadcast %cst_685 : f32 to vector<16x64xf32>
    %836 = arith.subf %835, %829 : vector<16x64xf32>
    %837 = arith.mulf %836, %834 : vector<16x64xf32>
    %838 = arith.mulf %829, %813 : vector<16x64xf32>
    %839 = arith.addf %837, %838 : vector<16x64xf32>
    %840 = arith.maximumf %814, %839 : vector<16x64xf32>
    %cst_686 = arith.constant dense<0.000000e+00> : vector<16x192xf32>
    %841 = tpu.matmul %839, %3, %cst_686 {dimension_numbers = #tpu.dot_dimension_numbers<[1], [0], [0], [1], [0, 0, 1, 1], [], []>} : vector<16x64xf32>, vector<64x192xf32>, vector<16x192xf32> -> vector<16x192xf32>
    %842 = vector.broadcast %9 : vector<1x192xf32> to vector<16x192xf32>
    %843 = arith.addf %841, %842 : vector<16x192xf32>
    %844 = vector.extract_strided_slice %734 {offsets = [64, 0], sizes = [16, 192], strides = [1, 1]} : vector<128x192xf32> to vector<16x192xf32>
    %845 = vector.extract_strided_slice %844 {offsets = [0, 0], sizes = [16, 128], strides = [1, 1]} : vector<16x192xf32> to vector<16x128xf32>
    %846 = vector.extract_strided_slice %843 {offsets = [0, 0], sizes = [16, 128], strides = [1, 1]} : vector<16x192xf32> to vector<16x128xf32>
    %847 = arith.addf %845, %846 : vector<16x128xf32>
    %cst_687 = arith.constant 0.000000e+00 : f32
    %848 = vector.broadcast %cst_687 : f32 to vector<16x128xf32>
    %849 = arith.subf %848, %847 : vector<16x128xf32>
    %850 = math.exp %849 : vector<16x128xf32>
    %cst_688 = arith.constant 1.000000e+00 : f32
    %851 = vector.broadcast %cst_688 : f32 to vector<16x128xf32>
    %852 = arith.addf %851, %850 : vector<16x128xf32>
    %853 = tpu.reciprocal %852 {approx = true} : vector<16x128xf32> -> vector<16x128xf32>
    %854 = vector.extract_strided_slice %853 {offsets = [0, 0], sizes = [16, 64], strides = [1, 1]} : vector<16x128xf32> to vector<16x64xf32>
    %855 = vector.extract_strided_slice %853 {offsets = [0, 64], sizes = [16, 64], strides = [1, 1]} : vector<16x128xf32> to vector<16x64xf32>
    %856 = vector.extract_strided_slice %844 {offsets = [0, 128], sizes = [16, 64], strides = [1, 1]} : vector<16x192xf32> to vector<16x64xf32>
    %857 = vector.extract_strided_slice %843 {offsets = [0, 128], sizes = [16, 64], strides = [1, 1]} : vector<16x192xf32> to vector<16x64xf32>
    %858 = arith.mulf %854, %857 : vector<16x64xf32>
    %859 = arith.addf %856, %858 : vector<16x64xf32>
    %860 = math.tanh %859 : vector<16x64xf32>
    %cst_689 = arith.constant 1.000000e+00 : f32
    %861 = vector.broadcast %cst_689 : f32 to vector<16x64xf32>
    %862 = arith.subf %861, %855 : vector<16x64xf32>
    %863 = arith.mulf %862, %860 : vector<16x64xf32>
    %864 = arith.mulf %855, %839 : vector<16x64xf32>
    %865 = arith.addf %863, %864 : vector<16x64xf32>
    %866 = arith.maximumf %840, %865 : vector<16x64xf32>
    %cst_690 = arith.constant dense<0.000000e+00> : vector<16x192xf32>
    %867 = tpu.matmul %865, %3, %cst_690 {dimension_numbers = #tpu.dot_dimension_numbers<[1], [0], [0], [1], [0, 0, 1, 1], [], []>} : vector<16x64xf32>, vector<64x192xf32>, vector<16x192xf32> -> vector<16x192xf32>
    %868 = vector.broadcast %9 : vector<1x192xf32> to vector<16x192xf32>
    %869 = arith.addf %867, %868 : vector<16x192xf32>
    %870 = vector.extract_strided_slice %734 {offsets = [80, 0], sizes = [16, 192], strides = [1, 1]} : vector<128x192xf32> to vector<16x192xf32>
    %871 = vector.extract_strided_slice %870 {offsets = [0, 0], sizes = [16, 128], strides = [1, 1]} : vector<16x192xf32> to vector<16x128xf32>
    %872 = vector.extract_strided_slice %869 {offsets = [0, 0], sizes = [16, 128], strides = [1, 1]} : vector<16x192xf32> to vector<16x128xf32>
    %873 = arith.addf %871, %872 : vector<16x128xf32>
    %cst_691 = arith.constant 0.000000e+00 : f32
    %874 = vector.broadcast %cst_691 : f32 to vector<16x128xf32>
    %875 = arith.subf %874, %873 : vector<16x128xf32>
    %876 = math.exp %875 : vector<16x128xf32>
    %cst_692 = arith.constant 1.000000e+00 : f32
    %877 = vector.broadcast %cst_692 : f32 to vector<16x128xf32>
    %878 = arith.addf %877, %876 : vector<16x128xf32>
    %879 = tpu.reciprocal %878 {approx = true} : vector<16x128xf32> -> vector<16x128xf32>
    %880 = vector.extract_strided_slice %879 {offsets = [0, 0], sizes = [16, 64], strides = [1, 1]} : vector<16x128xf32> to vector<16x64xf32>
    %881 = vector.extract_strided_slice %879 {offsets = [0, 64], sizes = [16, 64], strides = [1, 1]} : vector<16x128xf32> to vector<16x64xf32>
    %882 = vector.extract_strided_slice %870 {offsets = [0, 128], sizes = [16, 64], strides = [1, 1]} : vector<16x192xf32> to vector<16x64xf32>
    %883 = vector.extract_strided_slice %869 {offsets = [0, 128], sizes = [16, 64], strides = [1, 1]} : vector<16x192xf32> to vector<16x64xf32>
    %884 = arith.mulf %880, %883 : vector<16x64xf32>
    %885 = arith.addf %882, %884 : vector<16x64xf32>
    %886 = math.tanh %885 : vector<16x64xf32>
    %cst_693 = arith.constant 1.000000e+00 : f32
    %887 = vector.broadcast %cst_693 : f32 to vector<16x64xf32>
    %888 = arith.subf %887, %881 : vector<16x64xf32>
    %889 = arith.mulf %888, %886 : vector<16x64xf32>
    %890 = arith.mulf %881, %865 : vector<16x64xf32>
    %891 = arith.addf %889, %890 : vector<16x64xf32>
    %892 = arith.maximumf %866, %891 : vector<16x64xf32>
    %cst_694 = arith.constant dense<0.000000e+00> : vector<16x192xf32>
    %893 = tpu.matmul %891, %3, %cst_694 {dimension_numbers = #tpu.dot_dimension_numbers<[1], [0], [0], [1], [0, 0, 1, 1], [], []>} : vector<16x64xf32>, vector<64x192xf32>, vector<16x192xf32> -> vector<16x192xf32>
    %894 = vector.broadcast %9 : vector<1x192xf32> to vector<16x192xf32>
    %895 = arith.addf %893, %894 : vector<16x192xf32>
    %896 = vector.extract_strided_slice %734 {offsets = [96, 0], sizes = [16, 192], strides = [1, 1]} : vector<128x192xf32> to vector<16x192xf32>
    %897 = vector.extract_strided_slice %896 {offsets = [0, 0], sizes = [16, 128], strides = [1, 1]} : vector<16x192xf32> to vector<16x128xf32>
    %898 = vector.extract_strided_slice %895 {offsets = [0, 0], sizes = [16, 128], strides = [1, 1]} : vector<16x192xf32> to vector<16x128xf32>
    %899 = arith.addf %897, %898 : vector<16x128xf32>
    %cst_695 = arith.constant 0.000000e+00 : f32
    %900 = vector.broadcast %cst_695 : f32 to vector<16x128xf32>
    %901 = arith.subf %900, %899 : vector<16x128xf32>
    %902 = math.exp %901 : vector<16x128xf32>
    %cst_696 = arith.constant 1.000000e+00 : f32
    %903 = vector.broadcast %cst_696 : f32 to vector<16x128xf32>
    %904 = arith.addf %903, %902 : vector<16x128xf32>
    %905 = tpu.reciprocal %904 {approx = true} : vector<16x128xf32> -> vector<16x128xf32>
    %906 = vector.extract_strided_slice %905 {offsets = [0, 0], sizes = [16, 64], strides = [1, 1]} : vector<16x128xf32> to vector<16x64xf32>
    %907 = vector.extract_strided_slice %905 {offsets = [0, 64], sizes = [16, 64], strides = [1, 1]} : vector<16x128xf32> to vector<16x64xf32>
    %908 = vector.extract_strided_slice %896 {offsets = [0, 128], sizes = [16, 64], strides = [1, 1]} : vector<16x192xf32> to vector<16x64xf32>
    %909 = vector.extract_strided_slice %895 {offsets = [0, 128], sizes = [16, 64], strides = [1, 1]} : vector<16x192xf32> to vector<16x64xf32>
    %910 = arith.mulf %906, %909 : vector<16x64xf32>
    %911 = arith.addf %908, %910 : vector<16x64xf32>
    %912 = math.tanh %911 : vector<16x64xf32>
    %cst_697 = arith.constant 1.000000e+00 : f32
    %913 = vector.broadcast %cst_697 : f32 to vector<16x64xf32>
    %914 = arith.subf %913, %907 : vector<16x64xf32>
    %915 = arith.mulf %914, %912 : vector<16x64xf32>
    %916 = arith.mulf %907, %891 : vector<16x64xf32>
    %917 = arith.addf %915, %916 : vector<16x64xf32>
    %918 = arith.maximumf %892, %917 : vector<16x64xf32>
    %cst_698 = arith.constant dense<0.000000e+00> : vector<16x192xf32>
    %919 = tpu.matmul %917, %3, %cst_698 {dimension_numbers = #tpu.dot_dimension_numbers<[1], [0], [0], [1], [0, 0, 1, 1], [], []>} : vector<16x64xf32>, vector<64x192xf32>, vector<16x192xf32> -> vector<16x192xf32>
    %920 = vector.broadcast %9 : vector<1x192xf32> to vector<16x192xf32>
    %921 = arith.addf %919, %920 : vector<16x192xf32>
    %922 = vector.extract_strided_slice %734 {offsets = [112, 0], sizes = [16, 192], strides = [1, 1]} : vector<128x192xf32> to vector<16x192xf32>
    %923 = vector.extract_strided_slice %922 {offsets = [0, 0], sizes = [16, 128], strides = [1, 1]} : vector<16x192xf32> to vector<16x128xf32>
    %924 = vector.extract_strided_slice %921 {offsets = [0, 0], sizes = [16, 128], strides = [1, 1]} : vector<16x192xf32> to vector<16x128xf32>
    %925 = arith.addf %923, %924 : vector<16x128xf32>
    %cst_699 = arith.constant 0.000000e+00 : f32
    %926 = vector.broadcast %cst_699 : f32 to vector<16x128xf32>
    %927 = arith.subf %926, %925 : vector<16x128xf32>
    %928 = math.exp %927 : vector<16x128xf32>
    %cst_700 = arith.constant 1.000000e+00 : f32
    %929 = vector.broadcast %cst_700 : f32 to vector<16x128xf32>
    %930 = arith.addf %929, %928 : vector<16x128xf32>
    %931 = tpu.reciprocal %930 {approx = true} : vector<16x128xf32> -> vector<16x128xf32>
    %932 = vector.extract_strided_slice %931 {offsets = [0, 0], sizes = [16, 64], strides = [1, 1]} : vector<16x128xf32> to vector<16x64xf32>
    %933 = vector.extract_strided_slice %931 {offsets = [0, 64], sizes = [16, 64], strides = [1, 1]} : vector<16x128xf32> to vector<16x64xf32>
    %934 = vector.extract_strided_slice %922 {offsets = [0, 128], sizes = [16, 64], strides = [1, 1]} : vector<16x192xf32> to vector<16x64xf32>
    %935 = vector.extract_strided_slice %921 {offsets = [0, 128], sizes = [16, 64], strides = [1, 1]} : vector<16x192xf32> to vector<16x64xf32>
    %936 = arith.mulf %932, %935 : vector<16x64xf32>
    %937 = arith.addf %934, %936 : vector<16x64xf32>
    %938 = math.tanh %937 : vector<16x64xf32>
    %cst_701 = arith.constant 1.000000e+00 : f32
    %939 = vector.broadcast %cst_701 : f32 to vector<16x64xf32>
    %940 = arith.subf %939, %933 : vector<16x64xf32>
    %941 = arith.mulf %940, %938 : vector<16x64xf32>
    %942 = arith.mulf %933, %917 : vector<16x64xf32>
    %943 = arith.addf %941, %942 : vector<16x64xf32>
    %944 = arith.maximumf %918, %943 : vector<16x64xf32>
    %945 = vector.extract_strided_slice %944 {offsets = [0, 0], sizes = [2, 64], strides = [1, 1]} : vector<16x64xf32> to vector<2x64xf32>
    %946 = vector.extract_strided_slice %944 {offsets = [2, 0], sizes = [2, 64], strides = [1, 1]} : vector<16x64xf32> to vector<2x64xf32>
    %947 = vector.extract_strided_slice %944 {offsets = [4, 0], sizes = [3, 64], strides = [1, 1]} : vector<16x64xf32> to vector<3x64xf32>
    %948 = vector.extract_strided_slice %946 {offsets = [0, 0], sizes = [1, 64], strides = [1, 1]} : vector<2x64xf32> to vector<1x64xf32>
    %949 = vector.broadcast %948 : vector<1x64xf32> to vector<3x64xf32>
    %950 = arith.mulf %947, %949 : vector<3x64xf32>
    %cst_702 = arith.constant dense<0.000000e+00> : vector<3xf32>
    %951 = vector.multi_reduction <add>, %950, %cst_702 [1] : vector<3x64xf32> to vector<3xf32>
    %952 = vector.shape_cast %951 : vector<3xf32> to vector<3x1xf32>
    %cst_703 = arith.constant dense<0xFF800000> : vector<1xf32>
    %953 = vector.multi_reduction <maximumf>, %952, %cst_703 [0] : vector<3x1xf32> to vector<1xf32>
    %954 = vector.shape_cast %953 : vector<1xf32> to vector<1x1xf32>
    %955 = vector.broadcast %954 : vector<1x1xf32> to vector<3x1xf32>
    %956 = arith.subf %952, %955 : vector<3x1xf32>
    %957 = math.exp %956 : vector<3x1xf32>
    %cst_704 = arith.constant dense<0.000000e+00> : vector<1xf32>
    %958 = vector.multi_reduction <add>, %957, %cst_704 [0] : vector<3x1xf32> to vector<1xf32>
    %959 = vector.shape_cast %958 : vector<1xf32> to vector<1x1xf32>
    %960 = vector.broadcast %959 : vector<1x1xf32> to vector<3x1xf32>
    %961 = arith.divf %957, %960 : vector<3x1xf32>
    %962 = vector.broadcast %961 : vector<3x1xf32> to vector<3x64xf32>
    %963 = arith.mulf %962, %947 : vector<3x64xf32>
    %cst_705 = arith.constant dense<0.000000e+00> : vector<64xf32>
    %964 = vector.multi_reduction <add>, %963, %cst_705 [0] : vector<3x64xf32> to vector<64xf32>
    %965 = vector.shape_cast %964 : vector<64xf32> to vector<1x64xf32>
    %966 = vector.extract_strided_slice %944 {offsets = [7, 0], sizes = [3, 64], strides = [1, 1]} : vector<16x64xf32> to vector<3x64xf32>
    %967 = vector.extract_strided_slice %946 {offsets = [1, 0], sizes = [1, 64], strides = [1, 1]} : vector<2x64xf32> to vector<1x64xf32>
    %968 = vector.broadcast %967 : vector<1x64xf32> to vector<3x64xf32>
    %969 = arith.mulf %966, %968 : vector<3x64xf32>
    %cst_706 = arith.constant dense<0.000000e+00> : vector<3xf32>
    %970 = vector.multi_reduction <add>, %969, %cst_706 [1] : vector<3x64xf32> to vector<3xf32>
    %971 = vector.shape_cast %970 : vector<3xf32> to vector<3x1xf32>
    %cst_707 = arith.constant dense<0xFF800000> : vector<1xf32>
    %972 = vector.multi_reduction <maximumf>, %971, %cst_707 [0] : vector<3x1xf32> to vector<1xf32>
    %973 = vector.shape_cast %972 : vector<1xf32> to vector<1x1xf32>
    %974 = vector.broadcast %973 : vector<1x1xf32> to vector<3x1xf32>
    %975 = arith.subf %971, %974 : vector<3x1xf32>
    %976 = math.exp %975 : vector<3x1xf32>
    %cst_708 = arith.constant dense<0.000000e+00> : vector<1xf32>
    %977 = vector.multi_reduction <add>, %976, %cst_708 [0] : vector<3x1xf32> to vector<1xf32>
    %978 = vector.shape_cast %977 : vector<1xf32> to vector<1x1xf32>
    %979 = vector.broadcast %978 : vector<1x1xf32> to vector<3x1xf32>
    %980 = arith.divf %976, %979 : vector<3x1xf32>
    %981 = vector.broadcast %980 : vector<3x1xf32> to vector<3x64xf32>
    %982 = arith.mulf %981, %966 : vector<3x64xf32>
    %cst_709 = arith.constant dense<0.000000e+00> : vector<64xf32>
    %983 = vector.multi_reduction <add>, %982, %cst_709 [0] : vector<3x64xf32> to vector<64xf32>
    %984 = vector.shape_cast %983 : vector<64xf32> to vector<1x64xf32>
    %985 = tpu.concatenate %965, %984 in 0 : vector<1x64xf32>, vector<1x64xf32> -> vector<2x64xf32>
    %cst_710 = arith.constant dense<0.000000e+00> : vector<2x192xf32>
    %986 = tpu.matmul %985, %4, %cst_710 {dimension_numbers = #tpu.dot_dimension_numbers<[1], [0], [0], [1], [0, 0, 1, 1], [], []>} : vector<2x64xf32>, vector<64x192xf32>, vector<2x192xf32> -> vector<2x192xf32>
    %987 = vector.broadcast %10 : vector<1x192xf32> to vector<2x192xf32>
    %988 = arith.addf %986, %987 : vector<2x192xf32>
    %cst_711 = arith.constant dense<0.000000e+00> : vector<2x192xf32>
    %989 = tpu.matmul %946, %5, %cst_711 {dimension_numbers = #tpu.dot_dimension_numbers<[1], [0], [0], [1], [0, 0, 1, 1], [], []>} : vector<2x64xf32>, vector<64x192xf32>, vector<2x192xf32> -> vector<2x192xf32>
    %990 = vector.broadcast %11 : vector<1x192xf32> to vector<2x192xf32>
    %991 = arith.addf %989, %990 : vector<2x192xf32>
    %992 = vector.extract_strided_slice %988 {offsets = [0, 0], sizes = [2, 128], strides = [1, 1]} : vector<2x192xf32> to vector<2x128xf32>
    %993 = vector.extract_strided_slice %991 {offsets = [0, 0], sizes = [2, 128], strides = [1, 1]} : vector<2x192xf32> to vector<2x128xf32>
    %994 = arith.addf %992, %993 : vector<2x128xf32>
    %cst_712 = arith.constant 0.000000e+00 : f32
    %995 = vector.broadcast %cst_712 : f32 to vector<2x128xf32>
    %996 = arith.subf %995, %994 : vector<2x128xf32>
    %997 = math.exp %996 : vector<2x128xf32>
    %cst_713 = arith.constant 1.000000e+00 : f32
    %998 = vector.broadcast %cst_713 : f32 to vector<2x128xf32>
    %999 = arith.addf %998, %997 : vector<2x128xf32>
    %1000 = tpu.reciprocal %999 {approx = true} : vector<2x128xf32> -> vector<2x128xf32>
    %1001 = vector.extract_strided_slice %1000 {offsets = [0, 0], sizes = [2, 64], strides = [1, 1]} : vector<2x128xf32> to vector<2x64xf32>
    %1002 = vector.extract_strided_slice %1000 {offsets = [0, 64], sizes = [2, 64], strides = [1, 1]} : vector<2x128xf32> to vector<2x64xf32>
    %1003 = vector.extract_strided_slice %988 {offsets = [0, 128], sizes = [2, 64], strides = [1, 1]} : vector<2x192xf32> to vector<2x64xf32>
    %1004 = vector.extract_strided_slice %991 {offsets = [0, 128], sizes = [2, 64], strides = [1, 1]} : vector<2x192xf32> to vector<2x64xf32>
    %1005 = arith.mulf %1001, %1004 : vector<2x64xf32>
    %1006 = arith.addf %1003, %1005 : vector<2x64xf32>
    %1007 = math.tanh %1006 : vector<2x64xf32>
    %cst_714 = arith.constant 1.000000e+00 : f32
    %1008 = vector.broadcast %cst_714 : f32 to vector<2x64xf32>
    %1009 = arith.subf %1008, %1002 : vector<2x64xf32>
    %1010 = arith.mulf %1009, %1007 : vector<2x64xf32>
    %1011 = arith.mulf %1002, %946 : vector<2x64xf32>
    %1012 = arith.addf %1010, %1011 : vector<2x64xf32>
    %1013 = arith.addf %1012, %945 : vector<2x64xf32>
    %1014 = math.absf %1013 : vector<2x64xf32>
    %c6_715 = arith.constant 6 : index
    %c0_716 = arith.constant 0 : index
    %1015 = vector.load %arg8[%c6_715, %c0_716] : memref<16x192xf32, #tpu.memory_space<vmem>>, vector<1x64xf32>
    %c6_717 = arith.constant 6 : index
    %c64_718 = arith.constant 64 : index
    %1016 = vector.load %arg8[%c6_717, %c64_718] : memref<16x192xf32, #tpu.memory_space<vmem>>, vector<1x1xf32>
    %1017 = vector.broadcast %1015 : vector<1x64xf32> to vector<2x64xf32>
    %1018 = arith.mulf %1014, %1017 : vector<2x64xf32>
    %cst_719 = arith.constant dense<0.000000e+00> : vector<2xf32>
    %1019 = vector.multi_reduction <add>, %1018, %cst_719 [1] : vector<2x64xf32> to vector<2xf32>
    %1020 = vector.shape_cast %1019 : vector<2xf32> to vector<2x1xf32>
    %1021 = vector.broadcast %1016 : vector<1x1xf32> to vector<2x1xf32>
    %1022 = arith.addf %1020, %1021 : vector<2x1xf32>
    %cst_720 = arith.constant 0.000000e+00 : f32
    %1023 = vector.broadcast %cst_720 : f32 to vector<2x1xf32>
    %1024 = arith.subf %1023, %1022 : vector<2x1xf32>
    %1025 = math.exp %1024 : vector<2x1xf32>
    %cst_721 = arith.constant 1.000000e+00 : f32
    %1026 = vector.broadcast %cst_721 : f32 to vector<2x1xf32>
    %1027 = arith.addf %1026, %1025 : vector<2x1xf32>
    %cst_722 = arith.constant 1.000000e+00 : f32
    %1028 = vector.broadcast %cst_722 : f32 to vector<2x1xf32>
    %1029 = arith.divf %1028, %1027 : vector<2x1xf32>
    %1030 = arith.fptosi %1029 : vector<2x1xf32> to vector<2x1xi32>
    %1031 = arith.sitofp %1030 : vector<2x1xi32> to vector<2x1xf32>
    %c7_723 = arith.constant 7 : index
    %c0_724 = arith.constant 0 : index
    %1032 = vector.load %arg8[%c7_723, %c0_724] : memref<16x192xf32, #tpu.memory_space<vmem>>, vector<1x32xf32>
    %c8_725 = arith.constant 8 : index
    %c0_726 = arith.constant 0 : index
    %1033 = vector.load %arg8[%c8_725, %c0_726] : memref<16x192xf32, #tpu.memory_space<vmem>>, vector<1x32xf32>
    %c9_727 = arith.constant 9 : index
    %c0_728 = arith.constant 0 : index
    %1034 = vector.load %arg8[%c9_727, %c0_728] : memref<16x192xf32, #tpu.memory_space<vmem>>, vector<1x32xf32>
    %c10 = arith.constant 10 : index
    %c0_729 = arith.constant 0 : index
    %1035 = vector.load %arg8[%c10, %c0_729] : memref<16x192xf32, #tpu.memory_space<vmem>>, vector<1x32xf32>
    %c11 = arith.constant 11 : index
    %c0_730 = arith.constant 0 : index
    %1036 = vector.load %arg8[%c11, %c0_730] : memref<16x192xf32, #tpu.memory_space<vmem>>, vector<1x32xf32>
    %c12 = arith.constant 12 : index
    %c0_731 = arith.constant 0 : index
    %1037 = vector.load %arg8[%c12, %c0_731] : memref<16x192xf32, #tpu.memory_space<vmem>>, vector<1x32xf32>
    %c12_732 = arith.constant 12 : index
    %c32_733 = arith.constant 32 : index
    %1038 = vector.load %arg8[%c12_732, %c32_733] : memref<16x192xf32, #tpu.memory_space<vmem>>, vector<1x1xf32>
    %c0_734 = arith.constant 0 : index
    %1039 = memref.load %arg3[%c0_734] : memref<2xf32, #tpu.memory_space<smem>>
    %1040 = arith.fptosi %1039 : f32 to i32
    %1041 = arith.sitofp %1040 : i32 to f32
    %c0_735 = arith.constant 0 : index
    %1042 = memref.load %arg4[%c0_735] : memref<2xf32, #tpu.memory_space<smem>>
    %1043 = arith.fptosi %1042 : f32 to i32
    %1044 = arith.sitofp %1043 : i32 to f32
    %c0_736 = arith.constant 0 : index
    %1045 = memref.load %arg5[%c0_736] : memref<2xf32, #tpu.memory_space<smem>>
    %1046 = arith.fptosi %1045 : f32 to i32
    %1047 = arith.sitofp %1046 : i32 to f32
    %1048 = vector.broadcast %1041 : f32 to vector<1x32xf32>
    %1049 = arith.mulf %1048, %1033 : vector<1x32xf32>
    %1050 = vector.broadcast %1044 : f32 to vector<1x32xf32>
    %1051 = arith.mulf %1050, %1034 : vector<1x32xf32>
    %1052 = arith.addf %1049, %1051 : vector<1x32xf32>
    %1053 = vector.broadcast %1047 : f32 to vector<1x32xf32>
    %1054 = arith.mulf %1053, %1035 : vector<1x32xf32>
    %1055 = arith.addf %1052, %1054 : vector<1x32xf32>
    %c1_737 = arith.constant 1 : index
    %1056 = memref.load %arg3[%c1_737] : memref<2xf32, #tpu.memory_space<smem>>
    %1057 = arith.fptosi %1056 : f32 to i32
    %1058 = arith.sitofp %1057 : i32 to f32
    %c1_738 = arith.constant 1 : index
    %1059 = memref.load %arg4[%c1_738] : memref<2xf32, #tpu.memory_space<smem>>
    %1060 = arith.fptosi %1059 : f32 to i32
    %1061 = arith.sitofp %1060 : i32 to f32
    %c1_739 = arith.constant 1 : index
    %1062 = memref.load %arg5[%c1_739] : memref<2xf32, #tpu.memory_space<smem>>
    %1063 = arith.fptosi %1062 : f32 to i32
    %1064 = arith.sitofp %1063 : i32 to f32
    %1065 = vector.broadcast %1058 : f32 to vector<1x32xf32>
    %1066 = arith.mulf %1065, %1033 : vector<1x32xf32>
    %1067 = vector.broadcast %1061 : f32 to vector<1x32xf32>
    %1068 = arith.mulf %1067, %1034 : vector<1x32xf32>
    %1069 = arith.addf %1066, %1068 : vector<1x32xf32>
    %1070 = vector.broadcast %1064 : f32 to vector<1x32xf32>
    %1071 = arith.mulf %1070, %1035 : vector<1x32xf32>
    %1072 = arith.addf %1069, %1071 : vector<1x32xf32>
    %1073 = tpu.concatenate %1055, %1072 in 0 : vector<1x32xf32>, vector<1x32xf32> -> vector<2x32xf32>
    %1074 = vector.broadcast %1031 : vector<2x1xf32> to vector<2x32xf32>
    %1075 = vector.broadcast %1032 : vector<1x32xf32> to vector<2x32xf32>
    %1076 = arith.mulf %1074, %1075 : vector<2x32xf32>
    %1077 = arith.addf %1076, %1073 : vector<2x32xf32>
    %1078 = vector.broadcast %1036 : vector<1x32xf32> to vector<2x32xf32>
    %1079 = arith.addf %1077, %1078 : vector<2x32xf32>
    %cst_740 = arith.constant 0.000000e+00 : f32
    %1080 = vector.broadcast %cst_740 : f32 to vector<2x32xf32>
    %1081 = arith.maximumf %1079, %1080 : vector<2x32xf32>
    %1082 = vector.broadcast %1037 : vector<1x32xf32> to vector<2x32xf32>
    %1083 = arith.mulf %1081, %1082 : vector<2x32xf32>
    %cst_741 = arith.constant dense<0.000000e+00> : vector<2xf32>
    %1084 = vector.multi_reduction <add>, %1083, %cst_741 [1] : vector<2x32xf32> to vector<2xf32>
    %1085 = vector.shape_cast %1084 : vector<2xf32> to vector<2x1xf32>
    %1086 = vector.broadcast %1038 : vector<1x1xf32> to vector<2x1xf32>
    %1087 = arith.addf %1085, %1086 : vector<2x1xf32>
    %cst_742 = arith.constant 0.000000e+00 : f32
    %cst_743 = arith.constant 1.000000e+00 : f32
    %1088 = vector.broadcast %cst_742 : f32 to vector<2x1xf32>
    %1089 = arith.maximumf %1088, %1087 : vector<2x1xf32>
    %1090 = vector.broadcast %cst_743 : f32 to vector<2x1xf32>
    %1091 = arith.minimumf %1090, %1089 : vector<2x1xf32>
    %c0_744 = arith.constant 0 : index
    %c0_745 = arith.constant 0 : index
    %1092 = vector.load %arg9[%c0_744, %c0_745] : memref<2x1xf32, #tpu.memory_space<vmem>>, vector<2x1xf32>
    tpu.vector_store %arg9[%c0_744, %c0_745], %1091 {strides = array<i32>} : memref<2x1xf32, #tpu.memory_space<vmem>>, vector<2x1xf32>,
    return
  }
}

</mosaic_0001>

<llo_original>
// kernel: forward.1
$region0: #{forward.1}
  #allocation0 [shape = 'u32[]', space=smem, size = 0x4, offset = 0x4, fixed_abs, tag = 'smem constant byte address 0x4 - core index']
  #allocation1 [shape = 'u32[72,128]{1,0:T(1,128)}', space=vmem, size = 0x9000, scoped, tag = 'internal scratch']
  #allocation2 [shape = 'f32[128,64]{1,0:T(8,128)}', space=vmem, size = 0x10000, scoped, tag = 'scratch operand']
  #allocation3 [shape = 'f32[128,128]{1,0:T(8,128)}', space=vmem, size = 0x10000, scoped, tag = 'scratch operand']
  %s0 = inlined_call_operand.vmem [shape: s32[2,8], index: 0, kind: input, shape index: {}]
  %s1 = inlined_call_operand.vmem [shape: s32[2,8], index: 1, kind: input, shape index: {}]
  %s2 = inlined_call_operand.vmem [shape: s32[6,8], index: 2, kind: input, shape index: {}]
  %s3 = inlined_call_operand.vmem [shape: f32[2], index: 3, kind: input, shape index: {}]
  %s4 = inlined_call_operand.vmem [shape: f32[2], index: 4, kind: input, shape index: {}]
  %s5 = inlined_call_operand.vmem [shape: f32[2], index: 5, kind: input, shape index: {}]
  %s6 = inlined_call_operand.vmem [shape: f32[128,32], index: 6, kind: input, shape index: {}]
  %s7 = inlined_call_operand.vmem [shape: f32[448,192], index: 7, kind: input, shape index: {}]
  %s8 = inlined_call_operand.vmem [shape: f32[16,192], index: 8, kind: input, shape index: {}]
  %s9 = inlined_call_operand.vmem [shape: f32[2,1], index: 9, kind: output, shape index: {}]
  %s10 = sld [smem:[#allocation0]]
  $region70: #{forward.1} parent=0
    _
  %s12 = ssub.s32 1, %s10
  %s13 = scalar_select 0, %s12, %s10
  $region1: #{forward.1} parent=0
    #allocation4 [shape = 'u8[1024]{0}', space=smem, size = 0x400, scoped, tag = 'input window, operand 0, single buffered']
    #allocation5 [shape = 's32[1]{0}', space=sflag, size = 0x4, scoped, tag = 'scoped memory for forward.1']
    #allocation6 [shape = 'u8[1024]{0}', space=smem, size = 0x400, scoped, tag = 'input window, operand 1, single buffered']
    #allocation7 [shape = 's32[1]{0}', space=sflag, size = 0x4, scoped, tag = 'scoped memory for forward.1']
    #allocation8 [shape = 'u8[4096]{0}', space=smem, size = 0x1000, scoped, tag = 'input window, operand 2, single buffered']
    #allocation9 [shape = 'u8[512]{0}', space=smem, size = 0x200, scoped, tag = 'input window, operand 3, single buffered']
    #allocation10 [shape = 's32[1]{0}', space=sflag, size = 0x4, scoped, tag = 'scoped memory for forward.1']
    #allocation11 [shape = 'u8[512]{0}', space=smem, size = 0x200, scoped, tag = 'input window, operand 4, single buffered']
    #allocation12 [shape = 'u8[512]{0}', space=smem, size = 0x200, scoped, tag = 'input window, operand 5, single buffered']
    #allocation13 [shape = 's32[1]{0}', space=sflag, size = 0x4, scoped, tag = 'scoped memory for forward.1']
    %14 = vsyncpa [#allocation5], 0
    %15 = vsyncpa [#allocation7], 0
    %16 = vsyncpa [#allocation10], 0
    %17 = vsyncpa [#allocation13], 0
    // Predicated region
    $region2: #{forward.1} parent=1 // pred_check
      _
    $region3: #{forward.1} parent=1 // pred_check_branch
      %19 = sbr.rel (0) target = $region5
    $region4: #{forward.1} parent=1 // pred_region
      %21 = vsyncadd [#allocation5], 0
      %s23 = sshll.u32 %s0, 4
      %s24 = int_to_ptr.vmem [resolvable:$true] %s23
      %26 = dma.vmem_to_smem %s24, 32, [#allocation4], [#allocation5]
    $region5: #{forward.1} parent=1 // pred_fallthru
      _
    // Predicated region
    $region6: #{forward.1} parent=1 // pred_check
      _
    $region7: #{forward.1} parent=1 // pred_check_branch
      %28 = sbr.rel (0) target = $region9
    $region8: #{forward.1} parent=1 // pred_region
      %30 = vsyncadd [#allocation7], 0
      %s32 = sshll.u32 %s1, 4
      %s33 = int_to_ptr.vmem [resolvable:$true] %s32
      %35 = dma.vmem_to_smem %s33, 32, [#allocation6], [#allocation7]
    $region9: #{forward.1} parent=1 // pred_fallthru
      _
    // Predicated region
    $region10: #{forward.1} parent=1 // pred_check
      _
    $region11: #{forward.1} parent=1 // pred_check_branch
      %37 = sbr.rel (0) target = $region13
    $region12: #{forward.1} parent=1 // pred_region
      %39 = vsyncadd [#allocation7], 0
      %s41 = sshll.u32 %s2, 4
      %s42 = int_to_ptr.vmem [resolvable:$true] %s41
      %44 = dma.vmem_to_smem %s42, 128, [#allocation8], [#allocation7]
    $region13: #{forward.1} parent=1 // pred_fallthru
      _
    // Predicated region
    $region14: #{forward.1} parent=1 // pred_check
      _
    $region15: #{forward.1} parent=1 // pred_check_branch
      %46 = sbr.rel (0) target = $region17
    $region16: #{forward.1} parent=1 // pred_region
      %48 = vsyncadd [#allocation10], 0
      %s50 = sshll.u32 %s3, 4
      %s51 = int_to_ptr.vmem [resolvable:$true] %s50
      %53 = dma.vmem_to_smem %s51, 16, [#allocation9], [#allocation10]
    $region17: #{forward.1} parent=1 // pred_fallthru
      _
    // Predicated region
    $region18: #{forward.1} parent=1 // pred_check
      _
    $region19: #{forward.1} parent=1 // pred_check_branch
      %55 = sbr.rel (0) target = $region21
    $region20: #{forward.1} parent=1 // pred_region
      %57 = vsyncadd [#allocation10], 0
      %s59 = sshll.u32 %s4, 4
      %s60 = int_to_ptr.vmem [resolvable:$true] %s59
      %62 = dma.vmem_to_smem %s60, 16, [#allocation11], [#allocation10]
    $region21: #{forward.1} parent=1 // pred_fallthru
      _
    // Predicated region
    $region22: #{forward.1} parent=1 // pred_check
      _
    $region23: #{forward.1} parent=1 // pred_check_branch
      %64 = sbr.rel (0) target = $region25
    $region24: #{forward.1} parent=1 // pred_region
      %66 = vsyncadd [#allocation13], 0
      %s68 = sshll.u32 %s5, 4
      %s69 = int_to_ptr.vmem [resolvable:$true] %s68
      %71 = dma.vmem_to_smem %s69, 16, [#allocation12], [#allocation13]
    $region25: #{forward.1} parent=1 // pred_fallthru
      _
    // Predicated region
    $region26: #{forward.1} parent=1 // pred_check
      _
    $region27: #{forward.1} parent=1 // pred_check_branch
      %73 = sbr.rel (0) target = $region29
    $region28: #{forward.1} parent=1 // pred_region
      _
    $region29: #{forward.1} parent=1 // pred_fallthru
      _
    // Predicated region
    $region30: #{forward.1} parent=1 // pred_check
      _
    $region31: #{forward.1} parent=1 // pred_check_branch
      %75 = sbr.rel (0) target = $region33
    $region32: #{forward.1} parent=1 // pred_region
      _
    $region33: #{forward.1} parent=1 // pred_fallthru
      _
    // Predicated region
    $region34: #{forward.1} parent=1 // pred_check
      _
    $region35: #{forward.1} parent=1 // pred_check_branch
      %77 = sbr.rel (0) target = $region37
    $region36: #{forward.1} parent=1 // pred_region
      _
    $region37: #{forward.1} parent=1 // pred_fallthru
      _
    // Predicated region
    $region38: #{forward.1} parent=1 // pred_check
      _
    $region39: #{forward.1} parent=1 // pred_check_branch
      %79 = sbr.rel (0) target = $region41
    $region40: #{forward.1} parent=1 // pred_region
      %81 = dma.done [#allocation5], 32
    $region41: #{forward.1} parent=1 // pred_fallthru
      _
    // Predicated region
    $region42: #{forward.1} parent=1 // pred_check
      _
    $region43: #{forward.1} parent=1 // pred_check_branch
      %83 = sbr.rel (0) target = $region45
    $region44: #{forward.1} parent=1 // pred_region
      %85 = dma.done [#allocation7], 32
    $region45: #{forward.1} parent=1 // pred_fallthru
      _
    // Predicated region
    $region46: #{forward.1} parent=1 // pred_check
      _
    $region47: #{forward.1} parent=1 // pred_check_branch
      %87 = sbr.rel (0) target = $region49
    $region48: #{forward.1} parent=1 // pred_region
      %89 = dma.done [#allocation7], 128
    $region49: #{forward.1} parent=1 // pred_fallthru
      _
    // Predicated region
    $region50: #{forward.1} parent=1 // pred_check
      _
    $region51: #{forward.1} parent=1 // pred_check_branch
      %91 = sbr.rel (0) target = $region53
    $region52: #{forward.1} parent=1 // pred_region
      %93 = dma.done [#allocation10], 16
    $region53: #{forward.1} parent=1 // pred_fallthru
      _
    // Predicated region
    $region54: #{forward.1} parent=1 // pred_check
      _
    $region55: #{forward.1} parent=1 // pred_check_branch
      %95 = sbr.rel (0) target = $region57
    $region56: #{forward.1} parent=1 // pred_region
      %97 = dma.done [#allocation10], 16
    $region57: #{forward.1} parent=1 // pred_fallthru
      _
    // Predicated region
    $region58: #{forward.1} parent=1 // pred_check
      _
    $region59: #{forward.1} parent=1 // pred_check_branch
      %99 = sbr.rel (0) target = $region61
    $region60: #{forward.1} parent=1 // pred_region
      %101 = dma.done [#allocation13], 16
    $region61: #{forward.1} parent=1 // pred_fallthru
      _
    %102 = sfence
    %v103 = vld [vmem:[%s7] sm:$0xff]
    %v104 = vld [vmem:[%s7 + $0x8] sm:$0xff]
    %v105 = vld [vmem:[%s7 + $0x10] sm:$0xff]
    %v106 = vld [vmem:[%s7 + $0x18] sm:$0xff]
    %v107 = vld [vmem:[%s7 + $0x20] sm:$0xff]
    %v108 = vld [vmem:[%s7 + $0x28] sm:$0xff]
    %v109 = vld [vmem:[%s7 + $0x30] sm:$0xff]
    %v110 = vld [vmem:[%s7 + $0x38] sm:$0xff]
    %v111 = vld [vmem:[%s7 + $0x40] sm:$0xff]
    %v112 = vld [vmem:[%s7 + $0x48] sm:$0xff]
    %v113 = vld [vmem:[%s7 + $0x50] sm:$0xff]
    %v114 = vld [vmem:[%s7 + $0x58] sm:$0xff]
    %v115 = vld [vmem:[%s7 + $0x60] sm:$0xff]
    %v116 = vld [vmem:[%s7 + $0x68] sm:$0xff]
    %v117 = vld [vmem:[%s7 + $0x70] sm:$0xff]
    %v118 = vld [vmem:[%s7 + $0x78] sm:$0xff]
    %v119 = vld [vmem:[%s7 + $0x80] sm:$0xff]
    %v120 = vld [vmem:[%s7 + $0x88] sm:$0xff]
    %v121 = vld [vmem:[%s7 + $0x90] sm:$0xff]
    %v122 = vld [vmem:[%s7 + $0x98] sm:$0xff]
    %v123 = vld [vmem:[%s7 + $0xa0] sm:$0xff]
    %v124 = vld [vmem:[%s7 + $0xa8] sm:$0xff]
    %v125 = vld [vmem:[%s7 + $0xb0] sm:$0xff]
    %v126 = vld [vmem:[%s7 + $0xb8] sm:$0xff]
    %v127 = vld [vmem:[%s7 + $0xc0] sm:$0xff]
    %v128 = vld [vmem:[%s7 + $0xc8] sm:$0xff]
    %v129 = vld [vmem:[%s7 + $0xd0] sm:$0xff]
    %v130 = vld [vmem:[%s7 + $0xd8] sm:$0xff]
    %v131 = vld [vmem:[%s7 + $0xe0] sm:$0xff]
    %v132 = vld [vmem:[%s7 + $0xe8] sm:$0xff]
    %v133 = vld [vmem:[%s7 + $0xf0] sm:$0xff]
    %v134 = vld [vmem:[%s7 + $0xf8] sm:$0xff]
    %v135 = vld [vmem:[%s7 + $0x100] sm:$0xff]
    %v136 = vld [vmem:[%s7 + $0x108] sm:$0xff]
    %v137 = vld [vmem:[%s7 + $0x110] sm:$0xff]
    %v138 = vld [vmem:[%s7 + $0x118] sm:$0xff]
    %v139 = vld [vmem:[%s7 + $0x120] sm:$0xff]
    %v140 = vld [vmem:[%s7 + $0x128] sm:$0xff]
    %v141 = vld [vmem:[%s7 + $0x130] sm:$0xff]
    %v142 = vld [vmem:[%s7 + $0x138] sm:$0xff]
    %v143 = vld [vmem:[%s7 + $0x140] sm:$0xff]
    %v144 = vld [vmem:[%s7 + $0x148] sm:$0xff]
    %v145 = vld [vmem:[%s7 + $0x150] sm:$0xff]
    %v146 = vld [vmem:[%s7 + $0x158] sm:$0xff]
    %v147 = vld [vmem:[%s7 + $0x160] sm:$0xff]
    %v148 = vld [vmem:[%s7 + $0x168] sm:$0xff]
    %v149 = vld [vmem:[%s7 + $0x170] sm:$0xff]
    %v150 = vld [vmem:[%s7 + $0x178] sm:$0xff]
    %v151 = vld [vmem:[%s7 + $0x180] sm:$0xff]
    %v152 = vld [vmem:[%s7 + $0x188] sm:$0xff]
    %v153 = vld [vmem:[%s7 + $0x190] sm:$0xff]
    %v154 = vld [vmem:[%s7 + $0x198] sm:$0xff]
    %v155 = vld [vmem:[%s7 + $0x1a0] sm:$0xff]
    %v156 = vld [vmem:[%s7 + $0x1a8] sm:$0xff]
    %v157 = vld [vmem:[%s7 + $0x1b0] sm:$0xff]
    %v158 = vld [vmem:[%s7 + $0x1b8] sm:$0xff]
    %v159 = vld [vmem:[%s7 + $0x1c0] sm:$0xff]
    %v160 = vld [vmem:[%s7 + $0x1c8] sm:$0xff]
    %v161 = vld [vmem:[%s7 + $0x1d0] sm:$0xff]
    %v162 = vld [vmem:[%s7 + $0x1d8] sm:$0xff]
    %v163 = vld [vmem:[%s7 + $0x1e0] sm:$0xff]
    %v164 = vld [vmem:[%s7 + $0x1e8] sm:$0xff]
    %v165 = vld [vmem:[%s7 + $0x1f0] sm:$0xff]
    %v166 = vld [vmem:[%s7 + $0x1f8] sm:$0xff]
    %v167 = vld [vmem:[%s7 + $0x200] sm:$0xff]
    %v168 = vld [vmem:[%s7 + $0x208] sm:$0xff]
    %v169 = vld [vmem:[%s7 + $0x210] sm:$0xff]
    %v170 = vld [vmem:[%s7 + $0x218] sm:$0xff]
    %v171 = vld [vmem:[%s7 + $0x220] sm:$0xff]
    %v172 = vld [vmem:[%s7 + $0x228] sm:$0xff]
    %v173 = vld [vmem:[%s7 + $0x230] sm:$0xff]
    %v174 = vld [vmem:[%s7 + $0x238] sm:$0xff]
    %v175 = vld [vmem:[%s7 + $0x240] sm:$0xff]
    %v176 = vld [vmem:[%s7 + $0x248] sm:$0xff]
    %v177 = vld [vmem:[%s7 + $0x250] sm:$0xff]
    %v178 = vld [vmem:[%s7 + $0x258] sm:$0xff]
    %v179 = vld [vmem:[%s7 + $0x260] sm:$0xff]
    %v180 = vld [vmem:[%s7 + $0x268] sm:$0xff]
    %v181 = vld [vmem:[%s7 + $0x270] sm:$0xff]
    %v182 = vld [vmem:[%s7 + $0x278] sm:$0xff]
    %v183 = vld [vmem:[%s7 + $0x280] sm:$0xff]
    %v184 = vld [vmem:[%s7 + $0x288] sm:$0xff]
    %v185 = vld [vmem:[%s7 + $0x290] sm:$0xff]
    %v186 = vld [vmem:[%s7 + $0x298] sm:$0xff]
    %v187 = vld [vmem:[%s7 + $0x2a0] sm:$0xff]
    %v188 = vld [vmem:[%s7 + $0x2a8] sm:$0xff]
    %v189 = vld [vmem:[%s7 + $0x2b0] sm:$0xff]
    %v190 = vld [vmem:[%s7 + $0x2b8] sm:$0xff]
    %v191 = vld [vmem:[%s7 + $0x2c0] sm:$0xff]
    %v192 = vld [vmem:[%s7 + $0x2c8] sm:$0xff]
    %v193 = vld [vmem:[%s7 + $0x2d0] sm:$0xff]
    %v194 = vld [vmem:[%s7 + $0x2d8] sm:$0xff]
    %v195 = vld [vmem:[%s7 + $0x2e0] sm:$0xff]
    %v196 = vld [vmem:[%s7 + $0x2e8] sm:$0xff]
    %v197 = vld [vmem:[%s7 + $0x2f0] sm:$0xff]
    %v198 = vld [vmem:[%s7 + $0x2f8] sm:$0xff]
    %v199 = vld [vmem:[%s7 + $0x300] sm:$0xff]
    %v200 = vld [vmem:[%s7 + $0x308] sm:$0xff]
    %v201 = vld [vmem:[%s7 + $0x310] sm:$0xff]
    %v202 = vld [vmem:[%s7 + $0x318] sm:$0xff]
    %v203 = vld [vmem:[%s7 + $0x320] sm:$0xff]
    %v204 = vld [vmem:[%s7 + $0x328] sm:$0xff]
    %v205 = vld [vmem:[%s7 + $0x330] sm:$0xff]
    %v206 = vld [vmem:[%s7 + $0x338] sm:$0xff]
    %v207 = vld [vmem:[%s7 + $0x340] sm:$0xff]
    %v208 = vld [vmem:[%s7 + $0x348] sm:$0xff]
    %v209 = vld [vmem:[%s7 + $0x350] sm:$0xff]
    %v210 = vld [vmem:[%s7 + $0x358] sm:$0xff]
    %v211 = vld [vmem:[%s7 + $0x360] sm:$0xff]
    %v212 = vld [vmem:[%s7 + $0x368] sm:$0xff]
    %v213 = vld [vmem:[%s7 + $0x370] sm:$0xff]
    %v214 = vld [vmem:[%s7 + $0x378] sm:$0xff]
    %v215 = vld [vmem:[%s8] ss:$8 sm:$0x3]
    %s216 = scalar_lea.vmem %s8, 1
    %v217 = vld [vmem:[%s216] ss:$8 sm:$0x3]
    %s218 = scalar_lea.vmem %s8, 2
    %v219 = vld [vmem:[%s218] ss:$8 sm:$0x3]
    %s220 = scalar_lea.vmem %s8, 3
    %v221 = vld [vmem:[%s220] ss:$8 sm:$0x3]
    %s222 = scalar_lea.vmem %s8, 4
    %v223 = vld [vmem:[%s222] ss:$8 sm:$0x3]
    %s224 = scalar_lea.vmem %s8, 5
    %v225 = vld [vmem:[%s224] ss:$8 sm:$0x3]
    %vm226 = vcmask 523264
    %227 = vst.msk [vmem:[#allocation2] sm:$0xff] %vm226, 0.0
    %228 = vst.msk [vmem:[#allocation2 + $0x8] sm:$0xff] %vm226, 0.0
    %229 = vst.msk [vmem:[#allocation2 + $0x10] sm:$0xff] %vm226, 0.0
    %230 = vst.msk [vmem:[#allocation2 + $0x18] sm:$0xff] %vm226, 0.0
    %231 = vst.msk [vmem:[#allocation2 + $0x20] sm:$0xff] %vm226, 0.0
    %232 = vst.msk [vmem:[#allocation2 + $0x28] sm:$0xff] %vm226, 0.0
    %233 = vst.msk [vmem:[#allocation2 + $0x30] sm:$0xff] %vm226, 0.0
    %234 = vst.msk [vmem:[#allocation2 + $0x38] sm:$0xff] %vm226, 0.0
    %235 = vst.msk [vmem:[#allocation2 + $0x40] sm:$0xff] %vm226, 0.0
    %236 = vst.msk [vmem:[#allocation2 + $0x48] sm:$0xff] %vm226, 0.0
    %237 = vst.msk [vmem:[#allocation2 + $0x50] sm:$0xff] %vm226, 0.0
    %238 = vst.msk [vmem:[#allocation2 + $0x58] sm:$0xff] %vm226, 0.0
    %239 = vst.msk [vmem:[#allocation2 + $0x60] sm:$0xff] %vm226, 0.0
    %240 = vst.msk [vmem:[#allocation2 + $0x68] sm:$0xff] %vm226, 0.0
    %241 = vst.msk [vmem:[#allocation2 + $0x70] sm:$0xff] %vm226, 0.0
    %242 = vst.msk [vmem:[#allocation2 + $0x78] sm:$0xff] %vm226, 0.0
    %s243 = sld [smem:[#allocation4]]
    %s244 = scalar_lea.vmem %s6, %s243
    %v245 = vld [vmem:[%s244] sm:$0x1]
    %vm246 = vcmask 253952
    %247 = vst.msk [vmem:[#allocation2] sm:$0x1] %vm246, %v245
    %249 = vrot.lane.b32.xlu0 %v245, 32
    %v250 = vpop.permute.xlu0 %249
    %vm252 = vcmask 516352
    %253 = vst.msk [vmem:[#allocation2 + $0x70] sm:$0x1] %vm252, %v250
    %s254 = sld [smem:[#allocation4 + $0x80]]
    %s255 = scalar_lea.vmem %s6, %s254
    %v256 = vld [vmem:[%s255] sm:$0x1]
    %257 = vst.msk [vmem:[#allocation2 + $0x1] sm:$0x1] %vm246, %v256
    %259 = vrot.lane.b32.xlu0 %v256, 32
    %v260 = vpop.permute.xlu0 %259
    %262 = vst.msk [vmem:[#allocation2 + $0x71] sm:$0x1] %vm252, %v260
    %s263 = sld [smem:[#allocation6]]
    %s264 = sadd.s32 %s263, 64
    %s265 = scalar_lea.vmem %s6, %s264
    %v266 = vld [vmem:[%s265] sm:$0x1]
    %267 = vst.msk [vmem:[#allocation2 + $0x2] sm:$0x1] %vm246, %v266
    %269 = vrot.lane.b32.xlu0 %v266, 32
    %v270 = vpop.permute.xlu0 %269
    %272 = vst.msk [vmem:[#allocation2 + $0x72] sm:$0x1] %vm252, %v270
    %s273 = sld [smem:[#allocation6 + $0x80]]
    %s274 = sadd.s32 %s273, 64
    %s275 = scalar_lea.vmem %s6, %s274
    %v276 = vld [vmem:[%s275] sm:$0x1]
    %277 = vst.msk [vmem:[#allocation2 + $0x3] sm:$0x1] %vm246, %v276
    %279 = vrot.lane.b32.xlu0 %v276, 32
    %v280 = vpop.permute.xlu0 %279
    %282 = vst.msk [vmem:[#allocation2 + $0x73] sm:$0x1] %vm252, %v280
    %s283 = sld [smem:[#allocation8]]
    %s284 = sadd.s32 %s283, 64
    %s285 = scalar_lea.vmem %s6, %s284
    %v286 = vld [vmem:[%s285] sm:$0x1]
    %287 = vst.msk [vmem:[#allocation2 + $0x4] sm:$0x1] %vm246, %v286
    %289 = vrot.lane.b32.xlu0 %v286, 32
    %v290 = vpop.permute.xlu0 %289
    %292 = vst.msk [vmem:[#allocation2 + $0x74] sm:$0x1] %vm252, %v290
    %s293 = sld [smem:[#allocation8 + $0x80]]
    %s294 = sadd.s32 %s293, 64
    %s295 = scalar_lea.vmem %s6, %s294
    %v296 = vld [vmem:[%s295] sm:$0x1]
    %297 = vst.msk [vmem:[#allocation2 + $0x5] sm:$0x1] %vm246, %v296
    %299 = vrot.lane.b32.xlu0 %v296, 32
    %v300 = vpop.permute.xlu0 %299
    %302 = vst.msk [vmem:[#allocation2 + $0x75] sm:$0x1] %vm252, %v300
    %s303 = sld [smem:[#allocation8 + $0x100]]
    %s304 = sadd.s32 %s303, 64
    %s305 = scalar_lea.vmem %s6, %s304
    %v306 = vld [vmem:[%s305] sm:$0x1]
    %307 = vst.msk [vmem:[#allocation2 + $0x6] sm:$0x1] %vm246, %v306
    %309 = vrot.lane.b32.xlu0 %v306, 32
    %v310 = vpop.permute.xlu0 %309
    %312 = vst.msk [vmem:[#allocation2 + $0x76] sm:$0x1] %vm252, %v310
    %s313 = sld [smem:[#allocation8 + $0x180]]
    %s314 = sadd.s32 %s313, 64
    %s315 = scalar_lea.vmem %s6, %s314
    %v316 = vld [vmem:[%s315] sm:$0x1]
    %317 = vst.msk [vmem:[#allocation2 + $0x7] sm:$0x1] %vm246, %v316
    %319 = vrot.lane.b32.xlu0 %v316, 32
    %v320 = vpop.permute.xlu0 %319
    %322 = vst.msk [vmem:[#allocation2 + $0x77] sm:$0x1] %vm252, %v320
    %s323 = sld [smem:[#allocation8 + $0x200]]
    %s324 = sadd.s32 %s323, 64
    %s325 = scalar_lea.vmem %s6, %s324
    %v326 = vld [vmem:[%s325] sm:$0x1]
    %327 = vst.msk [vmem:[#allocation2 + $0x8] sm:$0x1] %vm246, %v326
    %329 = vrot.lane.b32.xlu0 %v326, 32
    %v330 = vpop.permute.xlu0 %329
    %332 = vst.msk [vmem:[#allocation2 + $0x78] sm:$0x1] %vm252, %v330
    %s333 = sld [smem:[#allocation8 + $0x280]]
    %s334 = sadd.s32 %s333, 64
    %s335 = scalar_lea.vmem %s6, %s334
    %v336 = vld [vmem:[%s335] sm:$0x1]
    %337 = vst.msk [vmem:[#allocation2 + $0x9] sm:$0x1] %vm246, %v336
    %339 = vrot.lane.b32.xlu0 %v336, 32
    %v340 = vpop.permute.xlu0 %339
    %342 = vst.msk [vmem:[#allocation2 + $0x79] sm:$0x1] %vm252, %v340
    %s343 = sld [smem:[#allocation4 + $0x1]]
    %s344 = scalar_lea.vmem %s6, %s343
    %v345 = vld [vmem:[%s344] sm:$0x1]
    %346 = vst.msk [vmem:[#allocation2 + $0x10] sm:$0x1] %vm246, %v345
    %348 = vrot.lane.b32.xlu0 %v345, 32
    %v349 = vpop.permute.xlu0 %348
    %351 = vst.msk [vmem:[#allocation2 + $0x60] sm:$0x1] %vm252, %v349
    %s352 = sld [smem:[#allocation4 + $0x81]]
    %s353 = scalar_lea.vmem %s6, %s352
    %v354 = vld [vmem:[%s353] sm:$0x1]
    %355 = vst.msk [vmem:[#allocation2 + $0x11] sm:$0x1] %vm246, %v354
    %357 = vrot.lane.b32.xlu0 %v354, 32
    %v358 = vpop.permute.xlu0 %357
    %360 = vst.msk [vmem:[#allocation2 + $0x61] sm:$0x1] %vm252, %v358
    %s361 = sld [smem:[#allocation6 + $0x1]]
    %s362 = sadd.s32 %s361, 64
    %s363 = scalar_lea.vmem %s6, %s362
    %v364 = vld [vmem:[%s363] sm:$0x1]
    %365 = vst.msk [vmem:[#allocation2 + $0x12] sm:$0x1] %vm246, %v364
    %367 = vrot.lane.b32.xlu0 %v364, 32
    %v368 = vpop.permute.xlu0 %367
    %370 = vst.msk [vmem:[#allocation2 + $0x62] sm:$0x1] %vm252, %v368
    %s371 = sld [smem:[#allocation6 + $0x81]]
    %s372 = sadd.s32 %s371, 64
    %s373 = scalar_lea.vmem %s6, %s372
    %v374 = vld [vmem:[%s373] sm:$0x1]
    %375 = vst.msk [vmem:[#allocation2 + $0x13] sm:$0x1] %vm246, %v374
    %377 = vrot.lane.b32.xlu0 %v374, 32
    %v378 = vpop.permute.xlu0 %377
    %380 = vst.msk [vmem:[#allocation2 + $0x63] sm:$0x1] %vm252, %v378
    %s381 = sld [smem:[#allocation8 + $0x1]]
    %s382 = sadd.s32 %s381, 64
    %s383 = scalar_lea.vmem %s6, %s382
    %v384 = vld [vmem:[%s383] sm:$0x1]
    %385 = vst.msk [vmem:[#allocation2 + $0x14] sm:$0x1] %vm246, %v384
    %387 = vrot.lane.b32.xlu0 %v384, 32
    %v388 = vpop.permute.xlu0 %387
    %390 = vst.msk [vmem:[#allocation2 + $0x64] sm:$0x1] %vm252, %v388
    %s391 = sld [smem:[#allocation8 + $0x81]]
    %s392 = sadd.s32 %s391, 64
    %s393 = scalar_lea.vmem %s6, %s392
    %v394 = vld [vmem:[%s393] sm:$0x1]
    %395 = vst.msk [vmem:[#allocation2 + $0x15] sm:$0x1] %vm246, %v394
    %397 = vrot.lane.b32.xlu0 %v394, 32
    %v398 = vpop.permute.xlu0 %397
    %400 = vst.msk [vmem:[#allocation2 + $0x65] sm:$0x1] %vm252, %v398
    %s401 = sld [smem:[#allocation8 + $0x101]]
    %s402 = sadd.s32 %s401, 64
    %s403 = scalar_lea.vmem %s6, %s402
    %v404 = vld [vmem:[%s403] sm:$0x1]
    %405 = vst.msk [vmem:[#allocation2 + $0x16] sm:$0x1] %vm246, %v404
    %407 = vrot.lane.b32.xlu0 %v404, 32
    %v408 = vpop.permute.xlu0 %407
    %410 = vst.msk [vmem:[#allocation2 + $0x66] sm:$0x1] %vm252, %v408
    %s411 = sld [smem:[#allocation8 + $0x181]]
    %s412 = sadd.s32 %s411, 64
    %s413 = scalar_lea.vmem %s6, %s412
    %v414 = vld [vmem:[%s413] sm:$0x1]
    %415 = vst.msk [vmem:[#allocation2 + $0x17] sm:$0x1] %vm246, %v414
    %417 = vrot.lane.b32.xlu0 %v414, 32
    %v418 = vpop.permute.xlu0 %417
    %420 = vst.msk [vmem:[#allocation2 + $0x67] sm:$0x1] %vm252, %v418
    %s421 = sld [smem:[#allocation8 + $0x201]]
    %s422 = sadd.s32 %s421, 64
    %s423 = scalar_lea.vmem %s6, %s422
    %v424 = vld [vmem:[%s423] sm:$0x1]
    %425 = vst.msk [vmem:[#allocation2 + $0x18] sm:$0x1] %vm246, %v424
    %427 = vrot.lane.b32.xlu0 %v424, 32
    %v428 = vpop.permute.xlu0 %427
    %430 = vst.msk [vmem:[#allocation2 + $0x68] sm:$0x1] %vm252, %v428
    %s431 = sld [smem:[#allocation8 + $0x281]]
    %s432 = sadd.s32 %s431, 64
    %s433 = scalar_lea.vmem %s6, %s432
    %v434 = vld [vmem:[%s433] sm:$0x1]
    %435 = vst.msk [vmem:[#allocation2 + $0x19] sm:$0x1] %vm246, %v434
    %437 = vrot.lane.b32.xlu0 %v434, 32
    %v438 = vpop.permute.xlu0 %437
    %440 = vst.msk [vmem:[#allocation2 + $0x69] sm:$0x1] %vm252, %v438
    %s441 = sld [smem:[#allocation4 + $0x2]]
    %s442 = scalar_lea.vmem %s6, %s441
    %v443 = vld [vmem:[%s442] sm:$0x1]
    %444 = vst.msk [vmem:[#allocation2 + $0x20] sm:$0x1] %vm246, %v443
    %446 = vrot.lane.b32.xlu0 %v443, 32
    %v447 = vpop.permute.xlu0 %446
    %449 = vst.msk [vmem:[#allocation2 + $0x50] sm:$0x1] %vm252, %v447
    %s450 = sld [smem:[#allocation4 + $0x82]]
    %s451 = scalar_lea.vmem %s6, %s450
    %v452 = vld [vmem:[%s451] sm:$0x1]
    %453 = vst.msk [vmem:[#allocation2 + $0x21] sm:$0x1] %vm246, %v452
    %455 = vrot.lane.b32.xlu0 %v452, 32
    %v456 = vpop.permute.xlu0 %455
    %458 = vst.msk [vmem:[#allocation2 + $0x51] sm:$0x1] %vm252, %v456
    %s459 = sld [smem:[#allocation6 + $0x2]]
    %s460 = sadd.s32 %s459, 64
    %s461 = scalar_lea.vmem %s6, %s460
    %v462 = vld [vmem:[%s461] sm:$0x1]
    %463 = vst.msk [vmem:[#allocation2 + $0x22] sm:$0x1] %vm246, %v462
    %465 = vrot.lane.b32.xlu0 %v462, 32
    %v466 = vpop.permute.xlu0 %465
    %468 = vst.msk [vmem:[#allocation2 + $0x52] sm:$0x1] %vm252, %v466
    %s469 = sld [smem:[#allocation6 + $0x82]]
    %s470 = sadd.s32 %s469, 64
    %s471 = scalar_lea.vmem %s6, %s470
    %v472 = vld [vmem:[%s471] sm:$0x1]
    %473 = vst.msk [vmem:[#allocation2 + $0x23] sm:$0x1] %vm246, %v472
    %475 = vrot.lane.b32.xlu0 %v472, 32
    %v476 = vpop.permute.xlu0 %475
    %478 = vst.msk [vmem:[#allocation2 + $0x53] sm:$0x1] %vm252, %v476
    %s479 = sld [smem:[#allocation8 + $0x2]]
    %s480 = sadd.s32 %s479, 64
    %s481 = scalar_lea.vmem %s6, %s480
    %v482 = vld [vmem:[%s481] sm:$0x1]
    %483 = vst.msk [vmem:[#allocation2 + $0x24] sm:$0x1] %vm246, %v482
    %485 = vrot.lane.b32.xlu0 %v482, 32
    %v486 = vpop.permute.xlu0 %485
    %488 = vst.msk [vmem:[#allocation2 + $0x54] sm:$0x1] %vm252, %v486
    %s489 = sld [smem:[#allocation8 + $0x82]]
    %s490 = sadd.s32 %s489, 64
    %s491 = scalar_lea.vmem %s6, %s490
    %v492 = vld [vmem:[%s491] sm:$0x1]
    %493 = vst.msk [vmem:[#allocation2 + $0x25] sm:$0x1] %vm246, %v492
    %495 = vrot.lane.b32.xlu0 %v492, 32
    %v496 = vpop.permute.xlu0 %495
    %498 = vst.msk [vmem:[#allocation2 + $0x55] sm:$0x1] %vm252, %v496
    %s499 = sld [smem:[#allocation8 + $0x102]]
    %s500 = sadd.s32 %s499, 64
    %s501 = scalar_lea.vmem %s6, %s500
    %v502 = vld [vmem:[%s501] sm:$0x1]
    %503 = vst.msk [vmem:[#allocation2 + $0x26] sm:$0x1] %vm246, %v502
    %505 = vrot.lane.b32.xlu0 %v502, 32
    %v506 = vpop.permute.xlu0 %505
    %508 = vst.msk [vmem:[#allocation2 + $0x56] sm:$0x1] %vm252, %v506
    %s509 = sld [smem:[#allocation8 + $0x182]]
    %s510 = sadd.s32 %s509, 64
    %s511 = scalar_lea.vmem %s6, %s510
    %v512 = vld [vmem:[%s511] sm:$0x1]
    %513 = vst.msk [vmem:[#allocation2 + $0x27] sm:$0x1] %vm246, %v512
    %515 = vrot.lane.b32.xlu0 %v512, 32
    %v516 = vpop.permute.xlu0 %515
    %518 = vst.msk [vmem:[#allocation2 + $0x57] sm:$0x1] %vm252, %v516
    %s519 = sld [smem:[#allocation8 + $0x202]]
    %s520 = sadd.s32 %s519, 64
    %s521 = scalar_lea.vmem %s6, %s520
    %v522 = vld [vmem:[%s521] sm:$0x1]
    %523 = vst.msk [vmem:[#allocation2 + $0x28] sm:$0x1] %vm246, %v522
    %525 = vrot.lane.b32.xlu0 %v522, 32
    %v526 = vpop.permute.xlu0 %525
    %528 = vst.msk [vmem:[#allocation2 + $0x58] sm:$0x1] %vm252, %v526
    %s529 = sld [smem:[#allocation8 + $0x282]]
    %s530 = sadd.s32 %s529, 64
    %s531 = scalar_lea.vmem %s6, %s530
    %v532 = vld [vmem:[%s531] sm:$0x1]
    %533 = vst.msk [vmem:[#allocation2 + $0x29] sm:$0x1] %vm246, %v532
    %535 = vrot.lane.b32.xlu0 %v532, 32
    %v536 = vpop.permute.xlu0 %535
    %538 = vst.msk [vmem:[#allocation2 + $0x59] sm:$0x1] %vm252, %v536
    %s539 = sld [smem:[#allocation4 + $0x3]]
    %s540 = scalar_lea.vmem %s6, %s539
    %v541 = vld [vmem:[%s540] sm:$0x1]
    %542 = vst.msk [vmem:[#allocation2 + $0x30] sm:$0x1] %vm246, %v541
    %544 = vrot.lane.b32.xlu0 %v541, 32
    %v545 = vpop.permute.xlu0 %544
    %547 = vst.msk [vmem:[#allocation2 + $0x40] sm:$0x1] %vm252, %v545
    %s548 = sld [smem:[#allocation4 + $0x83]]
    %s549 = scalar_lea.vmem %s6, %s548
    %v550 = vld [vmem:[%s549] sm:$0x1]
    %551 = vst.msk [vmem:[#allocation2 + $0x31] sm:$0x1] %vm246, %v550
    %553 = vrot.lane.b32.xlu0 %v550, 32
    %v554 = vpop.permute.xlu0 %553
    %556 = vst.msk [vmem:[#allocation2 + $0x41] sm:$0x1] %vm252, %v554
    %s557 = sld [smem:[#allocation6 + $0x3]]
    %s558 = sadd.s32 %s557, 64
    %s559 = scalar_lea.vmem %s6, %s558
    %v560 = vld [vmem:[%s559] sm:$0x1]
    %561 = vst.msk [vmem:[#allocation2 + $0x32] sm:$0x1] %vm246, %v560
    %563 = vrot.lane.b32.xlu0 %v560, 32
    %v564 = vpop.permute.xlu0 %563
    %566 = vst.msk [vmem:[#allocation2 + $0x42] sm:$0x1] %vm252, %v564
    %s567 = sld [smem:[#allocation6 + $0x83]]
    %s568 = sadd.s32 %s567, 64
    %s569 = scalar_lea.vmem %s6, %s568
    %v570 = vld [vmem:[%s569] sm:$0x1]
    %571 = vst.msk [vmem:[#allocation2 + $0x33] sm:$0x1] %vm246, %v570
    %573 = vrot.lane.b32.xlu0 %v570, 32
    %v574 = vpop.permute.xlu0 %573
    %576 = vst.msk [vmem:[#allocation2 + $0x43] sm:$0x1] %vm252, %v574
    %s577 = sld [smem:[#allocation8 + $0x3]]
    %s578 = sadd.s32 %s577, 64
    %s579 = scalar_lea.vmem %s6, %s578
    %v580 = vld [vmem:[%s579] sm:$0x1]
    %581 = vst.msk [vmem:[#allocation2 + $0x34] sm:$0x1] %vm246, %v580
    %583 = vrot.lane.b32.xlu0 %v580, 32
    %v584 = vpop.permute.xlu0 %583
    %586 = vst.msk [vmem:[#allocation2 + $0x44] sm:$0x1] %vm252, %v584
    %s587 = sld [smem:[#allocation8 + $0x83]]
    %s588 = sadd.s32 %s587, 64
    %s589 = scalar_lea.vmem %s6, %s588
    %v590 = vld [vmem:[%s589] sm:$0x1]
    %591 = vst.msk [vmem:[#allocation2 + $0x35] sm:$0x1] %vm246, %v590
    %593 = vrot.lane.b32.xlu0 %v590, 32
    %v594 = vpop.permute.xlu0 %593
    %596 = vst.msk [vmem:[#allocation2 + $0x45] sm:$0x1] %vm252, %v594
    %s597 = sld [smem:[#allocation8 + $0x103]]
    %s598 = sadd.s32 %s597, 64
    %s599 = scalar_lea.vmem %s6, %s598
    %v600 = vld [vmem:[%s599] sm:$0x1]
    %601 = vst.msk [vmem:[#allocation2 + $0x36] sm:$0x1] %vm246, %v600
    %603 = vrot.lane.b32.xlu0 %v600, 32
    %v604 = vpop.permute.xlu0 %603
    %606 = vst.msk [vmem:[#allocation2 + $0x46] sm:$0x1] %vm252, %v604
    %s607 = sld [smem:[#allocation8 + $0x183]]
    %s608 = sadd.s32 %s607, 64
    %s609 = scalar_lea.vmem %s6, %s608
    %v610 = vld [vmem:[%s609] sm:$0x1]
    %611 = vst.msk [vmem:[#allocation2 + $0x37] sm:$0x1] %vm246, %v610
    %613 = vrot.lane.b32.xlu0 %v610, 32
    %v614 = vpop.permute.xlu0 %613
    %616 = vst.msk [vmem:[#allocation2 + $0x47] sm:$0x1] %vm252, %v614
    %s617 = sld [smem:[#allocation8 + $0x203]]
    %s618 = sadd.s32 %s617, 64
    %s619 = scalar_lea.vmem %s6, %s618
    %v620 = vld [vmem:[%s619] sm:$0x1]
    %621 = vst.msk [vmem:[#allocation2 + $0x38] sm:$0x1] %vm246, %v620
    %623 = vrot.lane.b32.xlu0 %v620, 32
    %v624 = vpop.permute.xlu0 %623
    %626 = vst.msk [vmem:[#allocation2 + $0x48] sm:$0x1] %vm252, %v624
    %s627 = sld [smem:[#allocation8 + $0x283]]
    %s628 = sadd.s32 %s627, 64
    %s629 = scalar_lea.vmem %s6, %s628
    %v630 = vld [vmem:[%s629] sm:$0x1]
    %631 = vst.msk [vmem:[#allocation2 + $0x39] sm:$0x1] %vm246, %v630
    %633 = vrot.lane.b32.xlu0 %v630, 32
    %v634 = vpop.permute.xlu0 %633
    %636 = vst.msk [vmem:[#allocation2 + $0x49] sm:$0x1] %vm252, %v634
    %s637 = sld [smem:[#allocation4 + $0x4]]
    %s638 = scalar_lea.vmem %s6, %s637
    %v639 = vld [vmem:[%s638] sm:$0x1]
    %640 = vst.msk [vmem:[#allocation2 + $0x40] sm:$0x1] %vm246, %v639
    %642 = vrot.lane.b32.xlu0 %v639, 32
    %v643 = vpop.permute.xlu0 %642
    %645 = vst.msk [vmem:[#allocation2 + $0x30] sm:$0x1] %vm252, %v643
    %s646 = sld [smem:[#allocation4 + $0x84]]
    %s647 = scalar_lea.vmem %s6, %s646
    %v648 = vld [vmem:[%s647] sm:$0x1]
    %649 = vst.msk [vmem:[#allocation2 + $0x41] sm:$0x1] %vm246, %v648
    %651 = vrot.lane.b32.xlu0 %v648, 32
    %v652 = vpop.permute.xlu0 %651
    %654 = vst.msk [vmem:[#allocation2 + $0x31] sm:$0x1] %vm252, %v652
    %s655 = sld [smem:[#allocation6 + $0x4]]
    %s656 = sadd.s32 %s655, 64
    %s657 = scalar_lea.vmem %s6, %s656
    %v658 = vld [vmem:[%s657] sm:$0x1]
    %659 = vst.msk [vmem:[#allocation2 + $0x42] sm:$0x1] %vm246, %v658
    %661 = vrot.lane.b32.xlu0 %v658, 32
    %v662 = vpop.permute.xlu0 %661
    %664 = vst.msk [vmem:[#allocation2 + $0x32] sm:$0x1] %vm252, %v662
    %s665 = sld [smem:[#allocation6 + $0x84]]
    %s666 = sadd.s32 %s665, 64
    %s667 = scalar_lea.vmem %s6, %s666
    %v668 = vld [vmem:[%s667] sm:$0x1]
    %669 = vst.msk [vmem:[#allocation2 + $0x43] sm:$0x1] %vm246, %v668
    %671 = vrot.lane.b32.xlu0 %v668, 32
    %v672 = vpop.permute.xlu0 %671
    %674 = vst.msk [vmem:[#allocation2 + $0x33] sm:$0x1] %vm252, %v672
    %s675 = sld [smem:[#allocation8 + $0x4]]
    %s676 = sadd.s32 %s675, 64
    %s677 = scalar_lea.vmem %s6, %s676
    %v678 = vld [vmem:[%s677] sm:$0x1]
    %679 = vst.msk [vmem:[#allocation2 + $0x44] sm:$0x1] %vm246, %v678
    %681 = vrot.lane.b32.xlu0 %v678, 32
    %v682 = vpop.permute.xlu0 %681
    %684 = vst.msk [vmem:[#allocation2 + $0x34] sm:$0x1] %vm252, %v682
    %s685 = sld [smem:[#allocation8 + $0x84]]
    %s686 = sadd.s32 %s685, 64
    %s687 = scalar_lea.vmem %s6, %s686
    %v688 = vld [vmem:[%s687] sm:$0x1]
    %689 = vst.msk [vmem:[#allocation2 + $0x45] sm:$0x1] %vm246, %v688
    %691 = vrot.lane.b32.xlu0 %v688, 32
    %v692 = vpop.permute.xlu0 %691
    %694 = vst.msk [vmem:[#allocation2 + $0x35] sm:$0x1] %vm252, %v692
    %s695 = sld [smem:[#allocation8 + $0x104]]
    %s696 = sadd.s32 %s695, 64
    %s697 = scalar_lea.vmem %s6, %s696
    %v698 = vld [vmem:[%s697] sm:$0x1]
    %699 = vst.msk [vmem:[#allocation2 + $0x46] sm:$0x1] %vm246, %v698
    %701 = vrot.lane.b32.xlu0 %v698, 32
    %v702 = vpop.permute.xlu0 %701
    %704 = vst.msk [vmem:[#allocation2 + $0x36] sm:$0x1] %vm252, %v702
    %s705 = sld [smem:[#allocation8 + $0x184]]
    %s706 = sadd.s32 %s705, 64
    %s707 = scalar_lea.vmem %s6, %s706
    %v708 = vld [vmem:[%s707] sm:$0x1]
    %709 = vst.msk [vmem:[#allocation2 + $0x47] sm:$0x1] %vm246, %v708
    %711 = vrot.lane.b32.xlu0 %v708, 32
    %v712 = vpop.permute.xlu0 %711
    %714 = vst.msk [vmem:[#allocation2 + $0x37] sm:$0x1] %vm252, %v712
    %s715 = sld [smem:[#allocation8 + $0x204]]
    %s716 = sadd.s32 %s715, 64
    %s717 = scalar_lea.vmem %s6, %s716
    %v718 = vld [vmem:[%s717] sm:$0x1]
    %719 = vst.msk [vmem:[#allocation2 + $0x48] sm:$0x1] %vm246, %v718
    %721 = vrot.lane.b32.xlu0 %v718, 32
    %v722 = vpop.permute.xlu0 %721
    %724 = vst.msk [vmem:[#allocation2 + $0x38] sm:$0x1] %vm252, %v722
    %s725 = sld [smem:[#allocation8 + $0x284]]
    %s726 = sadd.s32 %s725, 64
    %s727 = scalar_lea.vmem %s6, %s726
    %v728 = vld [vmem:[%s727] sm:$0x1]
    %729 = vst.msk [vmem:[#allocation2 + $0x49] sm:$0x1] %vm246, %v728
    %731 = vrot.lane.b32.xlu0 %v728, 32
    %v732 = vpop.permute.xlu0 %731
    %734 = vst.msk [vmem:[#allocation2 + $0x39] sm:$0x1] %vm252, %v732
    %s735 = sld [smem:[#allocation4 + $0x5]]
    %s736 = scalar_lea.vmem %s6, %s735
    %v737 = vld [vmem:[%s736] sm:$0x1]
    %738 = vst.msk [vmem:[#allocation2 + $0x50] sm:$0x1] %vm246, %v737
    %740 = vrot.lane.b32.xlu0 %v737, 32
    %v741 = vpop.permute.xlu0 %740
    %743 = vst.msk [vmem:[#allocation2 + $0x20] sm:$0x1] %vm252, %v741
    %s744 = sld [smem:[#allocation4 + $0x85]]
    %s745 = scalar_lea.vmem %s6, %s744
    %v746 = vld [vmem:[%s745] sm:$0x1]
    %747 = vst.msk [vmem:[#allocation2 + $0x51] sm:$0x1] %vm246, %v746
    %749 = vrot.lane.b32.xlu0 %v746, 32
    %v750 = vpop.permute.xlu0 %749
    %752 = vst.msk [vmem:[#allocation2 + $0x21] sm:$0x1] %vm252, %v750
    %s753 = sld [smem:[#allocation6 + $0x5]]
    %s754 = sadd.s32 %s753, 64
    %s755 = scalar_lea.vmem %s6, %s754
    %v756 = vld [vmem:[%s755] sm:$0x1]
    %757 = vst.msk [vmem:[#allocation2 + $0x52] sm:$0x1] %vm246, %v756
    %759 = vrot.lane.b32.xlu0 %v756, 32
    %v760 = vpop.permute.xlu0 %759
    %762 = vst.msk [vmem:[#allocation2 + $0x22] sm:$0x1] %vm252, %v760
    %s763 = sld [smem:[#allocation6 + $0x85]]
    %s764 = sadd.s32 %s763, 64
    %s765 = scalar_lea.vmem %s6, %s764
    %v766 = vld [vmem:[%s765] sm:$0x1]
    %767 = vst.msk [vmem:[#allocation2 + $0x53] sm:$0x1] %vm246, %v766
    %769 = vrot.lane.b32.xlu0 %v766, 32
    %v770 = vpop.permute.xlu0 %769
    %772 = vst.msk [vmem:[#allocation2 + $0x23] sm:$0x1] %vm252, %v770
    %s773 = sld [smem:[#allocation8 + $0x5]]
    %s774 = sadd.s32 %s773, 64
    %s775 = scalar_lea.vmem %s6, %s774
    %v776 = vld [vmem:[%s775] sm:$0x1]
    %777 = vst.msk [vmem:[#allocation2 + $0x54] sm:$0x1] %vm246, %v776
    %779 = vrot.lane.b32.xlu0 %v776, 32
    %v780 = vpop.permute.xlu0 %779
    %782 = vst.msk [vmem:[#allocation2 + $0x24] sm:$0x1] %vm252, %v780
    %s783 = sld [smem:[#allocation8 + $0x85]]
    %s784 = sadd.s32 %s783, 64
    %s785 = scalar_lea.vmem %s6, %s784
    %v786 = vld [vmem:[%s785] sm:$0x1]
    %787 = vst.msk [vmem:[#allocation2 + $0x55] sm:$0x1] %vm246, %v786
    %789 = vrot.lane.b32.xlu0 %v786, 32
    %v790 = vpop.permute.xlu0 %789
    %792 = vst.msk [vmem:[#allocation2 + $0x25] sm:$0x1] %vm252, %v790
    %s793 = sld [smem:[#allocation8 + $0x105]]
    %s794 = sadd.s32 %s793, 64
    %s795 = scalar_lea.vmem %s6, %s794
    %v796 = vld [vmem:[%s795] sm:$0x1]
    %797 = vst.msk [vmem:[#allocation2 + $0x56] sm:$0x1] %vm246, %v796
    %799 = vrot.lane.b32.xlu0 %v796, 32
    %v800 = vpop.permute.xlu0 %799
    %802 = vst.msk [vmem:[#allocation2 + $0x26] sm:$0x1] %vm252, %v800
    %s803 = sld [smem:[#allocation8 + $0x185]]
    %s804 = sadd.s32 %s803, 64
    %s805 = scalar_lea.vmem %s6, %s804
    %v806 = vld [vmem:[%s805] sm:$0x1]
    %807 = vst.msk [vmem:[#allocation2 + $0x57] sm:$0x1] %vm246, %v806
    %809 = vrot.lane.b32.xlu0 %v806, 32
    %v810 = vpop.permute.xlu0 %809
    %812 = vst.msk [vmem:[#allocation2 + $0x27] sm:$0x1] %vm252, %v810
    %s813 = sld [smem:[#allocation8 + $0x205]]
    %s814 = sadd.s32 %s813, 64
    %s815 = scalar_lea.vmem %s6, %s814
    %v816 = vld [vmem:[%s815] sm:$0x1]
    %817 = vst.msk [vmem:[#allocation2 + $0x58] sm:$0x1] %vm246, %v816
    %819 = vrot.lane.b32.xlu0 %v816, 32
    %v820 = vpop.permute.xlu0 %819
    %822 = vst.msk [vmem:[#allocation2 + $0x28] sm:$0x1] %vm252, %v820
    %s823 = sld [smem:[#allocation8 + $0x285]]
    %s824 = sadd.s32 %s823, 64
    %s825 = scalar_lea.vmem %s6, %s824
    %v826 = vld [vmem:[%s825] sm:$0x1]
    %827 = vst.msk [vmem:[#allocation2 + $0x59] sm:$0x1] %vm246, %v826
    %829 = vrot.lane.b32.xlu0 %v826, 32
    %v830 = vpop.permute.xlu0 %829
    %832 = vst.msk [vmem:[#allocation2 + $0x29] sm:$0x1] %vm252, %v830
    %s833 = sld [smem:[#allocation4 + $0x6]]
    %s834 = scalar_lea.vmem %s6, %s833
    %v835 = vld [vmem:[%s834] sm:$0x1]
    %836 = vst.msk [vmem:[#allocation2 + $0x60] sm:$0x1] %vm246, %v835
    %838 = vrot.lane.b32.xlu0 %v835, 32
    %v839 = vpop.permute.xlu0 %838
    %841 = vst.msk [vmem:[#allocation2 + $0x10] sm:$0x1] %vm252, %v839
    %s842 = sld [smem:[#allocation4 + $0x86]]
    %s843 = scalar_lea.vmem %s6, %s842
    %v844 = vld [vmem:[%s843] sm:$0x1]
    %845 = vst.msk [vmem:[#allocation2 + $0x61] sm:$0x1] %vm246, %v844
    %847 = vrot.lane.b32.xlu0 %v844, 32
    %v848 = vpop.permute.xlu0 %847
    %850 = vst.msk [vmem:[#allocation2 + $0x11] sm:$0x1] %vm252, %v848
    %s851 = sld [smem:[#allocation6 + $0x6]]
    %s852 = sadd.s32 %s851, 64
    %s853 = scalar_lea.vmem %s6, %s852
    %v854 = vld [vmem:[%s853] sm:$0x1]
    %855 = vst.msk [vmem:[#allocation2 + $0x62] sm:$0x1] %vm246, %v854
    %857 = vrot.lane.b32.xlu0 %v854, 32
    %v858 = vpop.permute.xlu0 %857
    %860 = vst.msk [vmem:[#allocation2 + $0x12] sm:$0x1] %vm252, %v858
    %s861 = sld [smem:[#allocation6 + $0x86]]
    %s862 = sadd.s32 %s861, 64
    %s863 = scalar_lea.vmem %s6, %s862
    %v864 = vld [vmem:[%s863] sm:$0x1]
    %865 = vst.msk [vmem:[#allocation2 + $0x63] sm:$0x1] %vm246, %v864
    %867 = vrot.lane.b32.xlu0 %v864, 32
    %v868 = vpop.permute.xlu0 %867
    %870 = vst.msk [vmem:[#allocation2 + $0x13] sm:$0x1] %vm252, %v868
    %s871 = sld [smem:[#allocation8 + $0x6]]
    %s872 = sadd.s32 %s871, 64
    %s873 = scalar_lea.vmem %s6, %s872
    %v874 = vld [vmem:[%s873] sm:$0x1]
    %875 = vst.msk [vmem:[#allocation2 + $0x64] sm:$0x1] %vm246, %v874
    %877 = vrot.lane.b32.xlu0 %v874, 32
    %v878 = vpop.permute.xlu0 %877
    %880 = vst.msk [vmem:[#allocation2 + $0x14] sm:$0x1] %vm252, %v878
    %s881 = sld [smem:[#allocation8 + $0x86]]
    %s882 = sadd.s32 %s881, 64
    %s883 = scalar_lea.vmem %s6, %s882
    %v884 = vld [vmem:[%s883] sm:$0x1]
    %885 = vst.msk [vmem:[#allocation2 + $0x65] sm:$0x1] %vm246, %v884
    %887 = vrot.lane.b32.xlu0 %v884, 32
    %v888 = vpop.permute.xlu0 %887
    %890 = vst.msk [vmem:[#allocation2 + $0x15] sm:$0x1] %vm252, %v888
    %s891 = sld [smem:[#allocation8 + $0x106]]
    %s892 = sadd.s32 %s891, 64
    %s893 = scalar_lea.vmem %s6, %s892
    %v894 = vld [vmem:[%s893] sm:$0x1]
    %895 = vst.msk [vmem:[#allocation2 + $0x66] sm:$0x1] %vm246, %v894
    %897 = vrot.lane.b32.xlu0 %v894, 32
    %v898 = vpop.permute.xlu0 %897
    %900 = vst.msk [vmem:[#allocation2 + $0x16] sm:$0x1] %vm252, %v898
    %s901 = sld [smem:[#allocation8 + $0x186]]
    %s902 = sadd.s32 %s901, 64
    %s903 = scalar_lea.vmem %s6, %s902
    %v904 = vld [vmem:[%s903] sm:$0x1]
    %905 = vst.msk [vmem:[#allocation2 + $0x67] sm:$0x1] %vm246, %v904
    %907 = vrot.lane.b32.xlu0 %v904, 32
    %v908 = vpop.permute.xlu0 %907
    %910 = vst.msk [vmem:[#allocation2 + $0x17] sm:$0x1] %vm252, %v908
    %s911 = sld [smem:[#allocation8 + $0x206]]
    %s912 = sadd.s32 %s911, 64
    %s913 = scalar_lea.vmem %s6, %s912
    %v914 = vld [vmem:[%s913] sm:$0x1]
    %915 = vst.msk [vmem:[#allocation2 + $0x68] sm:$0x1] %vm246, %v914
    %917 = vrot.lane.b32.xlu0 %v914, 32
    %v918 = vpop.permute.xlu0 %917
    %920 = vst.msk [vmem:[#allocation2 + $0x18] sm:$0x1] %vm252, %v918
    %s921 = sld [smem:[#allocation8 + $0x286]]
    %s922 = sadd.s32 %s921, 64
    %s923 = scalar_lea.vmem %s6, %s922
    %v924 = vld [vmem:[%s923] sm:$0x1]
    %925 = vst.msk [vmem:[#allocation2 + $0x69] sm:$0x1] %vm246, %v924
    %927 = vrot.lane.b32.xlu0 %v924, 32
    %v928 = vpop.permute.xlu0 %927
    %930 = vst.msk [vmem:[#allocation2 + $0x19] sm:$0x1] %vm252, %v928
    %s931 = sld [smem:[#allocation4 + $0x7]]
    %s932 = scalar_lea.vmem %s6, %s931
    %v933 = vld [vmem:[%s932] sm:$0x1]
    %934 = vst.msk [vmem:[#allocation2 + $0x70] sm:$0x1] %vm246, %v933
    %936 = vrot.lane.b32.xlu0 %v933, 32
    %v937 = vpop.permute.xlu0 %936
    %939 = vst.msk [vmem:[#allocation2] sm:$0x1] %vm252, %v937
    %s940 = sld [smem:[#allocation4 + $0x87]]
    %s941 = scalar_lea.vmem %s6, %s940
    %v942 = vld [vmem:[%s941] sm:$0x1]
    %943 = vst.msk [vmem:[#allocation2 + $0x71] sm:$0x1] %vm246, %v942
    %945 = vrot.lane.b32.xlu0 %v942, 32
    %v946 = vpop.permute.xlu0 %945
    %948 = vst.msk [vmem:[#allocation2 + $0x1] sm:$0x1] %vm252, %v946
    %s949 = sld [smem:[#allocation6 + $0x7]]
    %s950 = sadd.s32 %s949, 64
    %s951 = scalar_lea.vmem %s6, %s950
    %v952 = vld [vmem:[%s951] sm:$0x1]
    %953 = vst.msk [vmem:[#allocation2 + $0x72] sm:$0x1] %vm246, %v952
    %955 = vrot.lane.b32.xlu0 %v952, 32
    %v956 = vpop.permute.xlu0 %955
    %958 = vst.msk [vmem:[#allocation2 + $0x2] sm:$0x1] %vm252, %v956
    %s959 = sld [smem:[#allocation6 + $0x87]]
    %s960 = sadd.s32 %s959, 64
    %s961 = scalar_lea.vmem %s6, %s960
    %v962 = vld [vmem:[%s961] sm:$0x1]
    %963 = vst.msk [vmem:[#allocation2 + $0x73] sm:$0x1] %vm246, %v962
    %965 = vrot.lane.b32.xlu0 %v962, 32
    %v966 = vpop.permute.xlu0 %965
    %968 = vst.msk [vmem:[#allocation2 + $0x3] sm:$0x1] %vm252, %v966
    %s969 = sld [smem:[#allocation8 + $0x7]]
    %s970 = sadd.s32 %s969, 64
    %s971 = scalar_lea.vmem %s6, %s970
    %v972 = vld [vmem:[%s971] sm:$0x1]
    %973 = vst.msk [vmem:[#allocation2 + $0x74] sm:$0x1] %vm246, %v972
    %975 = vrot.lane.b32.xlu0 %v972, 32
    %v976 = vpop.permute.xlu0 %975
    %978 = vst.msk [vmem:[#allocation2 + $0x4] sm:$0x1] %vm252, %v976
    %s979 = sld [smem:[#allocation8 + $0x87]]
    %s980 = sadd.s32 %s979, 64
    %s981 = scalar_lea.vmem %s6, %s980
    %v982 = vld [vmem:[%s981] sm:$0x1]
    %983 = vst.msk [vmem:[#allocation2 + $0x75] sm:$0x1] %vm246, %v982
    %985 = vrot.lane.b32.xlu0 %v982, 32
    %v986 = vpop.permute.xlu0 %985
    %988 = vst.msk [vmem:[#allocation2 + $0x5] sm:$0x1] %vm252, %v986
    %s989 = sld [smem:[#allocation8 + $0x107]]
    %s990 = sadd.s32 %s989, 64
    %s991 = scalar_lea.vmem %s6, %s990
    %v992 = vld [vmem:[%s991] sm:$0x1]
    %993 = vst.msk [vmem:[#allocation2 + $0x76] sm:$0x1] %vm246, %v992
    %995 = vrot.lane.b32.xlu0 %v992, 32
    %v996 = vpop.permute.xlu0 %995
    %998 = vst.msk [vmem:[#allocation2 + $0x6] sm:$0x1] %vm252, %v996
    %s999 = sld [smem:[#allocation8 + $0x187]]
    %s1000 = sadd.s32 %s999, 64
    %s1001 = scalar_lea.vmem %s6, %s1000
    %v1002 = vld [vmem:[%s1001] sm:$0x1]
    %1003 = vst.msk [vmem:[#allocation2 + $0x77] sm:$0x1] %vm246, %v1002
    %1005 = vrot.lane.b32.xlu0 %v1002, 32
    %v1006 = vpop.permute.xlu0 %1005
    %1008 = vst.msk [vmem:[#allocation2 + $0x7] sm:$0x1] %vm252, %v1006
    %s1009 = sld [smem:[#allocation8 + $0x207]]
    %s1010 = sadd.s32 %s1009, 64
    %s1011 = scalar_lea.vmem %s6, %s1010
    %v1012 = vld [vmem:[%s1011] sm:$0x1]
    %1013 = vst.msk [vmem:[#allocation2 + $0x78] sm:$0x1] %vm246, %v1012
    %1015 = vrot.lane.b32.xlu0 %v1012, 32
    %v1016 = vpop.permute.xlu0 %1015
    %1018 = vst.msk [vmem:[#allocation2 + $0x8] sm:$0x1] %vm252, %v1016
    %s1019 = sld [smem:[#allocation8 + $0x287]]
    %s1020 = sadd.s32 %s1019, 64
    %s1021 = scalar_lea.vmem %s6, %s1020
    %v1022 = vld [vmem:[%s1021] sm:$0x1]
    %1023 = vst.msk [vmem:[#allocation2 + $0x79] sm:$0x1] %vm246, %v1022
    %1025 = vrot.lane.b32.xlu0 %v1022, 32
    %v1026 = vpop.permute.xlu0 %1025
    %1028 = vst.msk [vmem:[#allocation2 + $0x9] sm:$0x1] %vm252, %v1026
    %v1029 = vld [vmem:[#allocation2] sm:$0xff]
    %v1030 = vld [vmem:[#allocation2 + $0x8] sm:$0xff]
    %v1031 = vld [vmem:[#allocation2 + $0x10] sm:$0xff]
    %v1032 = vld [vmem:[#allocation2 + $0x18] sm:$0xff]
    %v1033 = vld [vmem:[#allocation2 + $0x20] sm:$0xff]
    %v1034 = vld [vmem:[#allocation2 + $0x28] sm:$0xff]
    %v1035 = vld [vmem:[#allocation2 + $0x30] sm:$0xff]
    %v1036 = vld [vmem:[#allocation2 + $0x38] sm:$0xff]
    %v1037 = vld [vmem:[#allocation2 + $0x40] sm:$0xff]
    %v1038 = vld [vmem:[#allocation2 + $0x48] sm:$0xff]
    %v1039 = vld [vmem:[#allocation2 + $0x50] sm:$0xff]
    %v1040 = vld [vmem:[#allocation2 + $0x58] sm:$0xff]
    %v1041 = vld [vmem:[#allocation2 + $0x60] sm:$0xff]
    %v1042 = vld [vmem:[#allocation2 + $0x68] sm:$0xff]
    %v1043 = vld [vmem:[#allocation2 + $0x70] sm:$0xff]
    %v1044 = vld [vmem:[#allocation2 + $0x78] sm:$0xff]
    %v1046 = vperm.slane %v215, 0
    %v1047 = vperm.slane %v215, 1
    %v1051 = vsel %vm226, %v1029, 0
    %v1054 = vsel %vm226, %v1030, 0
    %v1057 = vsel %vm226, %v1031, 0
    %v1060 = vsel %vm226, %v1032, 0
    %v1063 = vsel %vm226, %v1033, 0
    %v1066 = vsel %vm226, %v1034, 0
    %v1069 = vsel %vm226, %v1035, 0
    %v1072 = vsel %vm226, %v1036, 0
    %v1075 = vsel %vm226, %v1037, 0
    %v1078 = vsel %vm226, %v1038, 0
    %v1081 = vsel %vm226, %v1039, 0
    %v1084 = vsel %vm226, %v1040, 0
    %v1087 = vsel %vm226, %v1041, 0
    %v1090 = vsel %vm226, %v1042, 0
    %v1093 = vsel %vm226, %v1043, 0
    %v1096 = vsel %vm226, %v1044, 0
    %1098 = vmatpush.msra.mxu0 0.0
    %1099 = vmatpush.msra.mxu0 0.0
    %1100 = vmatpush.msra.mxu0 0.0
    %1101 = vmatpush.msra.mxu0 0.0
    %1102 = vmatpush.msra.mxu0 0.0
    %1103 = vmatpush.msra.mxu0 0.0
    %1104 = vmatpush.msra.mxu0 0.0
    %1105 = vmatpush.msra.mxu0 0.0
    %1106 = vmatpush.msra.mxu0 %v117
    %1107 = vmatpush.msra.mxu0 %v115
    %1108 = vmatpush.msra.mxu0 %v113
    %1109 = vmatpush.msra.mxu0 %v111
    %1110 = vmatpush.msra.mxu0 %v109
    %1111 = vmatpush.msra.mxu0 %v107
    %1112 = vmatpush.msra.mxu0 %v105
    %1113 = vmatpush.msra.mxu0 %v103
    %1114 = vmatmul.f32.gmra.mxu0 %v1051
    %v1115 = vpop.f32.mrf.mxu0
    %v1116 = vadd.f32 %v1046, %v1115
    %1117 = vmatmul.f32.gmra.mxu0 %v1054
    %v1118 = vpop.f32.mrf.mxu0
    %v1119 = vadd.f32 %v1046, %v1118
    %1120 = vmatmul.f32.gmra.mxu0 %v1057
    %v1121 = vpop.f32.mrf.mxu0
    %v1122 = vadd.f32 %v1046, %v1121
    %1123 = vmatmul.f32.gmra.mxu0 %v1060
    %v1124 = vpop.f32.mrf.mxu0
    %v1125 = vadd.f32 %v1046, %v1124
    %1126 = vmatmul.f32.gmra.mxu0 %v1063
    %v1127 = vpop.f32.mrf.mxu0
    %v1128 = vadd.f32 %v1046, %v1127
    %1129 = vmatmul.f32.gmra.mxu0 %v1066
    %v1130 = vpop.f32.mrf.mxu0
    %v1131 = vadd.f32 %v1046, %v1130
    %1132 = vmatmul.f32.gmra.mxu0 %v1069
    %v1133 = vpop.f32.mrf.mxu0
    %v1134 = vadd.f32 %v1046, %v1133
    %1135 = vmatmul.f32.gmra.mxu0 %v1072
    %v1136 = vpop.f32.mrf.mxu0
    %v1137 = vadd.f32 %v1046, %v1136
    %1138 = vmatmul.f32.gmra.mxu0 %v1075
    %v1139 = vpop.f32.mrf.mxu0
    %v1140 = vadd.f32 %v1046, %v1139
    %1141 = vmatmul.f32.gmra.mxu0 %v1078
    %v1142 = vpop.f32.mrf.mxu0
    %v1143 = vadd.f32 %v1046, %v1142
    %1144 = vmatmul.f32.gmra.mxu0 %v1081
    %v1145 = vpop.f32.mrf.mxu0
    %v1146 = vadd.f32 %v1046, %v1145
    %1147 = vmatmul.f32.gmra.mxu0 %v1084
    %v1148 = vpop.f32.mrf.mxu0
    %v1149 = vadd.f32 %v1046, %v1148
    %1150 = vmatmul.f32.gmra.mxu0 %v1087
    %v1151 = vpop.f32.mrf.mxu0
    %v1152 = vadd.f32 %v1046, %v1151
    %1153 = vmatmul.f32.gmra.mxu0 %v1090
    %v1154 = vpop.f32.mrf.mxu0
    %v1155 = vadd.f32 %v1046, %v1154
    %1156 = vmatmul.f32.gmra.mxu0 %v1093
    %v1157 = vpop.f32.mrf.mxu0
    %v1158 = vadd.f32 %v1046, %v1157
    %1159 = vmatmul.f32.gmra.mxu0 %v1096
    %v1160 = vpop.f32.mrf.mxu0
    %v1161 = vadd.f32 %v1046, %v1160
    %1162 = vdwg.mxu0
    %1163 = vmatpush.msra.mxu0 0.0
    %1164 = vmatpush.msra.mxu0 0.0
    %1165 = vmatpush.msra.mxu0 0.0
    %1166 = vmatpush.msra.mxu0 0.0
    %1167 = vmatpush.msra.mxu0 0.0
    %1168 = vmatpush.msra.mxu0 0.0
    %1169 = vmatpush.msra.mxu0 0.0
    %1170 = vmatpush.msra.mxu0 0.0
    %1171 = vmatpush.msra.mxu0 %v118
    %1172 = vmatpush.msra.mxu0 %v116
    %1173 = vmatpush.msra.mxu0 %v114
    %1174 = vmatpush.msra.mxu0 %v112
    %1175 = vmatpush.msra.mxu0 %v110
    %1176 = vmatpush.msra.mxu0 %v108
    %1177 = vmatpush.msra.mxu0 %v106
    %1178 = vmatpush.msra.mxu0 %v104
    %1179 = vmatmul.f32.gmra.mxu0 %v1051
    %v1180 = vpop.f32.mrf.mxu0
    %v1181 = vadd.f32 %v1047, %v1180
    %1182 = vmatmul.f32.gmra.mxu0 %v1054
    %v1183 = vpop.f32.mrf.mxu0
    %v1184 = vadd.f32 %v1047, %v1183
    %1185 = vmatmul.f32.gmra.mxu0 %v1057
    %v1186 = vpop.f32.mrf.mxu0
    %v1187 = vadd.f32 %v1047, %v1186
    %1188 = vmatmul.f32.gmra.mxu0 %v1060
    %v1189 = vpop.f32.mrf.mxu0
    %v1190 = vadd.f32 %v1047, %v1189
    %1191 = vmatmul.f32.gmra.mxu0 %v1063
    %v1192 = vpop.f32.mrf.mxu0
    %v1193 = vadd.f32 %v1047, %v1192
    %1194 = vmatmul.f32.gmra.mxu0 %v1066
    %v1195 = vpop.f32.mrf.mxu0
    %v1196 = vadd.f32 %v1047, %v1195
    %1197 = vmatmul.f32.gmra.mxu0 %v1069
    %v1198 = vpop.f32.mrf.mxu0
    %v1199 = vadd.f32 %v1047, %v1198
    %1200 = vmatmul.f32.gmra.mxu0 %v1072
    %v1201 = vpop.f32.mrf.mxu0
    %v1202 = vadd.f32 %v1047, %v1201
    %1203 = vmatmul.f32.gmra.mxu0 %v1075
    %v1204 = vpop.f32.mrf.mxu0
    %v1205 = vadd.f32 %v1047, %v1204
    %1206 = vmatmul.f32.gmra.mxu0 %v1078
    %v1207 = vpop.f32.mrf.mxu0
    %v1208 = vadd.f32 %v1047, %v1207
    %1209 = vmatmul.f32.gmra.mxu0 %v1081
    %v1210 = vpop.f32.mrf.mxu0
    %v1211 = vadd.f32 %v1047, %v1210
    %1212 = vmatmul.f32.gmra.mxu0 %v1084
    %v1213 = vpop.f32.mrf.mxu0
    %v1214 = vadd.f32 %v1047, %v1213
    %1215 = vmatmul.f32.gmra.mxu0 %v1087
    %v1216 = vpop.f32.mrf.mxu0
    %v1217 = vadd.f32 %v1047, %v1216
    %1218 = vmatmul.f32.gmra.mxu0 %v1090
    %v1219 = vpop.f32.mrf.mxu0
    %v1220 = vadd.f32 %v1047, %v1219
    %1221 = vmatmul.f32.gmra.mxu0 %v1093
    %v1222 = vpop.f32.mrf.mxu0
    %v1223 = vadd.f32 %v1047, %v1222
    %1224 = vmatmul.f32.gmra.mxu0 %v1096
    %v1225 = vpop.f32.mrf.mxu0
    %v1226 = vadd.f32 %v1047, %v1225
    %1227 = vdwg.mxu0
    %v1229 = vperm.slane %v217, 0
    %v1230 = vperm.slane %v217, 1
    %v1234 = vsel %vm226, 0.0, 0
    %1236 = vmatpush.msra.mxu0 0.0
    %1237 = vmatpush.msra.mxu0 0.0
    %1238 = vmatpush.msra.mxu0 0.0
    %1239 = vmatpush.msra.mxu0 0.0
    %1240 = vmatpush.msra.mxu0 0.0
    %1241 = vmatpush.msra.mxu0 0.0
    %1242 = vmatpush.msra.mxu0 0.0
    %1243 = vmatpush.msra.mxu0 0.0
    %1244 = vmatpush.msra.mxu0 %v133
    %1245 = vmatpush.msra.mxu0 %v131
    %1246 = vmatpush.msra.mxu0 %v129
    %1247 = vmatpush.msra.mxu0 %v127
    %1248 = vmatpush.msra.mxu0 %v125
    %1249 = vmatpush.msra.mxu0 %v123
    %1250 = vmatpush.msra.mxu0 %v121
    %1251 = vmatpush.msra.mxu0 %v119
    %1252 = vmatmul.f32.gmra.mxu0 %v1234
    %v1253 = vpop.f32.mrf.mxu0
    %v1254 = vadd.f32 %v1229, %v1253
    %1255 = vmatmul.f32.gmra.mxu0 %v1234
    %v1256 = vpop.f32.mrf.mxu0
    %v1257 = vadd.f32 %v1229, %v1256
    %1258 = vdwg.mxu0
    %1259 = vmatpush.msra.mxu0 0.0
    %1260 = vmatpush.msra.mxu0 0.0
    %1261 = vmatpush.msra.mxu0 0.0
    %1262 = vmatpush.msra.mxu0 0.0
    %1263 = vmatpush.msra.mxu0 0.0
    %1264 = vmatpush.msra.mxu0 0.0
    %1265 = vmatpush.msra.mxu0 0.0
    %1266 = vmatpush.msra.mxu0 0.0
    %1267 = vmatpush.msra.mxu0 %v134
    %1268 = vmatpush.msra.mxu0 %v132
    %1269 = vmatpush.msra.mxu0 %v130
    %1270 = vmatpush.msra.mxu0 %v128
    %1271 = vmatpush.msra.mxu0 %v126
    %1272 = vmatpush.msra.mxu0 %v124
    %1273 = vmatpush.msra.mxu0 %v122
    %1274 = vmatpush.msra.mxu0 %v120
    %1275 = vmatmul.f32.gmra.mxu0 %v1234
    %v1276 = vpop.f32.mrf.mxu0
    %v1277 = vadd.f32 %v1230, %v1276
    %1278 = vmatmul.f32.gmra.mxu0 %v1234
    %v1279 = vpop.f32.mrf.mxu0
    %v1280 = vadd.f32 %v1230, %v1279
    %1281 = vdwg.mxu0
    %v1282 = vadd.f32 %v1116, %v1254
    %v1283 = vadd.f32 %v1119, %v1257
    %v1284 = vsub.f32 0.0, %v1282
    %v1285 = vsub.f32 0.0, %v1283
    %v1286 = vmul.f32 %v1284, 1.442695
    %v1287 = vpow.pop %v1286
    %v1288 = vmul.f32 %v1285, 1.442695
    %v1289 = vpow.pop %v1288
    %v1290 = vadd.f32 %v1287, 1.0
    %v1291 = vadd.f32 %v1289, 1.0
    %v1292 = vrcp.pop %v1290
    %v1293 = vrcp.pop %v1291
    %v1294 = vmul.f32 %v1292, %v1277
    %v1295 = vmul.f32 %v1293, %v1280
    %v1296 = vadd.f32 %v1181, %v1294
    %v1297 = vadd.f32 %v1184, %v1295
    %v1298 = vtanh.pop %v1296
    %v1299 = vtanh.pop %v1297
    %v1300 = vsub.f32 1.0, %v1292
    %v1301 = vsub.f32 1.0, %v1293
    %1304 = vrot.lane.b32.xlu0 %v1298, 64
    %v1305 = vpop.permute.xlu0 %1304
    %1306 = vrot.lane.b32.xlu0 %v1299, 64
    %v1307 = vpop.permute.xlu0 %1306
    %v1310 = vmul.f32 %v1300, %v1305
    %v1311 = vmul.f32 %v1301, %v1307
    %v1312 = vmul.f32 %v1292, 0.0
    %v1313 = vmul.f32 %v1293, 0.0
    %v1314 = vadd.f32 %v1310, %v1312
    %v1315 = vadd.f32 %v1311, %v1313
    %1318 = vrot.lane.b32.xlu0 %v1314, 64
    %v1319 = vpop.permute.xlu0 %1318
    %1320 = vrot.lane.b32.xlu0 %v1315, 64
    %v1321 = vpop.permute.xlu0 %1320
    %vm1324 = vcmask 261120
    %1325 = vst.msk [vmem:[#allocation3] sm:$0xff] %vm1324, %v1319
    %1326 = vst.msk [vmem:[#allocation3 + $0x8] sm:$0xff] %vm1324, %v1321
    %vm1327 = vcmask 523520
    %1328 = vst.msk [vmem:[#allocation3 + $0x70] sm:$0xff] %vm1327, %v1319
    %1329 = vst.msk [vmem:[#allocation3 + $0x78] sm:$0xff] %vm1327, %v1321
    %vm1330 = vcmask 785920
    %1331 = vst.msk [vmem:[#allocation3 + $0x70] sm:$0xff] %vm1330, %v1314
    %1332 = vst.msk [vmem:[#allocation3 + $0x78] sm:$0xff] %vm1330, %v1315
    %vm1333 = vcmask 1048320
    %1334 = vst.msk [vmem:[#allocation3] sm:$0xff] %vm1333, %v1314
    %1335 = vst.msk [vmem:[#allocation3 + $0x8] sm:$0xff] %vm1333, %v1315
    %v1336 = vsel %vm226, %v1319, 0
    %v1338 = vsel %vm226, %v1321, 0
    %1340 = vmatpush.msra.mxu0 0.0
    %1341 = vmatpush.msra.mxu0 0.0
    %1342 = vmatpush.msra.mxu0 0.0
    %1343 = vmatpush.msra.mxu0 0.0
    %1344 = vmatpush.msra.mxu0 0.0
    %1345 = vmatpush.msra.mxu0 0.0
    %1346 = vmatpush.msra.mxu0 0.0
    %1347 = vmatpush.msra.mxu0 0.0
    %1348 = vmatpush.msra.mxu0 %v133
    %1349 = vmatpush.msra.mxu0 %v131
    %1350 = vmatpush.msra.mxu0 %v129
    %1351 = vmatpush.msra.mxu0 %v127
    %1352 = vmatpush.msra.mxu0 %v125
    %1353 = vmatpush.msra.mxu0 %v123
    %1354 = vmatpush.msra.mxu0 %v121
    %1355 = vmatpush.msra.mxu0 %v119
    %1356 = vmatmul.f32.gmra.mxu0 %v1336
    %v1357 = vpop.f32.mrf.mxu0
    %v1358 = vadd.f32 %v1229, %v1357
    %1359 = vmatmul.f32.gmra.mxu0 %v1338
    %v1360 = vpop.f32.mrf.mxu0
    %v1361 = vadd.f32 %v1229, %v1360
    %1362 = vdwg.mxu0
    %1363 = vmatpush.msra.mxu0 0.0
    %1364 = vmatpush.msra.mxu0 0.0
    %1365 = vmatpush.msra.mxu0 0.0
    %1366 = vmatpush.msra.mxu0 0.0
    %1367 = vmatpush.msra.mxu0 0.0
    %1368 = vmatpush.msra.mxu0 0.0
    %1369 = vmatpush.msra.mxu0 0.0
    %1370 = vmatpush.msra.mxu0 0.0
    %1371 = vmatpush.msra.mxu0 %v134
    %1372 = vmatpush.msra.mxu0 %v132
    %1373 = vmatpush.msra.mxu0 %v130
    %1374 = vmatpush.msra.mxu0 %v128
    %1375 = vmatpush.msra.mxu0 %v126
    %1376 = vmatpush.msra.mxu0 %v124
    %1377 = vmatpush.msra.mxu0 %v122
    %1378 = vmatpush.msra.mxu0 %v120
    %1379 = vmatmul.f32.gmra.mxu0 %v1336
    %v1380 = vpop.f32.mrf.mxu0
    %v1381 = vadd.f32 %v1230, %v1380
    %1382 = vmatmul.f32.gmra.mxu0 %v1338
    %v1383 = vpop.f32.mrf.mxu0
    %v1384 = vadd.f32 %v1230, %v1383
    %1385 = vdwg.mxu0
    %v1386 = vadd.f32 %v1122, %v1358
    %v1387 = vadd.f32 %v1125, %v1361
    %v1388 = vsub.f32 0.0, %v1386
    %v1389 = vsub.f32 0.0, %v1387
    %v1390 = vmul.f32 %v1388, 1.442695
    %v1391 = vpow.pop %v1390
    %v1392 = vmul.f32 %v1389, 1.442695
    %v1393 = vpow.pop %v1392
    %v1394 = vadd.f32 %v1391, 1.0
    %v1395 = vadd.f32 %v1393, 1.0
    %v1396 = vrcp.pop %v1394
    %v1397 = vrcp.pop %v1395
    %v1398 = vmul.f32 %v1396, %v1381
    %v1399 = vmul.f32 %v1397, %v1384
    %v1400 = vadd.f32 %v1187, %v1398
    %v1401 = vadd.f32 %v1190, %v1399
    %v1402 = vtanh.pop %v1400
    %v1403 = vtanh.pop %v1401
    %v1404 = vsub.f32 1.0, %v1396
    %v1405 = vsub.f32 1.0, %v1397
    %1408 = vrot.lane.b32.xlu0 %v1402, 64
    %v1409 = vpop.permute.xlu0 %1408
    %1410 = vrot.lane.b32.xlu0 %v1403, 64
    %v1411 = vpop.permute.xlu0 %1410
    %v1414 = vmul.f32 %v1404, %v1409
    %v1415 = vmul.f32 %v1405, %v1411
    %v1416 = vmul.f32 %v1396, %v1314
    %v1417 = vmul.f32 %v1397, %v1315
    %v1418 = vadd.f32 %v1414, %v1416
    %v1419 = vadd.f32 %v1415, %v1417
    %1422 = vrot.lane.b32.xlu0 %v1418, 64
    %v1423 = vpop.permute.xlu0 %1422
    %1424 = vrot.lane.b32.xlu0 %v1419, 64
    %v1425 = vpop.permute.xlu0 %1424
    %1428 = vst.msk [vmem:[#allocation3 + $0x10] sm:$0xff] %vm1324, %v1423
    %1429 = vst.msk [vmem:[#allocation3 + $0x18] sm:$0xff] %vm1324, %v1425
    %1430 = vst.msk [vmem:[#allocation3 + $0x60] sm:$0xff] %vm1327, %v1423
    %1431 = vst.msk [vmem:[#allocation3 + $0x68] sm:$0xff] %vm1327, %v1425
    %1432 = vst.msk [vmem:[#allocation3 + $0x60] sm:$0xff] %vm1330, %v1418
    %1433 = vst.msk [vmem:[#allocation3 + $0x68] sm:$0xff] %vm1330, %v1419
    %1434 = vst.msk [vmem:[#allocation3 + $0x10] sm:$0xff] %vm1333, %v1418
    %1435 = vst.msk [vmem:[#allocation3 + $0x18] sm:$0xff] %vm1333, %v1419
    %v1436 = vsel %vm226, %v1423, 0
    %v1438 = vsel %vm226, %v1425, 0
    %1440 = vmatpush.msra.mxu0 0.0
    %1441 = vmatpush.msra.mxu0 0.0
    %1442 = vmatpush.msra.mxu0 0.0
    %1443 = vmatpush.msra.mxu0 0.0
    %1444 = vmatpush.msra.mxu0 0.0
    %1445 = vmatpush.msra.mxu0 0.0
    %1446 = vmatpush.msra.mxu0 0.0
    %1447 = vmatpush.msra.mxu0 0.0
    %1448 = vmatpush.msra.mxu0 %v133
    %1449 = vmatpush.msra.mxu0 %v131
    %1450 = vmatpush.msra.mxu0 %v129
    %1451 = vmatpush.msra.mxu0 %v127
    %1452 = vmatpush.msra.mxu0 %v125
    %1453 = vmatpush.msra.mxu0 %v123
    %1454 = vmatpush.msra.mxu0 %v121
    %1455 = vmatpush.msra.mxu0 %v119
    %1456 = vmatmul.f32.gmra.mxu0 %v1436
    %v1457 = vpop.f32.mrf.mxu0
    %v1458 = vadd.f32 %v1229, %v1457
    %1459 = vmatmul.f32.gmra.mxu0 %v1438
    %v1460 = vpop.f32.mrf.mxu0
    %v1461 = vadd.f32 %v1229, %v1460
    %1462 = vdwg.mxu0
    %1463 = vmatpush.msra.mxu0 0.0
    %1464 = vmatpush.msra.mxu0 0.0
    %1465 = vmatpush.msra.mxu0 0.0
    %1466 = vmatpush.msra.mxu0 0.0
    %1467 = vmatpush.msra.mxu0 0.0
    %1468 = vmatpush.msra.mxu0 0.0
    %1469 = vmatpush.msra.mxu0 0.0
    %1470 = vmatpush.msra.mxu0 0.0
    %1471 = vmatpush.msra.mxu0 %v134
    %1472 = vmatpush.msra.mxu0 %v132
    %1473 = vmatpush.msra.mxu0 %v130
    %1474 = vmatpush.msra.mxu0 %v128
    %1475 = vmatpush.msra.mxu0 %v126
    %1476 = vmatpush.msra.mxu0 %v124
    %1477 = vmatpush.msra.mxu0 %v122
    %1478 = vmatpush.msra.mxu0 %v120
    %1479 = vmatmul.f32.gmra.mxu0 %v1436
    %v1480 = vpop.f32.mrf.mxu0
    %v1481 = vadd.f32 %v1230, %v1480
    %1482 = vmatmul.f32.gmra.mxu0 %v1438
    %v1483 = vpop.f32.mrf.mxu0
    %v1484 = vadd.f32 %v1230, %v1483
    %1485 = vdwg.mxu0
    %v1486 = vadd.f32 %v1128, %v1458
    %v1487 = vadd.f32 %v1131, %v1461
    %v1488 = vsub.f32 0.0, %v1486
    %v1489 = vsub.f32 0.0, %v1487
    %v1490 = vmul.f32 %v1488, 1.442695
    %v1491 = vpow.pop %v1490
    %v1492 = vmul.f32 %v1489, 1.442695
    %v1493 = vpow.pop %v1492
    %v1494 = vadd.f32 %v1491, 1.0
    %v1495 = vadd.f32 %v1493, 1.0
    %v1496 = vrcp.pop %v1494
    %v1497 = vrcp.pop %v1495
    %v1498 = vmul.f32 %v1496, %v1481
    %v1499 = vmul.f32 %v1497, %v1484
    %v1500 = vadd.f32 %v1193, %v1498
    %v1501 = vadd.f32 %v1196, %v1499
    %v1502 = vtanh.pop %v1500
    %v1503 = vtanh.pop %v1501
    %v1504 = vsub.f32 1.0, %v1496
    %v1505 = vsub.f32 1.0, %v1497
    %1508 = vrot.lane.b32.xlu0 %v1502, 64
    %v1509 = vpop.permute.xlu0 %1508
    %1510 = vrot.lane.b32.xlu0 %v1503, 64
    %v1511 = vpop.permute.xlu0 %1510
    %v1514 = vmul.f32 %v1504, %v1509
    %v1515 = vmul.f32 %v1505, %v1511
    %v1516 = vmul.f32 %v1496, %v1418
    %v1517 = vmul.f32 %v1497, %v1419
    %v1518 = vadd.f32 %v1514, %v1516
    %v1519 = vadd.f32 %v1515, %v1517
    %1522 = vrot.lane.b32.xlu0 %v1518, 64
    %v1523 = vpop.permute.xlu0 %1522
    %1524 = vrot.lane.b32.xlu0 %v1519, 64
    %v1525 = vpop.permute.xlu0 %1524
    %1528 = vst.msk [vmem:[#allocation3 + $0x20] sm:$0xff] %vm1324, %v1523
    %1529 = vst.msk [vmem:[#allocation3 + $0x28] sm:$0xff] %vm1324, %v1525
    %1530 = vst.msk [vmem:[#allocation3 + $0x50] sm:$0xff] %vm1327, %v1523
    %1531 = vst.msk [vmem:[#allocation3 + $0x58] sm:$0xff] %vm1327, %v1525
    %1532 = vst.msk [vmem:[#allocation3 + $0x50] sm:$0xff] %vm1330, %v1518
    %1533 = vst.msk [vmem:[#allocation3 + $0x58] sm:$0xff] %vm1330, %v1519
    %1534 = vst.msk [vmem:[#allocation3 + $0x20] sm:$0xff] %vm1333, %v1518
    %1535 = vst.msk [vmem:[#allocation3 + $0x28] sm:$0xff] %vm1333, %v1519
    %v1536 = vsel %vm226, %v1523, 0
    %v1538 = vsel %vm226, %v1525, 0
    %1540 = vmatpush.msra.mxu0 0.0
    %1541 = vmatpush.msra.mxu0 0.0
    %1542 = vmatpush.msra.mxu0 0.0
    %1543 = vmatpush.msra.mxu0 0.0
    %1544 = vmatpush.msra.mxu0 0.0
    %1545 = vmatpush.msra.mxu0 0.0
    %1546 = vmatpush.msra.mxu0 0.0
    %1547 = vmatpush.msra.mxu0 0.0
    %1548 = vmatpush.msra.mxu0 %v133
    %1549 = vmatpush.msra.mxu0 %v131
    %1550 = vmatpush.msra.mxu0 %v129
    %1551 = vmatpush.msra.mxu0 %v127
    %1552 = vmatpush.msra.mxu0 %v125
    %1553 = vmatpush.msra.mxu0 %v123
    %1554 = vmatpush.msra.mxu0 %v121
    %1555 = vmatpush.msra.mxu0 %v119
    %1556 = vmatmul.f32.gmra.mxu0 %v1536
    %v1557 = vpop.f32.mrf.mxu0
    %v1558 = vadd.f32 %v1229, %v1557
    %1559 = vmatmul.f32.gmra.mxu0 %v1538
    %v1560 = vpop.f32.mrf.mxu0
    %v1561 = vadd.f32 %v1229, %v1560
    %1562 = vdwg.mxu0
    %1563 = vmatpush.msra.mxu0 0.0
    %1564 = vmatpush.msra.mxu0 0.0
    %1565 = vmatpush.msra.mxu0 0.0
    %1566 = vmatpush.msra.mxu0 0.0
    %1567 = vmatpush.msra.mxu0 0.0
    %1568 = vmatpush.msra.mxu0 0.0
    %1569 = vmatpush.msra.mxu0 0.0
    %1570 = vmatpush.msra.mxu0 0.0
    %1571 = vmatpush.msra.mxu0 %v134
    %1572 = vmatpush.msra.mxu0 %v132
    %1573 = vmatpush.msra.mxu0 %v130
    %1574 = vmatpush.msra.mxu0 %v128
    %1575 = vmatpush.msra.mxu0 %v126
    %1576 = vmatpush.msra.mxu0 %v124
    %1577 = vmatpush.msra.mxu0 %v122
    %1578 = vmatpush.msra.mxu0 %v120
    %1579 = vmatmul.f32.gmra.mxu0 %v1536
    %v1580 = vpop.f32.mrf.mxu0
    %v1581 = vadd.f32 %v1230, %v1580
    %1582 = vmatmul.f32.gmra.mxu0 %v1538
    %v1583 = vpop.f32.mrf.mxu0
    %v1584 = vadd.f32 %v1230, %v1583
    %1585 = vdwg.mxu0
    %v1586 = vadd.f32 %v1134, %v1558
    %v1587 = vadd.f32 %v1137, %v1561
    %v1588 = vsub.f32 0.0, %v1586
    %v1589 = vsub.f32 0.0, %v1587
    %v1590 = vmul.f32 %v1588, 1.442695
    %v1591 = vpow.pop %v1590
    %v1592 = vmul.f32 %v1589, 1.442695
    %v1593 = vpow.pop %v1592
    %v1594 = vadd.f32 %v1591, 1.0
    %v1595 = vadd.f32 %v1593, 1.0
    %v1596 = vrcp.pop %v1594
    %v1597 = vrcp.pop %v1595
    %v1598 = vmul.f32 %v1596, %v1581
    %v1599 = vmul.f32 %v1597, %v1584
    %v1600 = vadd.f32 %v1199, %v1598
    %v1601 = vadd.f32 %v1202, %v1599
    %v1602 = vtanh.pop %v1600
    %v1603 = vtanh.pop %v1601
    %v1604 = vsub.f32 1.0, %v1596
    %v1605 = vsub.f32 1.0, %v1597
    %1608 = vrot.lane.b32.xlu0 %v1602, 64
    %v1609 = vpop.permute.xlu0 %1608
    %1610 = vrot.lane.b32.xlu0 %v1603, 64
    %v1611 = vpop.permute.xlu0 %1610
    %v1614 = vmul.f32 %v1604, %v1609
    %v1615 = vmul.f32 %v1605, %v1611
    %v1616 = vmul.f32 %v1596, %v1518
    %v1617 = vmul.f32 %v1597, %v1519
    %v1618 = vadd.f32 %v1614, %v1616
    %v1619 = vadd.f32 %v1615, %v1617
    %1622 = vrot.lane.b32.xlu0 %v1618, 64
    %v1623 = vpop.permute.xlu0 %1622
    %1624 = vrot.lane.b32.xlu0 %v1619, 64
    %v1625 = vpop.permute.xlu0 %1624
    %1628 = vst.msk [vmem:[#allocation3 + $0x30] sm:$0xff] %vm1324, %v1623
    %1629 = vst.msk [vmem:[#allocation3 + $0x38] sm:$0xff] %vm1324, %v1625
    %1630 = vst.msk [vmem:[#allocation3 + $0x40] sm:$0xff] %vm1327, %v1623
    %1631 = vst.msk [vmem:[#allocation3 + $0x48] sm:$0xff] %vm1327, %v1625
    %1632 = vst.msk [vmem:[#allocation3 + $0x40] sm:$0xff] %vm1330, %v1618
    %1633 = vst.msk [vmem:[#allocation3 + $0x48] sm:$0xff] %vm1330, %v1619
    %1634 = vst.msk [vmem:[#allocation3 + $0x30] sm:$0xff] %vm1333, %v1618
    %1635 = vst.msk [vmem:[#allocation3 + $0x38] sm:$0xff] %vm1333, %v1619
    %v1636 = vsel %vm226, %v1623, 0
    %v1638 = vsel %vm226, %v1625, 0
    %1640 = vmatpush.msra.mxu0 0.0
    %1641 = vmatpush.msra.mxu0 0.0
    %1642 = vmatpush.msra.mxu0 0.0
    %1643 = vmatpush.msra.mxu0 0.0
    %1644 = vmatpush.msra.mxu0 0.0
    %1645 = vmatpush.msra.mxu0 0.0
    %1646 = vmatpush.msra.mxu0 0.0
    %1647 = vmatpush.msra.mxu0 0.0
    %1648 = vmatpush.msra.mxu0 %v133
    %1649 = vmatpush.msra.mxu0 %v131
    %1650 = vmatpush.msra.mxu0 %v129
    %1651 = vmatpush.msra.mxu0 %v127
    %1652 = vmatpush.msra.mxu0 %v125
    %1653 = vmatpush.msra.mxu0 %v123
    %1654 = vmatpush.msra.mxu0 %v121
    %1655 = vmatpush.msra.mxu0 %v119
    %1656 = vmatmul.f32.gmra.mxu0 %v1636
    %v1657 = vpop.f32.mrf.mxu0
    %v1658 = vadd.f32 %v1229, %v1657
    %1659 = vmatmul.f32.gmra.mxu0 %v1638
    %v1660 = vpop.f32.mrf.mxu0
    %v1661 = vadd.f32 %v1229, %v1660
    %1662 = vdwg.mxu0
    %1663 = vmatpush.msra.mxu0 0.0
    %1664 = vmatpush.msra.mxu0 0.0
    %1665 = vmatpush.msra.mxu0 0.0
    %1666 = vmatpush.msra.mxu0 0.0
    %1667 = vmatpush.msra.mxu0 0.0
    %1668 = vmatpush.msra.mxu0 0.0
    %1669 = vmatpush.msra.mxu0 0.0
    %1670 = vmatpush.msra.mxu0 0.0
    %1671 = vmatpush.msra.mxu0 %v134
    %1672 = vmatpush.msra.mxu0 %v132
    %1673 = vmatpush.msra.mxu0 %v130
    %1674 = vmatpush.msra.mxu0 %v128
    %1675 = vmatpush.msra.mxu0 %v126
    %1676 = vmatpush.msra.mxu0 %v124
    %1677 = vmatpush.msra.mxu0 %v122
    %1678 = vmatpush.msra.mxu0 %v120
    %1679 = vmatmul.f32.gmra.mxu0 %v1636
    %v1680 = vpop.f32.mrf.mxu0
    %v1681 = vadd.f32 %v1230, %v1680
    %1682 = vmatmul.f32.gmra.mxu0 %v1638
    %v1683 = vpop.f32.mrf.mxu0
    %v1684 = vadd.f32 %v1230, %v1683
    %1685 = vdwg.mxu0
    %v1686 = vadd.f32 %v1140, %v1658
    %v1687 = vadd.f32 %v1143, %v1661
    %v1688 = vsub.f32 0.0, %v1686
    %v1689 = vsub.f32 0.0, %v1687
    %v1690 = vmul.f32 %v1688, 1.442695
    %v1691 = vpow.pop %v1690
    %v1692 = vmul.f32 %v1689, 1.442695
    %v1693 = vpow.pop %v1692
    %v1694 = vadd.f32 %v1691, 1.0
    %v1695 = vadd.f32 %v1693, 1.0
    %v1696 = vrcp.pop %v1694
    %v1697 = vrcp.pop %v1695
    %v1698 = vmul.f32 %v1696, %v1681
    %v1699 = vmul.f32 %v1697, %v1684
    %v1700 = vadd.f32 %v1205, %v1698
    %v1701 = vadd.f32 %v1208, %v1699
    %v1702 = vtanh.pop %v1700
    %v1703 = vtanh.pop %v1701
    %v1704 = vsub.f32 1.0, %v1696
    %v1705 = vsub.f32 1.0, %v1697
    %1708 = vrot.lane.b32.xlu0 %v1702, 64
    %v1709 = vpop.permute.xlu0 %1708
    %1710 = vrot.lane.b32.xlu0 %v1703, 64
    %v1711 = vpop.permute.xlu0 %1710
    %v1714 = vmul.f32 %v1704, %v1709
    %v1715 = vmul.f32 %v1705, %v1711
    %v1716 = vmul.f32 %v1696, %v1618
    %v1717 = vmul.f32 %v1697, %v1619
    %v1718 = vadd.f32 %v1714, %v1716
    %v1719 = vadd.f32 %v1715, %v1717
    %1722 = vrot.lane.b32.xlu0 %v1718, 64
    %v1723 = vpop.permute.xlu0 %1722
    %1724 = vrot.lane.b32.xlu0 %v1719, 64
    %v1725 = vpop.permute.xlu0 %1724
    %1728 = vst.msk [vmem:[#allocation3 + $0x40] sm:$0xff] %vm1324, %v1723
    %1729 = vst.msk [vmem:[#allocation3 + $0x48] sm:$0xff] %vm1324, %v1725
    %1730 = vst.msk [vmem:[#allocation3 + $0x30] sm:$0xff] %vm1327, %v1723
    %1731 = vst.msk [vmem:[#allocation3 + $0x38] sm:$0xff] %vm1327, %v1725
    %1732 = vst.msk [vmem:[#allocation3 + $0x30] sm:$0xff] %vm1330, %v1718
    %1733 = vst.msk [vmem:[#allocation3 + $0x38] sm:$0xff] %vm1330, %v1719
    %1734 = vst.msk [vmem:[#allocation3 + $0x40] sm:$0xff] %vm1333, %v1718
    %1735 = vst.msk [vmem:[#allocation3 + $0x48] sm:$0xff] %vm1333, %v1719
    %v1736 = vsel %vm226, %v1723, 0
    %v1738 = vsel %vm226, %v1725, 0
    %1740 = vmatpush.msra.mxu0 0.0
    %1741 = vmatpush.msra.mxu0 0.0
    %1742 = vmatpush.msra.mxu0 0.0
    %1743 = vmatpush.msra.mxu0 0.0
    %1744 = vmatpush.msra.mxu0 0.0
    %1745 = vmatpush.msra.mxu0 0.0
    %1746 = vmatpush.msra.mxu0 0.0
    %1747 = vmatpush.msra.mxu0 0.0
    %1748 = vmatpush.msra.mxu0 %v133
    %1749 = vmatpush.msra.mxu0 %v131
    %1750 = vmatpush.msra.mxu0 %v129
    %1751 = vmatpush.msra.mxu0 %v127
    %1752 = vmatpush.msra.mxu0 %v125
    %1753 = vmatpush.msra.mxu0 %v123
    %1754 = vmatpush.msra.mxu0 %v121
    %1755 = vmatpush.msra.mxu0 %v119
    %1756 = vmatmul.f32.gmra.mxu0 %v1736
    %v1757 = vpop.f32.mrf.mxu0
    %v1758 = vadd.f32 %v1229, %v1757
    %1759 = vmatmul.f32.gmra.mxu0 %v1738
    %v1760 = vpop.f32.mrf.mxu0
    %v1761 = vadd.f32 %v1229, %v1760
    %1762 = vdwg.mxu0
    %1763 = vmatpush.msra.mxu0 0.0
    %1764 = vmatpush.msra.mxu0 0.0
    %1765 = vmatpush.msra.mxu0 0.0
    %1766 = vmatpush.msra.mxu0 0.0
    %1767 = vmatpush.msra.mxu0 0.0
    %1768 = vmatpush.msra.mxu0 0.0
    %1769 = vmatpush.msra.mxu0 0.0
    %1770 = vmatpush.msra.mxu0 0.0
    %1771 = vmatpush.msra.mxu0 %v134
    %1772 = vmatpush.msra.mxu0 %v132
    %1773 = vmatpush.msra.mxu0 %v130
    %1774 = vmatpush.msra.mxu0 %v128
    %1775 = vmatpush.msra.mxu0 %v126
    %1776 = vmatpush.msra.mxu0 %v124
    %1777 = vmatpush.msra.mxu0 %v122
    %1778 = vmatpush.msra.mxu0 %v120
    %1779 = vmatmul.f32.gmra.mxu0 %v1736
    %v1780 = vpop.f32.mrf.mxu0
    %v1781 = vadd.f32 %v1230, %v1780
    %1782 = vmatmul.f32.gmra.mxu0 %v1738
    %v1783 = vpop.f32.mrf.mxu0
    %v1784 = vadd.f32 %v1230, %v1783
    %1785 = vdwg.mxu0
    %v1786 = vadd.f32 %v1146, %v1758
    %v1787 = vadd.f32 %v1149, %v1761
    %v1788 = vsub.f32 0.0, %v1786
    %v1789 = vsub.f32 0.0, %v1787
    %v1790 = vmul.f32 %v1788, 1.442695
    %v1791 = vpow.pop %v1790
    %v1792 = vmul.f32 %v1789, 1.442695
    %v1793 = vpow.pop %v1792
    %v1794 = vadd.f32 %v1791, 1.0
    %v1795 = vadd.f32 %v1793, 1.0
    %v1796 = vrcp.pop %v1794
    %v1797 = vrcp.pop %v1795
    %v1798 = vmul.f32 %v1796, %v1781
    %v1799 = vmul.f32 %v1797, %v1784
    %v1800 = vadd.f32 %v1211, %v1798
    %v1801 = vadd.f32 %v1214, %v1799
    %v1802 = vtanh.pop %v1800
    %v1803 = vtanh.pop %v1801
    %v1804 = vsub.f32 1.0, %v1796
    %v1805 = vsub.f32 1.0, %v1797
    %1808 = vrot.lane.b32.xlu0 %v1802, 64
    %v1809 = vpop.permute.xlu0 %1808
    %1810 = vrot.lane.b32.xlu0 %v1803, 64
    %v1811 = vpop.permute.xlu0 %1810
    %v1814 = vmul.f32 %v1804, %v1809
    %v1815 = vmul.f32 %v1805, %v1811
    %v1816 = vmul.f32 %v1796, %v1718
    %v1817 = vmul.f32 %v1797, %v1719
    %v1818 = vadd.f32 %v1814, %v1816
    %v1819 = vadd.f32 %v1815, %v1817
    %1822 = vrot.lane.b32.xlu0 %v1818, 64
    %v1823 = vpop.permute.xlu0 %1822
    %1824 = vrot.lane.b32.xlu0 %v1819, 64
    %v1825 = vpop.permute.xlu0 %1824
    %1828 = vst.msk [vmem:[#allocation3 + $0x50] sm:$0xff] %vm1324, %v1823
    %1829 = vst.msk [vmem:[#allocation3 + $0x58] sm:$0xff] %vm1324, %v1825
    %1830 = vst.msk [vmem:[#allocation3 + $0x20] sm:$0xff] %vm1327, %v1823
    %1831 = vst.msk [vmem:[#allocation3 + $0x28] sm:$0xff] %vm1327, %v1825
    %1832 = vst.msk [vmem:[#allocation3 + $0x20] sm:$0xff] %vm1330, %v1818
    %1833 = vst.msk [vmem:[#allocation3 + $0x28] sm:$0xff] %vm1330, %v1819
    %1834 = vst.msk [vmem:[#allocation3 + $0x50] sm:$0xff] %vm1333, %v1818
    %1835 = vst.msk [vmem:[#allocation3 + $0x58] sm:$0xff] %vm1333, %v1819
    %v1836 = vsel %vm226, %v1823, 0
    %v1838 = vsel %vm226, %v1825, 0
    %1840 = vmatpush.msra.mxu0 0.0
    %1841 = vmatpush.msra.mxu0 0.0
    %1842 = vmatpush.msra.mxu0 0.0
    %1843 = vmatpush.msra.mxu0 0.0
    %1844 = vmatpush.msra.mxu0 0.0
    %1845 = vmatpush.msra.mxu0 0.0
    %1846 = vmatpush.msra.mxu0 0.0
    %1847 = vmatpush.msra.mxu0 0.0
    %1848 = vmatpush.msra.mxu0 %v133
    %1849 = vmatpush.msra.mxu0 %v131
    %1850 = vmatpush.msra.mxu0 %v129
    %1851 = vmatpush.msra.mxu0 %v127
    %1852 = vmatpush.msra.mxu0 %v125
    %1853 = vmatpush.msra.mxu0 %v123
    %1854 = vmatpush.msra.mxu0 %v121
    %1855 = vmatpush.msra.mxu0 %v119
    %1856 = vmatmul.f32.gmra.mxu0 %v1836
    %v1857 = vpop.f32.mrf.mxu0
    %v1858 = vadd.f32 %v1229, %v1857
    %1859 = vmatmul.f32.gmra.mxu0 %v1838
    %v1860 = vpop.f32.mrf.mxu0
    %v1861 = vadd.f32 %v1229, %v1860
    %1862 = vdwg.mxu0
    %1863 = vmatpush.msra.mxu0 0.0
    %1864 = vmatpush.msra.mxu0 0.0
    %1865 = vmatpush.msra.mxu0 0.0
    %1866 = vmatpush.msra.mxu0 0.0
    %1867 = vmatpush.msra.mxu0 0.0
    %1868 = vmatpush.msra.mxu0 0.0
    %1869 = vmatpush.msra.mxu0 0.0
    %1870 = vmatpush.msra.mxu0 0.0
    %1871 = vmatpush.msra.mxu0 %v134
    %1872 = vmatpush.msra.mxu0 %v132
    %1873 = vmatpush.msra.mxu0 %v130
    %1874 = vmatpush.msra.mxu0 %v128
    %1875 = vmatpush.msra.mxu0 %v126
    %1876 = vmatpush.msra.mxu0 %v124
    %1877 = vmatpush.msra.mxu0 %v122
    %1878 = vmatpush.msra.mxu0 %v120
    %1879 = vmatmul.f32.gmra.mxu0 %v1836
    %v1880 = vpop.f32.mrf.mxu0
    %v1881 = vadd.f32 %v1230, %v1880
    %1882 = vmatmul.f32.gmra.mxu0 %v1838
    %v1883 = vpop.f32.mrf.mxu0
    %v1884 = vadd.f32 %v1230, %v1883
    %1885 = vdwg.mxu0
    %v1886 = vadd.f32 %v1152, %v1858
    %v1887 = vadd.f32 %v1155, %v1861
    %v1888 = vsub.f32 0.0, %v1886
    %v1889 = vsub.f32 0.0, %v1887
    %v1890 = vmul.f32 %v1888, 1.442695
    %v1891 = vpow.pop %v1890
    %v1892 = vmul.f32 %v1889, 1.442695
    %v1893 = vpow.pop %v1892
    %v1894 = vadd.f32 %v1891, 1.0
    %v1895 = vadd.f32 %v1893, 1.0
    %v1896 = vrcp.pop %v1894
    %v1897 = vrcp.pop %v1895
    %v1898 = vmul.f32 %v1896, %v1881
    %v1899 = vmul.f32 %v1897, %v1884
    %v1900 = vadd.f32 %v1217, %v1898
    %v1901 = vadd.f32 %v1220, %v1899
    %v1902 = vtanh.pop %v1900
    %v1903 = vtanh.pop %v1901
    %v1904 = vsub.f32 1.0, %v1896
    %v1905 = vsub.f32 1.0, %v1897
    %1908 = vrot.lane.b32.xlu0 %v1902, 64
    %v1909 = vpop.permute.xlu0 %1908
    %1910 = vrot.lane.b32.xlu0 %v1903, 64
    %v1911 = vpop.permute.xlu0 %1910
    %v1914 = vmul.f32 %v1904, %v1909
    %v1915 = vmul.f32 %v1905, %v1911
    %v1916 = vmul.f32 %v1896, %v1818
    %v1917 = vmul.f32 %v1897, %v1819
    %v1918 = vadd.f32 %v1914, %v1916
    %v1919 = vadd.f32 %v1915, %v1917
    %1922 = vrot.lane.b32.xlu0 %v1918, 64
    %v1923 = vpop.permute.xlu0 %1922
    %1924 = vrot.lane.b32.xlu0 %v1919, 64
    %v1925 = vpop.permute.xlu0 %1924
    %1928 = vst.msk [vmem:[#allocation3 + $0x60] sm:$0xff] %vm1324, %v1923
    %1929 = vst.msk [vmem:[#allocation3 + $0x68] sm:$0xff] %vm1324, %v1925
    %1930 = vst.msk [vmem:[#allocation3 + $0x10] sm:$0xff] %vm1327, %v1923
    %1931 = vst.msk [vmem:[#allocation3 + $0x18] sm:$0xff] %vm1327, %v1925
    %1932 = vst.msk [vmem:[#allocation3 + $0x10] sm:$0xff] %vm1330, %v1918
    %1933 = vst.msk [vmem:[#allocation3 + $0x18] sm:$0xff] %vm1330, %v1919
    %1934 = vst.msk [vmem:[#allocation3 + $0x60] sm:$0xff] %vm1333, %v1918
    %1935 = vst.msk [vmem:[#allocation3 + $0x68] sm:$0xff] %vm1333, %v1919
    %v1936 = vsel %vm226, %v1923, 0
    %v1938 = vsel %vm226, %v1925, 0
    %1940 = vmatpush.msra.mxu0 0.0
    %1941 = vmatpush.msra.mxu0 0.0
    %1942 = vmatpush.msra.mxu0 0.0
    %1943 = vmatpush.msra.mxu0 0.0
    %1944 = vmatpush.msra.mxu0 0.0
    %1945 = vmatpush.msra.mxu0 0.0
    %1946 = vmatpush.msra.mxu0 0.0
    %1947 = vmatpush.msra.mxu0 0.0
    %1948 = vmatpush.msra.mxu0 %v133
    %1949 = vmatpush.msra.mxu0 %v131
    %1950 = vmatpush.msra.mxu0 %v129
    %1951 = vmatpush.msra.mxu0 %v127
    %1952 = vmatpush.msra.mxu0 %v125
    %1953 = vmatpush.msra.mxu0 %v123
    %1954 = vmatpush.msra.mxu0 %v121
    %1955 = vmatpush.msra.mxu0 %v119
    %1956 = vmatmul.f32.gmra.mxu0 %v1936
    %v1957 = vpop.f32.mrf.mxu0
    %v1958 = vadd.f32 %v1229, %v1957
    %1959 = vmatmul.f32.gmra.mxu0 %v1938
    %v1960 = vpop.f32.mrf.mxu0
    %v1961 = vadd.f32 %v1229, %v1960
    %1962 = vdwg.mxu0
    %1963 = vmatpush.msra.mxu0 0.0
    %1964 = vmatpush.msra.mxu0 0.0
    %1965 = vmatpush.msra.mxu0 0.0
    %1966 = vmatpush.msra.mxu0 0.0
    %1967 = vmatpush.msra.mxu0 0.0
    %1968 = vmatpush.msra.mxu0 0.0
    %1969 = vmatpush.msra.mxu0 0.0
    %1970 = vmatpush.msra.mxu0 0.0
    %1971 = vmatpush.msra.mxu0 %v134
    %1972 = vmatpush.msra.mxu0 %v132
    %1973 = vmatpush.msra.mxu0 %v130
    %1974 = vmatpush.msra.mxu0 %v128
    %1975 = vmatpush.msra.mxu0 %v126
    %1976 = vmatpush.msra.mxu0 %v124
    %1977 = vmatpush.msra.mxu0 %v122
    %1978 = vmatpush.msra.mxu0 %v120
    %1979 = vmatmul.f32.gmra.mxu0 %v1936
    %v1980 = vpop.f32.mrf.mxu0
    %v1981 = vadd.f32 %v1230, %v1980
    %1982 = vmatmul.f32.gmra.mxu0 %v1938
    %v1983 = vpop.f32.mrf.mxu0
    %v1984 = vadd.f32 %v1230, %v1983
    %1985 = vdwg.mxu0
    %v1986 = vadd.f32 %v1158, %v1958
    %v1987 = vadd.f32 %v1161, %v1961
    %v1988 = vsub.f32 0.0, %v1986
    %v1989 = vsub.f32 0.0, %v1987
    %v1990 = vmul.f32 %v1988, 1.442695
    %v1991 = vpow.pop %v1990
    %v1992 = vmul.f32 %v1989, 1.442695
    %v1993 = vpow.pop %v1992
    %v1994 = vadd.f32 %v1991, 1.0
    %v1995 = vadd.f32 %v1993, 1.0
    %v1996 = vrcp.pop %v1994
    %v1997 = vrcp.pop %v1995
    %v1998 = vmul.f32 %v1996, %v1981
    %v1999 = vmul.f32 %v1997, %v1984
    %v2000 = vadd.f32 %v1223, %v1998
    %v2001 = vadd.f32 %v1226, %v1999
    %v2002 = vtanh.pop %v2000
    %v2003 = vtanh.pop %v2001
    %v2004 = vsub.f32 1.0, %v1996
    %v2005 = vsub.f32 1.0, %v1997
    %2008 = vrot.lane.b32.xlu0 %v2002, 64
    %v2009 = vpop.permute.xlu0 %2008
    %2010 = vrot.lane.b32.xlu0 %v2003, 64
    %v2011 = vpop.permute.xlu0 %2010
    %v2014 = vmul.f32 %v2004, %v2009
    %v2015 = vmul.f32 %v2005, %v2011
    %v2016 = vmul.f32 %v1996, %v1918
    %v2017 = vmul.f32 %v1997, %v1919
    %v2018 = vadd.f32 %v2014, %v2016
    %v2019 = vadd.f32 %v2015, %v2017
    %2022 = vrot.lane.b32.xlu0 %v2018, 64
    %v2023 = vpop.permute.xlu0 %2022
    %2024 = vrot.lane.b32.xlu0 %v2019, 64
    %v2025 = vpop.permute.xlu0 %2024
    %2028 = vst.msk [vmem:[#allocation3 + $0x70] sm:$0xff] %vm1324, %v2023
    %2029 = vst.msk [vmem:[#allocation3 + $0x78] sm:$0xff] %vm1324, %v2025
    %2030 = vst.msk [vmem:[#allocation3] sm:$0xff] %vm1327, %v2023
    %2031 = vst.msk [vmem:[#allocation3 + $0x8] sm:$0xff] %vm1327, %v2025
    %2032 = vst.msk [vmem:[#allocation3] sm:$0xff] %vm1330, %v2018
    %2033 = vst.msk [vmem:[#allocation3 + $0x8] sm:$0xff] %vm1330, %v2019
    %2034 = vst.msk [vmem:[#allocation3 + $0x70] sm:$0xff] %vm1333, %v2018
    %2035 = vst.msk [vmem:[#allocation3 + $0x78] sm:$0xff] %vm1333, %v2019
    %v2036 = vld [vmem:[#allocation3] sm:$0xff]
    %v2037 = vld [vmem:[#allocation3 + $0x8] sm:$0xff]
    %v2038 = vld [vmem:[#allocation3 + $0x10] sm:$0xff]
    %v2039 = vld [vmem:[#allocation3 + $0x18] sm:$0xff]
    %v2040 = vld [vmem:[#allocation3 + $0x20] sm:$0xff]
    %v2041 = vld [vmem:[#allocation3 + $0x28] sm:$0xff]
    %v2042 = vld [vmem:[#allocation3 + $0x30] sm:$0xff]
    %v2043 = vld [vmem:[#allocation3 + $0x38] sm:$0xff]
    %v2044 = vld [vmem:[#allocation3 + $0x40] sm:$0xff]
    %v2045 = vld [vmem:[#allocation3 + $0x48] sm:$0xff]
    %v2046 = vld [vmem:[#allocation3 + $0x50] sm:$0xff]
    %v2047 = vld [vmem:[#allocation3 + $0x58] sm:$0xff]
    %v2048 = vld [vmem:[#allocation3 + $0x60] sm:$0xff]
    %v2049 = vld [vmem:[#allocation3 + $0x68] sm:$0xff]
    %v2050 = vld [vmem:[#allocation3 + $0x70] sm:$0xff]
    %v2051 = vld [vmem:[#allocation3 + $0x78] sm:$0xff]
    %v2053 = vperm.slane %v219, 0
    %v2054 = vperm.slane %v219, 1
    %2057 = vmatpush.msra.mxu0 %v165
    %2058 = vmatpush.msra.mxu0 %v163
    %2059 = vmatpush.msra.mxu0 %v161
    %2060 = vmatpush.msra.mxu0 %v159
    %2061 = vmatpush.msra.mxu0 %v157
    %2062 = vmatpush.msra.mxu0 %v155
    %2063 = vmatpush.msra.mxu0 %v153
    %2064 = vmatpush.msra.mxu0 %v151
    %2065 = vmatpush.msra.mxu0 %v149
    %2066 = vmatpush.msra.mxu0 %v147
    %2067 = vmatpush.msra.mxu0 %v145
    %2068 = vmatpush.msra.mxu0 %v143
    %2069 = vmatpush.msra.mxu0 %v141
    %2070 = vmatpush.msra.mxu0 %v139
    %2071 = vmatpush.msra.mxu0 %v137
    %2072 = vmatpush.msra.mxu0 %v135
    %2073 = vmatmul.f32.gmra.mxu0 %v2036
    %v2074 = vpop.f32.mrf.mxu0
    %v2075 = vadd.f32 %v2053, %v2074
    %2076 = vmatmul.f32.gmra.mxu0 %v2037
    %v2077 = vpop.f32.mrf.mxu0
    %v2078 = vadd.f32 %v2053, %v2077
    %2079 = vmatmul.f32.gmra.mxu0 %v2038
    %v2080 = vpop.f32.mrf.mxu0
    %v2081 = vadd.f32 %v2053, %v2080
    %2082 = vmatmul.f32.gmra.mxu0 %v2039
    %v2083 = vpop.f32.mrf.mxu0
    %v2084 = vadd.f32 %v2053, %v2083
    %2085 = vmatmul.f32.gmra.mxu0 %v2040
    %v2086 = vpop.f32.mrf.mxu0
    %v2087 = vadd.f32 %v2053, %v2086
    %2088 = vmatmul.f32.gmra.mxu0 %v2041
    %v2089 = vpop.f32.mrf.mxu0
    %v2090 = vadd.f32 %v2053, %v2089
    %2091 = vmatmul.f32.gmra.mxu0 %v2042
    %v2092 = vpop.f32.mrf.mxu0
    %v2093 = vadd.f32 %v2053, %v2092
    %2094 = vmatmul.f32.gmra.mxu0 %v2043
    %v2095 = vpop.f32.mrf.mxu0
    %v2096 = vadd.f32 %v2053, %v2095
    %2097 = vmatmul.f32.gmra.mxu0 %v2044
    %v2098 = vpop.f32.mrf.mxu0
    %v2099 = vadd.f32 %v2053, %v2098
    %2100 = vmatmul.f32.gmra.mxu0 %v2045
    %v2101 = vpop.f32.mrf.mxu0
    %v2102 = vadd.f32 %v2053, %v2101
    %2103 = vmatmul.f32.gmra.mxu0 %v2046
    %v2104 = vpop.f32.mrf.mxu0
    %v2105 = vadd.f32 %v2053, %v2104
    %2106 = vmatmul.f32.gmra.mxu0 %v2047
    %v2107 = vpop.f32.mrf.mxu0
    %v2108 = vadd.f32 %v2053, %v2107
    %2109 = vmatmul.f32.gmra.mxu0 %v2048
    %v2110 = vpop.f32.mrf.mxu0
    %v2111 = vadd.f32 %v2053, %v2110
    %2112 = vmatmul.f32.gmra.mxu0 %v2049
    %v2113 = vpop.f32.mrf.mxu0
    %v2114 = vadd.f32 %v2053, %v2113
    %2115 = vmatmul.f32.gmra.mxu0 %v2050
    %v2116 = vpop.f32.mrf.mxu0
    %v2117 = vadd.f32 %v2053, %v2116
    %2118 = vmatmul.f32.gmra.mxu0 %v2051
    %v2119 = vpop.f32.mrf.mxu0
    %v2120 = vadd.f32 %v2053, %v2119
    %2121 = vdwg.mxu0
    %2122 = vmatpush.msra.mxu0 %v166
    %2123 = vmatpush.msra.mxu0 %v164
    %2124 = vmatpush.msra.mxu0 %v162
    %2125 = vmatpush.msra.mxu0 %v160
    %2126 = vmatpush.msra.mxu0 %v158
    %2127 = vmatpush.msra.mxu0 %v156
    %2128 = vmatpush.msra.mxu0 %v154
    %2129 = vmatpush.msra.mxu0 %v152
    %2130 = vmatpush.msra.mxu0 %v150
    %2131 = vmatpush.msra.mxu0 %v148
    %2132 = vmatpush.msra.mxu0 %v146
    %2133 = vmatpush.msra.mxu0 %v144
    %2134 = vmatpush.msra.mxu0 %v142
    %2135 = vmatpush.msra.mxu0 %v140
    %2136 = vmatpush.msra.mxu0 %v138
    %2137 = vmatpush.msra.mxu0 %v136
    %2138 = vmatmul.f32.gmra.mxu0 %v2036
    %v2139 = vpop.f32.mrf.mxu0
    %v2140 = vadd.f32 %v2054, %v2139
    %2141 = vmatmul.f32.gmra.mxu0 %v2037
    %v2142 = vpop.f32.mrf.mxu0
    %v2143 = vadd.f32 %v2054, %v2142
    %2144 = vmatmul.f32.gmra.mxu0 %v2038
    %v2145 = vpop.f32.mrf.mxu0
    %v2146 = vadd.f32 %v2054, %v2145
    %2147 = vmatmul.f32.gmra.mxu0 %v2039
    %v2148 = vpop.f32.mrf.mxu0
    %v2149 = vadd.f32 %v2054, %v2148
    %2150 = vmatmul.f32.gmra.mxu0 %v2040
    %v2151 = vpop.f32.mrf.mxu0
    %v2152 = vadd.f32 %v2054, %v2151
    %2153 = vmatmul.f32.gmra.mxu0 %v2041
    %v2154 = vpop.f32.mrf.mxu0
    %v2155 = vadd.f32 %v2054, %v2154
    %2156 = vmatmul.f32.gmra.mxu0 %v2042
    %v2157 = vpop.f32.mrf.mxu0
    %v2158 = vadd.f32 %v2054, %v2157
    %2159 = vmatmul.f32.gmra.mxu0 %v2043
    %v2160 = vpop.f32.mrf.mxu0
    %v2161 = vadd.f32 %v2054, %v2160
    %2162 = vmatmul.f32.gmra.mxu0 %v2044
    %v2163 = vpop.f32.mrf.mxu0
    %v2164 = vadd.f32 %v2054, %v2163
    %2165 = vmatmul.f32.gmra.mxu0 %v2045
    %v2166 = vpop.f32.mrf.mxu0
    %v2167 = vadd.f32 %v2054, %v2166
    %2168 = vmatmul.f32.gmra.mxu0 %v2046
    %v2169 = vpop.f32.mrf.mxu0
    %v2170 = vadd.f32 %v2054, %v2169
    %2171 = vmatmul.f32.gmra.mxu0 %v2047
    %v2172 = vpop.f32.mrf.mxu0
    %v2173 = vadd.f32 %v2054, %v2172
    %2174 = vmatmul.f32.gmra.mxu0 %v2048
    %v2175 = vpop.f32.mrf.mxu0
    %v2176 = vadd.f32 %v2054, %v2175
    %2177 = vmatmul.f32.gmra.mxu0 %v2049
    %v2178 = vpop.f32.mrf.mxu0
    %v2179 = vadd.f32 %v2054, %v2178
    %2180 = vmatmul.f32.gmra.mxu0 %v2050
    %v2181 = vpop.f32.mrf.mxu0
    %v2182 = vadd.f32 %v2054, %v2181
    %2183 = vmatmul.f32.gmra.mxu0 %v2051
    %v2184 = vpop.f32.mrf.mxu0
    %v2185 = vadd.f32 %v2054, %v2184
    %2186 = vdwg.mxu0
    %v2188 = vperm.slane %v221, 0
    %v2189 = vperm.slane %v221, 1
    %2192 = vmatpush.msra.mxu0 0.0
    %2193 = vmatpush.msra.mxu0 0.0
    %2194 = vmatpush.msra.mxu0 0.0
    %2195 = vmatpush.msra.mxu0 0.0
    %2196 = vmatpush.msra.mxu0 0.0
    %2197 = vmatpush.msra.mxu0 0.0
    %2198 = vmatpush.msra.mxu0 0.0
    %2199 = vmatpush.msra.mxu0 0.0
    %2200 = vmatpush.msra.mxu0 %v181
    %2201 = vmatpush.msra.mxu0 %v179
    %2202 = vmatpush.msra.mxu0 %v177
    %2203 = vmatpush.msra.mxu0 %v175
    %2204 = vmatpush.msra.mxu0 %v173
    %2205 = vmatpush.msra.mxu0 %v171
    %2206 = vmatpush.msra.mxu0 %v169
    %2207 = vmatpush.msra.mxu0 %v167
    %2208 = vmatmul.f32.gmra.mxu0 %v1234
    %v2209 = vpop.f32.mrf.mxu0
    %v2210 = vadd.f32 %v2188, %v2209
    %2211 = vmatmul.f32.gmra.mxu0 %v1234
    %v2212 = vpop.f32.mrf.mxu0
    %v2213 = vadd.f32 %v2188, %v2212
    %2214 = vdwg.mxu0
    %2215 = vmatpush.msra.mxu0 0.0
    %2216 = vmatpush.msra.mxu0 0.0
    %2217 = vmatpush.msra.mxu0 0.0
    %2218 = vmatpush.msra.mxu0 0.0
    %2219 = vmatpush.msra.mxu0 0.0
    %2220 = vmatpush.msra.mxu0 0.0
    %2221 = vmatpush.msra.mxu0 0.0
    %2222 = vmatpush.msra.mxu0 0.0
    %2223 = vmatpush.msra.mxu0 %v182
    %2224 = vmatpush.msra.mxu0 %v180
    %2225 = vmatpush.msra.mxu0 %v178
    %2226 = vmatpush.msra.mxu0 %v176
    %2227 = vmatpush.msra.mxu0 %v174
    %2228 = vmatpush.msra.mxu0 %v172
    %2229 = vmatpush.msra.mxu0 %v170
    %2230 = vmatpush.msra.mxu0 %v168
    %2231 = vmatmul.f32.gmra.mxu0 %v1234
    %v2232 = vpop.f32.mrf.mxu0
    %v2233 = vadd.f32 %v2189, %v2232
    %2234 = vmatmul.f32.gmra.mxu0 %v1234
    %v2235 = vpop.f32.mrf.mxu0
    %v2236 = vadd.f32 %v2189, %v2235
    %2237 = vdwg.mxu0
    %v2238 = vadd.f32 %v2075, %v2210
    %v2239 = vadd.f32 %v2078, %v2213
    %v2240 = vsub.f32 0.0, %v2238
    %v2241 = vsub.f32 0.0, %v2239
    %v2242 = vmul.f32 %v2240, 1.442695
    %v2243 = vpow.pop %v2242
    %v2244 = vmul.f32 %v2241, 1.442695
    %v2245 = vpow.pop %v2244
    %v2246 = vadd.f32 %v2243, 1.0
    %v2247 = vadd.f32 %v2245, 1.0
    %v2248 = vrcp.pop %v2246
    %v2249 = vrcp.pop %v2247
    %v2250 = vmul.f32 %v2248, %v2233
    %v2251 = vmul.f32 %v2249, %v2236
    %v2252 = vadd.f32 %v2140, %v2250
    %v2253 = vadd.f32 %v2143, %v2251
    %v2254 = vtanh.pop %v2252
    %v2255 = vtanh.pop %v2253
    %v2256 = vsub.f32 1.0, %v2248
    %v2257 = vsub.f32 1.0, %v2249
    %2260 = vrot.lane.b32.xlu0 %v2254, 64
    %v2261 = vpop.permute.xlu0 %2260
    %2262 = vrot.lane.b32.xlu0 %v2255, 64
    %v2263 = vpop.permute.xlu0 %2262
    %v2266 = vmul.f32 %v2256, %v2261
    %v2267 = vmul.f32 %v2257, %v2263
    %v2268 = vmul.f32 %v2248, 0.0
    %v2269 = vmul.f32 %v2249, 0.0
    %v2270 = vadd.f32 %v2266, %v2268
    %v2271 = vadd.f32 %v2267, %v2269
    %2274 = vrot.lane.b32.xlu0 %v2270, 64
    %v2275 = vpop.permute.xlu0 %2274
    %2276 = vrot.lane.b32.xlu0 %v2271, 64
    %v2277 = vpop.permute.xlu0 %2276
    %v2278 = vsel %vm226, %v2275, 0
    %v2280 = vsel %vm226, %v2277, 0
    %2282 = vmatpush.msra.mxu0 0.0
    %2283 = vmatpush.msra.mxu0 0.0
    %2284 = vmatpush.msra.mxu0 0.0
    %2285 = vmatpush.msra.mxu0 0.0
    %2286 = vmatpush.msra.mxu0 0.0
    %2287 = vmatpush.msra.mxu0 0.0
    %2288 = vmatpush.msra.mxu0 0.0
    %2289 = vmatpush.msra.mxu0 0.0
    %2290 = vmatpush.msra.mxu0 %v181
    %2291 = vmatpush.msra.mxu0 %v179
    %2292 = vmatpush.msra.mxu0 %v177
    %2293 = vmatpush.msra.mxu0 %v175
    %2294 = vmatpush.msra.mxu0 %v173
    %2295 = vmatpush.msra.mxu0 %v171
    %2296 = vmatpush.msra.mxu0 %v169
    %2297 = vmatpush.msra.mxu0 %v167
    %2298 = vmatmul.f32.gmra.mxu0 %v2278
    %v2299 = vpop.f32.mrf.mxu0
    %v2300 = vadd.f32 %v2188, %v2299
    %2301 = vmatmul.f32.gmra.mxu0 %v2280
    %v2302 = vpop.f32.mrf.mxu0
    %v2303 = vadd.f32 %v2188, %v2302
    %2304 = vdwg.mxu0
    %2305 = vmatpush.msra.mxu0 0.0
    %2306 = vmatpush.msra.mxu0 0.0
    %2307 = vmatpush.msra.mxu0 0.0
    %2308 = vmatpush.msra.mxu0 0.0
    %2309 = vmatpush.msra.mxu0 0.0
    %2310 = vmatpush.msra.mxu0 0.0
    %2311 = vmatpush.msra.mxu0 0.0
    %2312 = vmatpush.msra.mxu0 0.0
    %2313 = vmatpush.msra.mxu0 %v182
    %2314 = vmatpush.msra.mxu0 %v180
    %2315 = vmatpush.msra.mxu0 %v178
    %2316 = vmatpush.msra.mxu0 %v176
    %2317 = vmatpush.msra.mxu0 %v174
    %2318 = vmatpush.msra.mxu0 %v172
    %2319 = vmatpush.msra.mxu0 %v170
    %2320 = vmatpush.msra.mxu0 %v168
    %2321 = vmatmul.f32.gmra.mxu0 %v2278
    %v2322 = vpop.f32.mrf.mxu0
    %v2323 = vadd.f32 %v2189, %v2322
    %2324 = vmatmul.f32.gmra.mxu0 %v2280
    %v2325 = vpop.f32.mrf.mxu0
    %v2326 = vadd.f32 %v2189, %v2325
    %2327 = vdwg.mxu0
    %v2328 = vadd.f32 %v2081, %v2300
    %v2329 = vadd.f32 %v2084, %v2303
    %v2330 = vsub.f32 0.0, %v2328
    %v2331 = vsub.f32 0.0, %v2329
    %v2332 = vmul.f32 %v2330, 1.442695
    %v2333 = vpow.pop %v2332
    %v2334 = vmul.f32 %v2331, 1.442695
    %v2335 = vpow.pop %v2334
    %v2336 = vadd.f32 %v2333, 1.0
    %v2337 = vadd.f32 %v2335, 1.0
    %v2338 = vrcp.pop %v2336
    %v2339 = vrcp.pop %v2337
    %v2340 = vmul.f32 %v2338, %v2323
    %v2341 = vmul.f32 %v2339, %v2326
    %v2342 = vadd.f32 %v2146, %v2340
    %v2343 = vadd.f32 %v2149, %v2341
    %v2344 = vtanh.pop %v2342
    %v2345 = vtanh.pop %v2343
    %v2346 = vsub.f32 1.0, %v2338
    %v2347 = vsub.f32 1.0, %v2339
    %2350 = vrot.lane.b32.xlu0 %v2344, 64
    %v2351 = vpop.permute.xlu0 %2350
    %2352 = vrot.lane.b32.xlu0 %v2345, 64
    %v2353 = vpop.permute.xlu0 %2352
    %v2356 = vmul.f32 %v2346, %v2351
    %v2357 = vmul.f32 %v2347, %v2353
    %v2358 = vmul.f32 %v2338, %v2270
    %v2359 = vmul.f32 %v2339, %v2271
    %v2360 = vadd.f32 %v2356, %v2358
    %v2361 = vadd.f32 %v2357, %v2359
    %v2362 = vmax.f32 %v2270, %v2360
    %v2363 = vmax.f32 %v2271, %v2361
    %2366 = vrot.lane.b32.xlu0 %v2360, 64
    %v2367 = vpop.permute.xlu0 %2366
    %2368 = vrot.lane.b32.xlu0 %v2361, 64
    %v2369 = vpop.permute.xlu0 %2368
    %v2370 = vsel %vm226, %v2367, 0
    %v2372 = vsel %vm226, %v2369, 0
    %2374 = vmatpush.msra.mxu0 0.0
    %2375 = vmatpush.msra.mxu0 0.0
    %2376 = vmatpush.msra.mxu0 0.0
    %2377 = vmatpush.msra.mxu0 0.0
    %2378 = vmatpush.msra.mxu0 0.0
    %2379 = vmatpush.msra.mxu0 0.0
    %2380 = vmatpush.msra.mxu0 0.0
    %2381 = vmatpush.msra.mxu0 0.0
    %2382 = vmatpush.msra.mxu0 %v181
    %2383 = vmatpush.msra.mxu0 %v179
    %2384 = vmatpush.msra.mxu0 %v177
    %2385 = vmatpush.msra.mxu0 %v175
    %2386 = vmatpush.msra.mxu0 %v173
    %2387 = vmatpush.msra.mxu0 %v171
    %2388 = vmatpush.msra.mxu0 %v169
    %2389 = vmatpush.msra.mxu0 %v167
    %2390 = vmatmul.f32.gmra.mxu0 %v2370
    %v2391 = vpop.f32.mrf.mxu0
    %v2392 = vadd.f32 %v2188, %v2391
    %2393 = vmatmul.f32.gmra.mxu0 %v2372
    %v2394 = vpop.f32.mrf.mxu0
    %v2395 = vadd.f32 %v2188, %v2394
    %2396 = vdwg.mxu0
    %2397 = vmatpush.msra.mxu0 0.0
    %2398 = vmatpush.msra.mxu0 0.0
    %2399 = vmatpush.msra.mxu0 0.0
    %2400 = vmatpush.msra.mxu0 0.0
    %2401 = vmatpush.msra.mxu0 0.0
    %2402 = vmatpush.msra.mxu0 0.0
    %2403 = vmatpush.msra.mxu0 0.0
    %2404 = vmatpush.msra.mxu0 0.0
    %2405 = vmatpush.msra.mxu0 %v182
    %2406 = vmatpush.msra.mxu0 %v180
    %2407 = vmatpush.msra.mxu0 %v178
    %2408 = vmatpush.msra.mxu0 %v176
    %2409 = vmatpush.msra.mxu0 %v174
    %2410 = vmatpush.msra.mxu0 %v172
    %2411 = vmatpush.msra.mxu0 %v170
    %2412 = vmatpush.msra.mxu0 %v168
    %2413 = vmatmul.f32.gmra.mxu0 %v2370
    %v2414 = vpop.f32.mrf.mxu0
    %v2415 = vadd.f32 %v2189, %v2414
    %2416 = vmatmul.f32.gmra.mxu0 %v2372
    %v2417 = vpop.f32.mrf.mxu0
    %v2418 = vadd.f32 %v2189, %v2417
    %2419 = vdwg.mxu0
    %v2420 = vadd.f32 %v2087, %v2392
    %v2421 = vadd.f32 %v2090, %v2395
    %v2422 = vsub.f32 0.0, %v2420
    %v2423 = vsub.f32 0.0, %v2421
    %v2424 = vmul.f32 %v2422, 1.442695
    %v2425 = vpow.pop %v2424
    %v2426 = vmul.f32 %v2423, 1.442695
    %v2427 = vpow.pop %v2426
    %v2428 = vadd.f32 %v2425, 1.0
    %v2429 = vadd.f32 %v2427, 1.0
    %v2430 = vrcp.pop %v2428
    %v2431 = vrcp.pop %v2429
    %v2432 = vmul.f32 %v2430, %v2415
    %v2433 = vmul.f32 %v2431, %v2418
    %v2434 = vadd.f32 %v2152, %v2432
    %v2435 = vadd.f32 %v2155, %v2433
    %v2436 = vtanh.pop %v2434
    %v2437 = vtanh.pop %v2435
    %v2438 = vsub.f32 1.0, %v2430
    %v2439 = vsub.f32 1.0, %v2431
    %2442 = vrot.lane.b32.xlu0 %v2436, 64
    %v2443 = vpop.permute.xlu0 %2442
    %2444 = vrot.lane.b32.xlu0 %v2437, 64
    %v2445 = vpop.permute.xlu0 %2444
    %v2448 = vmul.f32 %v2438, %v2443
    %v2449 = vmul.f32 %v2439, %v2445
    %v2450 = vmul.f32 %v2430, %v2360
    %v2451 = vmul.f32 %v2431, %v2361
    %v2452 = vadd.f32 %v2448, %v2450
    %v2453 = vadd.f32 %v2449, %v2451
    %v2454 = vmax.f32 %v2362, %v2452
    %v2455 = vmax.f32 %v2363, %v2453
    %2458 = vrot.lane.b32.xlu0 %v2452, 64
    %v2459 = vpop.permute.xlu0 %2458
    %2460 = vrot.lane.b32.xlu0 %v2453, 64
    %v2461 = vpop.permute.xlu0 %2460
    %v2462 = vsel %vm226, %v2459, 0
    %v2464 = vsel %vm226, %v2461, 0
    %2466 = vmatpush.msra.mxu0 0.0
    %2467 = vmatpush.msra.mxu0 0.0
    %2468 = vmatpush.msra.mxu0 0.0
    %2469 = vmatpush.msra.mxu0 0.0
    %2470 = vmatpush.msra.mxu0 0.0
    %2471 = vmatpush.msra.mxu0 0.0
    %2472 = vmatpush.msra.mxu0 0.0
    %2473 = vmatpush.msra.mxu0 0.0
    %2474 = vmatpush.msra.mxu0 %v181
    %2475 = vmatpush.msra.mxu0 %v179
    %2476 = vmatpush.msra.mxu0 %v177
    %2477 = vmatpush.msra.mxu0 %v175
    %2478 = vmatpush.msra.mxu0 %v173
    %2479 = vmatpush.msra.mxu0 %v171
    %2480 = vmatpush.msra.mxu0 %v169
    %2481 = vmatpush.msra.mxu0 %v167
    %2482 = vmatmul.f32.gmra.mxu0 %v2462
    %v2483 = vpop.f32.mrf.mxu0
    %v2484 = vadd.f32 %v2188, %v2483
    %2485 = vmatmul.f32.gmra.mxu0 %v2464
    %v2486 = vpop.f32.mrf.mxu0
    %v2487 = vadd.f32 %v2188, %v2486
    %2488 = vdwg.mxu0
    %2489 = vmatpush.msra.mxu0 0.0
    %2490 = vmatpush.msra.mxu0 0.0
    %2491 = vmatpush.msra.mxu0 0.0
    %2492 = vmatpush.msra.mxu0 0.0
    %2493 = vmatpush.msra.mxu0 0.0
    %2494 = vmatpush.msra.mxu0 0.0
    %2495 = vmatpush.msra.mxu0 0.0
    %2496 = vmatpush.msra.mxu0 0.0
    %2497 = vmatpush.msra.mxu0 %v182
    %2498 = vmatpush.msra.mxu0 %v180
    %2499 = vmatpush.msra.mxu0 %v178
    %2500 = vmatpush.msra.mxu0 %v176
    %2501 = vmatpush.msra.mxu0 %v174
    %2502 = vmatpush.msra.mxu0 %v172
    %2503 = vmatpush.msra.mxu0 %v170
    %2504 = vmatpush.msra.mxu0 %v168
    %2505 = vmatmul.f32.gmra.mxu0 %v2462
    %v2506 = vpop.f32.mrf.mxu0
    %v2507 = vadd.f32 %v2189, %v2506
    %2508 = vmatmul.f32.gmra.mxu0 %v2464
    %v2509 = vpop.f32.mrf.mxu0
    %v2510 = vadd.f32 %v2189, %v2509
    %2511 = vdwg.mxu0
    %v2512 = vadd.f32 %v2093, %v2484
    %v2513 = vadd.f32 %v2096, %v2487
    %v2514 = vsub.f32 0.0, %v2512
    %v2515 = vsub.f32 0.0, %v2513
    %v2516 = vmul.f32 %v2514, 1.442695
    %v2517 = vpow.pop %v2516
    %v2518 = vmul.f32 %v2515, 1.442695
    %v2519 = vpow.pop %v2518
    %v2520 = vadd.f32 %v2517, 1.0
    %v2521 = vadd.f32 %v2519, 1.0
    %v2522 = vrcp.pop %v2520
    %v2523 = vrcp.pop %v2521
    %v2524 = vmul.f32 %v2522, %v2507
    %v2525 = vmul.f32 %v2523, %v2510
    %v2526 = vadd.f32 %v2158, %v2524
    %v2527 = vadd.f32 %v2161, %v2525
    %v2528 = vtanh.pop %v2526
    %v2529 = vtanh.pop %v2527
    %v2530 = vsub.f32 1.0, %v2522
    %v2531 = vsub.f32 1.0, %v2523
    %2534 = vrot.lane.b32.xlu0 %v2528, 64
    %v2535 = vpop.permute.xlu0 %2534
    %2536 = vrot.lane.b32.xlu0 %v2529, 64
    %v2537 = vpop.permute.xlu0 %2536
    %v2540 = vmul.f32 %v2530, %v2535
    %v2541 = vmul.f32 %v2531, %v2537
    %v2542 = vmul.f32 %v2522, %v2452
    %v2543 = vmul.f32 %v2523, %v2453
    %v2544 = vadd.f32 %v2540, %v2542
    %v2545 = vadd.f32 %v2541, %v2543
    %v2546 = vmax.f32 %v2454, %v2544
    %v2547 = vmax.f32 %v2455, %v2545
    %2550 = vrot.lane.b32.xlu0 %v2544, 64
    %v2551 = vpop.permute.xlu0 %2550
    %2552 = vrot.lane.b32.xlu0 %v2545, 64
    %v2553 = vpop.permute.xlu0 %2552
    %v2554 = vsel %vm226, %v2551, 0
    %v2556 = vsel %vm226, %v2553, 0
    %2558 = vmatpush.msra.mxu0 0.0
    %2559 = vmatpush.msra.mxu0 0.0
    %2560 = vmatpush.msra.mxu0 0.0
    %2561 = vmatpush.msra.mxu0 0.0
    %2562 = vmatpush.msra.mxu0 0.0
    %2563 = vmatpush.msra.mxu0 0.0
    %2564 = vmatpush.msra.mxu0 0.0
    %2565 = vmatpush.msra.mxu0 0.0
    %2566 = vmatpush.msra.mxu0 %v181
    %2567 = vmatpush.msra.mxu0 %v179
    %2568 = vmatpush.msra.mxu0 %v177
    %2569 = vmatpush.msra.mxu0 %v175
    %2570 = vmatpush.msra.mxu0 %v173
    %2571 = vmatpush.msra.mxu0 %v171
    %2572 = vmatpush.msra.mxu0 %v169
    %2573 = vmatpush.msra.mxu0 %v167
    %2574 = vmatmul.f32.gmra.mxu0 %v2554
    %v2575 = vpop.f32.mrf.mxu0
    %v2576 = vadd.f32 %v2188, %v2575
    %2577 = vmatmul.f32.gmra.mxu0 %v2556
    %v2578 = vpop.f32.mrf.mxu0
    %v2579 = vadd.f32 %v2188, %v2578
    %2580 = vdwg.mxu0
    %2581 = vmatpush.msra.mxu0 0.0
    %2582 = vmatpush.msra.mxu0 0.0
    %2583 = vmatpush.msra.mxu0 0.0
    %2584 = vmatpush.msra.mxu0 0.0
    %2585 = vmatpush.msra.mxu0 0.0
    %2586 = vmatpush.msra.mxu0 0.0
    %2587 = vmatpush.msra.mxu0 0.0
    %2588 = vmatpush.msra.mxu0 0.0
    %2589 = vmatpush.msra.mxu0 %v182
    %2590 = vmatpush.msra.mxu0 %v180
    %2591 = vmatpush.msra.mxu0 %v178
    %2592 = vmatpush.msra.mxu0 %v176
    %2593 = vmatpush.msra.mxu0 %v174
    %2594 = vmatpush.msra.mxu0 %v172
    %2595 = vmatpush.msra.mxu0 %v170
    %2596 = vmatpush.msra.mxu0 %v168
    %2597 = vmatmul.f32.gmra.mxu0 %v2554
    %v2598 = vpop.f32.mrf.mxu0
    %v2599 = vadd.f32 %v2189, %v2598
    %2600 = vmatmul.f32.gmra.mxu0 %v2556
    %v2601 = vpop.f32.mrf.mxu0
    %v2602 = vadd.f32 %v2189, %v2601
    %2603 = vdwg.mxu0
    %v2604 = vadd.f32 %v2099, %v2576
    %v2605 = vadd.f32 %v2102, %v2579
    %v2606 = vsub.f32 0.0, %v2604
    %v2607 = vsub.f32 0.0, %v2605
    %v2608 = vmul.f32 %v2606, 1.442695
    %v2609 = vpow.pop %v2608
    %v2610 = vmul.f32 %v2607, 1.442695
    %v2611 = vpow.pop %v2610
    %v2612 = vadd.f32 %v2609, 1.0
    %v2613 = vadd.f32 %v2611, 1.0
    %v2614 = vrcp.pop %v2612
    %v2615 = vrcp.pop %v2613
    %v2616 = vmul.f32 %v2614, %v2599
    %v2617 = vmul.f32 %v2615, %v2602
    %v2618 = vadd.f32 %v2164, %v2616
    %v2619 = vadd.f32 %v2167, %v2617
    %v2620 = vtanh.pop %v2618
    %v2621 = vtanh.pop %v2619
    %v2622 = vsub.f32 1.0, %v2614
    %v2623 = vsub.f32 1.0, %v2615
    %2626 = vrot.lane.b32.xlu0 %v2620, 64
    %v2627 = vpop.permute.xlu0 %2626
    %2628 = vrot.lane.b32.xlu0 %v2621, 64
    %v2629 = vpop.permute.xlu0 %2628
    %v2632 = vmul.f32 %v2622, %v2627
    %v2633 = vmul.f32 %v2623, %v2629
    %v2634 = vmul.f32 %v2614, %v2544
    %v2635 = vmul.f32 %v2615, %v2545
    %v2636 = vadd.f32 %v2632, %v2634
    %v2637 = vadd.f32 %v2633, %v2635
    %v2638 = vmax.f32 %v2546, %v2636
    %v2639 = vmax.f32 %v2547, %v2637
    %2642 = vrot.lane.b32.xlu0 %v2636, 64
    %v2643 = vpop.permute.xlu0 %2642
    %2644 = vrot.lane.b32.xlu0 %v2637, 64
    %v2645 = vpop.permute.xlu0 %2644
    %v2646 = vsel %vm226, %v2643, 0
    %v2648 = vsel %vm226, %v2645, 0
    %2650 = vmatpush.msra.mxu0 0.0
    %2651 = vmatpush.msra.mxu0 0.0
    %2652 = vmatpush.msra.mxu0 0.0
    %2653 = vmatpush.msra.mxu0 0.0
    %2654 = vmatpush.msra.mxu0 0.0
    %2655 = vmatpush.msra.mxu0 0.0
    %2656 = vmatpush.msra.mxu0 0.0
    %2657 = vmatpush.msra.mxu0 0.0
    %2658 = vmatpush.msra.mxu0 %v181
    %2659 = vmatpush.msra.mxu0 %v179
    %2660 = vmatpush.msra.mxu0 %v177
    %2661 = vmatpush.msra.mxu0 %v175
    %2662 = vmatpush.msra.mxu0 %v173
    %2663 = vmatpush.msra.mxu0 %v171
    %2664 = vmatpush.msra.mxu0 %v169
    %2665 = vmatpush.msra.mxu0 %v167
    %2666 = vmatmul.f32.gmra.mxu0 %v2646
    %v2667 = vpop.f32.mrf.mxu0
    %v2668 = vadd.f32 %v2188, %v2667
    %2669 = vmatmul.f32.gmra.mxu0 %v2648
    %v2670 = vpop.f32.mrf.mxu0
    %v2671 = vadd.f32 %v2188, %v2670
    %2672 = vdwg.mxu0
    %2673 = vmatpush.msra.mxu0 0.0
    %2674 = vmatpush.msra.mxu0 0.0
    %2675 = vmatpush.msra.mxu0 0.0
    %2676 = vmatpush.msra.mxu0 0.0
    %2677 = vmatpush.msra.mxu0 0.0
    %2678 = vmatpush.msra.mxu0 0.0
    %2679 = vmatpush.msra.mxu0 0.0
    %2680 = vmatpush.msra.mxu0 0.0
    %2681 = vmatpush.msra.mxu0 %v182
    %2682 = vmatpush.msra.mxu0 %v180
    %2683 = vmatpush.msra.mxu0 %v178
    %2684 = vmatpush.msra.mxu0 %v176
    %2685 = vmatpush.msra.mxu0 %v174
    %2686 = vmatpush.msra.mxu0 %v172
    %2687 = vmatpush.msra.mxu0 %v170
    %2688 = vmatpush.msra.mxu0 %v168
    %2689 = vmatmul.f32.gmra.mxu0 %v2646
    %v2690 = vpop.f32.mrf.mxu0
    %v2691 = vadd.f32 %v2189, %v2690
    %2692 = vmatmul.f32.gmra.mxu0 %v2648
    %v2693 = vpop.f32.mrf.mxu0
    %v2694 = vadd.f32 %v2189, %v2693
    %2695 = vdwg.mxu0
    %v2696 = vadd.f32 %v2105, %v2668
    %v2697 = vadd.f32 %v2108, %v2671
    %v2698 = vsub.f32 0.0, %v2696
    %v2699 = vsub.f32 0.0, %v2697
    %v2700 = vmul.f32 %v2698, 1.442695
    %v2701 = vpow.pop %v2700
    %v2702 = vmul.f32 %v2699, 1.442695
    %v2703 = vpow.pop %v2702
    %v2704 = vadd.f32 %v2701, 1.0
    %v2705 = vadd.f32 %v2703, 1.0
    %v2706 = vrcp.pop %v2704
    %v2707 = vrcp.pop %v2705
    %v2708 = vmul.f32 %v2706, %v2691
    %v2709 = vmul.f32 %v2707, %v2694
    %v2710 = vadd.f32 %v2170, %v2708
    %v2711 = vadd.f32 %v2173, %v2709
    %v2712 = vtanh.pop %v2710
    %v2713 = vtanh.pop %v2711
    %v2714 = vsub.f32 1.0, %v2706
    %v2715 = vsub.f32 1.0, %v2707
    %2718 = vrot.lane.b32.xlu0 %v2712, 64
    %v2719 = vpop.permute.xlu0 %2718
    %2720 = vrot.lane.b32.xlu0 %v2713, 64
    %v2721 = vpop.permute.xlu0 %2720
    %v2724 = vmul.f32 %v2714, %v2719
    %v2725 = vmul.f32 %v2715, %v2721
    %v2726 = vmul.f32 %v2706, %v2636
    %v2727 = vmul.f32 %v2707, %v2637
    %v2728 = vadd.f32 %v2724, %v2726
    %v2729 = vadd.f32 %v2725, %v2727
    %v2730 = vmax.f32 %v2638, %v2728
    %v2731 = vmax.f32 %v2639, %v2729
    %2734 = vrot.lane.b32.xlu0 %v2728, 64
    %v2735 = vpop.permute.xlu0 %2734
    %2736 = vrot.lane.b32.xlu0 %v2729, 64
    %v2737 = vpop.permute.xlu0 %2736
    %v2738 = vsel %vm226, %v2735, 0
    %v2740 = vsel %vm226, %v2737, 0
    %2742 = vmatpush.msra.mxu0 0.0
    %2743 = vmatpush.msra.mxu0 0.0
    %2744 = vmatpush.msra.mxu0 0.0
    %2745 = vmatpush.msra.mxu0 0.0
    %2746 = vmatpush.msra.mxu0 0.0
    %2747 = vmatpush.msra.mxu0 0.0
    %2748 = vmatpush.msra.mxu0 0.0
    %2749 = vmatpush.msra.mxu0 0.0
    %2750 = vmatpush.msra.mxu0 %v181
    %2751 = vmatpush.msra.mxu0 %v179
    %2752 = vmatpush.msra.mxu0 %v177
    %2753 = vmatpush.msra.mxu0 %v175
    %2754 = vmatpush.msra.mxu0 %v173
    %2755 = vmatpush.msra.mxu0 %v171
    %2756 = vmatpush.msra.mxu0 %v169
    %2757 = vmatpush.msra.mxu0 %v167
    %2758 = vmatmul.f32.gmra.mxu0 %v2738
    %v2759 = vpop.f32.mrf.mxu0
    %v2760 = vadd.f32 %v2188, %v2759
    %2761 = vmatmul.f32.gmra.mxu0 %v2740
    %v2762 = vpop.f32.mrf.mxu0
    %v2763 = vadd.f32 %v2188, %v2762
    %2764 = vdwg.mxu0
    %2765 = vmatpush.msra.mxu0 0.0
    %2766 = vmatpush.msra.mxu0 0.0
    %2767 = vmatpush.msra.mxu0 0.0
    %2768 = vmatpush.msra.mxu0 0.0
    %2769 = vmatpush.msra.mxu0 0.0
    %2770 = vmatpush.msra.mxu0 0.0
    %2771 = vmatpush.msra.mxu0 0.0
    %2772 = vmatpush.msra.mxu0 0.0
    %2773 = vmatpush.msra.mxu0 %v182
    %2774 = vmatpush.msra.mxu0 %v180
    %2775 = vmatpush.msra.mxu0 %v178
    %2776 = vmatpush.msra.mxu0 %v176
    %2777 = vmatpush.msra.mxu0 %v174
    %2778 = vmatpush.msra.mxu0 %v172
    %2779 = vmatpush.msra.mxu0 %v170
    %2780 = vmatpush.msra.mxu0 %v168
    %2781 = vmatmul.f32.gmra.mxu0 %v2738
    %v2782 = vpop.f32.mrf.mxu0
    %v2783 = vadd.f32 %v2189, %v2782
    %2784 = vmatmul.f32.gmra.mxu0 %v2740
    %v2785 = vpop.f32.mrf.mxu0
    %v2786 = vadd.f32 %v2189, %v2785
    %2787 = vdwg.mxu0
    %v2788 = vadd.f32 %v2111, %v2760
    %v2789 = vadd.f32 %v2114, %v2763
    %v2790 = vsub.f32 0.0, %v2788
    %v2791 = vsub.f32 0.0, %v2789
    %v2792 = vmul.f32 %v2790, 1.442695
    %v2793 = vpow.pop %v2792
    %v2794 = vmul.f32 %v2791, 1.442695
    %v2795 = vpow.pop %v2794
    %v2796 = vadd.f32 %v2793, 1.0
    %v2797 = vadd.f32 %v2795, 1.0
    %v2798 = vrcp.pop %v2796
    %v2799 = vrcp.pop %v2797
    %v2800 = vmul.f32 %v2798, %v2783
    %v2801 = vmul.f32 %v2799, %v2786
    %v2802 = vadd.f32 %v2176, %v2800
    %v2803 = vadd.f32 %v2179, %v2801
    %v2804 = vtanh.pop %v2802
    %v2805 = vtanh.pop %v2803
    %v2806 = vsub.f32 1.0, %v2798
    %v2807 = vsub.f32 1.0, %v2799
    %2810 = vrot.lane.b32.xlu0 %v2804, 64
    %v2811 = vpop.permute.xlu0 %2810
    %2812 = vrot.lane.b32.xlu0 %v2805, 64
    %v2813 = vpop.permute.xlu0 %2812
    %v2816 = vmul.f32 %v2806, %v2811
    %v2817 = vmul.f32 %v2807, %v2813
    %v2818 = vmul.f32 %v2798, %v2728
    %v2819 = vmul.f32 %v2799, %v2729
    %v2820 = vadd.f32 %v2816, %v2818
    %v2821 = vadd.f32 %v2817, %v2819
    %v2822 = vmax.f32 %v2730, %v2820
    %v2823 = vmax.f32 %v2731, %v2821
    %2826 = vrot.lane.b32.xlu0 %v2820, 64
    %v2827 = vpop.permute.xlu0 %2826
    %2828 = vrot.lane.b32.xlu0 %v2821, 64
    %v2829 = vpop.permute.xlu0 %2828
    %v2830 = vsel %vm226, %v2827, 0
    %v2832 = vsel %vm226, %v2829, 0
    %2834 = vmatpush.msra.mxu0 0.0
    %2835 = vmatpush.msra.mxu0 0.0
    %2836 = vmatpush.msra.mxu0 0.0
    %2837 = vmatpush.msra.mxu0 0.0
    %2838 = vmatpush.msra.mxu0 0.0
    %2839 = vmatpush.msra.mxu0 0.0
    %2840 = vmatpush.msra.mxu0 0.0
    %2841 = vmatpush.msra.mxu0 0.0
    %2842 = vmatpush.msra.mxu0 %v181
    %2843 = vmatpush.msra.mxu0 %v179
    %2844 = vmatpush.msra.mxu0 %v177
    %2845 = vmatpush.msra.mxu0 %v175
    %2846 = vmatpush.msra.mxu0 %v173
    %2847 = vmatpush.msra.mxu0 %v171
    %2848 = vmatpush.msra.mxu0 %v169
    %2849 = vmatpush.msra.mxu0 %v167
    %2850 = vmatmul.f32.gmra.mxu0 %v2830
    %v2851 = vpop.f32.mrf.mxu0
    %v2852 = vadd.f32 %v2188, %v2851
    %2853 = vmatmul.f32.gmra.mxu0 %v2832
    %v2854 = vpop.f32.mrf.mxu0
    %v2855 = vadd.f32 %v2188, %v2854
    %2856 = vdwg.mxu0
    %2857 = vmatpush.msra.mxu0 0.0
    %2858 = vmatpush.msra.mxu0 0.0
    %2859 = vmatpush.msra.mxu0 0.0
    %2860 = vmatpush.msra.mxu0 0.0
    %2861 = vmatpush.msra.mxu0 0.0
    %2862 = vmatpush.msra.mxu0 0.0
    %2863 = vmatpush.msra.mxu0 0.0
    %2864 = vmatpush.msra.mxu0 0.0
    %2865 = vmatpush.msra.mxu0 %v182
    %2866 = vmatpush.msra.mxu0 %v180
    %2867 = vmatpush.msra.mxu0 %v178
    %2868 = vmatpush.msra.mxu0 %v176
    %2869 = vmatpush.msra.mxu0 %v174
    %2870 = vmatpush.msra.mxu0 %v172
    %2871 = vmatpush.msra.mxu0 %v170
    %2872 = vmatpush.msra.mxu0 %v168
    %2873 = vmatmul.f32.gmra.mxu0 %v2830
    %v2874 = vpop.f32.mrf.mxu0
    %v2875 = vadd.f32 %v2189, %v2874
    %2876 = vmatmul.f32.gmra.mxu0 %v2832
    %v2877 = vpop.f32.mrf.mxu0
    %v2878 = vadd.f32 %v2189, %v2877
    %2879 = vdwg.mxu0
    %v2880 = vadd.f32 %v2117, %v2852
    %v2881 = vadd.f32 %v2120, %v2855
    %v2882 = vsub.f32 0.0, %v2880
    %v2883 = vsub.f32 0.0, %v2881
    %v2884 = vmul.f32 %v2882, 1.442695
    %v2885 = vpow.pop %v2884
    %v2886 = vmul.f32 %v2883, 1.442695
    %v2887 = vpow.pop %v2886
    %v2888 = vadd.f32 %v2885, 1.0
    %v2889 = vadd.f32 %v2887, 1.0
    %v2890 = vrcp.pop %v2888
    %v2891 = vrcp.pop %v2889
    %v2892 = vmul.f32 %v2890, %v2875
    %v2893 = vmul.f32 %v2891, %v2878
    %v2894 = vadd.f32 %v2182, %v2892
    %v2895 = vadd.f32 %v2185, %v2893
    %v2896 = vtanh.pop %v2894
    %v2897 = vtanh.pop %v2895
    %v2898 = vsub.f32 1.0, %v2890
    %v2899 = vsub.f32 1.0, %v2891
    %2902 = vrot.lane.b32.xlu0 %v2896, 64
    %v2903 = vpop.permute.xlu0 %2902
    %2904 = vrot.lane.b32.xlu0 %v2897, 64
    %v2905 = vpop.permute.xlu0 %2904
    %v2908 = vmul.f32 %v2898, %v2903
    %v2909 = vmul.f32 %v2899, %v2905
    %v2910 = vmul.f32 %v2890, %v2820
    %v2911 = vmul.f32 %v2891, %v2821
    %v2912 = vadd.f32 %v2908, %v2910
    %v2913 = vadd.f32 %v2909, %v2911
    %v2914 = vmax.f32 %v2822, %v2912
    %v2915 = vmax.f32 %v2823, %v2913
    %v2916 = vperm.slane %v2914, 2
    %v2917 = vmul.f32 %v2914, %v2916
    %2919 = vrot.lane.b32.xlu0 %v2917, 64
    %v2920 = vpop.permute.xlu0 %2919
    %vm2922 = vcmask 522244
    %v2923 = vsel %vm2922, %v2920, 0.0
    %2924 = vadd.xlane.f32.xlu0 %v2923
    %v2925 = vpop.xlane.xlu0 %2924
    %vm2926 = vcmask 1046532
    %v2927 = vsel %vm2926, %v2925, -inf
    %v2928 = vrot.slane %v2927, 4
    %v2929 = vmax.f32 %v2927, %v2928
    %v2930 = vrot.slane %v2929, 2
    %v2931 = vmax.f32 %v2929, %v2930
    %v2932 = vrot.slane %v2931, 1
    %v2933 = vmax.f32 %v2931, %v2932
    %v2934 = vsub.f32 %v2925, %v2933
    %v2935 = vmul.f32 %v2934, 1.442695
    %v2936 = vpow.pop %v2935
    %v2938 = vrot.slane %v2936, 4
    %vm2940 = vcmask 1042432
    %v2941 = vsel %vm2940, %v2938, 0.0
    %v2942 = vrot.slane %v2941, 4
    %v2943 = vadd.f32 %v2941, %v2942
    %v2944 = vrot.slane %v2943, 2
    %v2945 = vadd.f32 %v2943, %v2944
    %v2946 = vrot.slane %v2945, 1
    %v2947 = vadd.f32 %v2945, %v2946
    %v2948 = vrcp.pop %v2947
    %v2949 = vmul.f32 %v2947, %v2948
    %v2950 = vsub.f32 1.0, %v2949
    %v2951 = vmul.f32 %v2948, %v2950
    %v2952 = vadd.f32 %v2948, %v2951
    %vm2953 = vweird.f32 %v2947
    %vm2954 = vweird.f32 %v2948
    %vm2955 = vmor %vm2953, %vm2954
    %v2956 = vsel %vm2955, %v2948, %v2952
    %v2957 = vand.u32 2147483647, %v2947
    %vm2958 = vcmp.eq.f32.partialorder %v2957, 8.507059e+37
    %v2959 = vand.u32 %v2947, 2147483648
    %v2960 = vor.u32 1.1754944e-38, %v2959
    %v2961 = vsel %vm2958, %v2960, %v2956
    %v2962 = vmul.f32 %v2936, %v2961
    %v2963 = vmul.f32 %v2962, %v2914
    %v2965 = vrot.slane %v2963, 4
    %vm2967 = vcmask 1042944
    %v2968 = vsel %vm2967, %v2965, 0.0
    %v2969 = vrot.slane %v2968, 4
    %v2970 = vadd.f32 %v2968, %v2969
    %v2971 = vrot.slane %v2970, 2
    %v2972 = vadd.f32 %v2970, %v2971
    %v2973 = vrot.slane %v2972, 1
    %v2974 = vadd.f32 %v2972, %v2973
    %v2975 = vperm.slane %v2914, 3
    %v2976 = vmul.f32 %v2914, %v2975
    %v2977 = vmul.f32 %v2915, %v2975
    %2980 = vrot.lane.b32.xlu0 %v2976, 64
    %v2981 = vpop.permute.xlu0 %2980
    %2982 = vrot.lane.b32.xlu0 %v2977, 64
    %v2983 = vpop.permute.xlu0 %2982
    %vm2986 = vcmask 523271
    %v2987 = vsel %vm2986, %v2981, 0.0
    %2988 = vadd.xlane.f32.xlu0 %v2987
    %v2989 = vpop.xlane.xlu0 %2988
    %vm2990 = vcmask 517120
    %v2991 = vsel %vm2990, %v2983, 0.0
    %2992 = vadd.xlane.f32.xlu0 %v2991
    %v2993 = vpop.xlane.xlu0 %2992
    %vm2994 = vcmask 1047559
    %v2995 = vsel %vm2994, %v2989, -inf
    %vm2996 = vcmask 1041408
    %v2997 = vsel %vm2996, %v2993, -inf
    %v2998 = vmax.f32 %v2995, %v2997
    %v2999 = vrot.slane %v2998, 4
    %v3000 = vmax.f32 %v2998, %v2999
    %v3001 = vrot.slane %v3000, 2
    %v3002 = vmax.f32 %v3000, %v3001
    %v3003 = vrot.slane %v3002, 1
    %v3004 = vmax.f32 %v3002, %v3003
    %v3005 = vsub.f32 %v2989, %v3004
    %v3006 = vsub.f32 %v2993, %v3004
    %v3007 = vmul.f32 %v3005, 1.442695
    %v3008 = vpow.pop %v3007
    %v3009 = vmul.f32 %v3006, 1.442695
    %v3010 = vpow.pop %v3009
    %vm3013 = vcmask 1040384
    %v3014 = vrot.slane %v3008, 7
    %v3015 = vrot.slane %v3010, 7
    %v3016 = vsel %vm3013, %v3014, %v3015
    %v3018 = vsel %vm2940, %v3016, 0.0
    %v3019 = vrot.slane %v3018, 4
    %v3020 = vadd.f32 %v3018, %v3019
    %v3021 = vrot.slane %v3020, 2
    %v3022 = vadd.f32 %v3020, %v3021
    %v3023 = vrot.slane %v3022, 1
    %v3024 = vadd.f32 %v3022, %v3023
    %v3025 = vrcp.pop %v3024
    %v3026 = vmul.f32 %v3024, %v3025
    %v3027 = vsub.f32 1.0, %v3026
    %v3028 = vmul.f32 %v3025, %v3027
    %v3029 = vadd.f32 %v3025, %v3028
    %vm3030 = vweird.f32 %v3024
    %vm3031 = vweird.f32 %v3025
    %vm3032 = vmor %vm3030, %vm3031
    %v3033 = vsel %vm3032, %v3025, %v3029
    %v3034 = vand.u32 2147483647, %v3024
    %vm3035 = vcmp.eq.f32.partialorder %v3034, 8.507059e+37
    %v3036 = vand.u32 %v3024, 2147483648
    %v3037 = vor.u32 1.1754944e-38, %v3036
    %v3038 = vsel %vm3035, %v3037, %v3033
    %v3039 = vmul.f32 %v3008, %v3038
    %v3040 = vmul.f32 %v3010, %v3038
    %v3041 = vmul.f32 %v3039, %v2914
    %v3042 = vmul.f32 %v3040, %v2915
    %v3045 = vrot.slane %v3041, 7
    %v3046 = vrot.slane %v3042, 7
    %v3047 = vsel %vm3013, %v3045, %v3046
    %v3049 = vsel %vm2967, %v3047, 0.0
    %v3050 = vrot.slane %v3049, 4
    %v3051 = vadd.f32 %v3049, %v3050
    %v3052 = vrot.slane %v3051, 2
    %v3053 = vadd.f32 %v3051, %v3052
    %v3054 = vrot.slane %v3053, 1
    %v3055 = vadd.f32 %v3053, %v3054
    %v3056 = vsel %vm3013, %v2974, %v3055
    %v3058 = vperm.slane %v223, 0
    %v3059 = vperm.slane %v223, 1
    %3063 = vrot.lane.b32.xlu0 %v3056, 64
    %v3064 = vpop.permute.xlu0 %3063
    %v3065 = vsel %vm226, %v3064, 0
    %3067 = vmatpush.msra.mxu0 0.0
    %3068 = vmatpush.msra.mxu0 0.0
    %3069 = vmatpush.msra.mxu0 0.0
    %3070 = vmatpush.msra.mxu0 0.0
    %3071 = vmatpush.msra.mxu0 0.0
    %3072 = vmatpush.msra.mxu0 0.0
    %3073 = vmatpush.msra.mxu0 0.0
    %3074 = vmatpush.msra.mxu0 0.0
    %3075 = vmatpush.msra.mxu0 %v197
    %3076 = vmatpush.msra.mxu0 %v195
    %3077 = vmatpush.msra.mxu0 %v193
    %3078 = vmatpush.msra.mxu0 %v191
    %3079 = vmatpush.msra.mxu0 %v189
    %3080 = vmatpush.msra.mxu0 %v187
    %3081 = vmatpush.msra.mxu0 %v185
    %3082 = vmatpush.msra.mxu0 %v183
    %3083 = vmatmul.f32.gmra.mxu0 %v3065
    %v3084 = vpop.f32.mrf.mxu0
    %v3085 = vadd.f32 %v3058, %v3084
    %3086 = vdwg.mxu0
    %3087 = vmatpush.msra.mxu0 0.0
    %3088 = vmatpush.msra.mxu0 0.0
    %3089 = vmatpush.msra.mxu0 0.0
    %3090 = vmatpush.msra.mxu0 0.0
    %3091 = vmatpush.msra.mxu0 0.0
    %3092 = vmatpush.msra.mxu0 0.0
    %3093 = vmatpush.msra.mxu0 0.0
    %3094 = vmatpush.msra.mxu0 0.0
    %3095 = vmatpush.msra.mxu0 %v198
    %3096 = vmatpush.msra.mxu0 %v196
    %3097 = vmatpush.msra.mxu0 %v194
    %3098 = vmatpush.msra.mxu0 %v192
    %3099 = vmatpush.msra.mxu0 %v190
    %3100 = vmatpush.msra.mxu0 %v188
    %3101 = vmatpush.msra.mxu0 %v186
    %3102 = vmatpush.msra.mxu0 %v184
    %3103 = vmatmul.f32.gmra.mxu0 %v3065
    %v3104 = vpop.f32.mrf.mxu0
    %v3105 = vadd.f32 %v3059, %v3104
    %3106 = vdwg.mxu0
    %v3108 = vperm.slane %v225, 0
    %v3109 = vperm.slane %v225, 1
    %v3113 = vrot.slane %v2914, 2
    %3114 = vrot.lane.b32.xlu0 %v3113, 64
    %v3115 = vpop.permute.xlu0 %3114
    %v3116 = vsel %vm226, %v3115, 0
    %3118 = vmatpush.msra.mxu0 0.0
    %3119 = vmatpush.msra.mxu0 0.0
    %3120 = vmatpush.msra.mxu0 0.0
    %3121 = vmatpush.msra.mxu0 0.0
    %3122 = vmatpush.msra.mxu0 0.0
    %3123 = vmatpush.msra.mxu0 0.0
    %3124 = vmatpush.msra.mxu0 0.0
    %3125 = vmatpush.msra.mxu0 0.0
    %3126 = vmatpush.msra.mxu0 %v213
    %3127 = vmatpush.msra.mxu0 %v211
    %3128 = vmatpush.msra.mxu0 %v209
    %3129 = vmatpush.msra.mxu0 %v207
    %3130 = vmatpush.msra.mxu0 %v205
    %3131 = vmatpush.msra.mxu0 %v203
    %3132 = vmatpush.msra.mxu0 %v201
    %3133 = vmatpush.msra.mxu0 %v199
    %3134 = vmatmul.f32.gmra.mxu0 %v3116
    %v3135 = vpop.f32.mrf.mxu0
    %v3136 = vadd.f32 %v3108, %v3135
    %3137 = vdwg.mxu0
    %3138 = vmatpush.msra.mxu0 0.0
    %3139 = vmatpush.msra.mxu0 0.0
    %3140 = vmatpush.msra.mxu0 0.0
    %3141 = vmatpush.msra.mxu0 0.0
    %3142 = vmatpush.msra.mxu0 0.0
    %3143 = vmatpush.msra.mxu0 0.0
    %3144 = vmatpush.msra.mxu0 0.0
    %3145 = vmatpush.msra.mxu0 0.0
    %3146 = vmatpush.msra.mxu0 %v214
    %3147 = vmatpush.msra.mxu0 %v212
    %3148 = vmatpush.msra.mxu0 %v210
    %3149 = vmatpush.msra.mxu0 %v208
    %3150 = vmatpush.msra.mxu0 %v206
    %3151 = vmatpush.msra.mxu0 %v204
    %3152 = vmatpush.msra.mxu0 %v202
    %3153 = vmatpush.msra.mxu0 %v200
    %3154 = vmatmul.f32.gmra.mxu0 %v3116
    %v3155 = vpop.f32.mrf.mxu0
    %v3156 = vadd.f32 %v3109, %v3155
    %3157 = vdwg.mxu0
    %v3158 = vadd.f32 %v3085, %v3136
    %v3159 = vsub.f32 0.0, %v3158
    %v3160 = vmul.f32 %v3159, 1.442695
    %v3161 = vpow.pop %v3160
    %v3162 = vadd.f32 %v3161, 1.0
    %v3163 = vrcp.pop %v3162
    %v3164 = vmul.f32 %v3163, %v3156
    %v3165 = vadd.f32 %v3105, %v3164
    %v3166 = vtanh.pop %v3165
    %v3167 = vsub.f32 1.0, %v3163
    %3169 = vrot.lane.b32.xlu0 %v3166, 64
    %v3170 = vpop.permute.xlu0 %3169
    %v3172 = vmul.f32 %v3167, %v3170
    %v3174 = vmul.f32 %v3163, %v3113
    %v3175 = vadd.f32 %v3172, %v3174
    %v3176 = vadd.f32 %v3175, %v2914
    %v3177 = vand.u32 2147483647, %v3176
    %v3178 = vld [vmem:[%s8 + $0x6] ss:$0 sm:$0xff]
    %3180 = vrot.lane.b32.xlu0 %v3178, 64
    %v3181 = vpop.permute.xlu0 %3180
    %v3183 = vmul.f32 %v3177, %v3181
    %3185 = vrot.lane.b32.xlu0 %v3183, 64
    %v3186 = vpop.permute.xlu0 %3185
    %v3188 = vsel %vm2990, %v3186, 0.0
    %3189 = vadd.xlane.f32.xlu0 %v3188
    %v3190 = vpop.xlane.xlu0 %3189
    %v3191 = vadd.f32 %v3190, %v3178
    %v3192 = vsub.f32 0.0, %v3191
    %v3193 = vmul.f32 %v3192, 1.442695
    %v3194 = vpow.pop %v3193
    %v3195 = vadd.f32 %v3194, 1.0
    %v3196 = vrcp.pop %v3195
    %v3197 = vmul.f32 %v3195, %v3196
    %v3198 = vsub.f32 1.0, %v3197
    %v3199 = vmul.f32 %v3196, %v3198
    %v3200 = vadd.f32 %v3196, %v3199
    %vm3201 = vweird.f32 %v3195
    %vm3202 = vweird.f32 %v3196
    %vm3203 = vmor %vm3201, %vm3202
    %v3204 = vsel %vm3203, %v3196, %v3200
    %v3205 = vand.u32 2147483647, %v3195
    %vm3206 = vcmp.eq.f32.partialorder %v3205, 8.507059e+37
    %v3207 = vand.u32 %v3195, 2147483648
    %v3208 = vor.u32 1.1754944e-38, %v3207
    %v3209 = vsel %vm3206, %v3208, %v3204
    %v3210 = vmul.f32 1.0, %v3209
    %v3211 = vcvt.f32.s32.to.zero.pseudo %v3210
    %v3212 = vcvt.s32.f32 %v3211
    %v3213 = vld [vmem:[%s8 + $0x7] ss:$0 sm:$0xff]
    %v3214 = vld [vmem:[%s8 + $0x10] ss:$0 sm:$0xff]
    %v3215 = vld [vmem:[%s8 + $0x11] ss:$0 sm:$0xff]
    %v3216 = vld [vmem:[%s8 + $0x12] ss:$0 sm:$0xff]
    %v3217 = vld [vmem:[%s8 + $0x13] ss:$0 sm:$0xff]
    %v3218 = vld [vmem:[%s8 + $0x14] ss:$0 sm:$0xff]
    %s3219 = sld [smem:[#allocation9]]
    %s3220 = scvt.f32.s32.to.zero.pseudo %s3219
    %s3221 = scvt.s32.f32 %s3220
    %s3222 = sld [smem:[#allocation11]]
    %s3223 = scvt.f32.s32.to.zero.pseudo %s3222
    %s3224 = scvt.s32.f32 %s3223
    %s3225 = sld [smem:[#allocation12]]
    %s3226 = scvt.f32.s32.to.zero.pseudo %s3225
    %s3227 = scvt.s32.f32 %s3226
    %v3228 = vstv %s3221
    %v3229 = vmul.f32 %v3228, %v3214
    %v3230 = vstv %s3224
    %v3231 = vmul.f32 %v3230, %v3215
    %v3232 = vadd.f32 %v3229, %v3231
    %v3233 = vstv %s3227
    %v3234 = vmul.f32 %v3233, %v3216
    %v3235 = vadd.f32 %v3232, %v3234
    %s3236 = sld [smem:[#allocation9 + $0x1]]
    %s3237 = scvt.f32.s32.to.zero.pseudo %s3236
    %s3238 = scvt.s32.f32 %s3237
    %s3239 = sld [smem:[#allocation11 + $0x1]]
    %s3240 = scvt.f32.s32.to.zero.pseudo %s3239
    %s3241 = scvt.s32.f32 %s3240
    %s3242 = sld [smem:[#allocation12 + $0x1]]
    %s3243 = scvt.f32.s32.to.zero.pseudo %s3242
    %s3244 = scvt.s32.f32 %s3243
    %v3245 = vstv %s3238
    %v3246 = vmul.f32 %v3245, %v3214
    %v3247 = vstv %s3241
    %v3248 = vmul.f32 %v3247, %v3215
    %v3249 = vadd.f32 %v3246, %v3248
    %v3250 = vstv %s3244
    %v3251 = vmul.f32 %v3250, %v3216
    %v3252 = vadd.f32 %v3249, %v3251
    %v3253 = vsel %vm3013, %v3235, %v3252
    %3255 = vset.pattern.permute.xlu0 64
    %3256 = vperm.xlu0 %3255, %v3212
    %v3257 = vpop.permute.xlu0 %3256
    %v3259 = vmul.f32 %v3257, %v3213
    %v3260 = vadd.f32 %v3259, %v3253
    %v3261 = vadd.f32 %v3260, %v3217
    %v3262 = vmax.f32 %v3261, 0.0
    %v3263 = vmul.f32 %v3262, %v3218
    %vm3264 = vcmask 254976
    %v3265 = vsel %vm3264, %v3263, 0.0
    %3266 = vadd.xlane.f32.xlu0 %v3265
    %v3267 = vpop.xlane.xlu0 %3266
    %v3268 = vadd.f32 %v3267, %v3218
    %v3269 = vmax.f32 %v3268, 0.0
    %v3270 = vmin.f32 %v3269, 1.0
    %3272 = vrot.lane.b32.xlu0 %v3270, 96
    %v3273 = vpop.permute.xlu0 %3272
    %vm3275 = vcmask 1024
    %3276 = vst.msk [vmem:[%s9] sm:$0x3] %vm3275, %v3273
    // Predicated region
    $region62: #{forward.1} parent=1 // pred_check
      _
    $region63: #{forward.1} parent=1 // pred_check_branch
      %3278 = sbr.rel (0) target = $region65
    $region64: #{forward.1} parent=1 // pred_region
      _
    $region65: #{forward.1} parent=1 // pred_fallthru
      _
    // Predicated region
    $region66: #{forward.1} parent=1 // pred_check
      _
    $region67: #{forward.1} parent=1 // pred_check_branch
      %3280 = sbr.rel (0) target = $region69
    $region68: #{forward.1} parent=1 // pred_region
      _
    $region69: #{forward.1} parent=1 // pred_fallthru
      _
    %3281 = vsyncpa [#allocation5], 1
    %3282 = vsyncpa [#allocation7], 1
    %3283 = vsyncpa [#allocation10], 1
    %3284 = vsyncpa [#allocation13], 1

</llo_original>
